<compile_context>
chip_gen: v7x
topology: tpu7x:2x2x1
jax: 0.10.0
libtpu: 0.0.40
codegen_flags: <defaults>
</compile_context>

<pallas_src>
import jax
import jax.numpy as jnp
from jax import lax
from jax.experimental import pallas as pl
from jax.experimental.pallas import tpu as pltpu

EPS = 1e-5


# ---------------------------------------------------------------------------
# Fused BasicBlock kernel (single pallas_call, everything resident in VMEM)
# ---------------------------------------------------------------------------
def _make_basic_block_kernel(N, H, W, C, mxu_dtype):
    M = N * H * W
    inv_m = 1.0 / float(M)
    compute_dtype = jnp.dtype(mxu_dtype)

    def kernel(x_ref, w1_ref, w2_ref, g1_ref, b1_ref, g2_ref, b2_ref,
               out_ref, pad_ref, patch_ref):

        def stage_taps():
            # Scatter the 9 shifted (M, C) windows of the zero-haloed activation into
            # the (M, 9*C) im2col scratch.  Static lane offsets; each iteration is a
            # ref->ref copy so the Python loop carries no live values.
            # TODO(synk): the dx shifts are sublane-misaligned (W+2 not a multiple of
            # 8); a pltpu.roll-based shift on a W*C-flattened layout would move the
            # shift onto the XLU — left for the large-channel tiled path.
            for t in range(9):
                dy, dx = divmod(t, 3)
                patch_ref[:, t * C:(t + 1) * C] = (
                    pad_ref[:, dy:dy + H, dx:dx + W, :].reshape(M, C))

        def conv3x3(w_ref):
            # One K = 9*C deep MXU matmul per conv, f32 accumulation.
            stage_taps()
            return jnp.dot(patch_ref[...], w_ref[...],
                           preferred_element_type=jnp.float32)

        def bn_relu(y, gamma, beta, residual=None):
            # Training-mode BatchNorm (biased variance), single sweep over y:
            # per-channel sum(y), sum(y*y) -> var = E[y^2] - E[y]^2.
            s = jnp.sum(y, axis=0, keepdims=True)
            s2 = jnp.sum(y * y, axis=0, keepdims=True)
            mean = s * inv_m
            var = s2 * inv_m - mean * mean
            scale = gamma * lax.rsqrt(var + EPS)
            shift = beta - mean * scale
            z = y * scale + shift
            if residual is not None:
                z = z + residual
            return jnp.maximum(z, 0.0)

        # --- Zero ONLY the 1-pixel halo of the padded scratch (interior is always
        # written before being read; the halo stays zero across both convs). ---
        zrow = jnp.zeros((N, 1, W + 2, C), compute_dtype)
        zcol = jnp.zeros((N, H, 1, C), compute_dtype)
        pad_ref[:, 0:1, :, :] = zrow
        pad_ref[:, H + 1:H + 2, :, :] = zrow
        pad_ref[:, 1:H + 1, 0:1, :] = zcol
        pad_ref[:, 1:H + 1, W + 1:W + 2, :] = zcol

        # conv1 -> bn1 (batch stats) -> relu.  MXU-dtype cast folded into staging copy.
        pad_ref[:, 1:H + 1, 1:W + 1, :] = x_ref[...].astype(compute_dtype)
        y1 = conv3x3(w1_ref)
        h1 = bn_relu(y1, g1_ref[...], b1_ref[...])

        # conv2 reuses the SAME padded scratch (halo still zero; inplanes == planes).
        pad_ref[:, 1:H + 1, 1:W + 1, :] = h1.reshape(N, H, W, C).astype(compute_dtype)
        y2 = conv3x3(w2_ref)

        # bn2 -> +residual -> relu.  Residual re-read from the resident input ref
        # instead of being kept live across both convs.
        res = x_ref[...].reshape(M, C).astype(jnp.float32)
        out = bn_relu(y2, g2_ref[...], b2_ref[...], residual=res)
        out_ref[...] = out.reshape(N, H, W, C)

    return kernel


# ---------------------------------------------------------------------------
# Helpers
# ---------------------------------------------------------------------------
def _flatten_conv_weight(w_oihw, mxu_dtype):
    """PyTorch (Cout, Cin, 3, 3) -> (9*Cin, Cout); row index = (ky*3+kx)*Cin + ci."""
    cout, cin, kh, kw = w_oihw.shape
    return (jnp.transpose(w_oihw.astype(jnp.float32), (2, 3, 1, 0))
            .reshape(kh * kw * cin, cout)
            .astype(mxu_dtype))


def _padded_vmem_bytes(shape, dtype=jnp.float32):
    """Conservative byte estimate once padded to TPU (8 sublane, 128 lane) tiles."""
    shape = tuple(int(d) for d in shape)
    if len(shape) == 1:
        shape = (1,) + shape
    lead, sub, lane = shape[:-2], shape[-2], shape[-1]
    sub_p = -(-sub // 8) * 8
    lane_p = -(-lane // 128) * 128
    n = 1
    for d in lead:
        n *= d
    return n * sub_p * lane_p * jnp.dtype(dtype).itemsize


def _vmem_capacity_bytes():
    """Per-core VMEM capacity; conservative 64 MiB (v7x) fallback if query fails."""
    try:
        cap = getattr(pltpu.get_tpu_info(), "vmem_capacity_bytes", None)
        if cap:
            return int(cap)
    except Exception:
        pass
    return 64 * 1024 * 1024


# ---------------------------------------------------------------------------
# BasicBlock forward (stride=1, downsample=None)
# ---------------------------------------------------------------------------
def basic_block_forward(x_nchw, params, *, mxu_dtype=jnp.float32):
    # NCHW <-> NHWC layout conversion exactly once at the block boundary.
    x = jnp.transpose(x_nchw, (0, 2, 3, 1)).astype(jnp.float32)   # NCHW -> NHWC
    N, H, W, Cin = x.shape

    w1 = _flatten_conv_weight(params["conv1_w"], mxu_dtype)   # (9*Cin, P)
    w2 = _flatten_conv_weight(params["conv2_w"], mxu_dtype)   # (9*P,   P)
    P = w1.shape[1]
    if Cin != P or w2.shape[0] != 9 * P:
        # TODO(synk): stride != 1 / downsample != None BasicBlock variants need a
        # residual projection path; not implemented here.
        raise NotImplementedError(
            "fused BasicBlock kernel assumes inplanes == planes, stride=1")

    g1 = params["bn1_gamma"].reshape(1, P).astype(jnp.float32)
    b1 = params["bn1_beta"].reshape(1, P).astype(jnp.float32)
    g2 = params["bn2_gamma"].reshape(1, P).astype(jnp.float32)
    b2 = params["bn2_beta"].reshape(1, P).astype(jnp.float32)

    M = N * H * W

    # Generation-aware VMEM budget: explicit refs + allowance for compiler-materialized
    # intermediates (y1 / h1 / y2 / out values).
    explicit = (
        _padded_vmem_bytes(x.shape) + _padded_vmem_bytes((N, H, W, P)) +
        _padded_vmem_bytes(w1.shape, mxu_dtype) + _padded_vmem_bytes(w2.shape, mxu_dtype) +
        4 * _padded_vmem_bytes((1, P)) +
        _padded_vmem_bytes((N, H + 2, W + 2, Cin), mxu_dtype) +    # shared halo scratch
        _padded_vmem_bytes((M, 9 * Cin), mxu_dtype))               # im2col scratch
    intermediates = 4 * _padded_vmem_bytes((M, P))
    vmem_est = explicit + intermediates

    budget = int(0.75 * _vmem_capacity_bytes())   # headroom for compiler scratch / DMA
    if vmem_est > budget:
        # TODO(synk): large ResNet stages need a tiled two-pass path (row-parallel grid
        # across TensorCores + cross-tile BN partials) instead of full fusion.
        raise NotImplementedError(
            "activation working set too large for the fused BasicBlock kernel")

    vmem_spec = pl.BlockSpec(memory_space=pltpu.MemorySpace.VMEM)
    kernel = _make_basic_block_kernel(N, H, W, Cin, mxu_dtype)

    out_nhwc = pl.pallas_call(
        kernel,
        out_shape=jax.ShapeDtypeStruct((N, H, W, P), jnp.float32),
        in_specs=[vmem_spec] * 7,
        out_specs=vmem_spec,
        scratch_shapes=[
            pltpu.VMEM((N, H + 2, W + 2, Cin), mxu_dtype),   # zero-haloed activation (shared)
            pltpu.VMEM((M, 9 * Cin), mxu_dtype),             # im2col patch matrix
        ],
        compiler_params=pltpu.CompilerParams(
            vmem_limit_bytes=int(min(budget, max(32 * 2**20, 2 * vmem_est)))),
    )(x, w1, w2, g1, b1, g2, b2)

    return jnp.transpose(out_nhwc, (0, 3, 1, 2))              # NHWC -> NCHW


# ---------------------------------------------------------------------------
# Pure-JAX reference (for correctness check)
# ---------------------------------------------------------------------------
def _ref_forward(x_nchw, params):
    dn = ("NCHW", "OIHW", "NCHW")

    def conv(x, w):
        return lax.conv_general_dilated(x, w, (1, 1), ((1, 1), (1, 1)),
                                        dimension_numbers=dn)

    def bn(y, gamma, beta):
        mean = jnp.mean(y, axis=(0, 2, 3), keepdims=True)
        var = jnp.mean((y - mean) ** 2, axis=(0, 2, 3), keepdims=True)
        g = gamma.reshape(1, -1, 1, 1)
        b = beta.reshape(1, -1, 1, 1)
        return (y - mean) * lax.rsqrt(var + EPS) * g + b

    out = conv(x_nchw, params["conv1_w"])
    out = jnp.maximum(bn(out, params["bn1_gamma"], params["bn1_beta"]), 0.0)
    out = conv(out, params["conv2_w"])
    out = bn(out, params["bn2_gamma"], params["bn2_beta"]) + x_nchw
    return jnp.maximum(out, 0.0)


# ---------------------------------------------------------------------------
if __name__ == "__main__":
    key = jax.random.PRNGKey(0)
    k_x, k_w1, k_w2, k_g1, k_b1, k_g2, k_b2 = jax.random.split(key, 7)

    N, C, H, W = 2, 4, 16, 16          # inplanes = planes = 4, stride = 1
    planes = C

    x = jax.random.normal(k_x, (N, C, H, W), dtype=jnp.float32)

    params = {
        "conv1_w": 0.1 * jax.random.normal(k_w1, (planes, C, 3, 3), dtype=jnp.float32),
        "conv2_w": 0.1 * jax.random.normal(k_w2, (planes, planes, 3, 3), dtype=jnp.float32),
        "bn1_gamma": 1.0 + 0.1 * jax.random.normal(k_g1, (planes,), dtype=jnp.float32),
        "bn1_beta": 0.1 * jax.random.normal(k_b1, (planes,), dtype=jnp.float32),
        "bn2_gamma": 1.0 + 0.1 * jax.random.normal(k_g2, (planes,), dtype=jnp.float32),
        "bn2_beta": 0.1 * jax.random.normal(k_b2, (planes,), dtype=jnp.float32),
    }

    # Default f32 MXU path keeps the 1e-4 check tight; flip mxu_dtype=jnp.bfloat16 on
    # v6e/v7x for the native-bf16 MXU path (requires loosening the tolerance).
    fwd = jax.jit(basic_block_forward)
    out = jax.block_until_ready(fwd(x, params))
    ref = jax.block_until_ready(_ref_forward(x, params))

    assert out.shape == (N, planes, H, W), out.shape
    assert jnp.allclose(out, ref, atol=1e-4, rtol=1e-4), float(jnp.max(jnp.abs(out - ref)))

    print("KERNEL_OK")
</pallas_src>

<mosaic_0001>
module attributes {stable_mosaic.version = 11 : i64} {
  func.func @kernel(%arg0: memref<2x16x16x4xf32, #tpu.memory_space<vmem>>, %arg1: memref<36x4xf32, #tpu.memory_space<vmem>>, %arg2: memref<36x4xf32, #tpu.memory_space<vmem>>, %arg3: memref<1x4xf32, #tpu.memory_space<vmem>>, %arg4: memref<1x4xf32, #tpu.memory_space<vmem>>, %arg5: memref<1x4xf32, #tpu.memory_space<vmem>>, %arg6: memref<1x4xf32, #tpu.memory_space<vmem>>, %arg7: memref<2x16x16x4xf32, #tpu.memory_space<vmem>>, %arg8: memref<2x18x18x4xf32, #tpu.memory_space<vmem>>, %arg9: memref<512x36xf32, #tpu.memory_space<vmem>>) attributes {dimension_semantics = [], scalar_prefetch = 0 : i64, scratch_operands = 2 : i64, tpu.core_type = #tpu.core_type<tc>} {
    %cst = arith.constant 0.000000e+00 : f32
    %0 = vector.broadcast %cst : f32 to vector<2x1x18x4xf32>
    %cst_0 = arith.constant 0.000000e+00 : f32
    %1 = vector.broadcast %cst_0 : f32 to vector<2x16x1x4xf32>
    %c0 = arith.constant 0 : index
    %c0_1 = arith.constant 0 : index
    %c0_2 = arith.constant 0 : index
    %c0_3 = arith.constant 0 : index
    %2 = vector.load %arg8[%c0, %c0_1, %c0_2, %c0_3] : memref<2x18x18x4xf32, #tpu.memory_space<vmem>>, vector<2x1x18x4xf32>
    tpu.vector_store %arg8[%c0, %c0_1, %c0_2, %c0_3], %0 {strides = array<i32>} : memref<2x18x18x4xf32, #tpu.memory_space<vmem>>, vector<2x1x18x4xf32>,
    %c0_4 = arith.constant 0 : index
    %c17 = arith.constant 17 : index
    %c0_5 = arith.constant 0 : index
    %c0_6 = arith.constant 0 : index
    %3 = vector.load %arg8[%c0_4, %c17, %c0_5, %c0_6] : memref<2x18x18x4xf32, #tpu.memory_space<vmem>>, vector<2x1x18x4xf32>
    tpu.vector_store %arg8[%c0_4, %c17, %c0_5, %c0_6], %0 {strides = array<i32>} : memref<2x18x18x4xf32, #tpu.memory_space<vmem>>, vector<2x1x18x4xf32>,
    %c0_7 = arith.constant 0 : index
    %c1 = arith.constant 1 : index
    %c0_8 = arith.constant 0 : index
    %c0_9 = arith.constant 0 : index
    %4 = vector.load %arg8[%c0_7, %c1, %c0_8, %c0_9] : memref<2x18x18x4xf32, #tpu.memory_space<vmem>>, vector<2x16x1x4xf32>
    tpu.vector_store %arg8[%c0_7, %c1, %c0_8, %c0_9], %1 {strides = array<i32>} : memref<2x18x18x4xf32, #tpu.memory_space<vmem>>, vector<2x16x1x4xf32>,
    %c0_10 = arith.constant 0 : index
    %c1_11 = arith.constant 1 : index
    %c17_12 = arith.constant 17 : index
    %c0_13 = arith.constant 0 : index
    %5 = vector.load %arg8[%c0_10, %c1_11, %c17_12, %c0_13] : memref<2x18x18x4xf32, #tpu.memory_space<vmem>>, vector<2x16x1x4xf32>
    tpu.vector_store %arg8[%c0_10, %c1_11, %c17_12, %c0_13], %1 {strides = array<i32>} : memref<2x18x18x4xf32, #tpu.memory_space<vmem>>, vector<2x16x1x4xf32>,
    %c0_14 = arith.constant 0 : index
    %c0_15 = arith.constant 0 : index
    %c0_16 = arith.constant 0 : index
    %c0_17 = arith.constant 0 : index
    %6 = vector.load %arg0[%c0_14, %c0_15, %c0_16, %c0_17] : memref<2x16x16x4xf32, #tpu.memory_space<vmem>>, vector<2x16x16x4xf32>
    %c0_18 = arith.constant 0 : index
    %c1_19 = arith.constant 1 : index
    %c1_20 = arith.constant 1 : index
    %c0_21 = arith.constant 0 : index
    %7 = vector.load %arg8[%c0_18, %c1_19, %c1_20, %c0_21] : memref<2x18x18x4xf32, #tpu.memory_space<vmem>>, vector<2x16x16x4xf32>
    tpu.vector_store %arg8[%c0_18, %c1_19, %c1_20, %c0_21], %6 {strides = array<i32>} : memref<2x18x18x4xf32, #tpu.memory_space<vmem>>, vector<2x16x16x4xf32>,
    %c0_22 = arith.constant 0 : index
    %c0_23 = arith.constant 0 : index
    %c0_24 = arith.constant 0 : index
    %c0_25 = arith.constant 0 : index
    %8 = vector.load %arg8[%c0_22, %c0_23, %c0_24, %c0_25] : memref<2x18x18x4xf32, #tpu.memory_space<vmem>>, vector<2x16x16x4xf32>
    %9 = vector.shape_cast %8 : vector<2x16x16x4xf32> to vector<512x4xf32>
    %c0_26 = arith.constant 0 : index
    %c0_27 = arith.constant 0 : index
    %10 = vector.load %arg9[%c0_26, %c0_27] : memref<512x36xf32, #tpu.memory_space<vmem>>, vector<512x4xf32>
    tpu.vector_store %arg9[%c0_26, %c0_27], %9 {strides = array<i32>} : memref<512x36xf32, #tpu.memory_space<vmem>>, vector<512x4xf32>,
    %c0_28 = arith.constant 0 : index
    %c0_29 = arith.constant 0 : index
    %c1_30 = arith.constant 1 : index
    %c0_31 = arith.constant 0 : index
    %11 = vector.load %arg8[%c0_28, %c0_29, %c1_30, %c0_31] : memref<2x18x18x4xf32, #tpu.memory_space<vmem>>, vector<2x16x16x4xf32>
    %12 = vector.shape_cast %11 : vector<2x16x16x4xf32> to vector<512x4xf32>
    %c0_32 = arith.constant 0 : index
    %c4 = arith.constant 4 : index
    %13 = vector.load %arg9[%c0_32, %c4] : memref<512x36xf32, #tpu.memory_space<vmem>>, vector<512x4xf32>
    tpu.vector_store %arg9[%c0_32, %c4], %12 {strides = array<i32>} : memref<512x36xf32, #tpu.memory_space<vmem>>, vector<512x4xf32>,
    %c0_33 = arith.constant 0 : index
    %c0_34 = arith.constant 0 : index
    %c2 = arith.constant 2 : index
    %c0_35 = arith.constant 0 : index
    %14 = vector.load %arg8[%c0_33, %c0_34, %c2, %c0_35] : memref<2x18x18x4xf32, #tpu.memory_space<vmem>>, vector<2x16x16x4xf32>
    %15 = vector.shape_cast %14 : vector<2x16x16x4xf32> to vector<512x4xf32>
    %c0_36 = arith.constant 0 : index
    %c8 = arith.constant 8 : index
    %16 = vector.load %arg9[%c0_36, %c8] : memref<512x36xf32, #tpu.memory_space<vmem>>, vector<512x4xf32>
    tpu.vector_store %arg9[%c0_36, %c8], %15 {strides = array<i32>} : memref<512x36xf32, #tpu.memory_space<vmem>>, vector<512x4xf32>,
    %c0_37 = arith.constant 0 : index
    %c1_38 = arith.constant 1 : index
    %c0_39 = arith.constant 0 : index
    %c0_40 = arith.constant 0 : index
    %17 = vector.load %arg8[%c0_37, %c1_38, %c0_39, %c0_40] : memref<2x18x18x4xf32, #tpu.memory_space<vmem>>, vector<2x16x16x4xf32>
    %18 = vector.shape_cast %17 : vector<2x16x16x4xf32> to vector<512x4xf32>
    %c0_41 = arith.constant 0 : index
    %c12 = arith.constant 12 : index
    %19 = vector.load %arg9[%c0_41, %c12] : memref<512x36xf32, #tpu.memory_space<vmem>>, vector<512x4xf32>
    tpu.vector_store %arg9[%c0_41, %c12], %18 {strides = array<i32>} : memref<512x36xf32, #tpu.memory_space<vmem>>, vector<512x4xf32>,
    %c0_42 = arith.constant 0 : index
    %c1_43 = arith.constant 1 : index
    %c1_44 = arith.constant 1 : index
    %c0_45 = arith.constant 0 : index
    %20 = vector.load %arg8[%c0_42, %c1_43, %c1_44, %c0_45] : memref<2x18x18x4xf32, #tpu.memory_space<vmem>>, vector<2x16x16x4xf32>
    %21 = vector.shape_cast %20 : vector<2x16x16x4xf32> to vector<512x4xf32>
    %c0_46 = arith.constant 0 : index
    %c16 = arith.constant 16 : index
    %22 = vector.load %arg9[%c0_46, %c16] : memref<512x36xf32, #tpu.memory_space<vmem>>, vector<512x4xf32>
    tpu.vector_store %arg9[%c0_46, %c16], %21 {strides = array<i32>} : memref<512x36xf32, #tpu.memory_space<vmem>>, vector<512x4xf32>,
    %c0_47 = arith.constant 0 : index
    %c1_48 = arith.constant 1 : index
    %c2_49 = arith.constant 2 : index
    %c0_50 = arith.constant 0 : index
    %23 = vector.load %arg8[%c0_47, %c1_48, %c2_49, %c0_50] : memref<2x18x18x4xf32, #tpu.memory_space<vmem>>, vector<2x16x16x4xf32>
    %24 = vector.shape_cast %23 : vector<2x16x16x4xf32> to vector<512x4xf32>
    %c0_51 = arith.constant 0 : index
    %c20 = arith.constant 20 : index
    %25 = vector.load %arg9[%c0_51, %c20] : memref<512x36xf32, #tpu.memory_space<vmem>>, vector<512x4xf32>
    tpu.vector_store %arg9[%c0_51, %c20], %24 {strides = array<i32>} : memref<512x36xf32, #tpu.memory_space<vmem>>, vector<512x4xf32>,
    %c0_52 = arith.constant 0 : index
    %c2_53 = arith.constant 2 : index
    %c0_54 = arith.constant 0 : index
    %c0_55 = arith.constant 0 : index
    %26 = vector.load %arg8[%c0_52, %c2_53, %c0_54, %c0_55] : memref<2x18x18x4xf32, #tpu.memory_space<vmem>>, vector<2x16x16x4xf32>
    %27 = vector.shape_cast %26 : vector<2x16x16x4xf32> to vector<512x4xf32>
    %c0_56 = arith.constant 0 : index
    %c24 = arith.constant 24 : index
    %28 = vector.load %arg9[%c0_56, %c24] : memref<512x36xf32, #tpu.memory_space<vmem>>, vector<512x4xf32>
    tpu.vector_store %arg9[%c0_56, %c24], %27 {strides = array<i32>} : memref<512x36xf32, #tpu.memory_space<vmem>>, vector<512x4xf32>,
    %c0_57 = arith.constant 0 : index
    %c2_58 = arith.constant 2 : index
    %c1_59 = arith.constant 1 : index
    %c0_60 = arith.constant 0 : index
    %29 = vector.load %arg8[%c0_57, %c2_58, %c1_59, %c0_60] : memref<2x18x18x4xf32, #tpu.memory_space<vmem>>, vector<2x16x16x4xf32>
    %30 = vector.shape_cast %29 : vector<2x16x16x4xf32> to vector<512x4xf32>
    %c0_61 = arith.constant 0 : index
    %c28 = arith.constant 28 : index
    %31 = vector.load %arg9[%c0_61, %c28] : memref<512x36xf32, #tpu.memory_space<vmem>>, vector<512x4xf32>
    tpu.vector_store %arg9[%c0_61, %c28], %30 {strides = array<i32>} : memref<512x36xf32, #tpu.memory_space<vmem>>, vector<512x4xf32>,
    %c0_62 = arith.constant 0 : index
    %c2_63 = arith.constant 2 : index
    %c2_64 = arith.constant 2 : index
    %c0_65 = arith.constant 0 : index
    %32 = vector.load %arg8[%c0_62, %c2_63, %c2_64, %c0_65] : memref<2x18x18x4xf32, #tpu.memory_space<vmem>>, vector<2x16x16x4xf32>
    %33 = vector.shape_cast %32 : vector<2x16x16x4xf32> to vector<512x4xf32>
    %c0_66 = arith.constant 0 : index
    %c32 = arith.constant 32 : index
    %34 = vector.load %arg9[%c0_66, %c32] : memref<512x36xf32, #tpu.memory_space<vmem>>, vector<512x4xf32>
    tpu.vector_store %arg9[%c0_66, %c32], %33 {strides = array<i32>} : memref<512x36xf32, #tpu.memory_space<vmem>>, vector<512x4xf32>,
    %c0_67 = arith.constant 0 : index
    %c0_68 = arith.constant 0 : index
    %35 = vector.load %arg9[%c0_67, %c0_68] : memref<512x36xf32, #tpu.memory_space<vmem>>, vector<512x36xf32>
    %c0_69 = arith.constant 0 : index
    %c0_70 = arith.constant 0 : index
    %36 = vector.load %arg1[%c0_69, %c0_70] : memref<36x4xf32, #tpu.memory_space<vmem>>, vector<36x4xf32>
    %cst_71 = arith.constant dense<0.000000e+00> : vector<512x4xf32>
    %37 = tpu.matmul %35, %36, %cst_71 {dimension_numbers = #tpu.dot_dimension_numbers<[1], [0], [0], [1], [0, 0, 1, 1], [], []>} : vector<512x36xf32>, vector<36x4xf32>, vector<512x4xf32> -> vector<512x4xf32>
    %c0_72 = arith.constant 0 : index
    %c0_73 = arith.constant 0 : index
    %38 = vector.load %arg3[%c0_72, %c0_73] : memref<1x4xf32, #tpu.memory_space<vmem>>, vector<1x4xf32>
    %c0_74 = arith.constant 0 : index
    %c0_75 = arith.constant 0 : index
    %39 = vector.load %arg4[%c0_74, %c0_75] : memref<1x4xf32, #tpu.memory_space<vmem>>, vector<1x4xf32>
    %cst_76 = arith.constant dense<0.000000e+00> : vector<4xf32>
    %40 = vector.multi_reduction <add>, %37, %cst_76 [0] : vector<512x4xf32> to vector<4xf32>
    %41 = vector.shape_cast %40 : vector<4xf32> to vector<1x4xf32>
    %42 = arith.mulf %37, %37 : vector<512x4xf32>
    %cst_77 = arith.constant dense<0.000000e+00> : vector<4xf32>
    %43 = vector.multi_reduction <add>, %42, %cst_77 [0] : vector<512x4xf32> to vector<4xf32>
    %44 = vector.shape_cast %43 : vector<4xf32> to vector<1x4xf32>
    %cst_78 = arith.constant 0.001953125 : f32
    %45 = vector.broadcast %cst_78 : f32 to vector<1x4xf32>
    %46 = arith.mulf %41, %45 : vector<1x4xf32>
    %cst_79 = arith.constant 0.001953125 : f32
    %47 = vector.broadcast %cst_79 : f32 to vector<1x4xf32>
    %48 = arith.mulf %44, %47 : vector<1x4xf32>
    %49 = arith.mulf %46, %46 : vector<1x4xf32>
    %50 = arith.subf %48, %49 : vector<1x4xf32>
    %cst_80 = arith.constant 9.99999974E-6 : f32
    %51 = vector.broadcast %cst_80 : f32 to vector<1x4xf32>
    %52 = arith.addf %50, %51 : vector<1x4xf32>
    %53 = math.rsqrt %52 : vector<1x4xf32>
    %54 = arith.mulf %38, %53 : vector<1x4xf32>
    %55 = arith.mulf %46, %54 : vector<1x4xf32>
    %56 = arith.subf %39, %55 : vector<1x4xf32>
    %57 = vector.broadcast %54 : vector<1x4xf32> to vector<512x4xf32>
    %58 = arith.mulf %37, %57 : vector<512x4xf32>
    %59 = vector.broadcast %56 : vector<1x4xf32> to vector<512x4xf32>
    %60 = arith.addf %58, %59 : vector<512x4xf32>
    %cst_81 = arith.constant 0.000000e+00 : f32
    %61 = vector.broadcast %cst_81 : f32 to vector<512x4xf32>
    %62 = arith.maximumf %60, %61 : vector<512x4xf32>
    %63 = vector.shape_cast %62 : vector<512x4xf32> to vector<2x16x16x4xf32>
    %c0_82 = arith.constant 0 : index
    %c1_83 = arith.constant 1 : index
    %c1_84 = arith.constant 1 : index
    %c0_85 = arith.constant 0 : index
    %64 = vector.load %arg8[%c0_82, %c1_83, %c1_84, %c0_85] : memref<2x18x18x4xf32, #tpu.memory_space<vmem>>, vector<2x16x16x4xf32>
    tpu.vector_store %arg8[%c0_82, %c1_83, %c1_84, %c0_85], %63 {strides = array<i32>} : memref<2x18x18x4xf32, #tpu.memory_space<vmem>>, vector<2x16x16x4xf32>,
    %c0_86 = arith.constant 0 : index
    %c0_87 = arith.constant 0 : index
    %c0_88 = arith.constant 0 : index
    %c0_89 = arith.constant 0 : index
    %65 = vector.load %arg8[%c0_86, %c0_87, %c0_88, %c0_89] : memref<2x18x18x4xf32, #tpu.memory_space<vmem>>, vector<2x16x16x4xf32>
    %66 = vector.shape_cast %65 : vector<2x16x16x4xf32> to vector<512x4xf32>
    %c0_90 = arith.constant 0 : index
    %c0_91 = arith.constant 0 : index
    %67 = vector.load %arg9[%c0_90, %c0_91] : memref<512x36xf32, #tpu.memory_space<vmem>>, vector<512x4xf32>
    tpu.vector_store %arg9[%c0_90, %c0_91], %66 {strides = array<i32>} : memref<512x36xf32, #tpu.memory_space<vmem>>, vector<512x4xf32>,
    %c0_92 = arith.constant 0 : index
    %c0_93 = arith.constant 0 : index
    %c1_94 = arith.constant 1 : index
    %c0_95 = arith.constant 0 : index
    %68 = vector.load %arg8[%c0_92, %c0_93, %c1_94, %c0_95] : memref<2x18x18x4xf32, #tpu.memory_space<vmem>>, vector<2x16x16x4xf32>
    %69 = vector.shape_cast %68 : vector<2x16x16x4xf32> to vector<512x4xf32>
    %c0_96 = arith.constant 0 : index
    %c4_97 = arith.constant 4 : index
    %70 = vector.load %arg9[%c0_96, %c4_97] : memref<512x36xf32, #tpu.memory_space<vmem>>, vector<512x4xf32>
    tpu.vector_store %arg9[%c0_96, %c4_97], %69 {strides = array<i32>} : memref<512x36xf32, #tpu.memory_space<vmem>>, vector<512x4xf32>,
    %c0_98 = arith.constant 0 : index
    %c0_99 = arith.constant 0 : index
    %c2_100 = arith.constant 2 : index
    %c0_101 = arith.constant 0 : index
    %71 = vector.load %arg8[%c0_98, %c0_99, %c2_100, %c0_101] : memref<2x18x18x4xf32, #tpu.memory_space<vmem>>, vector<2x16x16x4xf32>
    %72 = vector.shape_cast %71 : vector<2x16x16x4xf32> to vector<512x4xf32>
    %c0_102 = arith.constant 0 : index
    %c8_103 = arith.constant 8 : index
    %73 = vector.load %arg9[%c0_102, %c8_103] : memref<512x36xf32, #tpu.memory_space<vmem>>, vector<512x4xf32>
    tpu.vector_store %arg9[%c0_102, %c8_103], %72 {strides = array<i32>} : memref<512x36xf32, #tpu.memory_space<vmem>>, vector<512x4xf32>,
    %c0_104 = arith.constant 0 : index
    %c1_105 = arith.constant 1 : index
    %c0_106 = arith.constant 0 : index
    %c0_107 = arith.constant 0 : index
    %74 = vector.load %arg8[%c0_104, %c1_105, %c0_106, %c0_107] : memref<2x18x18x4xf32, #tpu.memory_space<vmem>>, vector<2x16x16x4xf32>
    %75 = vector.shape_cast %74 : vector<2x16x16x4xf32> to vector<512x4xf32>
    %c0_108 = arith.constant 0 : index
    %c12_109 = arith.constant 12 : index
    %76 = vector.load %arg9[%c0_108, %c12_109] : memref<512x36xf32, #tpu.memory_space<vmem>>, vector<512x4xf32>
    tpu.vector_store %arg9[%c0_108, %c12_109], %75 {strides = array<i32>} : memref<512x36xf32, #tpu.memory_space<vmem>>, vector<512x4xf32>,
    %c0_110 = arith.constant 0 : index
    %c1_111 = arith.constant 1 : index
    %c1_112 = arith.constant 1 : index
    %c0_113 = arith.constant 0 : index
    %77 = vector.load %arg8[%c0_110, %c1_111, %c1_112, %c0_113] : memref<2x18x18x4xf32, #tpu.memory_space<vmem>>, vector<2x16x16x4xf32>
    %78 = vector.shape_cast %77 : vector<2x16x16x4xf32> to vector<512x4xf32>
    %c0_114 = arith.constant 0 : index
    %c16_115 = arith.constant 16 : index
    %79 = vector.load %arg9[%c0_114, %c16_115] : memref<512x36xf32, #tpu.memory_space<vmem>>, vector<512x4xf32>
    tpu.vector_store %arg9[%c0_114, %c16_115], %78 {strides = array<i32>} : memref<512x36xf32, #tpu.memory_space<vmem>>, vector<512x4xf32>,
    %c0_116 = arith.constant 0 : index
    %c1_117 = arith.constant 1 : index
    %c2_118 = arith.constant 2 : index
    %c0_119 = arith.constant 0 : index
    %80 = vector.load %arg8[%c0_116, %c1_117, %c2_118, %c0_119] : memref<2x18x18x4xf32, #tpu.memory_space<vmem>>, vector<2x16x16x4xf32>
    %81 = vector.shape_cast %80 : vector<2x16x16x4xf32> to vector<512x4xf32>
    %c0_120 = arith.constant 0 : index
    %c20_121 = arith.constant 20 : index
    %82 = vector.load %arg9[%c0_120, %c20_121] : memref<512x36xf32, #tpu.memory_space<vmem>>, vector<512x4xf32>
    tpu.vector_store %arg9[%c0_120, %c20_121], %81 {strides = array<i32>} : memref<512x36xf32, #tpu.memory_space<vmem>>, vector<512x4xf32>,
    %c0_122 = arith.constant 0 : index
    %c2_123 = arith.constant 2 : index
    %c0_124 = arith.constant 0 : index
    %c0_125 = arith.constant 0 : index
    %83 = vector.load %arg8[%c0_122, %c2_123, %c0_124, %c0_125] : memref<2x18x18x4xf32, #tpu.memory_space<vmem>>, vector<2x16x16x4xf32>
    %84 = vector.shape_cast %83 : vector<2x16x16x4xf32> to vector<512x4xf32>
    %c0_126 = arith.constant 0 : index
    %c24_127 = arith.constant 24 : index
    %85 = vector.load %arg9[%c0_126, %c24_127] : memref<512x36xf32, #tpu.memory_space<vmem>>, vector<512x4xf32>
    tpu.vector_store %arg9[%c0_126, %c24_127], %84 {strides = array<i32>} : memref<512x36xf32, #tpu.memory_space<vmem>>, vector<512x4xf32>,
    %c0_128 = arith.constant 0 : index
    %c2_129 = arith.constant 2 : index
    %c1_130 = arith.constant 1 : index
    %c0_131 = arith.constant 0 : index
    %86 = vector.load %arg8[%c0_128, %c2_129, %c1_130, %c0_131] : memref<2x18x18x4xf32, #tpu.memory_space<vmem>>, vector<2x16x16x4xf32>
    %87 = vector.shape_cast %86 : vector<2x16x16x4xf32> to vector<512x4xf32>
    %c0_132 = arith.constant 0 : index
    %c28_133 = arith.constant 28 : index
    %88 = vector.load %arg9[%c0_132, %c28_133] : memref<512x36xf32, #tpu.memory_space<vmem>>, vector<512x4xf32>
    tpu.vector_store %arg9[%c0_132, %c28_133], %87 {strides = array<i32>} : memref<512x36xf32, #tpu.memory_space<vmem>>, vector<512x4xf32>,
    %c0_134 = arith.constant 0 : index
    %c2_135 = arith.constant 2 : index
    %c2_136 = arith.constant 2 : index
    %c0_137 = arith.constant 0 : index
    %89 = vector.load %arg8[%c0_134, %c2_135, %c2_136, %c0_137] : memref<2x18x18x4xf32, #tpu.memory_space<vmem>>, vector<2x16x16x4xf32>
    %90 = vector.shape_cast %89 : vector<2x16x16x4xf32> to vector<512x4xf32>
    %c0_138 = arith.constant 0 : index
    %c32_139 = arith.constant 32 : index
    %91 = vector.load %arg9[%c0_138, %c32_139] : memref<512x36xf32, #tpu.memory_space<vmem>>, vector<512x4xf32>
    tpu.vector_store %arg9[%c0_138, %c32_139], %90 {strides = array<i32>} : memref<512x36xf32, #tpu.memory_space<vmem>>, vector<512x4xf32>,
    %c0_140 = arith.constant 0 : index
    %c0_141 = arith.constant 0 : index
    %92 = vector.load %arg9[%c0_140, %c0_141] : memref<512x36xf32, #tpu.memory_space<vmem>>, vector<512x36xf32>
    %c0_142 = arith.constant 0 : index
    %c0_143 = arith.constant 0 : index
    %93 = vector.load %arg2[%c0_142, %c0_143] : memref<36x4xf32, #tpu.memory_space<vmem>>, vector<36x4xf32>
    %cst_144 = arith.constant dense<0.000000e+00> : vector<512x4xf32>
    %94 = tpu.matmul %92, %93, %cst_144 {dimension_numbers = #tpu.dot_dimension_numbers<[1], [0], [0], [1], [0, 0, 1, 1], [], []>} : vector<512x36xf32>, vector<36x4xf32>, vector<512x4xf32> -> vector<512x4xf32>
    %c0_145 = arith.constant 0 : index
    %c0_146 = arith.constant 0 : index
    %c0_147 = arith.constant 0 : index
    %c0_148 = arith.constant 0 : index
    %95 = vector.load %arg0[%c0_145, %c0_146, %c0_147, %c0_148] : memref<2x16x16x4xf32, #tpu.memory_space<vmem>>, vector<2x16x16x4xf32>
    %96 = vector.shape_cast %95 : vector<2x16x16x4xf32> to vector<512x4xf32>
    %c0_149 = arith.constant 0 : index
    %c0_150 = arith.constant 0 : index
    %97 = vector.load %arg5[%c0_149, %c0_150] : memref<1x4xf32, #tpu.memory_space<vmem>>, vector<1x4xf32>
    %c0_151 = arith.constant 0 : index
    %c0_152 = arith.constant 0 : index
    %98 = vector.load %arg6[%c0_151, %c0_152] : memref<1x4xf32, #tpu.memory_space<vmem>>, vector<1x4xf32>
    %cst_153 = arith.constant dense<0.000000e+00> : vector<4xf32>
    %99 = vector.multi_reduction <add>, %94, %cst_153 [0] : vector<512x4xf32> to vector<4xf32>
    %100 = vector.shape_cast %99 : vector<4xf32> to vector<1x4xf32>
    %101 = arith.mulf %94, %94 : vector<512x4xf32>
    %cst_154 = arith.constant dense<0.000000e+00> : vector<4xf32>
    %102 = vector.multi_reduction <add>, %101, %cst_154 [0] : vector<512x4xf32> to vector<4xf32>
    %103 = vector.shape_cast %102 : vector<4xf32> to vector<1x4xf32>
    %cst_155 = arith.constant 0.001953125 : f32
    %104 = vector.broadcast %cst_155 : f32 to vector<1x4xf32>
    %105 = arith.mulf %100, %104 : vector<1x4xf32>
    %cst_156 = arith.constant 0.001953125 : f32
    %106 = vector.broadcast %cst_156 : f32 to vector<1x4xf32>
    %107 = arith.mulf %103, %106 : vector<1x4xf32>
    %108 = arith.mulf %105, %105 : vector<1x4xf32>
    %109 = arith.subf %107, %108 : vector<1x4xf32>
    %cst_157 = arith.constant 9.99999974E-6 : f32
    %110 = vector.broadcast %cst_157 : f32 to vector<1x4xf32>
    %111 = arith.addf %109, %110 : vector<1x4xf32>
    %112 = math.rsqrt %111 : vector<1x4xf32>
    %113 = arith.mulf %97, %112 : vector<1x4xf32>
    %114 = arith.mulf %105, %113 : vector<1x4xf32>
    %115 = arith.subf %98, %114 : vector<1x4xf32>
    %116 = vector.broadcast %113 : vector<1x4xf32> to vector<512x4xf32>
    %117 = arith.mulf %94, %116 : vector<512x4xf32>
    %118 = vector.broadcast %115 : vector<1x4xf32> to vector<512x4xf32>
    %119 = arith.addf %117, %118 : vector<512x4xf32>
    %120 = arith.addf %119, %96 : vector<512x4xf32>
    %cst_158 = arith.constant 0.000000e+00 : f32
    %121 = vector.broadcast %cst_158 : f32 to vector<512x4xf32>
    %122 = arith.maximumf %120, %121 : vector<512x4xf32>
    %123 = vector.shape_cast %122 : vector<512x4xf32> to vector<2x16x16x4xf32>
    %c0_159 = arith.constant 0 : index
    %c0_160 = arith.constant 0 : index
    %c0_161 = arith.constant 0 : index
    %c0_162 = arith.constant 0 : index
    %124 = vector.load %arg7[%c0_159, %c0_160, %c0_161, %c0_162] : memref<2x16x16x4xf32, #tpu.memory_space<vmem>>, vector<2x16x16x4xf32>
    tpu.vector_store %arg7[%c0_159, %c0_160, %c0_161, %c0_162], %123 {strides = array<i32>} : memref<2x16x16x4xf32, #tpu.memory_space<vmem>>, vector<2x16x16x4xf32>,
    return
  }
}

</mosaic_0001>

<llo_original>
// kernel: basic_block_forward.1
$region0: #{basic_block_forward.1}
  #allocation0 [shape = 'u32[]', space=smem, size = 0x4, offset = 0x4, fixed_abs, tag = 'smem constant byte address 0x4 - core index']
  #allocation1 [shape = 'u32[144,128]{1,0:T(1,128)}', space=vmem, size = 0x12000, scoped, tag = 'internal scratch']
  #allocation2 [shape = 'f32[2,18,18,4]{3,2,1,0:T(8,128)}', space=vmem, size = 0x6c000, scoped, tag = 'scratch operand']
  #allocation3 [shape = 'f32[512,36]{1,0:T(8,128)}', space=vmem, size = 0x40000, scoped, tag = 'scratch operand']
  %s0 = inlined_call_operand.vmem [shape: f32[2,16,16,4], index: 0, kind: input, shape index: {}]
  %s1 = inlined_call_operand.vmem [shape: f32[36,4], index: 1, kind: input, shape index: {}]
  %s2 = inlined_call_operand.vmem [shape: f32[36,4], index: 2, kind: input, shape index: {}]
  %s3 = inlined_call_operand.vmem [shape: f32[1,4], index: 3, kind: input, shape index: {}]
  %s4 = inlined_call_operand.vmem [shape: f32[1,4], index: 4, kind: input, shape index: {}]
  %s5 = inlined_call_operand.vmem [shape: f32[1,4], index: 5, kind: input, shape index: {}]
  %s6 = inlined_call_operand.vmem [shape: f32[1,4], index: 6, kind: input, shape index: {}]
  %s7 = inlined_call_operand.vmem [shape: f32[2,16,16,4], index: 7, kind: output, shape index: {}]
  %s8 = sld [smem:[#allocation0]]
  $region38: #{basic_block_forward.1} parent=0
    _
  %s10 = ssub.s32 1, %s8
  %s11 = scalar_select 0, %s10, %s8
  // Predicated region
  $region2: #{basic_block_forward.1} parent=0 // pred_check
    _
  $region3: #{basic_block_forward.1} parent=0 // pred_check_branch
    %13 = sbr.rel (0) target = $region5
  $region4: #{basic_block_forward.1} parent=0 // pred_region
    _
  $region5: #{basic_block_forward.1} parent=0 // pred_fallthru
    _
  // Predicated region
  $region6: #{basic_block_forward.1} parent=0 // pred_check
    _
  $region7: #{basic_block_forward.1} parent=0 // pred_check_branch
    %15 = sbr.rel (0) target = $region9
  $region8: #{basic_block_forward.1} parent=0 // pred_region
    _
  $region9: #{basic_block_forward.1} parent=0 // pred_fallthru
    _
  // Predicated region
  $region10: #{basic_block_forward.1} parent=0 // pred_check
    _
  $region11: #{basic_block_forward.1} parent=0 // pred_check_branch
    %17 = sbr.rel (0) target = $region13
  $region12: #{basic_block_forward.1} parent=0 // pred_region
    _
  $region13: #{basic_block_forward.1} parent=0 // pred_fallthru
    _
  // Predicated region
  $region14: #{basic_block_forward.1} parent=0 // pred_check
    _
  $region15: #{basic_block_forward.1} parent=0 // pred_check_branch
    %19 = sbr.rel (0) target = $region17
  $region16: #{basic_block_forward.1} parent=0 // pred_region
    _
  $region17: #{basic_block_forward.1} parent=0 // pred_fallthru
    _
  // Predicated region
  $region18: #{basic_block_forward.1} parent=0 // pred_check
    _
  $region19: #{basic_block_forward.1} parent=0 // pred_check_branch
    %21 = sbr.rel (0) target = $region21
  $region20: #{basic_block_forward.1} parent=0 // pred_region
    _
  $region21: #{basic_block_forward.1} parent=0 // pred_fallthru
    _
  // Predicated region
  $region22: #{basic_block_forward.1} parent=0 // pred_check
    _
  $region23: #{basic_block_forward.1} parent=0 // pred_check_branch
    %23 = sbr.rel (0) target = $region25
  $region24: #{basic_block_forward.1} parent=0 // pred_region
    _
  $region25: #{basic_block_forward.1} parent=0 // pred_fallthru
    _
  // Predicated region
  $region26: #{basic_block_forward.1} parent=0 // pred_check
    _
  $region27: #{basic_block_forward.1} parent=0 // pred_check_branch
    %25 = sbr.rel (0) target = $region29
  $region28: #{basic_block_forward.1} parent=0 // pred_region
    _
  $region29: #{basic_block_forward.1} parent=0 // pred_fallthru
    _
  %vm26 = vcmask 31744
  %27 = vst.msk [vmem:[#allocation2] sm:$0xff] %vm26, 0.0
  %28 = vst.msk [vmem:[#allocation2 + $0x8] sm:$0xff] %vm26, 0.0
  %vm29 = vcmask 25600
  %30 = vst.msk [vmem:[#allocation2 + $0x10] sm:$0x3] %vm29, 0.0
  %31 = vst.msk [vmem:[#allocation2 + $0x1b0] sm:$0xff] %vm26, 0.0
  %32 = vst.msk [vmem:[#allocation2 + $0x1b8] sm:$0xff] %vm26, 0.0
  %33 = vst.msk [vmem:[#allocation2 + $0x1c0] sm:$0x3] %vm29, 0.0
  %s34 = scalar_lea.vmem [#allocation2], 408
  %35 = vst.msk [vmem:[%s34] sm:$0xff] %vm26, 0.0
  %36 = vst.msk [vmem:[%s34 + $0x8] sm:$0xff] %vm26, 0.0
  %37 = vst.msk [vmem:[%s34 + $0x10] sm:$0x3] %vm29, 0.0
  %38 = vst.msk [vmem:[%s34 + $0x1b0] sm:$0xff] %vm26, 0.0
  %39 = vst.msk [vmem:[%s34 + $0x1b8] sm:$0xff] %vm26, 0.0
  %40 = vst.msk [vmem:[%s34 + $0x1c0] sm:$0x3] %vm29, 0.0
  %s41 = scalar_lea.vmem [#allocation2], 24
  %vm42 = vcmask 24576
  %43 = vst.msk [vmem:[%s41] sm:$0x1] %vm42, 0.0
  %44 = vst.msk [vmem:[%s41 + $0x18] sm:$0x1] %vm42, 0.0
  %45 = vst.msk [vmem:[%s41 + $0x30] sm:$0x1] %vm42, 0.0
  %46 = vst.msk [vmem:[%s41 + $0x48] sm:$0x1] %vm42, 0.0
  %47 = vst.msk [vmem:[%s41 + $0x60] sm:$0x1] %vm42, 0.0
  %48 = vst.msk [vmem:[%s41 + $0x78] sm:$0x1] %vm42, 0.0
  %49 = vst.msk [vmem:[%s41 + $0x90] sm:$0x1] %vm42, 0.0
  %50 = vst.msk [vmem:[%s41 + $0xa8] sm:$0x1] %vm42, 0.0
  %51 = vst.msk [vmem:[%s41 + $0xc0] sm:$0x1] %vm42, 0.0
  %52 = vst.msk [vmem:[%s41 + $0xd8] sm:$0x1] %vm42, 0.0
  %53 = vst.msk [vmem:[%s41 + $0xf0] sm:$0x1] %vm42, 0.0
  %54 = vst.msk [vmem:[%s41 + $0x108] sm:$0x1] %vm42, 0.0
  %55 = vst.msk [vmem:[%s41 + $0x120] sm:$0x1] %vm42, 0.0
  %56 = vst.msk [vmem:[%s41 + $0x138] sm:$0x1] %vm42, 0.0
  %57 = vst.msk [vmem:[%s41 + $0x150] sm:$0x1] %vm42, 0.0
  %58 = vst.msk [vmem:[%s41 + $0x168] sm:$0x1] %vm42, 0.0
  %59 = vst.msk [vmem:[%s41 + $0x1b0] sm:$0x1] %vm42, 0.0
  %60 = vst.msk [vmem:[%s41 + $0x1c8] sm:$0x1] %vm42, 0.0
  %61 = vst.msk [vmem:[%s41 + $0x1e0] sm:$0x1] %vm42, 0.0
  %62 = vst.msk [vmem:[%s41 + $0x1f8] sm:$0x1] %vm42, 0.0
  %63 = vst.msk [vmem:[%s41 + $0x210] sm:$0x1] %vm42, 0.0
  %64 = vst.msk [vmem:[%s41 + $0x228] sm:$0x1] %vm42, 0.0
  %65 = vst.msk [vmem:[%s41 + $0x240] sm:$0x1] %vm42, 0.0
  %66 = vst.msk [vmem:[%s41 + $0x258] sm:$0x1] %vm42, 0.0
  %67 = vst.msk [vmem:[%s41 + $0x270] sm:$0x1] %vm42, 0.0
  %68 = vst.msk [vmem:[%s41 + $0x288] sm:$0x1] %vm42, 0.0
  %69 = vst.msk [vmem:[%s41 + $0x2a0] sm:$0x1] %vm42, 0.0
  %70 = vst.msk [vmem:[%s41 + $0x2b8] sm:$0x1] %vm42, 0.0
  %71 = vst.msk [vmem:[%s41 + $0x2d0] sm:$0x1] %vm42, 0.0
  %72 = vst.msk [vmem:[%s41 + $0x2e8] sm:$0x1] %vm42, 0.0
  %73 = vst.msk [vmem:[%s41 + $0x300] sm:$0x1] %vm42, 0.0
  %74 = vst.msk [vmem:[%s41 + $0x318] sm:$0x1] %vm42, 0.0
  %75 = vst.msk [vmem:[%s41 + $0x11] sm:$0x1] %vm42, 0.0
  %76 = vst.msk [vmem:[%s41 + $0x29] sm:$0x1] %vm42, 0.0
  %77 = vst.msk [vmem:[%s41 + $0x41] sm:$0x1] %vm42, 0.0
  %78 = vst.msk [vmem:[%s41 + $0x59] sm:$0x1] %vm42, 0.0
  %79 = vst.msk [vmem:[%s41 + $0x71] sm:$0x1] %vm42, 0.0
  %80 = vst.msk [vmem:[%s41 + $0x89] sm:$0x1] %vm42, 0.0
  %81 = vst.msk [vmem:[%s41 + $0xa1] sm:$0x1] %vm42, 0.0
  %82 = vst.msk [vmem:[%s41 + $0xb9] sm:$0x1] %vm42, 0.0
  %83 = vst.msk [vmem:[%s41 + $0xd1] sm:$0x1] %vm42, 0.0
  %84 = vst.msk [vmem:[%s41 + $0xe9] sm:$0x1] %vm42, 0.0
  %85 = vst.msk [vmem:[%s41 + $0x101] sm:$0x1] %vm42, 0.0
  %86 = vst.msk [vmem:[%s41 + $0x119] sm:$0x1] %vm42, 0.0
  %87 = vst.msk [vmem:[%s41 + $0x131] sm:$0x1] %vm42, 0.0
  %88 = vst.msk [vmem:[%s41 + $0x149] sm:$0x1] %vm42, 0.0
  %89 = vst.msk [vmem:[%s41 + $0x161] sm:$0x1] %vm42, 0.0
  %90 = vst.msk [vmem:[%s41 + $0x179] sm:$0x1] %vm42, 0.0
  %91 = vst.msk [vmem:[%s41 + $0x1c1] sm:$0x1] %vm42, 0.0
  %92 = vst.msk [vmem:[%s41 + $0x1d9] sm:$0x1] %vm42, 0.0
  %93 = vst.msk [vmem:[%s41 + $0x1f1] sm:$0x1] %vm42, 0.0
  %94 = vst.msk [vmem:[%s41 + $0x209] sm:$0x1] %vm42, 0.0
  %95 = vst.msk [vmem:[%s41 + $0x221] sm:$0x1] %vm42, 0.0
  %96 = vst.msk [vmem:[%s41 + $0x239] sm:$0x1] %vm42, 0.0
  %97 = vst.msk [vmem:[%s41 + $0x251] sm:$0x1] %vm42, 0.0
  %98 = vst.msk [vmem:[%s41 + $0x269] sm:$0x1] %vm42, 0.0
  %99 = vst.msk [vmem:[%s41 + $0x281] sm:$0x1] %vm42, 0.0
  %100 = vst.msk [vmem:[%s41 + $0x299] sm:$0x1] %vm42, 0.0
  %101 = vst.msk [vmem:[%s41 + $0x2b1] sm:$0x1] %vm42, 0.0
  %102 = vst.msk [vmem:[%s41 + $0x2c9] sm:$0x1] %vm42, 0.0
  %103 = vst.msk [vmem:[%s41 + $0x2e1] sm:$0x1] %vm42, 0.0
  %104 = vst.msk [vmem:[%s41 + $0x2f9] sm:$0x1] %vm42, 0.0
  %105 = vst.msk [vmem:[%s41 + $0x311] sm:$0x1] %vm42, 0.0
  %106 = vst.msk [vmem:[%s41 + $0x329] sm:$0x1] %vm42, 0.0
  %v107 = vld [vmem:[%s0] sm:$0xff]
  %v108 = vld [vmem:[%s0 + $0x8] sm:$0xff]
  %v109 = vld [vmem:[%s0 + $0x10] sm:$0xff]
  %v110 = vld [vmem:[%s0 + $0x18] sm:$0xff]
  %v111 = vld [vmem:[%s0 + $0x20] sm:$0xff]
  %v112 = vld [vmem:[%s0 + $0x28] sm:$0xff]
  %v113 = vld [vmem:[%s0 + $0x30] sm:$0xff]
  %v114 = vld [vmem:[%s0 + $0x38] sm:$0xff]
  %v115 = vld [vmem:[%s0 + $0x40] sm:$0xff]
  %v116 = vld [vmem:[%s0 + $0x48] sm:$0xff]
  %v117 = vld [vmem:[%s0 + $0x50] sm:$0xff]
  %v118 = vld [vmem:[%s0 + $0x58] sm:$0xff]
  %v119 = vld [vmem:[%s0 + $0x60] sm:$0xff]
  %v120 = vld [vmem:[%s0 + $0x68] sm:$0xff]
  %v121 = vld [vmem:[%s0 + $0x70] sm:$0xff]
  %v122 = vld [vmem:[%s0 + $0x78] sm:$0xff]
  %v123 = vld [vmem:[%s0 + $0x80] sm:$0xff]
  %v124 = vld [vmem:[%s0 + $0x88] sm:$0xff]
  %v125 = vld [vmem:[%s0 + $0x90] sm:$0xff]
  %v126 = vld [vmem:[%s0 + $0x98] sm:$0xff]
  %v127 = vld [vmem:[%s0 + $0xa0] sm:$0xff]
  %v128 = vld [vmem:[%s0 + $0xa8] sm:$0xff]
  %v129 = vld [vmem:[%s0 + $0xb0] sm:$0xff]
  %v130 = vld [vmem:[%s0 + $0xb8] sm:$0xff]
  %v131 = vld [vmem:[%s0 + $0xc0] sm:$0xff]
  %v132 = vld [vmem:[%s0 + $0xc8] sm:$0xff]
  %v133 = vld [vmem:[%s0 + $0xd0] sm:$0xff]
  %v134 = vld [vmem:[%s0 + $0xd8] sm:$0xff]
  %v135 = vld [vmem:[%s0 + $0xe0] sm:$0xff]
  %v136 = vld [vmem:[%s0 + $0xe8] sm:$0xff]
  %v137 = vld [vmem:[%s0 + $0xf0] sm:$0xff]
  %v138 = vld [vmem:[%s0 + $0xf8] sm:$0xff]
  %v139 = vld [vmem:[%s0 + $0x100] sm:$0xff]
  %v140 = vld [vmem:[%s0 + $0x108] sm:$0xff]
  %v141 = vld [vmem:[%s0 + $0x110] sm:$0xff]
  %v142 = vld [vmem:[%s0 + $0x118] sm:$0xff]
  %v143 = vld [vmem:[%s0 + $0x120] sm:$0xff]
  %v144 = vld [vmem:[%s0 + $0x128] sm:$0xff]
  %v145 = vld [vmem:[%s0 + $0x130] sm:$0xff]
  %v146 = vld [vmem:[%s0 + $0x138] sm:$0xff]
  %v147 = vld [vmem:[%s0 + $0x140] sm:$0xff]
  %v148 = vld [vmem:[%s0 + $0x148] sm:$0xff]
  %v149 = vld [vmem:[%s0 + $0x150] sm:$0xff]
  %v150 = vld [vmem:[%s0 + $0x158] sm:$0xff]
  %v151 = vld [vmem:[%s0 + $0x160] sm:$0xff]
  %v152 = vld [vmem:[%s0 + $0x168] sm:$0xff]
  %v153 = vld [vmem:[%s0 + $0x170] sm:$0xff]
  %v154 = vld [vmem:[%s0 + $0x178] sm:$0xff]
  %v155 = vld [vmem:[%s0 + $0x180] sm:$0xff]
  %v156 = vld [vmem:[%s0 + $0x188] sm:$0xff]
  %v157 = vld [vmem:[%s0 + $0x190] sm:$0xff]
  %v158 = vld [vmem:[%s0 + $0x198] sm:$0xff]
  %v159 = vld [vmem:[%s0 + $0x1a0] sm:$0xff]
  %v160 = vld [vmem:[%s0 + $0x1a8] sm:$0xff]
  %v161 = vld [vmem:[%s0 + $0x1b0] sm:$0xff]
  %v162 = vld [vmem:[%s0 + $0x1b8] sm:$0xff]
  %v163 = vld [vmem:[%s0 + $0x1c0] sm:$0xff]
  %v164 = vld [vmem:[%s0 + $0x1c8] sm:$0xff]
  %v165 = vld [vmem:[%s0 + $0x1d0] sm:$0xff]
  %v166 = vld [vmem:[%s0 + $0x1d8] sm:$0xff]
  %v167 = vld [vmem:[%s0 + $0x1e0] sm:$0xff]
  %v168 = vld [vmem:[%s0 + $0x1e8] sm:$0xff]
  %v169 = vld [vmem:[%s0 + $0x1f0] sm:$0xff]
  %v170 = vld [vmem:[%s0 + $0x1f8] sm:$0xff]
  %171 = vst.msk [vmem:[%s41 + $0x1] sm:$0xff] %vm26, %v107
  %172 = vst.msk [vmem:[%s41 + $0x9] sm:$0xff] %vm26, %v108
  %173 = vst.msk [vmem:[%s41 + $0x19] sm:$0xff] %vm26, %v109
  %174 = vst.msk [vmem:[%s41 + $0x21] sm:$0xff] %vm26, %v110
  %175 = vst.msk [vmem:[%s41 + $0x31] sm:$0xff] %vm26, %v111
  %176 = vst.msk [vmem:[%s41 + $0x39] sm:$0xff] %vm26, %v112
  %177 = vst.msk [vmem:[%s41 + $0x49] sm:$0xff] %vm26, %v113
  %178 = vst.msk [vmem:[%s41 + $0x51] sm:$0xff] %vm26, %v114
  %179 = vst.msk [vmem:[%s41 + $0x61] sm:$0xff] %vm26, %v115
  %180 = vst.msk [vmem:[%s41 + $0x69] sm:$0xff] %vm26, %v116
  %181 = vst.msk [vmem:[%s41 + $0x79] sm:$0xff] %vm26, %v117
  %182 = vst.msk [vmem:[%s41 + $0x81] sm:$0xff] %vm26, %v118
  %183 = vst.msk [vmem:[%s41 + $0x91] sm:$0xff] %vm26, %v119
  %184 = vst.msk [vmem:[%s41 + $0x99] sm:$0xff] %vm26, %v120
  %185 = vst.msk [vmem:[%s41 + $0xa9] sm:$0xff] %vm26, %v121
  %186 = vst.msk [vmem:[%s41 + $0xb1] sm:$0xff] %vm26, %v122
  %187 = vst.msk [vmem:[%s41 + $0xc1] sm:$0xff] %vm26, %v123
  %188 = vst.msk [vmem:[%s41 + $0xc9] sm:$0xff] %vm26, %v124
  %189 = vst.msk [vmem:[%s41 + $0xd9] sm:$0xff] %vm26, %v125
  %190 = vst.msk [vmem:[%s41 + $0xe1] sm:$0xff] %vm26, %v126
  %191 = vst.msk [vmem:[%s41 + $0xf1] sm:$0xff] %vm26, %v127
  %192 = vst.msk [vmem:[%s41 + $0xf9] sm:$0xff] %vm26, %v128
  %193 = vst.msk [vmem:[%s41 + $0x109] sm:$0xff] %vm26, %v129
  %194 = vst.msk [vmem:[%s41 + $0x111] sm:$0xff] %vm26, %v130
  %195 = vst.msk [vmem:[%s41 + $0x121] sm:$0xff] %vm26, %v131
  %196 = vst.msk [vmem:[%s41 + $0x129] sm:$0xff] %vm26, %v132
  %197 = vst.msk [vmem:[%s41 + $0x139] sm:$0xff] %vm26, %v133
  %198 = vst.msk [vmem:[%s41 + $0x141] sm:$0xff] %vm26, %v134
  %199 = vst.msk [vmem:[%s41 + $0x151] sm:$0xff] %vm26, %v135
  %200 = vst.msk [vmem:[%s41 + $0x159] sm:$0xff] %vm26, %v136
  %201 = vst.msk [vmem:[%s41 + $0x169] sm:$0xff] %vm26, %v137
  %202 = vst.msk [vmem:[%s41 + $0x171] sm:$0xff] %vm26, %v138
  %203 = vst.msk [vmem:[%s41 + $0x1b1] sm:$0xff] %vm26, %v139
  %204 = vst.msk [vmem:[%s41 + $0x1b9] sm:$0xff] %vm26, %v140
  %205 = vst.msk [vmem:[%s41 + $0x1c9] sm:$0xff] %vm26, %v141
  %206 = vst.msk [vmem:[%s41 + $0x1d1] sm:$0xff] %vm26, %v142
  %207 = vst.msk [vmem:[%s41 + $0x1e1] sm:$0xff] %vm26, %v143
  %208 = vst.msk [vmem:[%s41 + $0x1e9] sm:$0xff] %vm26, %v144
  %209 = vst.msk [vmem:[%s41 + $0x1f9] sm:$0xff] %vm26, %v145
  %210 = vst.msk [vmem:[%s41 + $0x201] sm:$0xff] %vm26, %v146
  %211 = vst.msk [vmem:[%s41 + $0x211] sm:$0xff] %vm26, %v147
  %212 = vst.msk [vmem:[%s41 + $0x219] sm:$0xff] %vm26, %v148
  %213 = vst.msk [vmem:[%s41 + $0x229] sm:$0xff] %vm26, %v149
  %214 = vst.msk [vmem:[%s41 + $0x231] sm:$0xff] %vm26, %v150
  %215 = vst.msk [vmem:[%s41 + $0x241] sm:$0xff] %vm26, %v151
  %216 = vst.msk [vmem:[%s41 + $0x249] sm:$0xff] %vm26, %v152
  %217 = vst.msk [vmem:[%s41 + $0x259] sm:$0xff] %vm26, %v153
  %218 = vst.msk [vmem:[%s41 + $0x261] sm:$0xff] %vm26, %v154
  %219 = vst.msk [vmem:[%s41 + $0x271] sm:$0xff] %vm26, %v155
  %220 = vst.msk [vmem:[%s41 + $0x279] sm:$0xff] %vm26, %v156
  %221 = vst.msk [vmem:[%s41 + $0x289] sm:$0xff] %vm26, %v157
  %222 = vst.msk [vmem:[%s41 + $0x291] sm:$0xff] %vm26, %v158
  %223 = vst.msk [vmem:[%s41 + $0x2a1] sm:$0xff] %vm26, %v159
  %224 = vst.msk [vmem:[%s41 + $0x2a9] sm:$0xff] %vm26, %v160
  %225 = vst.msk [vmem:[%s41 + $0x2b9] sm:$0xff] %vm26, %v161
  %226 = vst.msk [vmem:[%s41 + $0x2c1] sm:$0xff] %vm26, %v162
  %227 = vst.msk [vmem:[%s41 + $0x2d1] sm:$0xff] %vm26, %v163
  %228 = vst.msk [vmem:[%s41 + $0x2d9] sm:$0xff] %vm26, %v164
  %229 = vst.msk [vmem:[%s41 + $0x2e9] sm:$0xff] %vm26, %v165
  %230 = vst.msk [vmem:[%s41 + $0x2f1] sm:$0xff] %vm26, %v166
  %231 = vst.msk [vmem:[%s41 + $0x301] sm:$0xff] %vm26, %v167
  %232 = vst.msk [vmem:[%s41 + $0x309] sm:$0xff] %vm26, %v168
  %233 = vst.msk [vmem:[%s41 + $0x319] sm:$0xff] %vm26, %v169
  %234 = vst.msk [vmem:[%s41 + $0x321] sm:$0xff] %vm26, %v170
  %v235 = vld [vmem:[#allocation2] sm:$0xff]
  %v236 = vld [vmem:[#allocation2 + $0x8] sm:$0xff]
  %v237 = vld [vmem:[#allocation2 + $0x18] sm:$0xff]
  %v238 = vld [vmem:[#allocation2 + $0x20] sm:$0xff]
  %v239 = vld [vmem:[#allocation2 + $0x30] sm:$0xff]
  %v240 = vld [vmem:[#allocation2 + $0x38] sm:$0xff]
  %v241 = vld [vmem:[#allocation2 + $0x48] sm:$0xff]
  %v242 = vld [vmem:[#allocation2 + $0x50] sm:$0xff]
  %v243 = vld [vmem:[#allocation2 + $0x60] sm:$0xff]
  %v244 = vld [vmem:[#allocation2 + $0x68] sm:$0xff]
  %v245 = vld [vmem:[#allocation2 + $0x78] sm:$0xff]
  %v246 = vld [vmem:[#allocation2 + $0x80] sm:$0xff]
  %v247 = vld [vmem:[#allocation2 + $0x90] sm:$0xff]
  %v248 = vld [vmem:[#allocation2 + $0x98] sm:$0xff]
  %v249 = vld [vmem:[#allocation2 + $0xa8] sm:$0xff]
  %v250 = vld [vmem:[#allocation2 + $0xb0] sm:$0xff]
  %v251 = vld [vmem:[#allocation2 + $0xc0] sm:$0xff]
  %v252 = vld [vmem:[#allocation2 + $0xc8] sm:$0xff]
  %v253 = vld [vmem:[#allocation2 + $0xd8] sm:$0xff]
  %v254 = vld [vmem:[#allocation2 + $0xe0] sm:$0xff]
  %v255 = vld [vmem:[#allocation2 + $0xf0] sm:$0xff]
  %v256 = vld [vmem:[#allocation2 + $0xf8] sm:$0xff]
  %v257 = vld [vmem:[#allocation2 + $0x108] sm:$0xff]
  %v258 = vld [vmem:[#allocation2 + $0x110] sm:$0xff]
  %v259 = vld [vmem:[#allocation2 + $0x120] sm:$0xff]
  %v260 = vld [vmem:[#allocation2 + $0x128] sm:$0xff]
  %v261 = vld [vmem:[#allocation2 + $0x138] sm:$0xff]
  %v262 = vld [vmem:[#allocation2 + $0x140] sm:$0xff]
  %v263 = vld [vmem:[#allocation2 + $0x150] sm:$0xff]
  %v264 = vld [vmem:[#allocation2 + $0x158] sm:$0xff]
  %v265 = vld [vmem:[#allocation2 + $0x168] sm:$0xff]
  %v266 = vld [vmem:[#allocation2 + $0x170] sm:$0xff]
  %v267 = vld [vmem:[#allocation2 + $0x1b0] sm:$0xff]
  %v268 = vld [vmem:[#allocation2 + $0x1b8] sm:$0xff]
  %v269 = vld [vmem:[#allocation2 + $0x1c8] sm:$0xff]
  %v270 = vld [vmem:[#allocation2 + $0x1d0] sm:$0xff]
  %v271 = vld [vmem:[#allocation2 + $0x1e0] sm:$0xff]
  %v272 = vld [vmem:[#allocation2 + $0x1e8] sm:$0xff]
  %v273 = vld [vmem:[#allocation2 + $0x1f8] sm:$0xff]
  %v274 = vld [vmem:[#allocation2 + $0x200] sm:$0xff]
  %v275 = vld [vmem:[#allocation2 + $0x210] sm:$0xff]
  %v276 = vld [vmem:[#allocation2 + $0x218] sm:$0xff]
  %v277 = vld [vmem:[#allocation2 + $0x228] sm:$0xff]
  %v278 = vld [vmem:[#allocation2 + $0x230] sm:$0xff]
  %v279 = vld [vmem:[#allocation2 + $0x240] sm:$0xff]
  %v280 = vld [vmem:[#allocation2 + $0x248] sm:$0xff]
  %v281 = vld [vmem:[#allocation2 + $0x258] sm:$0xff]
  %v282 = vld [vmem:[#allocation2 + $0x260] sm:$0xff]
  %v283 = vld [vmem:[#allocation2 + $0x270] sm:$0xff]
  %v284 = vld [vmem:[#allocation2 + $0x278] sm:$0xff]
  %v285 = vld [vmem:[#allocation2 + $0x288] sm:$0xff]
  %v286 = vld [vmem:[#allocation2 + $0x290] sm:$0xff]
  %v287 = vld [vmem:[#allocation2 + $0x2a0] sm:$0xff]
  %v288 = vld [vmem:[#allocation2 + $0x2a8] sm:$0xff]
  %v289 = vld [vmem:[#allocation2 + $0x2b8] sm:$0xff]
  %v290 = vld [vmem:[#allocation2 + $0x2c0] sm:$0xff]
  %v291 = vld [vmem:[#allocation2 + $0x2d0] sm:$0xff]
  %v292 = vld [vmem:[#allocation2 + $0x2d8] sm:$0xff]
  %v293 = vld [vmem:[#allocation2 + $0x2e8] sm:$0xff]
  %v294 = vld [vmem:[#allocation2 + $0x2f0] sm:$0xff]
  %v295 = vld [vmem:[#allocation2 + $0x300] sm:$0xff]
  %v296 = vld [vmem:[#allocation2 + $0x308] sm:$0xff]
  %v297 = vld [vmem:[#allocation2 + $0x318] sm:$0xff]
  %v298 = vld [vmem:[#allocation2 + $0x320] sm:$0xff]
  %299 = vst.msk [vmem:[#allocation3] sm:$0xff] %vm26, %v235
  %300 = vst.msk [vmem:[#allocation3 + $0x8] sm:$0xff] %vm26, %v236
  %301 = vst.msk [vmem:[#allocation3 + $0x10] sm:$0xff] %vm26, %v237
  %302 = vst.msk [vmem:[#allocation3 + $0x18] sm:$0xff] %vm26, %v238
  %303 = vst.msk [vmem:[#allocation3 + $0x20] sm:$0xff] %vm26, %v239
  %304 = vst.msk [vmem:[#allocation3 + $0x28] sm:$0xff] %vm26, %v240
  %305 = vst.msk [vmem:[#allocation3 + $0x30] sm:$0xff] %vm26, %v241
  %306 = vst.msk [vmem:[#allocation3 + $0x38] sm:$0xff] %vm26, %v242
  %307 = vst.msk [vmem:[#allocation3 + $0x40] sm:$0xff] %vm26, %v243
  %308 = vst.msk [vmem:[#allocation3 + $0x48] sm:$0xff] %vm26, %v244
  %309 = vst.msk [vmem:[#allocation3 + $0x50] sm:$0xff] %vm26, %v245
  %310 = vst.msk [vmem:[#allocation3 + $0x58] sm:$0xff] %vm26, %v246
  %311 = vst.msk [vmem:[#allocation3 + $0x60] sm:$0xff] %vm26, %v247
  %312 = vst.msk [vmem:[#allocation3 + $0x68] sm:$0xff] %vm26, %v248
  %313 = vst.msk [vmem:[#allocation3 + $0x70] sm:$0xff] %vm26, %v249
  %314 = vst.msk [vmem:[#allocation3 + $0x78] sm:$0xff] %vm26, %v250
  %315 = vst.msk [vmem:[#allocation3 + $0x80] sm:$0xff] %vm26, %v251
  %316 = vst.msk [vmem:[#allocation3 + $0x88] sm:$0xff] %vm26, %v252
  %317 = vst.msk [vmem:[#allocation3 + $0x90] sm:$0xff] %vm26, %v253
  %318 = vst.msk [vmem:[#allocation3 + $0x98] sm:$0xff] %vm26, %v254
  %319 = vst.msk [vmem:[#allocation3 + $0xa0] sm:$0xff] %vm26, %v255
  %320 = vst.msk [vmem:[#allocation3 + $0xa8] sm:$0xff] %vm26, %v256
  %321 = vst.msk [vmem:[#allocation3 + $0xb0] sm:$0xff] %vm26, %v257
  %322 = vst.msk [vmem:[#allocation3 + $0xb8] sm:$0xff] %vm26, %v258
  %323 = vst.msk [vmem:[#allocation3 + $0xc0] sm:$0xff] %vm26, %v259
  %324 = vst.msk [vmem:[#allocation3 + $0xc8] sm:$0xff] %vm26, %v260
  %325 = vst.msk [vmem:[#allocation3 + $0xd0] sm:$0xff] %vm26, %v261
  %326 = vst.msk [vmem:[#allocation3 + $0xd8] sm:$0xff] %vm26, %v262
  %327 = vst.msk [vmem:[#allocation3 + $0xe0] sm:$0xff] %vm26, %v263
  %328 = vst.msk [vmem:[#allocation3 + $0xe8] sm:$0xff] %vm26, %v264
  %329 = vst.msk [vmem:[#allocation3 + $0xf0] sm:$0xff] %vm26, %v265
  %330 = vst.msk [vmem:[#allocation3 + $0xf8] sm:$0xff] %vm26, %v266
  %331 = vst.msk [vmem:[#allocation3 + $0x100] sm:$0xff] %vm26, %v267
  %332 = vst.msk [vmem:[#allocation3 + $0x108] sm:$0xff] %vm26, %v268
  %333 = vst.msk [vmem:[#allocation3 + $0x110] sm:$0xff] %vm26, %v269
  %334 = vst.msk [vmem:[#allocation3 + $0x118] sm:$0xff] %vm26, %v270
  %335 = vst.msk [vmem:[#allocation3 + $0x120] sm:$0xff] %vm26, %v271
  %336 = vst.msk [vmem:[#allocation3 + $0x128] sm:$0xff] %vm26, %v272
  %337 = vst.msk [vmem:[#allocation3 + $0x130] sm:$0xff] %vm26, %v273
  %338 = vst.msk [vmem:[#allocation3 + $0x138] sm:$0xff] %vm26, %v274
  %339 = vst.msk [vmem:[#allocation3 + $0x140] sm:$0xff] %vm26, %v275
  %340 = vst.msk [vmem:[#allocation3 + $0x148] sm:$0xff] %vm26, %v276
  %341 = vst.msk [vmem:[#allocation3 + $0x150] sm:$0xff] %vm26, %v277
  %342 = vst.msk [vmem:[#allocation3 + $0x158] sm:$0xff] %vm26, %v278
  %343 = vst.msk [vmem:[#allocation3 + $0x160] sm:$0xff] %vm26, %v279
  %344 = vst.msk [vmem:[#allocation3 + $0x168] sm:$0xff] %vm26, %v280
  %345 = vst.msk [vmem:[#allocation3 + $0x170] sm:$0xff] %vm26, %v281
  %346 = vst.msk [vmem:[#allocation3 + $0x178] sm:$0xff] %vm26, %v282
  %347 = vst.msk [vmem:[#allocation3 + $0x180] sm:$0xff] %vm26, %v283
  %348 = vst.msk [vmem:[#allocation3 + $0x188] sm:$0xff] %vm26, %v284
  %349 = vst.msk [vmem:[#allocation3 + $0x190] sm:$0xff] %vm26, %v285
  %350 = vst.msk [vmem:[#allocation3 + $0x198] sm:$0xff] %vm26, %v286
  %351 = vst.msk [vmem:[#allocation3 + $0x1a0] sm:$0xff] %vm26, %v287
  %352 = vst.msk [vmem:[#allocation3 + $0x1a8] sm:$0xff] %vm26, %v288
  %353 = vst.msk [vmem:[#allocation3 + $0x1b0] sm:$0xff] %vm26, %v289
  %354 = vst.msk [vmem:[#allocation3 + $0x1b8] sm:$0xff] %vm26, %v290
  %355 = vst.msk [vmem:[#allocation3 + $0x1c0] sm:$0xff] %vm26, %v291
  %356 = vst.msk [vmem:[#allocation3 + $0x1c8] sm:$0xff] %vm26, %v292
  %357 = vst.msk [vmem:[#allocation3 + $0x1d0] sm:$0xff] %vm26, %v293
  %358 = vst.msk [vmem:[#allocation3 + $0x1d8] sm:$0xff] %vm26, %v294
  %359 = vst.msk [vmem:[#allocation3 + $0x1e0] sm:$0xff] %vm26, %v295
  %360 = vst.msk [vmem:[#allocation3 + $0x1e8] sm:$0xff] %vm26, %v296
  %361 = vst.msk [vmem:[#allocation3 + $0x1f0] sm:$0xff] %vm26, %v297
  %362 = vst.msk [vmem:[#allocation3 + $0x1f8] sm:$0xff] %vm26, %v298
  %v363 = vld [vmem:[#allocation2 + $0x1] sm:$0xff]
  %v364 = vld [vmem:[#allocation2 + $0x9] sm:$0xff]
  %v365 = vld [vmem:[#allocation2 + $0x19] sm:$0xff]
  %v366 = vld [vmem:[#allocation2 + $0x21] sm:$0xff]
  %v367 = vld [vmem:[#allocation2 + $0x31] sm:$0xff]
  %v368 = vld [vmem:[#allocation2 + $0x39] sm:$0xff]
  %v369 = vld [vmem:[#allocation2 + $0x49] sm:$0xff]
  %v370 = vld [vmem:[#allocation2 + $0x51] sm:$0xff]
  %v371 = vld [vmem:[#allocation2 + $0x61] sm:$0xff]
  %v372 = vld [vmem:[#allocation2 + $0x69] sm:$0xff]
  %v373 = vld [vmem:[#allocation2 + $0x79] sm:$0xff]
  %v374 = vld [vmem:[#allocation2 + $0x81] sm:$0xff]
  %v375 = vld [vmem:[#allocation2 + $0x91] sm:$0xff]
  %v376 = vld [vmem:[#allocation2 + $0x99] sm:$0xff]
  %v377 = vld [vmem:[#allocation2 + $0xa9] sm:$0xff]
  %v378 = vld [vmem:[#allocation2 + $0xb1] sm:$0xff]
  %v379 = vld [vmem:[#allocation2 + $0xc1] sm:$0xff]
  %v380 = vld [vmem:[#allocation2 + $0xc9] sm:$0xff]
  %v381 = vld [vmem:[#allocation2 + $0xd9] sm:$0xff]
  %v382 = vld [vmem:[#allocation2 + $0xe1] sm:$0xff]
  %v383 = vld [vmem:[#allocation2 + $0xf1] sm:$0xff]
  %v384 = vld [vmem:[#allocation2 + $0xf9] sm:$0xff]
  %v385 = vld [vmem:[#allocation2 + $0x109] sm:$0xff]
  %v386 = vld [vmem:[#allocation2 + $0x111] sm:$0xff]
  %v387 = vld [vmem:[#allocation2 + $0x121] sm:$0xff]
  %v388 = vld [vmem:[#allocation2 + $0x129] sm:$0xff]
  %v389 = vld [vmem:[#allocation2 + $0x139] sm:$0xff]
  %v390 = vld [vmem:[#allocation2 + $0x141] sm:$0xff]
  %v391 = vld [vmem:[#allocation2 + $0x151] sm:$0xff]
  %v392 = vld [vmem:[#allocation2 + $0x159] sm:$0xff]
  %v393 = vld [vmem:[#allocation2 + $0x169] sm:$0xff]
  %v394 = vld [vmem:[#allocation2 + $0x171] sm:$0xff]
  %v395 = vld [vmem:[#allocation2 + $0x1b1] sm:$0xff]
  %v396 = vld [vmem:[#allocation2 + $0x1b9] sm:$0xff]
  %v397 = vld [vmem:[#allocation2 + $0x1c9] sm:$0xff]
  %v398 = vld [vmem:[#allocation2 + $0x1d1] sm:$0xff]
  %v399 = vld [vmem:[#allocation2 + $0x1e1] sm:$0xff]
  %v400 = vld [vmem:[#allocation2 + $0x1e9] sm:$0xff]
  %v401 = vld [vmem:[#allocation2 + $0x1f9] sm:$0xff]
  %v402 = vld [vmem:[#allocation2 + $0x201] sm:$0xff]
  %v403 = vld [vmem:[#allocation2 + $0x211] sm:$0xff]
  %v404 = vld [vmem:[#allocation2 + $0x219] sm:$0xff]
  %v405 = vld [vmem:[#allocation2 + $0x229] sm:$0xff]
  %v406 = vld [vmem:[#allocation2 + $0x231] sm:$0xff]
  %v407 = vld [vmem:[#allocation2 + $0x241] sm:$0xff]
  %v408 = vld [vmem:[#allocation2 + $0x249] sm:$0xff]
  %v409 = vld [vmem:[#allocation2 + $0x259] sm:$0xff]
  %v410 = vld [vmem:[#allocation2 + $0x261] sm:$0xff]
  %v411 = vld [vmem:[#allocation2 + $0x271] sm:$0xff]
  %v412 = vld [vmem:[#allocation2 + $0x279] sm:$0xff]
  %v413 = vld [vmem:[#allocation2 + $0x289] sm:$0xff]
  %v414 = vld [vmem:[#allocation2 + $0x291] sm:$0xff]
  %v415 = vld [vmem:[#allocation2 + $0x2a1] sm:$0xff]
  %v416 = vld [vmem:[#allocation2 + $0x2a9] sm:$0xff]
  %v417 = vld [vmem:[#allocation2 + $0x2b9] sm:$0xff]
  %v418 = vld [vmem:[#allocation2 + $0x2c1] sm:$0xff]
  %v419 = vld [vmem:[#allocation2 + $0x2d1] sm:$0xff]
  %v420 = vld [vmem:[#allocation2 + $0x2d9] sm:$0xff]
  %v421 = vld [vmem:[#allocation2 + $0x2e9] sm:$0xff]
  %v422 = vld [vmem:[#allocation2 + $0x2f1] sm:$0xff]
  %v423 = vld [vmem:[#allocation2 + $0x301] sm:$0xff]
  %v424 = vld [vmem:[#allocation2 + $0x309] sm:$0xff]
  %v425 = vld [vmem:[#allocation2 + $0x319] sm:$0xff]
  %v426 = vld [vmem:[#allocation2 + $0x321] sm:$0xff]
  %491 = vrot.lane.b32.xlu0 %v363, 4
  %v492 = vpop.permute.xlu0 %491
  %493 = vrot.lane.b32.xlu0 %v364, 4
  %v494 = vpop.permute.xlu0 %493
  %495 = vrot.lane.b32.xlu0 %v365, 4
  %v496 = vpop.permute.xlu0 %495
  %497 = vrot.lane.b32.xlu0 %v366, 4
  %v498 = vpop.permute.xlu0 %497
  %499 = vrot.lane.b32.xlu0 %v367, 4
  %v500 = vpop.permute.xlu0 %499
  %501 = vrot.lane.b32.xlu0 %v368, 4
  %v502 = vpop.permute.xlu0 %501
  %503 = vrot.lane.b32.xlu0 %v369, 4
  %v504 = vpop.permute.xlu0 %503
  %505 = vrot.lane.b32.xlu0 %v370, 4
  %v506 = vpop.permute.xlu0 %505
  %507 = vrot.lane.b32.xlu0 %v371, 4
  %v508 = vpop.permute.xlu0 %507
  %509 = vrot.lane.b32.xlu0 %v372, 4
  %v510 = vpop.permute.xlu0 %509
  %511 = vrot.lane.b32.xlu0 %v373, 4
  %v512 = vpop.permute.xlu0 %511
  %513 = vrot.lane.b32.xlu0 %v374, 4
  %v514 = vpop.permute.xlu0 %513
  %515 = vrot.lane.b32.xlu0 %v375, 4
  %v516 = vpop.permute.xlu0 %515
  %517 = vrot.lane.b32.xlu0 %v376, 4
  %v518 = vpop.permute.xlu0 %517
  %519 = vrot.lane.b32.xlu0 %v377, 4
  %v520 = vpop.permute.xlu0 %519
  %521 = vrot.lane.b32.xlu0 %v378, 4
  %v522 = vpop.permute.xlu0 %521
  %523 = vrot.lane.b32.xlu0 %v379, 4
  %v524 = vpop.permute.xlu0 %523
  %525 = vrot.lane.b32.xlu0 %v380, 4
  %v526 = vpop.permute.xlu0 %525
  %527 = vrot.lane.b32.xlu0 %v381, 4
  %v528 = vpop.permute.xlu0 %527
  %529 = vrot.lane.b32.xlu0 %v382, 4
  %v530 = vpop.permute.xlu0 %529
  %531 = vrot.lane.b32.xlu0 %v383, 4
  %v532 = vpop.permute.xlu0 %531
  %533 = vrot.lane.b32.xlu0 %v384, 4
  %v534 = vpop.permute.xlu0 %533
  %535 = vrot.lane.b32.xlu0 %v385, 4
  %v536 = vpop.permute.xlu0 %535
  %537 = vrot.lane.b32.xlu0 %v386, 4
  %v538 = vpop.permute.xlu0 %537
  %539 = vrot.lane.b32.xlu0 %v387, 4
  %v540 = vpop.permute.xlu0 %539
  %541 = vrot.lane.b32.xlu0 %v388, 4
  %v542 = vpop.permute.xlu0 %541
  %543 = vrot.lane.b32.xlu0 %v389, 4
  %v544 = vpop.permute.xlu0 %543
  %545 = vrot.lane.b32.xlu0 %v390, 4
  %v546 = vpop.permute.xlu0 %545
  %547 = vrot.lane.b32.xlu0 %v391, 4
  %v548 = vpop.permute.xlu0 %547
  %549 = vrot.lane.b32.xlu0 %v392, 4
  %v550 = vpop.permute.xlu0 %549
  %551 = vrot.lane.b32.xlu0 %v393, 4
  %v552 = vpop.permute.xlu0 %551
  %553 = vrot.lane.b32.xlu0 %v394, 4
  %v554 = vpop.permute.xlu0 %553
  %555 = vrot.lane.b32.xlu0 %v395, 4
  %v556 = vpop.permute.xlu0 %555
  %557 = vrot.lane.b32.xlu0 %v396, 4
  %v558 = vpop.permute.xlu0 %557
  %559 = vrot.lane.b32.xlu0 %v397, 4
  %v560 = vpop.permute.xlu0 %559
  %561 = vrot.lane.b32.xlu0 %v398, 4
  %v562 = vpop.permute.xlu0 %561
  %563 = vrot.lane.b32.xlu0 %v399, 4
  %v564 = vpop.permute.xlu0 %563
  %565 = vrot.lane.b32.xlu0 %v400, 4
  %v566 = vpop.permute.xlu0 %565
  %567 = vrot.lane.b32.xlu0 %v401, 4
  %v568 = vpop.permute.xlu0 %567
  %569 = vrot.lane.b32.xlu0 %v402, 4
  %v570 = vpop.permute.xlu0 %569
  %571 = vrot.lane.b32.xlu0 %v403, 4
  %v572 = vpop.permute.xlu0 %571
  %573 = vrot.lane.b32.xlu0 %v404, 4
  %v574 = vpop.permute.xlu0 %573
  %575 = vrot.lane.b32.xlu0 %v405, 4
  %v576 = vpop.permute.xlu0 %575
  %577 = vrot.lane.b32.xlu0 %v406, 4
  %v578 = vpop.permute.xlu0 %577
  %579 = vrot.lane.b32.xlu0 %v407, 4
  %v580 = vpop.permute.xlu0 %579
  %581 = vrot.lane.b32.xlu0 %v408, 4
  %v582 = vpop.permute.xlu0 %581
  %583 = vrot.lane.b32.xlu0 %v409, 4
  %v584 = vpop.permute.xlu0 %583
  %585 = vrot.lane.b32.xlu0 %v410, 4
  %v586 = vpop.permute.xlu0 %585
  %587 = vrot.lane.b32.xlu0 %v411, 4
  %v588 = vpop.permute.xlu0 %587
  %589 = vrot.lane.b32.xlu0 %v412, 4
  %v590 = vpop.permute.xlu0 %589
  %591 = vrot.lane.b32.xlu0 %v413, 4
  %v592 = vpop.permute.xlu0 %591
  %593 = vrot.lane.b32.xlu0 %v414, 4
  %v594 = vpop.permute.xlu0 %593
  %595 = vrot.lane.b32.xlu0 %v415, 4
  %v596 = vpop.permute.xlu0 %595
  %597 = vrot.lane.b32.xlu0 %v416, 4
  %v598 = vpop.permute.xlu0 %597
  %599 = vrot.lane.b32.xlu0 %v417, 4
  %v600 = vpop.permute.xlu0 %599
  %601 = vrot.lane.b32.xlu0 %v418, 4
  %v602 = vpop.permute.xlu0 %601
  %603 = vrot.lane.b32.xlu0 %v419, 4
  %v604 = vpop.permute.xlu0 %603
  %605 = vrot.lane.b32.xlu0 %v420, 4
  %v606 = vpop.permute.xlu0 %605
  %607 = vrot.lane.b32.xlu0 %v421, 4
  %v608 = vpop.permute.xlu0 %607
  %609 = vrot.lane.b32.xlu0 %v422, 4
  %v610 = vpop.permute.xlu0 %609
  %611 = vrot.lane.b32.xlu0 %v423, 4
  %v612 = vpop.permute.xlu0 %611
  %613 = vrot.lane.b32.xlu0 %v424, 4
  %v614 = vpop.permute.xlu0 %613
  %615 = vrot.lane.b32.xlu0 %v425, 4
  %v616 = vpop.permute.xlu0 %615
  %617 = vrot.lane.b32.xlu0 %v426, 4
  %v618 = vpop.permute.xlu0 %617
  %vm683 = vcmask 64544
  %684 = vst.msk [vmem:[#allocation3] sm:$0xff] %vm683, %v492
  %685 = vst.msk [vmem:[#allocation3 + $0x8] sm:$0xff] %vm683, %v494
  %686 = vst.msk [vmem:[#allocation3 + $0x10] sm:$0xff] %vm683, %v496
  %687 = vst.msk [vmem:[#allocation3 + $0x18] sm:$0xff] %vm683, %v498
  %688 = vst.msk [vmem:[#allocation3 + $0x20] sm:$0xff] %vm683, %v500
  %689 = vst.msk [vmem:[#allocation3 + $0x28] sm:$0xff] %vm683, %v502
  %690 = vst.msk [vmem:[#allocation3 + $0x30] sm:$0xff] %vm683, %v504
  %691 = vst.msk [vmem:[#allocation3 + $0x38] sm:$0xff] %vm683, %v506
  %692 = vst.msk [vmem:[#allocation3 + $0x40] sm:$0xff] %vm683, %v508
  %693 = vst.msk [vmem:[#allocation3 + $0x48] sm:$0xff] %vm683, %v510
  %694 = vst.msk [vmem:[#allocation3 + $0x50] sm:$0xff] %vm683, %v512
  %695 = vst.msk [vmem:[#allocation3 + $0x58] sm:$0xff] %vm683, %v514
  %696 = vst.msk [vmem:[#allocation3 + $0x60] sm:$0xff] %vm683, %v516
  %697 = vst.msk [vmem:[#allocation3 + $0x68] sm:$0xff] %vm683, %v518
  %698 = vst.msk [vmem:[#allocation3 + $0x70] sm:$0xff] %vm683, %v520
  %699 = vst.msk [vmem:[#allocation3 + $0x78] sm:$0xff] %vm683, %v522
  %700 = vst.msk [vmem:[#allocation3 + $0x80] sm:$0xff] %vm683, %v524
  %701 = vst.msk [vmem:[#allocation3 + $0x88] sm:$0xff] %vm683, %v526
  %702 = vst.msk [vmem:[#allocation3 + $0x90] sm:$0xff] %vm683, %v528
  %703 = vst.msk [vmem:[#allocation3 + $0x98] sm:$0xff] %vm683, %v530
  %704 = vst.msk [vmem:[#allocation3 + $0xa0] sm:$0xff] %vm683, %v532
  %705 = vst.msk [vmem:[#allocation3 + $0xa8] sm:$0xff] %vm683, %v534
  %706 = vst.msk [vmem:[#allocation3 + $0xb0] sm:$0xff] %vm683, %v536
  %707 = vst.msk [vmem:[#allocation3 + $0xb8] sm:$0xff] %vm683, %v538
  %708 = vst.msk [vmem:[#allocation3 + $0xc0] sm:$0xff] %vm683, %v540
  %709 = vst.msk [vmem:[#allocation3 + $0xc8] sm:$0xff] %vm683, %v542
  %710 = vst.msk [vmem:[#allocation3 + $0xd0] sm:$0xff] %vm683, %v544
  %711 = vst.msk [vmem:[#allocation3 + $0xd8] sm:$0xff] %vm683, %v546
  %712 = vst.msk [vmem:[#allocation3 + $0xe0] sm:$0xff] %vm683, %v548
  %713 = vst.msk [vmem:[#allocation3 + $0xe8] sm:$0xff] %vm683, %v550
  %714 = vst.msk [vmem:[#allocation3 + $0xf0] sm:$0xff] %vm683, %v552
  %715 = vst.msk [vmem:[#allocation3 + $0xf8] sm:$0xff] %vm683, %v554
  %716 = vst.msk [vmem:[#allocation3 + $0x100] sm:$0xff] %vm683, %v556
  %717 = vst.msk [vmem:[#allocation3 + $0x108] sm:$0xff] %vm683, %v558
  %718 = vst.msk [vmem:[#allocation3 + $0x110] sm:$0xff] %vm683, %v560
  %719 = vst.msk [vmem:[#allocation3 + $0x118] sm:$0xff] %vm683, %v562
  %720 = vst.msk [vmem:[#allocation3 + $0x120] sm:$0xff] %vm683, %v564
  %721 = vst.msk [vmem:[#allocation3 + $0x128] sm:$0xff] %vm683, %v566
  %722 = vst.msk [vmem:[#allocation3 + $0x130] sm:$0xff] %vm683, %v568
  %723 = vst.msk [vmem:[#allocation3 + $0x138] sm:$0xff] %vm683, %v570
  %724 = vst.msk [vmem:[#allocation3 + $0x140] sm:$0xff] %vm683, %v572
  %725 = vst.msk [vmem:[#allocation3 + $0x148] sm:$0xff] %vm683, %v574
  %726 = vst.msk [vmem:[#allocation3 + $0x150] sm:$0xff] %vm683, %v576
  %727 = vst.msk [vmem:[#allocation3 + $0x158] sm:$0xff] %vm683, %v578
  %728 = vst.msk [vmem:[#allocation3 + $0x160] sm:$0xff] %vm683, %v580
  %729 = vst.msk [vmem:[#allocation3 + $0x168] sm:$0xff] %vm683, %v582
  %730 = vst.msk [vmem:[#allocation3 + $0x170] sm:$0xff] %vm683, %v584
  %731 = vst.msk [vmem:[#allocation3 + $0x178] sm:$0xff] %vm683, %v586
  %732 = vst.msk [vmem:[#allocation3 + $0x180] sm:$0xff] %vm683, %v588
  %733 = vst.msk [vmem:[#allocation3 + $0x188] sm:$0xff] %vm683, %v590
  %734 = vst.msk [vmem:[#allocation3 + $0x190] sm:$0xff] %vm683, %v592
  %735 = vst.msk [vmem:[#allocation3 + $0x198] sm:$0xff] %vm683, %v594
  %736 = vst.msk [vmem:[#allocation3 + $0x1a0] sm:$0xff] %vm683, %v596
  %737 = vst.msk [vmem:[#allocation3 + $0x1a8] sm:$0xff] %vm683, %v598
  %738 = vst.msk [vmem:[#allocation3 + $0x1b0] sm:$0xff] %vm683, %v600
  %739 = vst.msk [vmem:[#allocation3 + $0x1b8] sm:$0xff] %vm683, %v602
  %740 = vst.msk [vmem:[#allocation3 + $0x1c0] sm:$0xff] %vm683, %v604
  %741 = vst.msk [vmem:[#allocation3 + $0x1c8] sm:$0xff] %vm683, %v606
  %742 = vst.msk [vmem:[#allocation3 + $0x1d0] sm:$0xff] %vm683, %v608
  %743 = vst.msk [vmem:[#allocation3 + $0x1d8] sm:$0xff] %vm683, %v610
  %744 = vst.msk [vmem:[#allocation3 + $0x1e0] sm:$0xff] %vm683, %v612
  %745 = vst.msk [vmem:[#allocation3 + $0x1e8] sm:$0xff] %vm683, %v614
  %746 = vst.msk [vmem:[#allocation3 + $0x1f0] sm:$0xff] %vm683, %v616
  %747 = vst.msk [vmem:[#allocation3 + $0x1f8] sm:$0xff] %vm683, %v618
  %v748 = vld [vmem:[#allocation2 + $0x2] sm:$0xff]
  %v749 = vld [vmem:[#allocation2 + $0xa] sm:$0xff]
  %v750 = vld [vmem:[#allocation2 + $0x1a] sm:$0xff]
  %v751 = vld [vmem:[#allocation2 + $0x22] sm:$0xff]
  %v752 = vld [vmem:[#allocation2 + $0x32] sm:$0xff]
  %v753 = vld [vmem:[#allocation2 + $0x3a] sm:$0xff]
  %v754 = vld [vmem:[#allocation2 + $0x4a] sm:$0xff]
  %v755 = vld [vmem:[#allocation2 + $0x52] sm:$0xff]
  %v756 = vld [vmem:[#allocation2 + $0x62] sm:$0xff]
  %v757 = vld [vmem:[#allocation2 + $0x6a] sm:$0xff]
  %v758 = vld [vmem:[#allocation2 + $0x7a] sm:$0xff]
  %v759 = vld [vmem:[#allocation2 + $0x82] sm:$0xff]
  %v760 = vld [vmem:[#allocation2 + $0x92] sm:$0xff]
  %v761 = vld [vmem:[#allocation2 + $0x9a] sm:$0xff]
  %v762 = vld [vmem:[#allocation2 + $0xaa] sm:$0xff]
  %v763 = vld [vmem:[#allocation2 + $0xb2] sm:$0xff]
  %v764 = vld [vmem:[#allocation2 + $0xc2] sm:$0xff]
  %v765 = vld [vmem:[#allocation2 + $0xca] sm:$0xff]
  %v766 = vld [vmem:[#allocation2 + $0xda] sm:$0xff]
  %v767 = vld [vmem:[#allocation2 + $0xe2] sm:$0xff]
  %v768 = vld [vmem:[#allocation2 + $0xf2] sm:$0xff]
  %v769 = vld [vmem:[#allocation2 + $0xfa] sm:$0xff]
  %v770 = vld [vmem:[#allocation2 + $0x10a] sm:$0xff]
  %v771 = vld [vmem:[#allocation2 + $0x112] sm:$0xff]
  %v772 = vld [vmem:[#allocation2 + $0x122] sm:$0xff]
  %v773 = vld [vmem:[#allocation2 + $0x12a] sm:$0xff]
  %v774 = vld [vmem:[#allocation2 + $0x13a] sm:$0xff]
  %v775 = vld [vmem:[#allocation2 + $0x142] sm:$0xff]
  %v776 = vld [vmem:[#allocation2 + $0x152] sm:$0xff]
  %v777 = vld [vmem:[#allocation2 + $0x15a] sm:$0xff]
  %v778 = vld [vmem:[#allocation2 + $0x16a] sm:$0xff]
  %v779 = vld [vmem:[#allocation2 + $0x172] sm:$0xff]
  %v780 = vld [vmem:[#allocation2 + $0x1b2] sm:$0xff]
  %v781 = vld [vmem:[#allocation2 + $0x1ba] sm:$0xff]
  %v782 = vld [vmem:[#allocation2 + $0x1ca] sm:$0xff]
  %v783 = vld [vmem:[#allocation2 + $0x1d2] sm:$0xff]
  %v784 = vld [vmem:[#allocation2 + $0x1e2] sm:$0xff]
  %v785 = vld [vmem:[#allocation2 + $0x1ea] sm:$0xff]
  %v786 = vld [vmem:[#allocation2 + $0x1fa] sm:$0xff]
  %v787 = vld [vmem:[#allocation2 + $0x202] sm:$0xff]
  %v788 = vld [vmem:[#allocation2 + $0x212] sm:$0xff]
  %v789 = vld [vmem:[#allocation2 + $0x21a] sm:$0xff]
  %v790 = vld [vmem:[#allocation2 + $0x22a] sm:$0xff]
  %v791 = vld [vmem:[#allocation2 + $0x232] sm:$0xff]
  %v792 = vld [vmem:[#allocation2 + $0x242] sm:$0xff]
  %v793 = vld [vmem:[#allocation2 + $0x24a] sm:$0xff]
  %v794 = vld [vmem:[#allocation2 + $0x25a] sm:$0xff]
  %v795 = vld [vmem:[#allocation2 + $0x262] sm:$0xff]
  %v796 = vld [vmem:[#allocation2 + $0x272] sm:$0xff]
  %v797 = vld [vmem:[#allocation2 + $0x27a] sm:$0xff]
  %v798 = vld [vmem:[#allocation2 + $0x28a] sm:$0xff]
  %v799 = vld [vmem:[#allocation2 + $0x292] sm:$0xff]
  %v800 = vld [vmem:[#allocation2 + $0x2a2] sm:$0xff]
  %v801 = vld [vmem:[#allocation2 + $0x2aa] sm:$0xff]
  %v802 = vld [vmem:[#allocation2 + $0x2ba] sm:$0xff]
  %v803 = vld [vmem:[#allocation2 + $0x2c2] sm:$0xff]
  %v804 = vld [vmem:[#allocation2 + $0x2d2] sm:$0xff]
  %v805 = vld [vmem:[#allocation2 + $0x2da] sm:$0xff]
  %v806 = vld [vmem:[#allocation2 + $0x2ea] sm:$0xff]
  %v807 = vld [vmem:[#allocation2 + $0x2f2] sm:$0xff]
  %v808 = vld [vmem:[#allocation2 + $0x302] sm:$0xff]
  %v809 = vld [vmem:[#allocation2 + $0x30a] sm:$0xff]
  %v810 = vld [vmem:[#allocation2 + $0x31a] sm:$0xff]
  %v811 = vld [vmem:[#allocation2 + $0x322] sm:$0xff]
  %876 = vrot.lane.b32.xlu0 %v748, 8
  %v877 = vpop.permute.xlu0 %876
  %878 = vrot.lane.b32.xlu0 %v749, 8
  %v879 = vpop.permute.xlu0 %878
  %880 = vrot.lane.b32.xlu0 %v750, 8
  %v881 = vpop.permute.xlu0 %880
  %882 = vrot.lane.b32.xlu0 %v751, 8
  %v883 = vpop.permute.xlu0 %882
  %884 = vrot.lane.b32.xlu0 %v752, 8
  %v885 = vpop.permute.xlu0 %884
  %886 = vrot.lane.b32.xlu0 %v753, 8
  %v887 = vpop.permute.xlu0 %886
  %888 = vrot.lane.b32.xlu0 %v754, 8
  %v889 = vpop.permute.xlu0 %888
  %890 = vrot.lane.b32.xlu0 %v755, 8
  %v891 = vpop.permute.xlu0 %890
  %892 = vrot.lane.b32.xlu0 %v756, 8
  %v893 = vpop.permute.xlu0 %892
  %894 = vrot.lane.b32.xlu0 %v757, 8
  %v895 = vpop.permute.xlu0 %894
  %896 = vrot.lane.b32.xlu0 %v758, 8
  %v897 = vpop.permute.xlu0 %896
  %898 = vrot.lane.b32.xlu0 %v759, 8
  %v899 = vpop.permute.xlu0 %898
  %900 = vrot.lane.b32.xlu0 %v760, 8
  %v901 = vpop.permute.xlu0 %900
  %902 = vrot.lane.b32.xlu0 %v761, 8
  %v903 = vpop.permute.xlu0 %902
  %904 = vrot.lane.b32.xlu0 %v762, 8
  %v905 = vpop.permute.xlu0 %904
  %906 = vrot.lane.b32.xlu0 %v763, 8
  %v907 = vpop.permute.xlu0 %906
  %908 = vrot.lane.b32.xlu0 %v764, 8
  %v909 = vpop.permute.xlu0 %908
  %910 = vrot.lane.b32.xlu0 %v765, 8
  %v911 = vpop.permute.xlu0 %910
  %912 = vrot.lane.b32.xlu0 %v766, 8
  %v913 = vpop.permute.xlu0 %912
  %914 = vrot.lane.b32.xlu0 %v767, 8
  %v915 = vpop.permute.xlu0 %914
  %916 = vrot.lane.b32.xlu0 %v768, 8
  %v917 = vpop.permute.xlu0 %916
  %918 = vrot.lane.b32.xlu0 %v769, 8
  %v919 = vpop.permute.xlu0 %918
  %920 = vrot.lane.b32.xlu0 %v770, 8
  %v921 = vpop.permute.xlu0 %920
  %922 = vrot.lane.b32.xlu0 %v771, 8
  %v923 = vpop.permute.xlu0 %922
  %924 = vrot.lane.b32.xlu0 %v772, 8
  %v925 = vpop.permute.xlu0 %924
  %926 = vrot.lane.b32.xlu0 %v773, 8
  %v927 = vpop.permute.xlu0 %926
  %928 = vrot.lane.b32.xlu0 %v774, 8
  %v929 = vpop.permute.xlu0 %928
  %930 = vrot.lane.b32.xlu0 %v775, 8
  %v931 = vpop.permute.xlu0 %930
  %932 = vrot.lane.b32.xlu0 %v776, 8
  %v933 = vpop.permute.xlu0 %932
  %934 = vrot.lane.b32.xlu0 %v777, 8
  %v935 = vpop.permute.xlu0 %934
  %936 = vrot.lane.b32.xlu0 %v778, 8
  %v937 = vpop.permute.xlu0 %936
  %938 = vrot.lane.b32.xlu0 %v779, 8
  %v939 = vpop.permute.xlu0 %938
  %940 = vrot.lane.b32.xlu0 %v780, 8
  %v941 = vpop.permute.xlu0 %940
  %942 = vrot.lane.b32.xlu0 %v781, 8
  %v943 = vpop.permute.xlu0 %942
  %944 = vrot.lane.b32.xlu0 %v782, 8
  %v945 = vpop.permute.xlu0 %944
  %946 = vrot.lane.b32.xlu0 %v783, 8
  %v947 = vpop.permute.xlu0 %946
  %948 = vrot.lane.b32.xlu0 %v784, 8
  %v949 = vpop.permute.xlu0 %948
  %950 = vrot.lane.b32.xlu0 %v785, 8
  %v951 = vpop.permute.xlu0 %950
  %952 = vrot.lane.b32.xlu0 %v786, 8
  %v953 = vpop.permute.xlu0 %952
  %954 = vrot.lane.b32.xlu0 %v787, 8
  %v955 = vpop.permute.xlu0 %954
  %956 = vrot.lane.b32.xlu0 %v788, 8
  %v957 = vpop.permute.xlu0 %956
  %958 = vrot.lane.b32.xlu0 %v789, 8
  %v959 = vpop.permute.xlu0 %958
  %960 = vrot.lane.b32.xlu0 %v790, 8
  %v961 = vpop.permute.xlu0 %960
  %962 = vrot.lane.b32.xlu0 %v791, 8
  %v963 = vpop.permute.xlu0 %962
  %964 = vrot.lane.b32.xlu0 %v792, 8
  %v965 = vpop.permute.xlu0 %964
  %966 = vrot.lane.b32.xlu0 %v793, 8
  %v967 = vpop.permute.xlu0 %966
  %968 = vrot.lane.b32.xlu0 %v794, 8
  %v969 = vpop.permute.xlu0 %968
  %970 = vrot.lane.b32.xlu0 %v795, 8
  %v971 = vpop.permute.xlu0 %970
  %972 = vrot.lane.b32.xlu0 %v796, 8
  %v973 = vpop.permute.xlu0 %972
  %974 = vrot.lane.b32.xlu0 %v797, 8
  %v975 = vpop.permute.xlu0 %974
  %976 = vrot.lane.b32.xlu0 %v798, 8
  %v977 = vpop.permute.xlu0 %976
  %978 = vrot.lane.b32.xlu0 %v799, 8
  %v979 = vpop.permute.xlu0 %978
  %980 = vrot.lane.b32.xlu0 %v800, 8
  %v981 = vpop.permute.xlu0 %980
  %982 = vrot.lane.b32.xlu0 %v801, 8
  %v983 = vpop.permute.xlu0 %982
  %984 = vrot.lane.b32.xlu0 %v802, 8
  %v985 = vpop.permute.xlu0 %984
  %986 = vrot.lane.b32.xlu0 %v803, 8
  %v987 = vpop.permute.xlu0 %986
  %988 = vrot.lane.b32.xlu0 %v804, 8
  %v989 = vpop.permute.xlu0 %988
  %990 = vrot.lane.b32.xlu0 %v805, 8
  %v991 = vpop.permute.xlu0 %990
  %992 = vrot.lane.b32.xlu0 %v806, 8
  %v993 = vpop.permute.xlu0 %992
  %994 = vrot.lane.b32.xlu0 %v807, 8
  %v995 = vpop.permute.xlu0 %994
  %996 = vrot.lane.b32.xlu0 %v808, 8
  %v997 = vpop.permute.xlu0 %996
  %998 = vrot.lane.b32.xlu0 %v809, 8
  %v999 = vpop.permute.xlu0 %998
  %1000 = vrot.lane.b32.xlu0 %v810, 8
  %v1001 = vpop.permute.xlu0 %1000
  %1002 = vrot.lane.b32.xlu0 %v811, 8
  %v1003 = vpop.permute.xlu0 %1002
  %vm1068 = vcmask 97344
  %1069 = vst.msk [vmem:[#allocation3] sm:$0xff] %vm1068, %v877
  %1070 = vst.msk [vmem:[#allocation3 + $0x8] sm:$0xff] %vm1068, %v879
  %1071 = vst.msk [vmem:[#allocation3 + $0x10] sm:$0xff] %vm1068, %v881
  %1072 = vst.msk [vmem:[#allocation3 + $0x18] sm:$0xff] %vm1068, %v883
  %1073 = vst.msk [vmem:[#allocation3 + $0x20] sm:$0xff] %vm1068, %v885
  %1074 = vst.msk [vmem:[#allocation3 + $0x28] sm:$0xff] %vm1068, %v887
  %1075 = vst.msk [vmem:[#allocation3 + $0x30] sm:$0xff] %vm1068, %v889
  %1076 = vst.msk [vmem:[#allocation3 + $0x38] sm:$0xff] %vm1068, %v891
  %1077 = vst.msk [vmem:[#allocation3 + $0x40] sm:$0xff] %vm1068, %v893
  %1078 = vst.msk [vmem:[#allocation3 + $0x48] sm:$0xff] %vm1068, %v895
  %1079 = vst.msk [vmem:[#allocation3 + $0x50] sm:$0xff] %vm1068, %v897
  %1080 = vst.msk [vmem:[#allocation3 + $0x58] sm:$0xff] %vm1068, %v899
  %1081 = vst.msk [vmem:[#allocation3 + $0x60] sm:$0xff] %vm1068, %v901
  %1082 = vst.msk [vmem:[#allocation3 + $0x68] sm:$0xff] %vm1068, %v903
  %1083 = vst.msk [vmem:[#allocation3 + $0x70] sm:$0xff] %vm1068, %v905
  %1084 = vst.msk [vmem:[#allocation3 + $0x78] sm:$0xff] %vm1068, %v907
  %1085 = vst.msk [vmem:[#allocation3 + $0x80] sm:$0xff] %vm1068, %v909
  %1086 = vst.msk [vmem:[#allocation3 + $0x88] sm:$0xff] %vm1068, %v911
  %1087 = vst.msk [vmem:[#allocation3 + $0x90] sm:$0xff] %vm1068, %v913
  %1088 = vst.msk [vmem:[#allocation3 + $0x98] sm:$0xff] %vm1068, %v915
  %1089 = vst.msk [vmem:[#allocation3 + $0xa0] sm:$0xff] %vm1068, %v917
  %1090 = vst.msk [vmem:[#allocation3 + $0xa8] sm:$0xff] %vm1068, %v919
  %1091 = vst.msk [vmem:[#allocation3 + $0xb0] sm:$0xff] %vm1068, %v921
  %1092 = vst.msk [vmem:[#allocation3 + $0xb8] sm:$0xff] %vm1068, %v923
  %1093 = vst.msk [vmem:[#allocation3 + $0xc0] sm:$0xff] %vm1068, %v925
  %1094 = vst.msk [vmem:[#allocation3 + $0xc8] sm:$0xff] %vm1068, %v927
  %1095 = vst.msk [vmem:[#allocation3 + $0xd0] sm:$0xff] %vm1068, %v929
  %1096 = vst.msk [vmem:[#allocation3 + $0xd8] sm:$0xff] %vm1068, %v931
  %1097 = vst.msk [vmem:[#allocation3 + $0xe0] sm:$0xff] %vm1068, %v933
  %1098 = vst.msk [vmem:[#allocation3 + $0xe8] sm:$0xff] %vm1068, %v935
  %1099 = vst.msk [vmem:[#allocation3 + $0xf0] sm:$0xff] %vm1068, %v937
  %1100 = vst.msk [vmem:[#allocation3 + $0xf8] sm:$0xff] %vm1068, %v939
  %1101 = vst.msk [vmem:[#allocation3 + $0x100] sm:$0xff] %vm1068, %v941
  %1102 = vst.msk [vmem:[#allocation3 + $0x108] sm:$0xff] %vm1068, %v943
  %1103 = vst.msk [vmem:[#allocation3 + $0x110] sm:$0xff] %vm1068, %v945
  %1104 = vst.msk [vmem:[#allocation3 + $0x118] sm:$0xff] %vm1068, %v947
  %1105 = vst.msk [vmem:[#allocation3 + $0x120] sm:$0xff] %vm1068, %v949
  %1106 = vst.msk [vmem:[#allocation3 + $0x128] sm:$0xff] %vm1068, %v951
  %1107 = vst.msk [vmem:[#allocation3 + $0x130] sm:$0xff] %vm1068, %v953
  %1108 = vst.msk [vmem:[#allocation3 + $0x138] sm:$0xff] %vm1068, %v955
  %1109 = vst.msk [vmem:[#allocation3 + $0x140] sm:$0xff] %vm1068, %v957
  %1110 = vst.msk [vmem:[#allocation3 + $0x148] sm:$0xff] %vm1068, %v959
  %1111 = vst.msk [vmem:[#allocation3 + $0x150] sm:$0xff] %vm1068, %v961
  %1112 = vst.msk [vmem:[#allocation3 + $0x158] sm:$0xff] %vm1068, %v963
  %1113 = vst.msk [vmem:[#allocation3 + $0x160] sm:$0xff] %vm1068, %v965
  %1114 = vst.msk [vmem:[#allocation3 + $0x168] sm:$0xff] %vm1068, %v967
  %1115 = vst.msk [vmem:[#allocation3 + $0x170] sm:$0xff] %vm1068, %v969
  %1116 = vst.msk [vmem:[#allocation3 + $0x178] sm:$0xff] %vm1068, %v971
  %1117 = vst.msk [vmem:[#allocation3 + $0x180] sm:$0xff] %vm1068, %v973
  %1118 = vst.msk [vmem:[#allocation3 + $0x188] sm:$0xff] %vm1068, %v975
  %1119 = vst.msk [vmem:[#allocation3 + $0x190] sm:$0xff] %vm1068, %v977
  %1120 = vst.msk [vmem:[#allocation3 + $0x198] sm:$0xff] %vm1068, %v979
  %1121 = vst.msk [vmem:[#allocation3 + $0x1a0] sm:$0xff] %vm1068, %v981
  %1122 = vst.msk [vmem:[#allocation3 + $0x1a8] sm:$0xff] %vm1068, %v983
  %1123 = vst.msk [vmem:[#allocation3 + $0x1b0] sm:$0xff] %vm1068, %v985
  %1124 = vst.msk [vmem:[#allocation3 + $0x1b8] sm:$0xff] %vm1068, %v987
  %1125 = vst.msk [vmem:[#allocation3 + $0x1c0] sm:$0xff] %vm1068, %v989
  %1126 = vst.msk [vmem:[#allocation3 + $0x1c8] sm:$0xff] %vm1068, %v991
  %1127 = vst.msk [vmem:[#allocation3 + $0x1d0] sm:$0xff] %vm1068, %v993
  %1128 = vst.msk [vmem:[#allocation3 + $0x1d8] sm:$0xff] %vm1068, %v995
  %1129 = vst.msk [vmem:[#allocation3 + $0x1e0] sm:$0xff] %vm1068, %v997
  %1130 = vst.msk [vmem:[#allocation3 + $0x1e8] sm:$0xff] %vm1068, %v999
  %1131 = vst.msk [vmem:[#allocation3 + $0x1f0] sm:$0xff] %vm1068, %v1001
  %1132 = vst.msk [vmem:[#allocation3 + $0x1f8] sm:$0xff] %vm1068, %v1003
  %v1133 = vld [vmem:[%s41] sm:$0xff]
  %v1134 = vld [vmem:[%s41 + $0x8] sm:$0xff]
  %v1135 = vld [vmem:[%s41 + $0x18] sm:$0xff]
  %v1136 = vld [vmem:[%s41 + $0x20] sm:$0xff]
  %v1137 = vld [vmem:[%s41 + $0x30] sm:$0xff]
  %v1138 = vld [vmem:[%s41 + $0x38] sm:$0xff]
  %v1139 = vld [vmem:[%s41 + $0x48] sm:$0xff]
  %v1140 = vld [vmem:[%s41 + $0x50] sm:$0xff]
  %v1141 = vld [vmem:[%s41 + $0x60] sm:$0xff]
  %v1142 = vld [vmem:[%s41 + $0x68] sm:$0xff]
  %v1143 = vld [vmem:[%s41 + $0x78] sm:$0xff]
  %v1144 = vld [vmem:[%s41 + $0x80] sm:$0xff]
  %v1145 = vld [vmem:[%s41 + $0x90] sm:$0xff]
  %v1146 = vld [vmem:[%s41 + $0x98] sm:$0xff]
  %v1147 = vld [vmem:[%s41 + $0xa8] sm:$0xff]
  %v1148 = vld [vmem:[%s41 + $0xb0] sm:$0xff]
  %v1149 = vld [vmem:[%s41 + $0xc0] sm:$0xff]
  %v1150 = vld [vmem:[%s41 + $0xc8] sm:$0xff]
  %v1151 = vld [vmem:[%s41 + $0xd8] sm:$0xff]
  %v1152 = vld [vmem:[%s41 + $0xe0] sm:$0xff]
  %v1153 = vld [vmem:[%s41 + $0xf0] sm:$0xff]
  %v1154 = vld [vmem:[%s41 + $0xf8] sm:$0xff]
  %v1155 = vld [vmem:[%s41 + $0x108] sm:$0xff]
  %v1156 = vld [vmem:[%s41 + $0x110] sm:$0xff]
  %v1157 = vld [vmem:[%s41 + $0x120] sm:$0xff]
  %v1158 = vld [vmem:[%s41 + $0x128] sm:$0xff]
  %v1159 = vld [vmem:[%s41 + $0x138] sm:$0xff]
  %v1160 = vld [vmem:[%s41 + $0x140] sm:$0xff]
  %v1161 = vld [vmem:[%s41 + $0x150] sm:$0xff]
  %v1162 = vld [vmem:[%s41 + $0x158] sm:$0xff]
  %v1163 = vld [vmem:[%s41 + $0x168] sm:$0xff]
  %v1164 = vld [vmem:[%s41 + $0x170] sm:$0xff]
  %v1165 = vld [vmem:[%s41 + $0x1b0] sm:$0xff]
  %v1166 = vld [vmem:[%s41 + $0x1b8] sm:$0xff]
  %v1167 = vld [vmem:[%s41 + $0x1c8] sm:$0xff]
  %v1168 = vld [vmem:[%s41 + $0x1d0] sm:$0xff]
  %v1169 = vld [vmem:[%s41 + $0x1e0] sm:$0xff]
  %v1170 = vld [vmem:[%s41 + $0x1e8] sm:$0xff]
  %v1171 = vld [vmem:[%s41 + $0x1f8] sm:$0xff]
  %v1172 = vld [vmem:[%s41 + $0x200] sm:$0xff]
  %v1173 = vld [vmem:[%s41 + $0x210] sm:$0xff]
  %v1174 = vld [vmem:[%s41 + $0x218] sm:$0xff]
  %v1175 = vld [vmem:[%s41 + $0x228] sm:$0xff]
  %v1176 = vld [vmem:[%s41 + $0x230] sm:$0xff]
  %v1177 = vld [vmem:[%s41 + $0x240] sm:$0xff]
  %v1178 = vld [vmem:[%s41 + $0x248] sm:$0xff]
  %v1179 = vld [vmem:[%s41 + $0x258] sm:$0xff]
  %v1180 = vld [vmem:[%s41 + $0x260] sm:$0xff]
  %v1181 = vld [vmem:[%s41 + $0x270] sm:$0xff]
  %v1182 = vld [vmem:[%s41 + $0x278] sm:$0xff]
  %v1183 = vld [vmem:[%s41 + $0x288] sm:$0xff]
  %v1184 = vld [vmem:[%s41 + $0x290] sm:$0xff]
  %v1185 = vld [vmem:[%s41 + $0x2a0] sm:$0xff]
  %v1186 = vld [vmem:[%s41 + $0x2a8] sm:$0xff]
  %v1187 = vld [vmem:[%s41 + $0x2b8] sm:$0xff]
  %v1188 = vld [vmem:[%s41 + $0x2c0] sm:$0xff]
  %v1189 = vld [vmem:[%s41 + $0x2d0] sm:$0xff]
  %v1190 = vld [vmem:[%s41 + $0x2d8] sm:$0xff]
  %v1191 = vld [vmem:[%s41 + $0x2e8] sm:$0xff]
  %v1192 = vld [vmem:[%s41 + $0x2f0] sm:$0xff]
  %v1193 = vld [vmem:[%s41 + $0x300] sm:$0xff]
  %v1194 = vld [vmem:[%s41 + $0x308] sm:$0xff]
  %v1195 = vld [vmem:[%s41 + $0x318] sm:$0xff]
  %v1196 = vld [vmem:[%s41 + $0x320] sm:$0xff]
  %1261 = vrot.lane.b32.xlu0 %v1133, 12
  %v1262 = vpop.permute.xlu0 %1261
  %1263 = vrot.lane.b32.xlu0 %v1134, 12
  %v1264 = vpop.permute.xlu0 %1263
  %1265 = vrot.lane.b32.xlu0 %v1135, 12
  %v1266 = vpop.permute.xlu0 %1265
  %1267 = vrot.lane.b32.xlu0 %v1136, 12
  %v1268 = vpop.permute.xlu0 %1267
  %1269 = vrot.lane.b32.xlu0 %v1137, 12
  %v1270 = vpop.permute.xlu0 %1269
  %1271 = vrot.lane.b32.xlu0 %v1138, 12
  %v1272 = vpop.permute.xlu0 %1271
  %1273 = vrot.lane.b32.xlu0 %v1139, 12
  %v1274 = vpop.permute.xlu0 %1273
  %1275 = vrot.lane.b32.xlu0 %v1140, 12
  %v1276 = vpop.permute.xlu0 %1275
  %1277 = vrot.lane.b32.xlu0 %v1141, 12
  %v1278 = vpop.permute.xlu0 %1277
  %1279 = vrot.lane.b32.xlu0 %v1142, 12
  %v1280 = vpop.permute.xlu0 %1279
  %1281 = vrot.lane.b32.xlu0 %v1143, 12
  %v1282 = vpop.permute.xlu0 %1281
  %1283 = vrot.lane.b32.xlu0 %v1144, 12
  %v1284 = vpop.permute.xlu0 %1283
  %1285 = vrot.lane.b32.xlu0 %v1145, 12
  %v1286 = vpop.permute.xlu0 %1285
  %1287 = vrot.lane.b32.xlu0 %v1146, 12
  %v1288 = vpop.permute.xlu0 %1287
  %1289 = vrot.lane.b32.xlu0 %v1147, 12
  %v1290 = vpop.permute.xlu0 %1289
  %1291 = vrot.lane.b32.xlu0 %v1148, 12
  %v1292 = vpop.permute.xlu0 %1291
  %1293 = vrot.lane.b32.xlu0 %v1149, 12
  %v1294 = vpop.permute.xlu0 %1293
  %1295 = vrot.lane.b32.xlu0 %v1150, 12
  %v1296 = vpop.permute.xlu0 %1295
  %1297 = vrot.lane.b32.xlu0 %v1151, 12
  %v1298 = vpop.permute.xlu0 %1297
  %1299 = vrot.lane.b32.xlu0 %v1152, 12
  %v1300 = vpop.permute.xlu0 %1299
  %1301 = vrot.lane.b32.xlu0 %v1153, 12
  %v1302 = vpop.permute.xlu0 %1301
  %1303 = vrot.lane.b32.xlu0 %v1154, 12
  %v1304 = vpop.permute.xlu0 %1303
  %1305 = vrot.lane.b32.xlu0 %v1155, 12
  %v1306 = vpop.permute.xlu0 %1305
  %1307 = vrot.lane.b32.xlu0 %v1156, 12
  %v1308 = vpop.permute.xlu0 %1307
  %1309 = vrot.lane.b32.xlu0 %v1157, 12
  %v1310 = vpop.permute.xlu0 %1309
  %1311 = vrot.lane.b32.xlu0 %v1158, 12
  %v1312 = vpop.permute.xlu0 %1311
  %1313 = vrot.lane.b32.xlu0 %v1159, 12
  %v1314 = vpop.permute.xlu0 %1313
  %1315 = vrot.lane.b32.xlu0 %v1160, 12
  %v1316 = vpop.permute.xlu0 %1315
  %1317 = vrot.lane.b32.xlu0 %v1161, 12
  %v1318 = vpop.permute.xlu0 %1317
  %1319 = vrot.lane.b32.xlu0 %v1162, 12
  %v1320 = vpop.permute.xlu0 %1319
  %1321 = vrot.lane.b32.xlu0 %v1163, 12
  %v1322 = vpop.permute.xlu0 %1321
  %1323 = vrot.lane.b32.xlu0 %v1164, 12
  %v1324 = vpop.permute.xlu0 %1323
  %1325 = vrot.lane.b32.xlu0 %v1165, 12
  %v1326 = vpop.permute.xlu0 %1325
  %1327 = vrot.lane.b32.xlu0 %v1166, 12
  %v1328 = vpop.permute.xlu0 %1327
  %1329 = vrot.lane.b32.xlu0 %v1167, 12
  %v1330 = vpop.permute.xlu0 %1329
  %1331 = vrot.lane.b32.xlu0 %v1168, 12
  %v1332 = vpop.permute.xlu0 %1331
  %1333 = vrot.lane.b32.xlu0 %v1169, 12
  %v1334 = vpop.permute.xlu0 %1333
  %1335 = vrot.lane.b32.xlu0 %v1170, 12
  %v1336 = vpop.permute.xlu0 %1335
  %1337 = vrot.lane.b32.xlu0 %v1171, 12
  %v1338 = vpop.permute.xlu0 %1337
  %1339 = vrot.lane.b32.xlu0 %v1172, 12
  %v1340 = vpop.permute.xlu0 %1339
  %1341 = vrot.lane.b32.xlu0 %v1173, 12
  %v1342 = vpop.permute.xlu0 %1341
  %1343 = vrot.lane.b32.xlu0 %v1174, 12
  %v1344 = vpop.permute.xlu0 %1343
  %1345 = vrot.lane.b32.xlu0 %v1175, 12
  %v1346 = vpop.permute.xlu0 %1345
  %1347 = vrot.lane.b32.xlu0 %v1176, 12
  %v1348 = vpop.permute.xlu0 %1347
  %1349 = vrot.lane.b32.xlu0 %v1177, 12
  %v1350 = vpop.permute.xlu0 %1349
  %1351 = vrot.lane.b32.xlu0 %v1178, 12
  %v1352 = vpop.permute.xlu0 %1351
  %1353 = vrot.lane.b32.xlu0 %v1179, 12
  %v1354 = vpop.permute.xlu0 %1353
  %1355 = vrot.lane.b32.xlu0 %v1180, 12
  %v1356 = vpop.permute.xlu0 %1355
  %1357 = vrot.lane.b32.xlu0 %v1181, 12
  %v1358 = vpop.permute.xlu0 %1357
  %1359 = vrot.lane.b32.xlu0 %v1182, 12
  %v1360 = vpop.permute.xlu0 %1359
  %1361 = vrot.lane.b32.xlu0 %v1183, 12
  %v1362 = vpop.permute.xlu0 %1361
  %1363 = vrot.lane.b32.xlu0 %v1184, 12
  %v1364 = vpop.permute.xlu0 %1363
  %1365 = vrot.lane.b32.xlu0 %v1185, 12
  %v1366 = vpop.permute.xlu0 %1365
  %1367 = vrot.lane.b32.xlu0 %v1186, 12
  %v1368 = vpop.permute.xlu0 %1367
  %1369 = vrot.lane.b32.xlu0 %v1187, 12
  %v1370 = vpop.permute.xlu0 %1369
  %1371 = vrot.lane.b32.xlu0 %v1188, 12
  %v1372 = vpop.permute.xlu0 %1371
  %1373 = vrot.lane.b32.xlu0 %v1189, 12
  %v1374 = vpop.permute.xlu0 %1373
  %1375 = vrot.lane.b32.xlu0 %v1190, 12
  %v1376 = vpop.permute.xlu0 %1375
  %1377 = vrot.lane.b32.xlu0 %v1191, 12
  %v1378 = vpop.permute.xlu0 %1377
  %1379 = vrot.lane.b32.xlu0 %v1192, 12
  %v1380 = vpop.permute.xlu0 %1379
  %1381 = vrot.lane.b32.xlu0 %v1193, 12
  %v1382 = vpop.permute.xlu0 %1381
  %1383 = vrot.lane.b32.xlu0 %v1194, 12
  %v1384 = vpop.permute.xlu0 %1383
  %1385 = vrot.lane.b32.xlu0 %v1195, 12
  %v1386 = vpop.permute.xlu0 %1385
  %1387 = vrot.lane.b32.xlu0 %v1196, 12
  %v1388 = vpop.permute.xlu0 %1387
  %vm1453 = vcmask 130144
  %1454 = vst.msk [vmem:[#allocation3] sm:$0xff] %vm1453, %v1262
  %1455 = vst.msk [vmem:[#allocation3 + $0x8] sm:$0xff] %vm1453, %v1264
  %1456 = vst.msk [vmem:[#allocation3 + $0x10] sm:$0xff] %vm1453, %v1266
  %1457 = vst.msk [vmem:[#allocation3 + $0x18] sm:$0xff] %vm1453, %v1268
  %1458 = vst.msk [vmem:[#allocation3 + $0x20] sm:$0xff] %vm1453, %v1270
  %1459 = vst.msk [vmem:[#allocation3 + $0x28] sm:$0xff] %vm1453, %v1272
  %1460 = vst.msk [vmem:[#allocation3 + $0x30] sm:$0xff] %vm1453, %v1274
  %1461 = vst.msk [vmem:[#allocation3 + $0x38] sm:$0xff] %vm1453, %v1276
  %1462 = vst.msk [vmem:[#allocation3 + $0x40] sm:$0xff] %vm1453, %v1278
  %1463 = vst.msk [vmem:[#allocation3 + $0x48] sm:$0xff] %vm1453, %v1280
  %1464 = vst.msk [vmem:[#allocation3 + $0x50] sm:$0xff] %vm1453, %v1282
  %1465 = vst.msk [vmem:[#allocation3 + $0x58] sm:$0xff] %vm1453, %v1284
  %1466 = vst.msk [vmem:[#allocation3 + $0x60] sm:$0xff] %vm1453, %v1286
  %1467 = vst.msk [vmem:[#allocation3 + $0x68] sm:$0xff] %vm1453, %v1288
  %1468 = vst.msk [vmem:[#allocation3 + $0x70] sm:$0xff] %vm1453, %v1290
  %1469 = vst.msk [vmem:[#allocation3 + $0x78] sm:$0xff] %vm1453, %v1292
  %1470 = vst.msk [vmem:[#allocation3 + $0x80] sm:$0xff] %vm1453, %v1294
  %1471 = vst.msk [vmem:[#allocation3 + $0x88] sm:$0xff] %vm1453, %v1296
  %1472 = vst.msk [vmem:[#allocation3 + $0x90] sm:$0xff] %vm1453, %v1298
  %1473 = vst.msk [vmem:[#allocation3 + $0x98] sm:$0xff] %vm1453, %v1300
  %1474 = vst.msk [vmem:[#allocation3 + $0xa0] sm:$0xff] %vm1453, %v1302
  %1475 = vst.msk [vmem:[#allocation3 + $0xa8] sm:$0xff] %vm1453, %v1304
  %1476 = vst.msk [vmem:[#allocation3 + $0xb0] sm:$0xff] %vm1453, %v1306
  %1477 = vst.msk [vmem:[#allocation3 + $0xb8] sm:$0xff] %vm1453, %v1308
  %1478 = vst.msk [vmem:[#allocation3 + $0xc0] sm:$0xff] %vm1453, %v1310
  %1479 = vst.msk [vmem:[#allocation3 + $0xc8] sm:$0xff] %vm1453, %v1312
  %1480 = vst.msk [vmem:[#allocation3 + $0xd0] sm:$0xff] %vm1453, %v1314
  %1481 = vst.msk [vmem:[#allocation3 + $0xd8] sm:$0xff] %vm1453, %v1316
  %1482 = vst.msk [vmem:[#allocation3 + $0xe0] sm:$0xff] %vm1453, %v1318
  %1483 = vst.msk [vmem:[#allocation3 + $0xe8] sm:$0xff] %vm1453, %v1320
  %1484 = vst.msk [vmem:[#allocation3 + $0xf0] sm:$0xff] %vm1453, %v1322
  %1485 = vst.msk [vmem:[#allocation3 + $0xf8] sm:$0xff] %vm1453, %v1324
  %1486 = vst.msk [vmem:[#allocation3 + $0x100] sm:$0xff] %vm1453, %v1326
  %1487 = vst.msk [vmem:[#allocation3 + $0x108] sm:$0xff] %vm1453, %v1328
  %1488 = vst.msk [vmem:[#allocation3 + $0x110] sm:$0xff] %vm1453, %v1330
  %1489 = vst.msk [vmem:[#allocation3 + $0x118] sm:$0xff] %vm1453, %v1332
  %1490 = vst.msk [vmem:[#allocation3 + $0x120] sm:$0xff] %vm1453, %v1334
  %1491 = vst.msk [vmem:[#allocation3 + $0x128] sm:$0xff] %vm1453, %v1336
  %1492 = vst.msk [vmem:[#allocation3 + $0x130] sm:$0xff] %vm1453, %v1338
  %1493 = vst.msk [vmem:[#allocation3 + $0x138] sm:$0xff] %vm1453, %v1340
  %1494 = vst.msk [vmem:[#allocation3 + $0x140] sm:$0xff] %vm1453, %v1342
  %1495 = vst.msk [vmem:[#allocation3 + $0x148] sm:$0xff] %vm1453, %v1344
  %1496 = vst.msk [vmem:[#allocation3 + $0x150] sm:$0xff] %vm1453, %v1346
  %1497 = vst.msk [vmem:[#allocation3 + $0x158] sm:$0xff] %vm1453, %v1348
  %1498 = vst.msk [vmem:[#allocation3 + $0x160] sm:$0xff] %vm1453, %v1350
  %1499 = vst.msk [vmem:[#allocation3 + $0x168] sm:$0xff] %vm1453, %v1352
  %1500 = vst.msk [vmem:[#allocation3 + $0x170] sm:$0xff] %vm1453, %v1354
  %1501 = vst.msk [vmem:[#allocation3 + $0x178] sm:$0xff] %vm1453, %v1356
  %1502 = vst.msk [vmem:[#allocation3 + $0x180] sm:$0xff] %vm1453, %v1358
  %1503 = vst.msk [vmem:[#allocation3 + $0x188] sm:$0xff] %vm1453, %v1360
  %1504 = vst.msk [vmem:[#allocation3 + $0x190] sm:$0xff] %vm1453, %v1362
  %1505 = vst.msk [vmem:[#allocation3 + $0x198] sm:$0xff] %vm1453, %v1364
  %1506 = vst.msk [vmem:[#allocation3 + $0x1a0] sm:$0xff] %vm1453, %v1366
  %1507 = vst.msk [vmem:[#allocation3 + $0x1a8] sm:$0xff] %vm1453, %v1368
  %1508 = vst.msk [vmem:[#allocation3 + $0x1b0] sm:$0xff] %vm1453, %v1370
  %1509 = vst.msk [vmem:[#allocation3 + $0x1b8] sm:$0xff] %vm1453, %v1372
  %1510 = vst.msk [vmem:[#allocation3 + $0x1c0] sm:$0xff] %vm1453, %v1374
  %1511 = vst.msk [vmem:[#allocation3 + $0x1c8] sm:$0xff] %vm1453, %v1376
  %1512 = vst.msk [vmem:[#allocation3 + $0x1d0] sm:$0xff] %vm1453, %v1378
  %1513 = vst.msk [vmem:[#allocation3 + $0x1d8] sm:$0xff] %vm1453, %v1380
  %1514 = vst.msk [vmem:[#allocation3 + $0x1e0] sm:$0xff] %vm1453, %v1382
  %1515 = vst.msk [vmem:[#allocation3 + $0x1e8] sm:$0xff] %vm1453, %v1384
  %1516 = vst.msk [vmem:[#allocation3 + $0x1f0] sm:$0xff] %vm1453, %v1386
  %1517 = vst.msk [vmem:[#allocation3 + $0x1f8] sm:$0xff] %vm1453, %v1388
  %v1518 = vld [vmem:[%s41 + $0x1] sm:$0xff]
  %v1519 = vld [vmem:[%s41 + $0x9] sm:$0xff]
  %v1520 = vld [vmem:[%s41 + $0x19] sm:$0xff]
  %v1521 = vld [vmem:[%s41 + $0x21] sm:$0xff]
  %v1522 = vld [vmem:[%s41 + $0x31] sm:$0xff]
  %v1523 = vld [vmem:[%s41 + $0x39] sm:$0xff]
  %v1524 = vld [vmem:[%s41 + $0x49] sm:$0xff]
  %v1525 = vld [vmem:[%s41 + $0x51] sm:$0xff]
  %v1526 = vld [vmem:[%s41 + $0x61] sm:$0xff]
  %v1527 = vld [vmem:[%s41 + $0x69] sm:$0xff]
  %v1528 = vld [vmem:[%s41 + $0x79] sm:$0xff]
  %v1529 = vld [vmem:[%s41 + $0x81] sm:$0xff]
  %v1530 = vld [vmem:[%s41 + $0x91] sm:$0xff]
  %v1531 = vld [vmem:[%s41 + $0x99] sm:$0xff]
  %v1532 = vld [vmem:[%s41 + $0xa9] sm:$0xff]
  %v1533 = vld [vmem:[%s41 + $0xb1] sm:$0xff]
  %v1534 = vld [vmem:[%s41 + $0xc1] sm:$0xff]
  %v1535 = vld [vmem:[%s41 + $0xc9] sm:$0xff]
  %v1536 = vld [vmem:[%s41 + $0xd9] sm:$0xff]
  %v1537 = vld [vmem:[%s41 + $0xe1] sm:$0xff]
  %v1538 = vld [vmem:[%s41 + $0xf1] sm:$0xff]
  %v1539 = vld [vmem:[%s41 + $0xf9] sm:$0xff]
  %v1540 = vld [vmem:[%s41 + $0x109] sm:$0xff]
  %v1541 = vld [vmem:[%s41 + $0x111] sm:$0xff]
  %v1542 = vld [vmem:[%s41 + $0x121] sm:$0xff]
  %v1543 = vld [vmem:[%s41 + $0x129] sm:$0xff]
  %v1544 = vld [vmem:[%s41 + $0x139] sm:$0xff]
  %v1545 = vld [vmem:[%s41 + $0x141] sm:$0xff]
  %v1546 = vld [vmem:[%s41 + $0x151] sm:$0xff]
  %v1547 = vld [vmem:[%s41 + $0x159] sm:$0xff]
  %v1548 = vld [vmem:[%s41 + $0x169] sm:$0xff]
  %v1549 = vld [vmem:[%s41 + $0x171] sm:$0xff]
  %v1550 = vld [vmem:[%s41 + $0x1b1] sm:$0xff]
  %v1551 = vld [vmem:[%s41 + $0x1b9] sm:$0xff]
  %v1552 = vld [vmem:[%s41 + $0x1c9] sm:$0xff]
  %v1553 = vld [vmem:[%s41 + $0x1d1] sm:$0xff]
  %v1554 = vld [vmem:[%s41 + $0x1e1] sm:$0xff]
  %v1555 = vld [vmem:[%s41 + $0x1e9] sm:$0xff]
  %v1556 = vld [vmem:[%s41 + $0x1f9] sm:$0xff]
  %v1557 = vld [vmem:[%s41 + $0x201] sm:$0xff]
  %v1558 = vld [vmem:[%s41 + $0x211] sm:$0xff]
  %v1559 = vld [vmem:[%s41 + $0x219] sm:$0xff]
  %v1560 = vld [vmem:[%s41 + $0x229] sm:$0xff]
  %v1561 = vld [vmem:[%s41 + $0x231] sm:$0xff]
  %v1562 = vld [vmem:[%s41 + $0x241] sm:$0xff]
  %v1563 = vld [vmem:[%s41 + $0x249] sm:$0xff]
  %v1564 = vld [vmem:[%s41 + $0x259] sm:$0xff]
  %v1565 = vld [vmem:[%s41 + $0x261] sm:$0xff]
  %v1566 = vld [vmem:[%s41 + $0x271] sm:$0xff]
  %v1567 = vld [vmem:[%s41 + $0x279] sm:$0xff]
  %v1568 = vld [vmem:[%s41 + $0x289] sm:$0xff]
  %v1569 = vld [vmem:[%s41 + $0x291] sm:$0xff]
  %v1570 = vld [vmem:[%s41 + $0x2a1] sm:$0xff]
  %v1571 = vld [vmem:[%s41 + $0x2a9] sm:$0xff]
  %v1572 = vld [vmem:[%s41 + $0x2b9] sm:$0xff]
  %v1573 = vld [vmem:[%s41 + $0x2c1] sm:$0xff]
  %v1574 = vld [vmem:[%s41 + $0x2d1] sm:$0xff]
  %v1575 = vld [vmem:[%s41 + $0x2d9] sm:$0xff]
  %v1576 = vld [vmem:[%s41 + $0x2e9] sm:$0xff]
  %v1577 = vld [vmem:[%s41 + $0x2f1] sm:$0xff]
  %v1578 = vld [vmem:[%s41 + $0x301] sm:$0xff]
  %v1579 = vld [vmem:[%s41 + $0x309] sm:$0xff]
  %v1580 = vld [vmem:[%s41 + $0x319] sm:$0xff]
  %v1581 = vld [vmem:[%s41 + $0x321] sm:$0xff]
  %1646 = vrot.lane.b32.xlu0 %v1518, 16
  %v1647 = vpop.permute.xlu0 %1646
  %1648 = vrot.lane.b32.xlu0 %v1519, 16
  %v1649 = vpop.permute.xlu0 %1648
  %1650 = vrot.lane.b32.xlu0 %v1520, 16
  %v1651 = vpop.permute.xlu0 %1650
  %1652 = vrot.lane.b32.xlu0 %v1521, 16
  %v1653 = vpop.permute.xlu0 %1652
  %1654 = vrot.lane.b32.xlu0 %v1522, 16
  %v1655 = vpop.permute.xlu0 %1654
  %1656 = vrot.lane.b32.xlu0 %v1523, 16
  %v1657 = vpop.permute.xlu0 %1656
  %1658 = vrot.lane.b32.xlu0 %v1524, 16
  %v1659 = vpop.permute.xlu0 %1658
  %1660 = vrot.lane.b32.xlu0 %v1525, 16
  %v1661 = vpop.permute.xlu0 %1660
  %1662 = vrot.lane.b32.xlu0 %v1526, 16
  %v1663 = vpop.permute.xlu0 %1662
  %1664 = vrot.lane.b32.xlu0 %v1527, 16
  %v1665 = vpop.permute.xlu0 %1664
  %1666 = vrot.lane.b32.xlu0 %v1528, 16
  %v1667 = vpop.permute.xlu0 %1666
  %1668 = vrot.lane.b32.xlu0 %v1529, 16
  %v1669 = vpop.permute.xlu0 %1668
  %1670 = vrot.lane.b32.xlu0 %v1530, 16
  %v1671 = vpop.permute.xlu0 %1670
  %1672 = vrot.lane.b32.xlu0 %v1531, 16
  %v1673 = vpop.permute.xlu0 %1672
  %1674 = vrot.lane.b32.xlu0 %v1532, 16
  %v1675 = vpop.permute.xlu0 %1674
  %1676 = vrot.lane.b32.xlu0 %v1533, 16
  %v1677 = vpop.permute.xlu0 %1676
  %1678 = vrot.lane.b32.xlu0 %v1534, 16
  %v1679 = vpop.permute.xlu0 %1678
  %1680 = vrot.lane.b32.xlu0 %v1535, 16
  %v1681 = vpop.permute.xlu0 %1680
  %1682 = vrot.lane.b32.xlu0 %v1536, 16
  %v1683 = vpop.permute.xlu0 %1682
  %1684 = vrot.lane.b32.xlu0 %v1537, 16
  %v1685 = vpop.permute.xlu0 %1684
  %1686 = vrot.lane.b32.xlu0 %v1538, 16
  %v1687 = vpop.permute.xlu0 %1686
  %1688 = vrot.lane.b32.xlu0 %v1539, 16
  %v1689 = vpop.permute.xlu0 %1688
  %1690 = vrot.lane.b32.xlu0 %v1540, 16
  %v1691 = vpop.permute.xlu0 %1690
  %1692 = vrot.lane.b32.xlu0 %v1541, 16
  %v1693 = vpop.permute.xlu0 %1692
  %1694 = vrot.lane.b32.xlu0 %v1542, 16
  %v1695 = vpop.permute.xlu0 %1694
  %1696 = vrot.lane.b32.xlu0 %v1543, 16
  %v1697 = vpop.permute.xlu0 %1696
  %1698 = vrot.lane.b32.xlu0 %v1544, 16
  %v1699 = vpop.permute.xlu0 %1698
  %1700 = vrot.lane.b32.xlu0 %v1545, 16
  %v1701 = vpop.permute.xlu0 %1700
  %1702 = vrot.lane.b32.xlu0 %v1546, 16
  %v1703 = vpop.permute.xlu0 %1702
  %1704 = vrot.lane.b32.xlu0 %v1547, 16
  %v1705 = vpop.permute.xlu0 %1704
  %1706 = vrot.lane.b32.xlu0 %v1548, 16
  %v1707 = vpop.permute.xlu0 %1706
  %1708 = vrot.lane.b32.xlu0 %v1549, 16
  %v1709 = vpop.permute.xlu0 %1708
  %1710 = vrot.lane.b32.xlu0 %v1550, 16
  %v1711 = vpop.permute.xlu0 %1710
  %1712 = vrot.lane.b32.xlu0 %v1551, 16
  %v1713 = vpop.permute.xlu0 %1712
  %1714 = vrot.lane.b32.xlu0 %v1552, 16
  %v1715 = vpop.permute.xlu0 %1714
  %1716 = vrot.lane.b32.xlu0 %v1553, 16
  %v1717 = vpop.permute.xlu0 %1716
  %1718 = vrot.lane.b32.xlu0 %v1554, 16
  %v1719 = vpop.permute.xlu0 %1718
  %1720 = vrot.lane.b32.xlu0 %v1555, 16
  %v1721 = vpop.permute.xlu0 %1720
  %1722 = vrot.lane.b32.xlu0 %v1556, 16
  %v1723 = vpop.permute.xlu0 %1722
  %1724 = vrot.lane.b32.xlu0 %v1557, 16
  %v1725 = vpop.permute.xlu0 %1724
  %1726 = vrot.lane.b32.xlu0 %v1558, 16
  %v1727 = vpop.permute.xlu0 %1726
  %1728 = vrot.lane.b32.xlu0 %v1559, 16
  %v1729 = vpop.permute.xlu0 %1728
  %1730 = vrot.lane.b32.xlu0 %v1560, 16
  %v1731 = vpop.permute.xlu0 %1730
  %1732 = vrot.lane.b32.xlu0 %v1561, 16
  %v1733 = vpop.permute.xlu0 %1732
  %1734 = vrot.lane.b32.xlu0 %v1562, 16
  %v1735 = vpop.permute.xlu0 %1734
  %1736 = vrot.lane.b32.xlu0 %v1563, 16
  %v1737 = vpop.permute.xlu0 %1736
  %1738 = vrot.lane.b32.xlu0 %v1564, 16
  %v1739 = vpop.permute.xlu0 %1738
  %1740 = vrot.lane.b32.xlu0 %v1565, 16
  %v1741 = vpop.permute.xlu0 %1740
  %1742 = vrot.lane.b32.xlu0 %v1566, 16
  %v1743 = vpop.permute.xlu0 %1742
  %1744 = vrot.lane.b32.xlu0 %v1567, 16
  %v1745 = vpop.permute.xlu0 %1744
  %1746 = vrot.lane.b32.xlu0 %v1568, 16
  %v1747 = vpop.permute.xlu0 %1746
  %1748 = vrot.lane.b32.xlu0 %v1569, 16
  %v1749 = vpop.permute.xlu0 %1748
  %1750 = vrot.lane.b32.xlu0 %v1570, 16
  %v1751 = vpop.permute.xlu0 %1750
  %1752 = vrot.lane.b32.xlu0 %v1571, 16
  %v1753 = vpop.permute.xlu0 %1752
  %1754 = vrot.lane.b32.xlu0 %v1572, 16
  %v1755 = vpop.permute.xlu0 %1754
  %1756 = vrot.lane.b32.xlu0 %v1573, 16
  %v1757 = vpop.permute.xlu0 %1756
  %1758 = vrot.lane.b32.xlu0 %v1574, 16
  %v1759 = vpop.permute.xlu0 %1758
  %1760 = vrot.lane.b32.xlu0 %v1575, 16
  %v1761 = vpop.permute.xlu0 %1760
  %1762 = vrot.lane.b32.xlu0 %v1576, 16
  %v1763 = vpop.permute.xlu0 %1762
  %1764 = vrot.lane.b32.xlu0 %v1577, 16
  %v1765 = vpop.permute.xlu0 %1764
  %1766 = vrot.lane.b32.xlu0 %v1578, 16
  %v1767 = vpop.permute.xlu0 %1766
  %1768 = vrot.lane.b32.xlu0 %v1579, 16
  %v1769 = vpop.permute.xlu0 %1768
  %1770 = vrot.lane.b32.xlu0 %v1580, 16
  %v1771 = vpop.permute.xlu0 %1770
  %1772 = vrot.lane.b32.xlu0 %v1581, 16
  %v1773 = vpop.permute.xlu0 %1772
  %vm1838 = vcmask 162944
  %1839 = vst.msk [vmem:[#allocation3] sm:$0xff] %vm1838, %v1647
  %1840 = vst.msk [vmem:[#allocation3 + $0x8] sm:$0xff] %vm1838, %v1649
  %1841 = vst.msk [vmem:[#allocation3 + $0x10] sm:$0xff] %vm1838, %v1651
  %1842 = vst.msk [vmem:[#allocation3 + $0x18] sm:$0xff] %vm1838, %v1653
  %1843 = vst.msk [vmem:[#allocation3 + $0x20] sm:$0xff] %vm1838, %v1655
  %1844 = vst.msk [vmem:[#allocation3 + $0x28] sm:$0xff] %vm1838, %v1657
  %1845 = vst.msk [vmem:[#allocation3 + $0x30] sm:$0xff] %vm1838, %v1659
  %1846 = vst.msk [vmem:[#allocation3 + $0x38] sm:$0xff] %vm1838, %v1661
  %1847 = vst.msk [vmem:[#allocation3 + $0x40] sm:$0xff] %vm1838, %v1663
  %1848 = vst.msk [vmem:[#allocation3 + $0x48] sm:$0xff] %vm1838, %v1665
  %1849 = vst.msk [vmem:[#allocation3 + $0x50] sm:$0xff] %vm1838, %v1667
  %1850 = vst.msk [vmem:[#allocation3 + $0x58] sm:$0xff] %vm1838, %v1669
  %1851 = vst.msk [vmem:[#allocation3 + $0x60] sm:$0xff] %vm1838, %v1671
  %1852 = vst.msk [vmem:[#allocation3 + $0x68] sm:$0xff] %vm1838, %v1673
  %1853 = vst.msk [vmem:[#allocation3 + $0x70] sm:$0xff] %vm1838, %v1675
  %1854 = vst.msk [vmem:[#allocation3 + $0x78] sm:$0xff] %vm1838, %v1677
  %1855 = vst.msk [vmem:[#allocation3 + $0x80] sm:$0xff] %vm1838, %v1679
  %1856 = vst.msk [vmem:[#allocation3 + $0x88] sm:$0xff] %vm1838, %v1681
  %1857 = vst.msk [vmem:[#allocation3 + $0x90] sm:$0xff] %vm1838, %v1683
  %1858 = vst.msk [vmem:[#allocation3 + $0x98] sm:$0xff] %vm1838, %v1685
  %1859 = vst.msk [vmem:[#allocation3 + $0xa0] sm:$0xff] %vm1838, %v1687
  %1860 = vst.msk [vmem:[#allocation3 + $0xa8] sm:$0xff] %vm1838, %v1689
  %1861 = vst.msk [vmem:[#allocation3 + $0xb0] sm:$0xff] %vm1838, %v1691
  %1862 = vst.msk [vmem:[#allocation3 + $0xb8] sm:$0xff] %vm1838, %v1693
  %1863 = vst.msk [vmem:[#allocation3 + $0xc0] sm:$0xff] %vm1838, %v1695
  %1864 = vst.msk [vmem:[#allocation3 + $0xc8] sm:$0xff] %vm1838, %v1697
  %1865 = vst.msk [vmem:[#allocation3 + $0xd0] sm:$0xff] %vm1838, %v1699
  %1866 = vst.msk [vmem:[#allocation3 + $0xd8] sm:$0xff] %vm1838, %v1701
  %1867 = vst.msk [vmem:[#allocation3 + $0xe0] sm:$0xff] %vm1838, %v1703
  %1868 = vst.msk [vmem:[#allocation3 + $0xe8] sm:$0xff] %vm1838, %v1705
  %1869 = vst.msk [vmem:[#allocation3 + $0xf0] sm:$0xff] %vm1838, %v1707
  %1870 = vst.msk [vmem:[#allocation3 + $0xf8] sm:$0xff] %vm1838, %v1709
  %1871 = vst.msk [vmem:[#allocation3 + $0x100] sm:$0xff] %vm1838, %v1711
  %1872 = vst.msk [vmem:[#allocation3 + $0x108] sm:$0xff] %vm1838, %v1713
  %1873 = vst.msk [vmem:[#allocation3 + $0x110] sm:$0xff] %vm1838, %v1715
  %1874 = vst.msk [vmem:[#allocation3 + $0x118] sm:$0xff] %vm1838, %v1717
  %1875 = vst.msk [vmem:[#allocation3 + $0x120] sm:$0xff] %vm1838, %v1719
  %1876 = vst.msk [vmem:[#allocation3 + $0x128] sm:$0xff] %vm1838, %v1721
  %1877 = vst.msk [vmem:[#allocation3 + $0x130] sm:$0xff] %vm1838, %v1723
  %1878 = vst.msk [vmem:[#allocation3 + $0x138] sm:$0xff] %vm1838, %v1725
  %1879 = vst.msk [vmem:[#allocation3 + $0x140] sm:$0xff] %vm1838, %v1727
  %1880 = vst.msk [vmem:[#allocation3 + $0x148] sm:$0xff] %vm1838, %v1729
  %1881 = vst.msk [vmem:[#allocation3 + $0x150] sm:$0xff] %vm1838, %v1731
  %1882 = vst.msk [vmem:[#allocation3 + $0x158] sm:$0xff] %vm1838, %v1733
  %1883 = vst.msk [vmem:[#allocation3 + $0x160] sm:$0xff] %vm1838, %v1735
  %1884 = vst.msk [vmem:[#allocation3 + $0x168] sm:$0xff] %vm1838, %v1737
  %1885 = vst.msk [vmem:[#allocation3 + $0x170] sm:$0xff] %vm1838, %v1739
  %1886 = vst.msk [vmem:[#allocation3 + $0x178] sm:$0xff] %vm1838, %v1741
  %1887 = vst.msk [vmem:[#allocation3 + $0x180] sm:$0xff] %vm1838, %v1743
  %1888 = vst.msk [vmem:[#allocation3 + $0x188] sm:$0xff] %vm1838, %v1745
  %1889 = vst.msk [vmem:[#allocation3 + $0x190] sm:$0xff] %vm1838, %v1747
  %1890 = vst.msk [vmem:[#allocation3 + $0x198] sm:$0xff] %vm1838, %v1749
  %1891 = vst.msk [vmem:[#allocation3 + $0x1a0] sm:$0xff] %vm1838, %v1751
  %1892 = vst.msk [vmem:[#allocation3 + $0x1a8] sm:$0xff] %vm1838, %v1753
  %1893 = vst.msk [vmem:[#allocation3 + $0x1b0] sm:$0xff] %vm1838, %v1755
  %1894 = vst.msk [vmem:[#allocation3 + $0x1b8] sm:$0xff] %vm1838, %v1757
  %1895 = vst.msk [vmem:[#allocation3 + $0x1c0] sm:$0xff] %vm1838, %v1759
  %1896 = vst.msk [vmem:[#allocation3 + $0x1c8] sm:$0xff] %vm1838, %v1761
  %1897 = vst.msk [vmem:[#allocation3 + $0x1d0] sm:$0xff] %vm1838, %v1763
  %1898 = vst.msk [vmem:[#allocation3 + $0x1d8] sm:$0xff] %vm1838, %v1765
  %1899 = vst.msk [vmem:[#allocation3 + $0x1e0] sm:$0xff] %vm1838, %v1767
  %1900 = vst.msk [vmem:[#allocation3 + $0x1e8] sm:$0xff] %vm1838, %v1769
  %1901 = vst.msk [vmem:[#allocation3 + $0x1f0] sm:$0xff] %vm1838, %v1771
  %1902 = vst.msk [vmem:[#allocation3 + $0x1f8] sm:$0xff] %vm1838, %v1773
  %v1903 = vld [vmem:[%s41 + $0x2] sm:$0xff]
  %v1904 = vld [vmem:[%s41 + $0xa] sm:$0xff]
  %v1905 = vld [vmem:[%s41 + $0x1a] sm:$0xff]
  %v1906 = vld [vmem:[%s41 + $0x22] sm:$0xff]
  %v1907 = vld [vmem:[%s41 + $0x32] sm:$0xff]
  %v1908 = vld [vmem:[%s41 + $0x3a] sm:$0xff]
  %v1909 = vld [vmem:[%s41 + $0x4a] sm:$0xff]
  %v1910 = vld [vmem:[%s41 + $0x52] sm:$0xff]
  %v1911 = vld [vmem:[%s41 + $0x62] sm:$0xff]
  %v1912 = vld [vmem:[%s41 + $0x6a] sm:$0xff]
  %v1913 = vld [vmem:[%s41 + $0x7a] sm:$0xff]
  %v1914 = vld [vmem:[%s41 + $0x82] sm:$0xff]
  %v1915 = vld [vmem:[%s41 + $0x92] sm:$0xff]
  %v1916 = vld [vmem:[%s41 + $0x9a] sm:$0xff]
  %v1917 = vld [vmem:[%s41 + $0xaa] sm:$0xff]
  %v1918 = vld [vmem:[%s41 + $0xb2] sm:$0xff]
  %v1919 = vld [vmem:[%s41 + $0xc2] sm:$0xff]
  %v1920 = vld [vmem:[%s41 + $0xca] sm:$0xff]
  %v1921 = vld [vmem:[%s41 + $0xda] sm:$0xff]
  %v1922 = vld [vmem:[%s41 + $0xe2] sm:$0xff]
  %v1923 = vld [vmem:[%s41 + $0xf2] sm:$0xff]
  %v1924 = vld [vmem:[%s41 + $0xfa] sm:$0xff]
  %v1925 = vld [vmem:[%s41 + $0x10a] sm:$0xff]
  %v1926 = vld [vmem:[%s41 + $0x112] sm:$0xff]
  %v1927 = vld [vmem:[%s41 + $0x122] sm:$0xff]
  %v1928 = vld [vmem:[%s41 + $0x12a] sm:$0xff]
  %v1929 = vld [vmem:[%s41 + $0x13a] sm:$0xff]
  %v1930 = vld [vmem:[%s41 + $0x142] sm:$0xff]
  %v1931 = vld [vmem:[%s41 + $0x152] sm:$0xff]
  %v1932 = vld [vmem:[%s41 + $0x15a] sm:$0xff]
  %v1933 = vld [vmem:[%s41 + $0x16a] sm:$0xff]
  %v1934 = vld [vmem:[%s41 + $0x172] sm:$0xff]
  %v1935 = vld [vmem:[%s41 + $0x1b2] sm:$0xff]
  %v1936 = vld [vmem:[%s41 + $0x1ba] sm:$0xff]
  %v1937 = vld [vmem:[%s41 + $0x1ca] sm:$0xff]
  %v1938 = vld [vmem:[%s41 + $0x1d2] sm:$0xff]
  %v1939 = vld [vmem:[%s41 + $0x1e2] sm:$0xff]
  %v1940 = vld [vmem:[%s41 + $0x1ea] sm:$0xff]
  %v1941 = vld [vmem:[%s41 + $0x1fa] sm:$0xff]
  %v1942 = vld [vmem:[%s41 + $0x202] sm:$0xff]
  %v1943 = vld [vmem:[%s41 + $0x212] sm:$0xff]
  %v1944 = vld [vmem:[%s41 + $0x21a] sm:$0xff]
  %v1945 = vld [vmem:[%s41 + $0x22a] sm:$0xff]
  %v1946 = vld [vmem:[%s41 + $0x232] sm:$0xff]
  %v1947 = vld [vmem:[%s41 + $0x242] sm:$0xff]
  %v1948 = vld [vmem:[%s41 + $0x24a] sm:$0xff]
  %v1949 = vld [vmem:[%s41 + $0x25a] sm:$0xff]
  %v1950 = vld [vmem:[%s41 + $0x262] sm:$0xff]
  %v1951 = vld [vmem:[%s41 + $0x272] sm:$0xff]
  %v1952 = vld [vmem:[%s41 + $0x27a] sm:$0xff]
  %v1953 = vld [vmem:[%s41 + $0x28a] sm:$0xff]
  %v1954 = vld [vmem:[%s41 + $0x292] sm:$0xff]
  %v1955 = vld [vmem:[%s41 + $0x2a2] sm:$0xff]
  %v1956 = vld [vmem:[%s41 + $0x2aa] sm:$0xff]
  %v1957 = vld [vmem:[%s41 + $0x2ba] sm:$0xff]
  %v1958 = vld [vmem:[%s41 + $0x2c2] sm:$0xff]
  %v1959 = vld [vmem:[%s41 + $0x2d2] sm:$0xff]
  %v1960 = vld [vmem:[%s41 + $0x2da] sm:$0xff]
  %v1961 = vld [vmem:[%s41 + $0x2ea] sm:$0xff]
  %v1962 = vld [vmem:[%s41 + $0x2f2] sm:$0xff]
  %v1963 = vld [vmem:[%s41 + $0x302] sm:$0xff]
  %v1964 = vld [vmem:[%s41 + $0x30a] sm:$0xff]
  %v1965 = vld [vmem:[%s41 + $0x31a] sm:$0xff]
  %v1966 = vld [vmem:[%s41 + $0x322] sm:$0xff]
  %2031 = vrot.lane.b32.xlu0 %v1903, 20
  %v2032 = vpop.permute.xlu0 %2031
  %2033 = vrot.lane.b32.xlu0 %v1904, 20
  %v2034 = vpop.permute.xlu0 %2033
  %2035 = vrot.lane.b32.xlu0 %v1905, 20
  %v2036 = vpop.permute.xlu0 %2035
  %2037 = vrot.lane.b32.xlu0 %v1906, 20
  %v2038 = vpop.permute.xlu0 %2037
  %2039 = vrot.lane.b32.xlu0 %v1907, 20
  %v2040 = vpop.permute.xlu0 %2039
  %2041 = vrot.lane.b32.xlu0 %v1908, 20
  %v2042 = vpop.permute.xlu0 %2041
  %2043 = vrot.lane.b32.xlu0 %v1909, 20
  %v2044 = vpop.permute.xlu0 %2043
  %2045 = vrot.lane.b32.xlu0 %v1910, 20
  %v2046 = vpop.permute.xlu0 %2045
  %2047 = vrot.lane.b32.xlu0 %v1911, 20
  %v2048 = vpop.permute.xlu0 %2047
  %2049 = vrot.lane.b32.xlu0 %v1912, 20
  %v2050 = vpop.permute.xlu0 %2049
  %2051 = vrot.lane.b32.xlu0 %v1913, 20
  %v2052 = vpop.permute.xlu0 %2051
  %2053 = vrot.lane.b32.xlu0 %v1914, 20
  %v2054 = vpop.permute.xlu0 %2053
  %2055 = vrot.lane.b32.xlu0 %v1915, 20
  %v2056 = vpop.permute.xlu0 %2055
  %2057 = vrot.lane.b32.xlu0 %v1916, 20
  %v2058 = vpop.permute.xlu0 %2057
  %2059 = vrot.lane.b32.xlu0 %v1917, 20
  %v2060 = vpop.permute.xlu0 %2059
  %2061 = vrot.lane.b32.xlu0 %v1918, 20
  %v2062 = vpop.permute.xlu0 %2061
  %2063 = vrot.lane.b32.xlu0 %v1919, 20
  %v2064 = vpop.permute.xlu0 %2063
  %2065 = vrot.lane.b32.xlu0 %v1920, 20
  %v2066 = vpop.permute.xlu0 %2065
  %2067 = vrot.lane.b32.xlu0 %v1921, 20
  %v2068 = vpop.permute.xlu0 %2067
  %2069 = vrot.lane.b32.xlu0 %v1922, 20
  %v2070 = vpop.permute.xlu0 %2069
  %2071 = vrot.lane.b32.xlu0 %v1923, 20
  %v2072 = vpop.permute.xlu0 %2071
  %2073 = vrot.lane.b32.xlu0 %v1924, 20
  %v2074 = vpop.permute.xlu0 %2073
  %2075 = vrot.lane.b32.xlu0 %v1925, 20
  %v2076 = vpop.permute.xlu0 %2075
  %2077 = vrot.lane.b32.xlu0 %v1926, 20
  %v2078 = vpop.permute.xlu0 %2077
  %2079 = vrot.lane.b32.xlu0 %v1927, 20
  %v2080 = vpop.permute.xlu0 %2079
  %2081 = vrot.lane.b32.xlu0 %v1928, 20
  %v2082 = vpop.permute.xlu0 %2081
  %2083 = vrot.lane.b32.xlu0 %v1929, 20
  %v2084 = vpop.permute.xlu0 %2083
  %2085 = vrot.lane.b32.xlu0 %v1930, 20
  %v2086 = vpop.permute.xlu0 %2085
  %2087 = vrot.lane.b32.xlu0 %v1931, 20
  %v2088 = vpop.permute.xlu0 %2087
  %2089 = vrot.lane.b32.xlu0 %v1932, 20
  %v2090 = vpop.permute.xlu0 %2089
  %2091 = vrot.lane.b32.xlu0 %v1933, 20
  %v2092 = vpop.permute.xlu0 %2091
  %2093 = vrot.lane.b32.xlu0 %v1934, 20
  %v2094 = vpop.permute.xlu0 %2093
  %2095 = vrot.lane.b32.xlu0 %v1935, 20
  %v2096 = vpop.permute.xlu0 %2095
  %2097 = vrot.lane.b32.xlu0 %v1936, 20
  %v2098 = vpop.permute.xlu0 %2097
  %2099 = vrot.lane.b32.xlu0 %v1937, 20
  %v2100 = vpop.permute.xlu0 %2099
  %2101 = vrot.lane.b32.xlu0 %v1938, 20
  %v2102 = vpop.permute.xlu0 %2101
  %2103 = vrot.lane.b32.xlu0 %v1939, 20
  %v2104 = vpop.permute.xlu0 %2103
  %2105 = vrot.lane.b32.xlu0 %v1940, 20
  %v2106 = vpop.permute.xlu0 %2105
  %2107 = vrot.lane.b32.xlu0 %v1941, 20
  %v2108 = vpop.permute.xlu0 %2107
  %2109 = vrot.lane.b32.xlu0 %v1942, 20
  %v2110 = vpop.permute.xlu0 %2109
  %2111 = vrot.lane.b32.xlu0 %v1943, 20
  %v2112 = vpop.permute.xlu0 %2111
  %2113 = vrot.lane.b32.xlu0 %v1944, 20
  %v2114 = vpop.permute.xlu0 %2113
  %2115 = vrot.lane.b32.xlu0 %v1945, 20
  %v2116 = vpop.permute.xlu0 %2115
  %2117 = vrot.lane.b32.xlu0 %v1946, 20
  %v2118 = vpop.permute.xlu0 %2117
  %2119 = vrot.lane.b32.xlu0 %v1947, 20
  %v2120 = vpop.permute.xlu0 %2119
  %2121 = vrot.lane.b32.xlu0 %v1948, 20
  %v2122 = vpop.permute.xlu0 %2121
  %2123 = vrot.lane.b32.xlu0 %v1949, 20
  %v2124 = vpop.permute.xlu0 %2123
  %2125 = vrot.lane.b32.xlu0 %v1950, 20
  %v2126 = vpop.permute.xlu0 %2125
  %2127 = vrot.lane.b32.xlu0 %v1951, 20
  %v2128 = vpop.permute.xlu0 %2127
  %2129 = vrot.lane.b32.xlu0 %v1952, 20
  %v2130 = vpop.permute.xlu0 %2129
  %2131 = vrot.lane.b32.xlu0 %v1953, 20
  %v2132 = vpop.permute.xlu0 %2131
  %2133 = vrot.lane.b32.xlu0 %v1954, 20
  %v2134 = vpop.permute.xlu0 %2133
  %2135 = vrot.lane.b32.xlu0 %v1955, 20
  %v2136 = vpop.permute.xlu0 %2135
  %2137 = vrot.lane.b32.xlu0 %v1956, 20
  %v2138 = vpop.permute.xlu0 %2137
  %2139 = vrot.lane.b32.xlu0 %v1957, 20
  %v2140 = vpop.permute.xlu0 %2139
  %2141 = vrot.lane.b32.xlu0 %v1958, 20
  %v2142 = vpop.permute.xlu0 %2141
  %2143 = vrot.lane.b32.xlu0 %v1959, 20
  %v2144 = vpop.permute.xlu0 %2143
  %2145 = vrot.lane.b32.xlu0 %v1960, 20
  %v2146 = vpop.permute.xlu0 %2145
  %2147 = vrot.lane.b32.xlu0 %v1961, 20
  %v2148 = vpop.permute.xlu0 %2147
  %2149 = vrot.lane.b32.xlu0 %v1962, 20
  %v2150 = vpop.permute.xlu0 %2149
  %2151 = vrot.lane.b32.xlu0 %v1963, 20
  %v2152 = vpop.permute.xlu0 %2151
  %2153 = vrot.lane.b32.xlu0 %v1964, 20
  %v2154 = vpop.permute.xlu0 %2153
  %2155 = vrot.lane.b32.xlu0 %v1965, 20
  %v2156 = vpop.permute.xlu0 %2155
  %2157 = vrot.lane.b32.xlu0 %v1966, 20
  %v2158 = vpop.permute.xlu0 %2157
  %vm2223 = vcmask 195744
  %2224 = vst.msk [vmem:[#allocation3] sm:$0xff] %vm2223, %v2032
  %2225 = vst.msk [vmem:[#allocation3 + $0x8] sm:$0xff] %vm2223, %v2034
  %2226 = vst.msk [vmem:[#allocation3 + $0x10] sm:$0xff] %vm2223, %v2036
  %2227 = vst.msk [vmem:[#allocation3 + $0x18] sm:$0xff] %vm2223, %v2038
  %2228 = vst.msk [vmem:[#allocation3 + $0x20] sm:$0xff] %vm2223, %v2040
  %2229 = vst.msk [vmem:[#allocation3 + $0x28] sm:$0xff] %vm2223, %v2042
  %2230 = vst.msk [vmem:[#allocation3 + $0x30] sm:$0xff] %vm2223, %v2044
  %2231 = vst.msk [vmem:[#allocation3 + $0x38] sm:$0xff] %vm2223, %v2046
  %2232 = vst.msk [vmem:[#allocation3 + $0x40] sm:$0xff] %vm2223, %v2048
  %2233 = vst.msk [vmem:[#allocation3 + $0x48] sm:$0xff] %vm2223, %v2050
  %2234 = vst.msk [vmem:[#allocation3 + $0x50] sm:$0xff] %vm2223, %v2052
  %2235 = vst.msk [vmem:[#allocation3 + $0x58] sm:$0xff] %vm2223, %v2054
  %2236 = vst.msk [vmem:[#allocation3 + $0x60] sm:$0xff] %vm2223, %v2056
  %2237 = vst.msk [vmem:[#allocation3 + $0x68] sm:$0xff] %vm2223, %v2058
  %2238 = vst.msk [vmem:[#allocation3 + $0x70] sm:$0xff] %vm2223, %v2060
  %2239 = vst.msk [vmem:[#allocation3 + $0x78] sm:$0xff] %vm2223, %v2062
  %2240 = vst.msk [vmem:[#allocation3 + $0x80] sm:$0xff] %vm2223, %v2064
  %2241 = vst.msk [vmem:[#allocation3 + $0x88] sm:$0xff] %vm2223, %v2066
  %2242 = vst.msk [vmem:[#allocation3 + $0x90] sm:$0xff] %vm2223, %v2068
  %2243 = vst.msk [vmem:[#allocation3 + $0x98] sm:$0xff] %vm2223, %v2070
  %2244 = vst.msk [vmem:[#allocation3 + $0xa0] sm:$0xff] %vm2223, %v2072
  %2245 = vst.msk [vmem:[#allocation3 + $0xa8] sm:$0xff] %vm2223, %v2074
  %2246 = vst.msk [vmem:[#allocation3 + $0xb0] sm:$0xff] %vm2223, %v2076
  %2247 = vst.msk [vmem:[#allocation3 + $0xb8] sm:$0xff] %vm2223, %v2078
  %2248 = vst.msk [vmem:[#allocation3 + $0xc0] sm:$0xff] %vm2223, %v2080
  %2249 = vst.msk [vmem:[#allocation3 + $0xc8] sm:$0xff] %vm2223, %v2082
  %2250 = vst.msk [vmem:[#allocation3 + $0xd0] sm:$0xff] %vm2223, %v2084
  %2251 = vst.msk [vmem:[#allocation3 + $0xd8] sm:$0xff] %vm2223, %v2086
  %2252 = vst.msk [vmem:[#allocation3 + $0xe0] sm:$0xff] %vm2223, %v2088
  %2253 = vst.msk [vmem:[#allocation3 + $0xe8] sm:$0xff] %vm2223, %v2090
  %2254 = vst.msk [vmem:[#allocation3 + $0xf0] sm:$0xff] %vm2223, %v2092
  %2255 = vst.msk [vmem:[#allocation3 + $0xf8] sm:$0xff] %vm2223, %v2094
  %2256 = vst.msk [vmem:[#allocation3 + $0x100] sm:$0xff] %vm2223, %v2096
  %2257 = vst.msk [vmem:[#allocation3 + $0x108] sm:$0xff] %vm2223, %v2098
  %2258 = vst.msk [vmem:[#allocation3 + $0x110] sm:$0xff] %vm2223, %v2100
  %2259 = vst.msk [vmem:[#allocation3 + $0x118] sm:$0xff] %vm2223, %v2102
  %2260 = vst.msk [vmem:[#allocation3 + $0x120] sm:$0xff] %vm2223, %v2104
  %2261 = vst.msk [vmem:[#allocation3 + $0x128] sm:$0xff] %vm2223, %v2106
  %2262 = vst.msk [vmem:[#allocation3 + $0x130] sm:$0xff] %vm2223, %v2108
  %2263 = vst.msk [vmem:[#allocation3 + $0x138] sm:$0xff] %vm2223, %v2110
  %2264 = vst.msk [vmem:[#allocation3 + $0x140] sm:$0xff] %vm2223, %v2112
  %2265 = vst.msk [vmem:[#allocation3 + $0x148] sm:$0xff] %vm2223, %v2114
  %2266 = vst.msk [vmem:[#allocation3 + $0x150] sm:$0xff] %vm2223, %v2116
  %2267 = vst.msk [vmem:[#allocation3 + $0x158] sm:$0xff] %vm2223, %v2118
  %2268 = vst.msk [vmem:[#allocation3 + $0x160] sm:$0xff] %vm2223, %v2120
  %2269 = vst.msk [vmem:[#allocation3 + $0x168] sm:$0xff] %vm2223, %v2122
  %2270 = vst.msk [vmem:[#allocation3 + $0x170] sm:$0xff] %vm2223, %v2124
  %2271 = vst.msk [vmem:[#allocation3 + $0x178] sm:$0xff] %vm2223, %v2126
  %2272 = vst.msk [vmem:[#allocation3 + $0x180] sm:$0xff] %vm2223, %v2128
  %2273 = vst.msk [vmem:[#allocation3 + $0x188] sm:$0xff] %vm2223, %v2130
  %2274 = vst.msk [vmem:[#allocation3 + $0x190] sm:$0xff] %vm2223, %v2132
  %2275 = vst.msk [vmem:[#allocation3 + $0x198] sm:$0xff] %vm2223, %v2134
  %2276 = vst.msk [vmem:[#allocation3 + $0x1a0] sm:$0xff] %vm2223, %v2136
  %2277 = vst.msk [vmem:[#allocation3 + $0x1a8] sm:$0xff] %vm2223, %v2138
  %2278 = vst.msk [vmem:[#allocation3 + $0x1b0] sm:$0xff] %vm2223, %v2140
  %2279 = vst.msk [vmem:[#allocation3 + $0x1b8] sm:$0xff] %vm2223, %v2142
  %2280 = vst.msk [vmem:[#allocation3 + $0x1c0] sm:$0xff] %vm2223, %v2144
  %2281 = vst.msk [vmem:[#allocation3 + $0x1c8] sm:$0xff] %vm2223, %v2146
  %2282 = vst.msk [vmem:[#allocation3 + $0x1d0] sm:$0xff] %vm2223, %v2148
  %2283 = vst.msk [vmem:[#allocation3 + $0x1d8] sm:$0xff] %vm2223, %v2150
  %2284 = vst.msk [vmem:[#allocation3 + $0x1e0] sm:$0xff] %vm2223, %v2152
  %2285 = vst.msk [vmem:[#allocation3 + $0x1e8] sm:$0xff] %vm2223, %v2154
  %2286 = vst.msk [vmem:[#allocation3 + $0x1f0] sm:$0xff] %vm2223, %v2156
  %2287 = vst.msk [vmem:[#allocation3 + $0x1f8] sm:$0xff] %vm2223, %v2158
  %s2288 = scalar_lea.vmem [#allocation2], 48
  %v2289 = vld [vmem:[%s2288] sm:$0xff]
  %v2290 = vld [vmem:[%s2288 + $0x8] sm:$0xff]
  %v2291 = vld [vmem:[%s2288 + $0x18] sm:$0xff]
  %v2292 = vld [vmem:[%s2288 + $0x20] sm:$0xff]
  %v2293 = vld [vmem:[%s2288 + $0x30] sm:$0xff]
  %v2294 = vld [vmem:[%s2288 + $0x38] sm:$0xff]
  %v2295 = vld [vmem:[%s2288 + $0x48] sm:$0xff]
  %v2296 = vld [vmem:[%s2288 + $0x50] sm:$0xff]
  %v2297 = vld [vmem:[%s2288 + $0x60] sm:$0xff]
  %v2298 = vld [vmem:[%s2288 + $0x68] sm:$0xff]
  %v2299 = vld [vmem:[%s2288 + $0x78] sm:$0xff]
  %v2300 = vld [vmem:[%s2288 + $0x80] sm:$0xff]
  %v2301 = vld [vmem:[%s2288 + $0x90] sm:$0xff]
  %v2302 = vld [vmem:[%s2288 + $0x98] sm:$0xff]
  %v2303 = vld [vmem:[%s2288 + $0xa8] sm:$0xff]
  %v2304 = vld [vmem:[%s2288 + $0xb0] sm:$0xff]
  %v2305 = vld [vmem:[%s2288 + $0xc0] sm:$0xff]
  %v2306 = vld [vmem:[%s2288 + $0xc8] sm:$0xff]
  %v2307 = vld [vmem:[%s2288 + $0xd8] sm:$0xff]
  %v2308 = vld [vmem:[%s2288 + $0xe0] sm:$0xff]
  %v2309 = vld [vmem:[%s2288 + $0xf0] sm:$0xff]
  %v2310 = vld [vmem:[%s2288 + $0xf8] sm:$0xff]
  %v2311 = vld [vmem:[%s2288 + $0x108] sm:$0xff]
  %v2312 = vld [vmem:[%s2288 + $0x110] sm:$0xff]
  %v2313 = vld [vmem:[%s2288 + $0x120] sm:$0xff]
  %v2314 = vld [vmem:[%s2288 + $0x128] sm:$0xff]
  %v2315 = vld [vmem:[%s2288 + $0x138] sm:$0xff]
  %v2316 = vld [vmem:[%s2288 + $0x140] sm:$0xff]
  %v2317 = vld [vmem:[%s2288 + $0x150] sm:$0xff]
  %v2318 = vld [vmem:[%s2288 + $0x158] sm:$0xff]
  %v2319 = vld [vmem:[%s2288 + $0x168] sm:$0xff]
  %v2320 = vld [vmem:[%s2288 + $0x170] sm:$0xff]
  %v2321 = vld [vmem:[%s2288 + $0x1b0] sm:$0xff]
  %v2322 = vld [vmem:[%s2288 + $0x1b8] sm:$0xff]
  %v2323 = vld [vmem:[%s2288 + $0x1c8] sm:$0xff]
  %v2324 = vld [vmem:[%s2288 + $0x1d0] sm:$0xff]
  %v2325 = vld [vmem:[%s2288 + $0x1e0] sm:$0xff]
  %v2326 = vld [vmem:[%s2288 + $0x1e8] sm:$0xff]
  %v2327 = vld [vmem:[%s2288 + $0x1f8] sm:$0xff]
  %v2328 = vld [vmem:[%s2288 + $0x200] sm:$0xff]
  %v2329 = vld [vmem:[%s2288 + $0x210] sm:$0xff]
  %v2330 = vld [vmem:[%s2288 + $0x218] sm:$0xff]
  %v2331 = vld [vmem:[%s2288 + $0x228] sm:$0xff]
  %v2332 = vld [vmem:[%s2288 + $0x230] sm:$0xff]
  %v2333 = vld [vmem:[%s2288 + $0x240] sm:$0xff]
  %v2334 = vld [vmem:[%s2288 + $0x248] sm:$0xff]
  %v2335 = vld [vmem:[%s2288 + $0x258] sm:$0xff]
  %v2336 = vld [vmem:[%s2288 + $0x260] sm:$0xff]
  %v2337 = vld [vmem:[%s2288 + $0x270] sm:$0xff]
  %v2338 = vld [vmem:[%s2288 + $0x278] sm:$0xff]
  %v2339 = vld [vmem:[%s2288 + $0x288] sm:$0xff]
  %v2340 = vld [vmem:[%s2288 + $0x290] sm:$0xff]
  %v2341 = vld [vmem:[%s2288 + $0x2a0] sm:$0xff]
  %v2342 = vld [vmem:[%s2288 + $0x2a8] sm:$0xff]
  %v2343 = vld [vmem:[%s2288 + $0x2b8] sm:$0xff]
  %v2344 = vld [vmem:[%s2288 + $0x2c0] sm:$0xff]
  %v2345 = vld [vmem:[%s2288 + $0x2d0] sm:$0xff]
  %v2346 = vld [vmem:[%s2288 + $0x2d8] sm:$0xff]
  %v2347 = vld [vmem:[%s2288 + $0x2e8] sm:$0xff]
  %v2348 = vld [vmem:[%s2288 + $0x2f0] sm:$0xff]
  %v2349 = vld [vmem:[%s2288 + $0x300] sm:$0xff]
  %v2350 = vld [vmem:[%s2288 + $0x308] sm:$0xff]
  %v2351 = vld [vmem:[%s2288 + $0x318] sm:$0xff]
  %v2352 = vld [vmem:[%s2288 + $0x320] sm:$0xff]
  %2417 = vrot.lane.b32.xlu0 %v2289, 24
  %v2418 = vpop.permute.xlu0 %2417
  %2419 = vrot.lane.b32.xlu0 %v2290, 24
  %v2420 = vpop.permute.xlu0 %2419
  %2421 = vrot.lane.b32.xlu0 %v2291, 24
  %v2422 = vpop.permute.xlu0 %2421
  %2423 = vrot.lane.b32.xlu0 %v2292, 24
  %v2424 = vpop.permute.xlu0 %2423
  %2425 = vrot.lane.b32.xlu0 %v2293, 24
  %v2426 = vpop.permute.xlu0 %2425
  %2427 = vrot.lane.b32.xlu0 %v2294, 24
  %v2428 = vpop.permute.xlu0 %2427
  %2429 = vrot.lane.b32.xlu0 %v2295, 24
  %v2430 = vpop.permute.xlu0 %2429
  %2431 = vrot.lane.b32.xlu0 %v2296, 24
  %v2432 = vpop.permute.xlu0 %2431
  %2433 = vrot.lane.b32.xlu0 %v2297, 24
  %v2434 = vpop.permute.xlu0 %2433
  %2435 = vrot.lane.b32.xlu0 %v2298, 24
  %v2436 = vpop.permute.xlu0 %2435
  %2437 = vrot.lane.b32.xlu0 %v2299, 24
  %v2438 = vpop.permute.xlu0 %2437
  %2439 = vrot.lane.b32.xlu0 %v2300, 24
  %v2440 = vpop.permute.xlu0 %2439
  %2441 = vrot.lane.b32.xlu0 %v2301, 24
  %v2442 = vpop.permute.xlu0 %2441
  %2443 = vrot.lane.b32.xlu0 %v2302, 24
  %v2444 = vpop.permute.xlu0 %2443
  %2445 = vrot.lane.b32.xlu0 %v2303, 24
  %v2446 = vpop.permute.xlu0 %2445
  %2447 = vrot.lane.b32.xlu0 %v2304, 24
  %v2448 = vpop.permute.xlu0 %2447
  %2449 = vrot.lane.b32.xlu0 %v2305, 24
  %v2450 = vpop.permute.xlu0 %2449
  %2451 = vrot.lane.b32.xlu0 %v2306, 24
  %v2452 = vpop.permute.xlu0 %2451
  %2453 = vrot.lane.b32.xlu0 %v2307, 24
  %v2454 = vpop.permute.xlu0 %2453
  %2455 = vrot.lane.b32.xlu0 %v2308, 24
  %v2456 = vpop.permute.xlu0 %2455
  %2457 = vrot.lane.b32.xlu0 %v2309, 24
  %v2458 = vpop.permute.xlu0 %2457
  %2459 = vrot.lane.b32.xlu0 %v2310, 24
  %v2460 = vpop.permute.xlu0 %2459
  %2461 = vrot.lane.b32.xlu0 %v2311, 24
  %v2462 = vpop.permute.xlu0 %2461
  %2463 = vrot.lane.b32.xlu0 %v2312, 24
  %v2464 = vpop.permute.xlu0 %2463
  %2465 = vrot.lane.b32.xlu0 %v2313, 24
  %v2466 = vpop.permute.xlu0 %2465
  %2467 = vrot.lane.b32.xlu0 %v2314, 24
  %v2468 = vpop.permute.xlu0 %2467
  %2469 = vrot.lane.b32.xlu0 %v2315, 24
  %v2470 = vpop.permute.xlu0 %2469
  %2471 = vrot.lane.b32.xlu0 %v2316, 24
  %v2472 = vpop.permute.xlu0 %2471
  %2473 = vrot.lane.b32.xlu0 %v2317, 24
  %v2474 = vpop.permute.xlu0 %2473
  %2475 = vrot.lane.b32.xlu0 %v2318, 24
  %v2476 = vpop.permute.xlu0 %2475
  %2477 = vrot.lane.b32.xlu0 %v2319, 24
  %v2478 = vpop.permute.xlu0 %2477
  %2479 = vrot.lane.b32.xlu0 %v2320, 24
  %v2480 = vpop.permute.xlu0 %2479
  %2481 = vrot.lane.b32.xlu0 %v2321, 24
  %v2482 = vpop.permute.xlu0 %2481
  %2483 = vrot.lane.b32.xlu0 %v2322, 24
  %v2484 = vpop.permute.xlu0 %2483
  %2485 = vrot.lane.b32.xlu0 %v2323, 24
  %v2486 = vpop.permute.xlu0 %2485
  %2487 = vrot.lane.b32.xlu0 %v2324, 24
  %v2488 = vpop.permute.xlu0 %2487
  %2489 = vrot.lane.b32.xlu0 %v2325, 24
  %v2490 = vpop.permute.xlu0 %2489
  %2491 = vrot.lane.b32.xlu0 %v2326, 24
  %v2492 = vpop.permute.xlu0 %2491
  %2493 = vrot.lane.b32.xlu0 %v2327, 24
  %v2494 = vpop.permute.xlu0 %2493
  %2495 = vrot.lane.b32.xlu0 %v2328, 24
  %v2496 = vpop.permute.xlu0 %2495
  %2497 = vrot.lane.b32.xlu0 %v2329, 24
  %v2498 = vpop.permute.xlu0 %2497
  %2499 = vrot.lane.b32.xlu0 %v2330, 24
  %v2500 = vpop.permute.xlu0 %2499
  %2501 = vrot.lane.b32.xlu0 %v2331, 24
  %v2502 = vpop.permute.xlu0 %2501
  %2503 = vrot.lane.b32.xlu0 %v2332, 24
  %v2504 = vpop.permute.xlu0 %2503
  %2505 = vrot.lane.b32.xlu0 %v2333, 24
  %v2506 = vpop.permute.xlu0 %2505
  %2507 = vrot.lane.b32.xlu0 %v2334, 24
  %v2508 = vpop.permute.xlu0 %2507
  %2509 = vrot.lane.b32.xlu0 %v2335, 24
  %v2510 = vpop.permute.xlu0 %2509
  %2511 = vrot.lane.b32.xlu0 %v2336, 24
  %v2512 = vpop.permute.xlu0 %2511
  %2513 = vrot.lane.b32.xlu0 %v2337, 24
  %v2514 = vpop.permute.xlu0 %2513
  %2515 = vrot.lane.b32.xlu0 %v2338, 24
  %v2516 = vpop.permute.xlu0 %2515
  %2517 = vrot.lane.b32.xlu0 %v2339, 24
  %v2518 = vpop.permute.xlu0 %2517
  %2519 = vrot.lane.b32.xlu0 %v2340, 24
  %v2520 = vpop.permute.xlu0 %2519
  %2521 = vrot.lane.b32.xlu0 %v2341, 24
  %v2522 = vpop.permute.xlu0 %2521
  %2523 = vrot.lane.b32.xlu0 %v2342, 24
  %v2524 = vpop.permute.xlu0 %2523
  %2525 = vrot.lane.b32.xlu0 %v2343, 24
  %v2526 = vpop.permute.xlu0 %2525
  %2527 = vrot.lane.b32.xlu0 %v2344, 24
  %v2528 = vpop.permute.xlu0 %2527
  %2529 = vrot.lane.b32.xlu0 %v2345, 24
  %v2530 = vpop.permute.xlu0 %2529
  %2531 = vrot.lane.b32.xlu0 %v2346, 24
  %v2532 = vpop.permute.xlu0 %2531
  %2533 = vrot.lane.b32.xlu0 %v2347, 24
  %v2534 = vpop.permute.xlu0 %2533
  %2535 = vrot.lane.b32.xlu0 %v2348, 24
  %v2536 = vpop.permute.xlu0 %2535
  %2537 = vrot.lane.b32.xlu0 %v2349, 24
  %v2538 = vpop.permute.xlu0 %2537
  %2539 = vrot.lane.b32.xlu0 %v2350, 24
  %v2540 = vpop.permute.xlu0 %2539
  %2541 = vrot.lane.b32.xlu0 %v2351, 24
  %v2542 = vpop.permute.xlu0 %2541
  %2543 = vrot.lane.b32.xlu0 %v2352, 24
  %v2544 = vpop.permute.xlu0 %2543
  %vm2609 = vcmask 228544
  %2610 = vst.msk [vmem:[#allocation3] sm:$0xff] %vm2609, %v2418
  %2611 = vst.msk [vmem:[#allocation3 + $0x8] sm:$0xff] %vm2609, %v2420
  %2612 = vst.msk [vmem:[#allocation3 + $0x10] sm:$0xff] %vm2609, %v2422
  %2613 = vst.msk [vmem:[#allocation3 + $0x18] sm:$0xff] %vm2609, %v2424
  %2614 = vst.msk [vmem:[#allocation3 + $0x20] sm:$0xff] %vm2609, %v2426
  %2615 = vst.msk [vmem:[#allocation3 + $0x28] sm:$0xff] %vm2609, %v2428
  %2616 = vst.msk [vmem:[#allocation3 + $0x30] sm:$0xff] %vm2609, %v2430
  %2617 = vst.msk [vmem:[#allocation3 + $0x38] sm:$0xff] %vm2609, %v2432
  %2618 = vst.msk [vmem:[#allocation3 + $0x40] sm:$0xff] %vm2609, %v2434
  %2619 = vst.msk [vmem:[#allocation3 + $0x48] sm:$0xff] %vm2609, %v2436
  %2620 = vst.msk [vmem:[#allocation3 + $0x50] sm:$0xff] %vm2609, %v2438
  %2621 = vst.msk [vmem:[#allocation3 + $0x58] sm:$0xff] %vm2609, %v2440
  %2622 = vst.msk [vmem:[#allocation3 + $0x60] sm:$0xff] %vm2609, %v2442
  %2623 = vst.msk [vmem:[#allocation3 + $0x68] sm:$0xff] %vm2609, %v2444
  %2624 = vst.msk [vmem:[#allocation3 + $0x70] sm:$0xff] %vm2609, %v2446
  %2625 = vst.msk [vmem:[#allocation3 + $0x78] sm:$0xff] %vm2609, %v2448
  %2626 = vst.msk [vmem:[#allocation3 + $0x80] sm:$0xff] %vm2609, %v2450
  %2627 = vst.msk [vmem:[#allocation3 + $0x88] sm:$0xff] %vm2609, %v2452
  %2628 = vst.msk [vmem:[#allocation3 + $0x90] sm:$0xff] %vm2609, %v2454
  %2629 = vst.msk [vmem:[#allocation3 + $0x98] sm:$0xff] %vm2609, %v2456
  %2630 = vst.msk [vmem:[#allocation3 + $0xa0] sm:$0xff] %vm2609, %v2458
  %2631 = vst.msk [vmem:[#allocation3 + $0xa8] sm:$0xff] %vm2609, %v2460
  %2632 = vst.msk [vmem:[#allocation3 + $0xb0] sm:$0xff] %vm2609, %v2462
  %2633 = vst.msk [vmem:[#allocation3 + $0xb8] sm:$0xff] %vm2609, %v2464
  %2634 = vst.msk [vmem:[#allocation3 + $0xc0] sm:$0xff] %vm2609, %v2466
  %2635 = vst.msk [vmem:[#allocation3 + $0xc8] sm:$0xff] %vm2609, %v2468
  %2636 = vst.msk [vmem:[#allocation3 + $0xd0] sm:$0xff] %vm2609, %v2470
  %2637 = vst.msk [vmem:[#allocation3 + $0xd8] sm:$0xff] %vm2609, %v2472
  %2638 = vst.msk [vmem:[#allocation3 + $0xe0] sm:$0xff] %vm2609, %v2474
  %2639 = vst.msk [vmem:[#allocation3 + $0xe8] sm:$0xff] %vm2609, %v2476
  %2640 = vst.msk [vmem:[#allocation3 + $0xf0] sm:$0xff] %vm2609, %v2478
  %2641 = vst.msk [vmem:[#allocation3 + $0xf8] sm:$0xff] %vm2609, %v2480
  %2642 = vst.msk [vmem:[#allocation3 + $0x100] sm:$0xff] %vm2609, %v2482
  %2643 = vst.msk [vmem:[#allocation3 + $0x108] sm:$0xff] %vm2609, %v2484
  %2644 = vst.msk [vmem:[#allocation3 + $0x110] sm:$0xff] %vm2609, %v2486
  %2645 = vst.msk [vmem:[#allocation3 + $0x118] sm:$0xff] %vm2609, %v2488
  %2646 = vst.msk [vmem:[#allocation3 + $0x120] sm:$0xff] %vm2609, %v2490
  %2647 = vst.msk [vmem:[#allocation3 + $0x128] sm:$0xff] %vm2609, %v2492
  %2648 = vst.msk [vmem:[#allocation3 + $0x130] sm:$0xff] %vm2609, %v2494
  %2649 = vst.msk [vmem:[#allocation3 + $0x138] sm:$0xff] %vm2609, %v2496
  %2650 = vst.msk [vmem:[#allocation3 + $0x140] sm:$0xff] %vm2609, %v2498
  %2651 = vst.msk [vmem:[#allocation3 + $0x148] sm:$0xff] %vm2609, %v2500
  %2652 = vst.msk [vmem:[#allocation3 + $0x150] sm:$0xff] %vm2609, %v2502
  %2653 = vst.msk [vmem:[#allocation3 + $0x158] sm:$0xff] %vm2609, %v2504
  %2654 = vst.msk [vmem:[#allocation3 + $0x160] sm:$0xff] %vm2609, %v2506
  %2655 = vst.msk [vmem:[#allocation3 + $0x168] sm:$0xff] %vm2609, %v2508
  %2656 = vst.msk [vmem:[#allocation3 + $0x170] sm:$0xff] %vm2609, %v2510
  %2657 = vst.msk [vmem:[#allocation3 + $0x178] sm:$0xff] %vm2609, %v2512
  %2658 = vst.msk [vmem:[#allocation3 + $0x180] sm:$0xff] %vm2609, %v2514
  %2659 = vst.msk [vmem:[#allocation3 + $0x188] sm:$0xff] %vm2609, %v2516
  %2660 = vst.msk [vmem:[#allocation3 + $0x190] sm:$0xff] %vm2609, %v2518
  %2661 = vst.msk [vmem:[#allocation3 + $0x198] sm:$0xff] %vm2609, %v2520
  %2662 = vst.msk [vmem:[#allocation3 + $0x1a0] sm:$0xff] %vm2609, %v2522
  %2663 = vst.msk [vmem:[#allocation3 + $0x1a8] sm:$0xff] %vm2609, %v2524
  %2664 = vst.msk [vmem:[#allocation3 + $0x1b0] sm:$0xff] %vm2609, %v2526
  %2665 = vst.msk [vmem:[#allocation3 + $0x1b8] sm:$0xff] %vm2609, %v2528
  %2666 = vst.msk [vmem:[#allocation3 + $0x1c0] sm:$0xff] %vm2609, %v2530
  %2667 = vst.msk [vmem:[#allocation3 + $0x1c8] sm:$0xff] %vm2609, %v2532
  %2668 = vst.msk [vmem:[#allocation3 + $0x1d0] sm:$0xff] %vm2609, %v2534
  %2669 = vst.msk [vmem:[#allocation3 + $0x1d8] sm:$0xff] %vm2609, %v2536
  %2670 = vst.msk [vmem:[#allocation3 + $0x1e0] sm:$0xff] %vm2609, %v2538
  %2671 = vst.msk [vmem:[#allocation3 + $0x1e8] sm:$0xff] %vm2609, %v2540
  %2672 = vst.msk [vmem:[#allocation3 + $0x1f0] sm:$0xff] %vm2609, %v2542
  %2673 = vst.msk [vmem:[#allocation3 + $0x1f8] sm:$0xff] %vm2609, %v2544
  %v2674 = vld [vmem:[%s2288 + $0x1] sm:$0xff]
  %v2675 = vld [vmem:[%s2288 + $0x9] sm:$0xff]
  %v2676 = vld [vmem:[%s2288 + $0x19] sm:$0xff]
  %v2677 = vld [vmem:[%s2288 + $0x21] sm:$0xff]
  %v2678 = vld [vmem:[%s2288 + $0x31] sm:$0xff]
  %v2679 = vld [vmem:[%s2288 + $0x39] sm:$0xff]
  %v2680 = vld [vmem:[%s2288 + $0x49] sm:$0xff]
  %v2681 = vld [vmem:[%s2288 + $0x51] sm:$0xff]
  %v2682 = vld [vmem:[%s2288 + $0x61] sm:$0xff]
  %v2683 = vld [vmem:[%s2288 + $0x69] sm:$0xff]
  %v2684 = vld [vmem:[%s2288 + $0x79] sm:$0xff]
  %v2685 = vld [vmem:[%s2288 + $0x81] sm:$0xff]
  %v2686 = vld [vmem:[%s2288 + $0x91] sm:$0xff]
  %v2687 = vld [vmem:[%s2288 + $0x99] sm:$0xff]
  %v2688 = vld [vmem:[%s2288 + $0xa9] sm:$0xff]
  %v2689 = vld [vmem:[%s2288 + $0xb1] sm:$0xff]
  %v2690 = vld [vmem:[%s2288 + $0xc1] sm:$0xff]
  %v2691 = vld [vmem:[%s2288 + $0xc9] sm:$0xff]
  %v2692 = vld [vmem:[%s2288 + $0xd9] sm:$0xff]
  %v2693 = vld [vmem:[%s2288 + $0xe1] sm:$0xff]
  %v2694 = vld [vmem:[%s2288 + $0xf1] sm:$0xff]
  %v2695 = vld [vmem:[%s2288 + $0xf9] sm:$0xff]
  %v2696 = vld [vmem:[%s2288 + $0x109] sm:$0xff]
  %v2697 = vld [vmem:[%s2288 + $0x111] sm:$0xff]
  %v2698 = vld [vmem:[%s2288 + $0x121] sm:$0xff]
  %v2699 = vld [vmem:[%s2288 + $0x129] sm:$0xff]
  %v2700 = vld [vmem:[%s2288 + $0x139] sm:$0xff]
  %v2701 = vld [vmem:[%s2288 + $0x141] sm:$0xff]
  %v2702 = vld [vmem:[%s2288 + $0x151] sm:$0xff]
  %v2703 = vld [vmem:[%s2288 + $0x159] sm:$0xff]
  %v2704 = vld [vmem:[%s2288 + $0x169] sm:$0xff]
  %v2705 = vld [vmem:[%s2288 + $0x171] sm:$0xff]
  %v2706 = vld [vmem:[%s2288 + $0x1b1] sm:$0xff]
  %v2707 = vld [vmem:[%s2288 + $0x1b9] sm:$0xff]
  %v2708 = vld [vmem:[%s2288 + $0x1c9] sm:$0xff]
  %v2709 = vld [vmem:[%s2288 + $0x1d1] sm:$0xff]
  %v2710 = vld [vmem:[%s2288 + $0x1e1] sm:$0xff]
  %v2711 = vld [vmem:[%s2288 + $0x1e9] sm:$0xff]
  %v2712 = vld [vmem:[%s2288 + $0x1f9] sm:$0xff]
  %v2713 = vld [vmem:[%s2288 + $0x201] sm:$0xff]
  %v2714 = vld [vmem:[%s2288 + $0x211] sm:$0xff]
  %v2715 = vld [vmem:[%s2288 + $0x219] sm:$0xff]
  %v2716 = vld [vmem:[%s2288 + $0x229] sm:$0xff]
  %v2717 = vld [vmem:[%s2288 + $0x231] sm:$0xff]
  %v2718 = vld [vmem:[%s2288 + $0x241] sm:$0xff]
  %v2719 = vld [vmem:[%s2288 + $0x249] sm:$0xff]
  %v2720 = vld [vmem:[%s2288 + $0x259] sm:$0xff]
  %v2721 = vld [vmem:[%s2288 + $0x261] sm:$0xff]
  %v2722 = vld [vmem:[%s2288 + $0x271] sm:$0xff]
  %v2723 = vld [vmem:[%s2288 + $0x279] sm:$0xff]
  %v2724 = vld [vmem:[%s2288 + $0x289] sm:$0xff]
  %v2725 = vld [vmem:[%s2288 + $0x291] sm:$0xff]
  %v2726 = vld [vmem:[%s2288 + $0x2a1] sm:$0xff]
  %v2727 = vld [vmem:[%s2288 + $0x2a9] sm:$0xff]
  %v2728 = vld [vmem:[%s2288 + $0x2b9] sm:$0xff]
  %v2729 = vld [vmem:[%s2288 + $0x2c1] sm:$0xff]
  %v2730 = vld [vmem:[%s2288 + $0x2d1] sm:$0xff]
  %v2731 = vld [vmem:[%s2288 + $0x2d9] sm:$0xff]
  %v2732 = vld [vmem:[%s2288 + $0x2e9] sm:$0xff]
  %v2733 = vld [vmem:[%s2288 + $0x2f1] sm:$0xff]
  %v2734 = vld [vmem:[%s2288 + $0x301] sm:$0xff]
  %v2735 = vld [vmem:[%s2288 + $0x309] sm:$0xff]
  %v2736 = vld [vmem:[%s2288 + $0x319] sm:$0xff]
  %v2737 = vld [vmem:[%s2288 + $0x321] sm:$0xff]
  %2802 = vrot.lane.b32.xlu0 %v2674, 28
  %v2803 = vpop.permute.xlu0 %2802
  %2804 = vrot.lane.b32.xlu0 %v2675, 28
  %v2805 = vpop.permute.xlu0 %2804
  %2806 = vrot.lane.b32.xlu0 %v2676, 28
  %v2807 = vpop.permute.xlu0 %2806
  %2808 = vrot.lane.b32.xlu0 %v2677, 28
  %v2809 = vpop.permute.xlu0 %2808
  %2810 = vrot.lane.b32.xlu0 %v2678, 28
  %v2811 = vpop.permute.xlu0 %2810
  %2812 = vrot.lane.b32.xlu0 %v2679, 28
  %v2813 = vpop.permute.xlu0 %2812
  %2814 = vrot.lane.b32.xlu0 %v2680, 28
  %v2815 = vpop.permute.xlu0 %2814
  %2816 = vrot.lane.b32.xlu0 %v2681, 28
  %v2817 = vpop.permute.xlu0 %2816
  %2818 = vrot.lane.b32.xlu0 %v2682, 28
  %v2819 = vpop.permute.xlu0 %2818
  %2820 = vrot.lane.b32.xlu0 %v2683, 28
  %v2821 = vpop.permute.xlu0 %2820
  %2822 = vrot.lane.b32.xlu0 %v2684, 28
  %v2823 = vpop.permute.xlu0 %2822
  %2824 = vrot.lane.b32.xlu0 %v2685, 28
  %v2825 = vpop.permute.xlu0 %2824
  %2826 = vrot.lane.b32.xlu0 %v2686, 28
  %v2827 = vpop.permute.xlu0 %2826
  %2828 = vrot.lane.b32.xlu0 %v2687, 28
  %v2829 = vpop.permute.xlu0 %2828
  %2830 = vrot.lane.b32.xlu0 %v2688, 28
  %v2831 = vpop.permute.xlu0 %2830
  %2832 = vrot.lane.b32.xlu0 %v2689, 28
  %v2833 = vpop.permute.xlu0 %2832
  %2834 = vrot.lane.b32.xlu0 %v2690, 28
  %v2835 = vpop.permute.xlu0 %2834
  %2836 = vrot.lane.b32.xlu0 %v2691, 28
  %v2837 = vpop.permute.xlu0 %2836
  %2838 = vrot.lane.b32.xlu0 %v2692, 28
  %v2839 = vpop.permute.xlu0 %2838
  %2840 = vrot.lane.b32.xlu0 %v2693, 28
  %v2841 = vpop.permute.xlu0 %2840
  %2842 = vrot.lane.b32.xlu0 %v2694, 28
  %v2843 = vpop.permute.xlu0 %2842
  %2844 = vrot.lane.b32.xlu0 %v2695, 28
  %v2845 = vpop.permute.xlu0 %2844
  %2846 = vrot.lane.b32.xlu0 %v2696, 28
  %v2847 = vpop.permute.xlu0 %2846
  %2848 = vrot.lane.b32.xlu0 %v2697, 28
  %v2849 = vpop.permute.xlu0 %2848
  %2850 = vrot.lane.b32.xlu0 %v2698, 28
  %v2851 = vpop.permute.xlu0 %2850
  %2852 = vrot.lane.b32.xlu0 %v2699, 28
  %v2853 = vpop.permute.xlu0 %2852
  %2854 = vrot.lane.b32.xlu0 %v2700, 28
  %v2855 = vpop.permute.xlu0 %2854
  %2856 = vrot.lane.b32.xlu0 %v2701, 28
  %v2857 = vpop.permute.xlu0 %2856
  %2858 = vrot.lane.b32.xlu0 %v2702, 28
  %v2859 = vpop.permute.xlu0 %2858
  %2860 = vrot.lane.b32.xlu0 %v2703, 28
  %v2861 = vpop.permute.xlu0 %2860
  %2862 = vrot.lane.b32.xlu0 %v2704, 28
  %v2863 = vpop.permute.xlu0 %2862
  %2864 = vrot.lane.b32.xlu0 %v2705, 28
  %v2865 = vpop.permute.xlu0 %2864
  %2866 = vrot.lane.b32.xlu0 %v2706, 28
  %v2867 = vpop.permute.xlu0 %2866
  %2868 = vrot.lane.b32.xlu0 %v2707, 28
  %v2869 = vpop.permute.xlu0 %2868
  %2870 = vrot.lane.b32.xlu0 %v2708, 28
  %v2871 = vpop.permute.xlu0 %2870
  %2872 = vrot.lane.b32.xlu0 %v2709, 28
  %v2873 = vpop.permute.xlu0 %2872
  %2874 = vrot.lane.b32.xlu0 %v2710, 28
  %v2875 = vpop.permute.xlu0 %2874
  %2876 = vrot.lane.b32.xlu0 %v2711, 28
  %v2877 = vpop.permute.xlu0 %2876
  %2878 = vrot.lane.b32.xlu0 %v2712, 28
  %v2879 = vpop.permute.xlu0 %2878
  %2880 = vrot.lane.b32.xlu0 %v2713, 28
  %v2881 = vpop.permute.xlu0 %2880
  %2882 = vrot.lane.b32.xlu0 %v2714, 28
  %v2883 = vpop.permute.xlu0 %2882
  %2884 = vrot.lane.b32.xlu0 %v2715, 28
  %v2885 = vpop.permute.xlu0 %2884
  %2886 = vrot.lane.b32.xlu0 %v2716, 28
  %v2887 = vpop.permute.xlu0 %2886
  %2888 = vrot.lane.b32.xlu0 %v2717, 28
  %v2889 = vpop.permute.xlu0 %2888
  %2890 = vrot.lane.b32.xlu0 %v2718, 28
  %v2891 = vpop.permute.xlu0 %2890
  %2892 = vrot.lane.b32.xlu0 %v2719, 28
  %v2893 = vpop.permute.xlu0 %2892
  %2894 = vrot.lane.b32.xlu0 %v2720, 28
  %v2895 = vpop.permute.xlu0 %2894
  %2896 = vrot.lane.b32.xlu0 %v2721, 28
  %v2897 = vpop.permute.xlu0 %2896
  %2898 = vrot.lane.b32.xlu0 %v2722, 28
  %v2899 = vpop.permute.xlu0 %2898
  %2900 = vrot.lane.b32.xlu0 %v2723, 28
  %v2901 = vpop.permute.xlu0 %2900
  %2902 = vrot.lane.b32.xlu0 %v2724, 28
  %v2903 = vpop.permute.xlu0 %2902
  %2904 = vrot.lane.b32.xlu0 %v2725, 28
  %v2905 = vpop.permute.xlu0 %2904
  %2906 = vrot.lane.b32.xlu0 %v2726, 28
  %v2907 = vpop.permute.xlu0 %2906
  %2908 = vrot.lane.b32.xlu0 %v2727, 28
  %v2909 = vpop.permute.xlu0 %2908
  %2910 = vrot.lane.b32.xlu0 %v2728, 28
  %v2911 = vpop.permute.xlu0 %2910
  %2912 = vrot.lane.b32.xlu0 %v2729, 28
  %v2913 = vpop.permute.xlu0 %2912
  %2914 = vrot.lane.b32.xlu0 %v2730, 28
  %v2915 = vpop.permute.xlu0 %2914
  %2916 = vrot.lane.b32.xlu0 %v2731, 28
  %v2917 = vpop.permute.xlu0 %2916
  %2918 = vrot.lane.b32.xlu0 %v2732, 28
  %v2919 = vpop.permute.xlu0 %2918
  %2920 = vrot.lane.b32.xlu0 %v2733, 28
  %v2921 = vpop.permute.xlu0 %2920
  %2922 = vrot.lane.b32.xlu0 %v2734, 28
  %v2923 = vpop.permute.xlu0 %2922
  %2924 = vrot.lane.b32.xlu0 %v2735, 28
  %v2925 = vpop.permute.xlu0 %2924
  %2926 = vrot.lane.b32.xlu0 %v2736, 28
  %v2927 = vpop.permute.xlu0 %2926
  %2928 = vrot.lane.b32.xlu0 %v2737, 28
  %v2929 = vpop.permute.xlu0 %2928
  %vm2994 = vcmask 261344
  %2995 = vst.msk [vmem:[#allocation3] sm:$0xff] %vm2994, %v2803
  %2996 = vst.msk [vmem:[#allocation3 + $0x8] sm:$0xff] %vm2994, %v2805
  %2997 = vst.msk [vmem:[#allocation3 + $0x10] sm:$0xff] %vm2994, %v2807
  %2998 = vst.msk [vmem:[#allocation3 + $0x18] sm:$0xff] %vm2994, %v2809
  %2999 = vst.msk [vmem:[#allocation3 + $0x20] sm:$0xff] %vm2994, %v2811
  %3000 = vst.msk [vmem:[#allocation3 + $0x28] sm:$0xff] %vm2994, %v2813
  %3001 = vst.msk [vmem:[#allocation3 + $0x30] sm:$0xff] %vm2994, %v2815
  %3002 = vst.msk [vmem:[#allocation3 + $0x38] sm:$0xff] %vm2994, %v2817
  %3003 = vst.msk [vmem:[#allocation3 + $0x40] sm:$0xff] %vm2994, %v2819
  %3004 = vst.msk [vmem:[#allocation3 + $0x48] sm:$0xff] %vm2994, %v2821
  %3005 = vst.msk [vmem:[#allocation3 + $0x50] sm:$0xff] %vm2994, %v2823
  %3006 = vst.msk [vmem:[#allocation3 + $0x58] sm:$0xff] %vm2994, %v2825
  %3007 = vst.msk [vmem:[#allocation3 + $0x60] sm:$0xff] %vm2994, %v2827
  %3008 = vst.msk [vmem:[#allocation3 + $0x68] sm:$0xff] %vm2994, %v2829
  %3009 = vst.msk [vmem:[#allocation3 + $0x70] sm:$0xff] %vm2994, %v2831
  %3010 = vst.msk [vmem:[#allocation3 + $0x78] sm:$0xff] %vm2994, %v2833
  %3011 = vst.msk [vmem:[#allocation3 + $0x80] sm:$0xff] %vm2994, %v2835
  %3012 = vst.msk [vmem:[#allocation3 + $0x88] sm:$0xff] %vm2994, %v2837
  %3013 = vst.msk [vmem:[#allocation3 + $0x90] sm:$0xff] %vm2994, %v2839
  %3014 = vst.msk [vmem:[#allocation3 + $0x98] sm:$0xff] %vm2994, %v2841
  %3015 = vst.msk [vmem:[#allocation3 + $0xa0] sm:$0xff] %vm2994, %v2843
  %3016 = vst.msk [vmem:[#allocation3 + $0xa8] sm:$0xff] %vm2994, %v2845
  %3017 = vst.msk [vmem:[#allocation3 + $0xb0] sm:$0xff] %vm2994, %v2847
  %3018 = vst.msk [vmem:[#allocation3 + $0xb8] sm:$0xff] %vm2994, %v2849
  %3019 = vst.msk [vmem:[#allocation3 + $0xc0] sm:$0xff] %vm2994, %v2851
  %3020 = vst.msk [vmem:[#allocation3 + $0xc8] sm:$0xff] %vm2994, %v2853
  %3021 = vst.msk [vmem:[#allocation3 + $0xd0] sm:$0xff] %vm2994, %v2855
  %3022 = vst.msk [vmem:[#allocation3 + $0xd8] sm:$0xff] %vm2994, %v2857
  %3023 = vst.msk [vmem:[#allocation3 + $0xe0] sm:$0xff] %vm2994, %v2859
  %3024 = vst.msk [vmem:[#allocation3 + $0xe8] sm:$0xff] %vm2994, %v2861
  %3025 = vst.msk [vmem:[#allocation3 + $0xf0] sm:$0xff] %vm2994, %v2863
  %3026 = vst.msk [vmem:[#allocation3 + $0xf8] sm:$0xff] %vm2994, %v2865
  %3027 = vst.msk [vmem:[#allocation3 + $0x100] sm:$0xff] %vm2994, %v2867
  %3028 = vst.msk [vmem:[#allocation3 + $0x108] sm:$0xff] %vm2994, %v2869
  %3029 = vst.msk [vmem:[#allocation3 + $0x110] sm:$0xff] %vm2994, %v2871
  %3030 = vst.msk [vmem:[#allocation3 + $0x118] sm:$0xff] %vm2994, %v2873
  %3031 = vst.msk [vmem:[#allocation3 + $0x120] sm:$0xff] %vm2994, %v2875
  %3032 = vst.msk [vmem:[#allocation3 + $0x128] sm:$0xff] %vm2994, %v2877
  %3033 = vst.msk [vmem:[#allocation3 + $0x130] sm:$0xff] %vm2994, %v2879
  %3034 = vst.msk [vmem:[#allocation3 + $0x138] sm:$0xff] %vm2994, %v2881
  %3035 = vst.msk [vmem:[#allocation3 + $0x140] sm:$0xff] %vm2994, %v2883
  %3036 = vst.msk [vmem:[#allocation3 + $0x148] sm:$0xff] %vm2994, %v2885
  %3037 = vst.msk [vmem:[#allocation3 + $0x150] sm:$0xff] %vm2994, %v2887
  %3038 = vst.msk [vmem:[#allocation3 + $0x158] sm:$0xff] %vm2994, %v2889
  %3039 = vst.msk [vmem:[#allocation3 + $0x160] sm:$0xff] %vm2994, %v2891
  %3040 = vst.msk [vmem:[#allocation3 + $0x168] sm:$0xff] %vm2994, %v2893
  %3041 = vst.msk [vmem:[#allocation3 + $0x170] sm:$0xff] %vm2994, %v2895
  %3042 = vst.msk [vmem:[#allocation3 + $0x178] sm:$0xff] %vm2994, %v2897
  %3043 = vst.msk [vmem:[#allocation3 + $0x180] sm:$0xff] %vm2994, %v2899
  %3044 = vst.msk [vmem:[#allocation3 + $0x188] sm:$0xff] %vm2994, %v2901
  %3045 = vst.msk [vmem:[#allocation3 + $0x190] sm:$0xff] %vm2994, %v2903
  %3046 = vst.msk [vmem:[#allocation3 + $0x198] sm:$0xff] %vm2994, %v2905
  %3047 = vst.msk [vmem:[#allocation3 + $0x1a0] sm:$0xff] %vm2994, %v2907
  %3048 = vst.msk [vmem:[#allocation3 + $0x1a8] sm:$0xff] %vm2994, %v2909
  %3049 = vst.msk [vmem:[#allocation3 + $0x1b0] sm:$0xff] %vm2994, %v2911
  %3050 = vst.msk [vmem:[#allocation3 + $0x1b8] sm:$0xff] %vm2994, %v2913
  %3051 = vst.msk [vmem:[#allocation3 + $0x1c0] sm:$0xff] %vm2994, %v2915
  %3052 = vst.msk [vmem:[#allocation3 + $0x1c8] sm:$0xff] %vm2994, %v2917
  %3053 = vst.msk [vmem:[#allocation3 + $0x1d0] sm:$0xff] %vm2994, %v2919
  %3054 = vst.msk [vmem:[#allocation3 + $0x1d8] sm:$0xff] %vm2994, %v2921
  %3055 = vst.msk [vmem:[#allocation3 + $0x1e0] sm:$0xff] %vm2994, %v2923
  %3056 = vst.msk [vmem:[#allocation3 + $0x1e8] sm:$0xff] %vm2994, %v2925
  %3057 = vst.msk [vmem:[#allocation3 + $0x1f0] sm:$0xff] %vm2994, %v2927
  %3058 = vst.msk [vmem:[#allocation3 + $0x1f8] sm:$0xff] %vm2994, %v2929
  %v3059 = vld [vmem:[%s2288 + $0x2] sm:$0xff]
  %v3060 = vld [vmem:[%s2288 + $0xa] sm:$0xff]
  %v3061 = vld [vmem:[%s2288 + $0x1a] sm:$0xff]
  %v3062 = vld [vmem:[%s2288 + $0x22] sm:$0xff]
  %v3063 = vld [vmem:[%s2288 + $0x32] sm:$0xff]
  %v3064 = vld [vmem:[%s2288 + $0x3a] sm:$0xff]
  %v3065 = vld [vmem:[%s2288 + $0x4a] sm:$0xff]
  %v3066 = vld [vmem:[%s2288 + $0x52] sm:$0xff]
  %v3067 = vld [vmem:[%s2288 + $0x62] sm:$0xff]
  %v3068 = vld [vmem:[%s2288 + $0x6a] sm:$0xff]
  %v3069 = vld [vmem:[%s2288 + $0x7a] sm:$0xff]
  %v3070 = vld [vmem:[%s2288 + $0x82] sm:$0xff]
  %v3071 = vld [vmem:[%s2288 + $0x92] sm:$0xff]
  %v3072 = vld [vmem:[%s2288 + $0x9a] sm:$0xff]
  %v3073 = vld [vmem:[%s2288 + $0xaa] sm:$0xff]
  %v3074 = vld [vmem:[%s2288 + $0xb2] sm:$0xff]
  %v3075 = vld [vmem:[%s2288 + $0xc2] sm:$0xff]
  %v3076 = vld [vmem:[%s2288 + $0xca] sm:$0xff]
  %v3077 = vld [vmem:[%s2288 + $0xda] sm:$0xff]
  %v3078 = vld [vmem:[%s2288 + $0xe2] sm:$0xff]
  %v3079 = vld [vmem:[%s2288 + $0xf2] sm:$0xff]
  %v3080 = vld [vmem:[%s2288 + $0xfa] sm:$0xff]
  %v3081 = vld [vmem:[%s2288 + $0x10a] sm:$0xff]
  %v3082 = vld [vmem:[%s2288 + $0x112] sm:$0xff]
  %v3083 = vld [vmem:[%s2288 + $0x122] sm:$0xff]
  %v3084 = vld [vmem:[%s2288 + $0x12a] sm:$0xff]
  %v3085 = vld [vmem:[%s2288 + $0x13a] sm:$0xff]
  %v3086 = vld [vmem:[%s2288 + $0x142] sm:$0xff]
  %v3087 = vld [vmem:[%s2288 + $0x152] sm:$0xff]
  %v3088 = vld [vmem:[%s2288 + $0x15a] sm:$0xff]
  %v3089 = vld [vmem:[%s2288 + $0x16a] sm:$0xff]
  %v3090 = vld [vmem:[%s2288 + $0x172] sm:$0xff]
  %v3091 = vld [vmem:[%s2288 + $0x1b2] sm:$0xff]
  %v3092 = vld [vmem:[%s2288 + $0x1ba] sm:$0xff]
  %v3093 = vld [vmem:[%s2288 + $0x1ca] sm:$0xff]
  %v3094 = vld [vmem:[%s2288 + $0x1d2] sm:$0xff]
  %v3095 = vld [vmem:[%s2288 + $0x1e2] sm:$0xff]
  %v3096 = vld [vmem:[%s2288 + $0x1ea] sm:$0xff]
  %v3097 = vld [vmem:[%s2288 + $0x1fa] sm:$0xff]
  %v3098 = vld [vmem:[%s2288 + $0x202] sm:$0xff]
  %v3099 = vld [vmem:[%s2288 + $0x212] sm:$0xff]
  %v3100 = vld [vmem:[%s2288 + $0x21a] sm:$0xff]
  %v3101 = vld [vmem:[%s2288 + $0x22a] sm:$0xff]
  %v3102 = vld [vmem:[%s2288 + $0x232] sm:$0xff]
  %v3103 = vld [vmem:[%s2288 + $0x242] sm:$0xff]
  %v3104 = vld [vmem:[%s2288 + $0x24a] sm:$0xff]
  %v3105 = vld [vmem:[%s2288 + $0x25a] sm:$0xff]
  %v3106 = vld [vmem:[%s2288 + $0x262] sm:$0xff]
  %v3107 = vld [vmem:[%s2288 + $0x272] sm:$0xff]
  %v3108 = vld [vmem:[%s2288 + $0x27a] sm:$0xff]
  %v3109 = vld [vmem:[%s2288 + $0x28a] sm:$0xff]
  %v3110 = vld [vmem:[%s2288 + $0x292] sm:$0xff]
  %v3111 = vld [vmem:[%s2288 + $0x2a2] sm:$0xff]
  %v3112 = vld [vmem:[%s2288 + $0x2aa] sm:$0xff]
  %v3113 = vld [vmem:[%s2288 + $0x2ba] sm:$0xff]
  %v3114 = vld [vmem:[%s2288 + $0x2c2] sm:$0xff]
  %v3115 = vld [vmem:[%s2288 + $0x2d2] sm:$0xff]
  %v3116 = vld [vmem:[%s2288 + $0x2da] sm:$0xff]
  %v3117 = vld [vmem:[%s2288 + $0x2ea] sm:$0xff]
  %v3118 = vld [vmem:[%s2288 + $0x2f2] sm:$0xff]
  %v3119 = vld [vmem:[%s2288 + $0x302] sm:$0xff]
  %v3120 = vld [vmem:[%s2288 + $0x30a] sm:$0xff]
  %v3121 = vld [vmem:[%s2288 + $0x31a] sm:$0xff]
  %v3122 = vld [vmem:[%s2288 + $0x322] sm:$0xff]
  %3187 = vrot.lane.b32.xlu0 %v3059, 32
  %v3188 = vpop.permute.xlu0 %3187
  %3189 = vrot.lane.b32.xlu0 %v3060, 32
  %v3190 = vpop.permute.xlu0 %3189
  %3191 = vrot.lane.b32.xlu0 %v3061, 32
  %v3192 = vpop.permute.xlu0 %3191
  %3193 = vrot.lane.b32.xlu0 %v3062, 32
  %v3194 = vpop.permute.xlu0 %3193
  %3195 = vrot.lane.b32.xlu0 %v3063, 32
  %v3196 = vpop.permute.xlu0 %3195
  %3197 = vrot.lane.b32.xlu0 %v3064, 32
  %v3198 = vpop.permute.xlu0 %3197
  %3199 = vrot.lane.b32.xlu0 %v3065, 32
  %v3200 = vpop.permute.xlu0 %3199
  %3201 = vrot.lane.b32.xlu0 %v3066, 32
  %v3202 = vpop.permute.xlu0 %3201
  %3203 = vrot.lane.b32.xlu0 %v3067, 32
  %v3204 = vpop.permute.xlu0 %3203
  %3205 = vrot.lane.b32.xlu0 %v3068, 32
  %v3206 = vpop.permute.xlu0 %3205
  %3207 = vrot.lane.b32.xlu0 %v3069, 32
  %v3208 = vpop.permute.xlu0 %3207
  %3209 = vrot.lane.b32.xlu0 %v3070, 32
  %v3210 = vpop.permute.xlu0 %3209
  %3211 = vrot.lane.b32.xlu0 %v3071, 32
  %v3212 = vpop.permute.xlu0 %3211
  %3213 = vrot.lane.b32.xlu0 %v3072, 32
  %v3214 = vpop.permute.xlu0 %3213
  %3215 = vrot.lane.b32.xlu0 %v3073, 32
  %v3216 = vpop.permute.xlu0 %3215
  %3217 = vrot.lane.b32.xlu0 %v3074, 32
  %v3218 = vpop.permute.xlu0 %3217
  %3219 = vrot.lane.b32.xlu0 %v3075, 32
  %v3220 = vpop.permute.xlu0 %3219
  %3221 = vrot.lane.b32.xlu0 %v3076, 32
  %v3222 = vpop.permute.xlu0 %3221
  %3223 = vrot.lane.b32.xlu0 %v3077, 32
  %v3224 = vpop.permute.xlu0 %3223
  %3225 = vrot.lane.b32.xlu0 %v3078, 32
  %v3226 = vpop.permute.xlu0 %3225
  %3227 = vrot.lane.b32.xlu0 %v3079, 32
  %v3228 = vpop.permute.xlu0 %3227
  %3229 = vrot.lane.b32.xlu0 %v3080, 32
  %v3230 = vpop.permute.xlu0 %3229
  %3231 = vrot.lane.b32.xlu0 %v3081, 32
  %v3232 = vpop.permute.xlu0 %3231
  %3233 = vrot.lane.b32.xlu0 %v3082, 32
  %v3234 = vpop.permute.xlu0 %3233
  %3235 = vrot.lane.b32.xlu0 %v3083, 32
  %v3236 = vpop.permute.xlu0 %3235
  %3237 = vrot.lane.b32.xlu0 %v3084, 32
  %v3238 = vpop.permute.xlu0 %3237
  %3239 = vrot.lane.b32.xlu0 %v3085, 32
  %v3240 = vpop.permute.xlu0 %3239
  %3241 = vrot.lane.b32.xlu0 %v3086, 32
  %v3242 = vpop.permute.xlu0 %3241
  %3243 = vrot.lane.b32.xlu0 %v3087, 32
  %v3244 = vpop.permute.xlu0 %3243
  %3245 = vrot.lane.b32.xlu0 %v3088, 32
  %v3246 = vpop.permute.xlu0 %3245
  %3247 = vrot.lane.b32.xlu0 %v3089, 32
  %v3248 = vpop.permute.xlu0 %3247
  %3249 = vrot.lane.b32.xlu0 %v3090, 32
  %v3250 = vpop.permute.xlu0 %3249
  %3251 = vrot.lane.b32.xlu0 %v3091, 32
  %v3252 = vpop.permute.xlu0 %3251
  %3253 = vrot.lane.b32.xlu0 %v3092, 32
  %v3254 = vpop.permute.xlu0 %3253
  %3255 = vrot.lane.b32.xlu0 %v3093, 32
  %v3256 = vpop.permute.xlu0 %3255
  %3257 = vrot.lane.b32.xlu0 %v3094, 32
  %v3258 = vpop.permute.xlu0 %3257
  %3259 = vrot.lane.b32.xlu0 %v3095, 32
  %v3260 = vpop.permute.xlu0 %3259
  %3261 = vrot.lane.b32.xlu0 %v3096, 32
  %v3262 = vpop.permute.xlu0 %3261
  %3263 = vrot.lane.b32.xlu0 %v3097, 32
  %v3264 = vpop.permute.xlu0 %3263
  %3265 = vrot.lane.b32.xlu0 %v3098, 32
  %v3266 = vpop.permute.xlu0 %3265
  %3267 = vrot.lane.b32.xlu0 %v3099, 32
  %v3268 = vpop.permute.xlu0 %3267
  %3269 = vrot.lane.b32.xlu0 %v3100, 32
  %v3270 = vpop.permute.xlu0 %3269
  %3271 = vrot.lane.b32.xlu0 %v3101, 32
  %v3272 = vpop.permute.xlu0 %3271
  %3273 = vrot.lane.b32.xlu0 %v3102, 32
  %v3274 = vpop.permute.xlu0 %3273
  %3275 = vrot.lane.b32.xlu0 %v3103, 32
  %v3276 = vpop.permute.xlu0 %3275
  %3277 = vrot.lane.b32.xlu0 %v3104, 32
  %v3278 = vpop.permute.xlu0 %3277
  %3279 = vrot.lane.b32.xlu0 %v3105, 32
  %v3280 = vpop.permute.xlu0 %3279
  %3281 = vrot.lane.b32.xlu0 %v3106, 32
  %v3282 = vpop.permute.xlu0 %3281
  %3283 = vrot.lane.b32.xlu0 %v3107, 32
  %v3284 = vpop.permute.xlu0 %3283
  %3285 = vrot.lane.b32.xlu0 %v3108, 32
  %v3286 = vpop.permute.xlu0 %3285
  %3287 = vrot.lane.b32.xlu0 %v3109, 32
  %v3288 = vpop.permute.xlu0 %3287
  %3289 = vrot.lane.b32.xlu0 %v3110, 32
  %v3290 = vpop.permute.xlu0 %3289
  %3291 = vrot.lane.b32.xlu0 %v3111, 32
  %v3292 = vpop.permute.xlu0 %3291
  %3293 = vrot.lane.b32.xlu0 %v3112, 32
  %v3294 = vpop.permute.xlu0 %3293
  %3295 = vrot.lane.b32.xlu0 %v3113, 32
  %v3296 = vpop.permute.xlu0 %3295
  %3297 = vrot.lane.b32.xlu0 %v3114, 32
  %v3298 = vpop.permute.xlu0 %3297
  %3299 = vrot.lane.b32.xlu0 %v3115, 32
  %v3300 = vpop.permute.xlu0 %3299
  %3301 = vrot.lane.b32.xlu0 %v3116, 32
  %v3302 = vpop.permute.xlu0 %3301
  %3303 = vrot.lane.b32.xlu0 %v3117, 32
  %v3304 = vpop.permute.xlu0 %3303
  %3305 = vrot.lane.b32.xlu0 %v3118, 32
  %v3306 = vpop.permute.xlu0 %3305
  %3307 = vrot.lane.b32.xlu0 %v3119, 32
  %v3308 = vpop.permute.xlu0 %3307
  %3309 = vrot.lane.b32.xlu0 %v3120, 32
  %v3310 = vpop.permute.xlu0 %3309
  %3311 = vrot.lane.b32.xlu0 %v3121, 32
  %v3312 = vpop.permute.xlu0 %3311
  %3313 = vrot.lane.b32.xlu0 %v3122, 32
  %v3314 = vpop.permute.xlu0 %3313
  %vm3379 = vcmask 294144
  %3380 = vst.msk [vmem:[#allocation3] sm:$0xff] %vm3379, %v3188
  %3381 = vst.msk [vmem:[#allocation3 + $0x8] sm:$0xff] %vm3379, %v3190
  %3382 = vst.msk [vmem:[#allocation3 + $0x10] sm:$0xff] %vm3379, %v3192
  %3383 = vst.msk [vmem:[#allocation3 + $0x18] sm:$0xff] %vm3379, %v3194
  %3384 = vst.msk [vmem:[#allocation3 + $0x20] sm:$0xff] %vm3379, %v3196
  %3385 = vst.msk [vmem:[#allocation3 + $0x28] sm:$0xff] %vm3379, %v3198
  %3386 = vst.msk [vmem:[#allocation3 + $0x30] sm:$0xff] %vm3379, %v3200
  %3387 = vst.msk [vmem:[#allocation3 + $0x38] sm:$0xff] %vm3379, %v3202
  %3388 = vst.msk [vmem:[#allocation3 + $0x40] sm:$0xff] %vm3379, %v3204
  %3389 = vst.msk [vmem:[#allocation3 + $0x48] sm:$0xff] %vm3379, %v3206
  %3390 = vst.msk [vmem:[#allocation3 + $0x50] sm:$0xff] %vm3379, %v3208
  %3391 = vst.msk [vmem:[#allocation3 + $0x58] sm:$0xff] %vm3379, %v3210
  %3392 = vst.msk [vmem:[#allocation3 + $0x60] sm:$0xff] %vm3379, %v3212
  %3393 = vst.msk [vmem:[#allocation3 + $0x68] sm:$0xff] %vm3379, %v3214
  %3394 = vst.msk [vmem:[#allocation3 + $0x70] sm:$0xff] %vm3379, %v3216
  %3395 = vst.msk [vmem:[#allocation3 + $0x78] sm:$0xff] %vm3379, %v3218
  %3396 = vst.msk [vmem:[#allocation3 + $0x80] sm:$0xff] %vm3379, %v3220
  %3397 = vst.msk [vmem:[#allocation3 + $0x88] sm:$0xff] %vm3379, %v3222
  %3398 = vst.msk [vmem:[#allocation3 + $0x90] sm:$0xff] %vm3379, %v3224
  %3399 = vst.msk [vmem:[#allocation3 + $0x98] sm:$0xff] %vm3379, %v3226
  %3400 = vst.msk [vmem:[#allocation3 + $0xa0] sm:$0xff] %vm3379, %v3228
  %3401 = vst.msk [vmem:[#allocation3 + $0xa8] sm:$0xff] %vm3379, %v3230
  %3402 = vst.msk [vmem:[#allocation3 + $0xb0] sm:$0xff] %vm3379, %v3232
  %3403 = vst.msk [vmem:[#allocation3 + $0xb8] sm:$0xff] %vm3379, %v3234
  %3404 = vst.msk [vmem:[#allocation3 + $0xc0] sm:$0xff] %vm3379, %v3236
  %3405 = vst.msk [vmem:[#allocation3 + $0xc8] sm:$0xff] %vm3379, %v3238
  %3406 = vst.msk [vmem:[#allocation3 + $0xd0] sm:$0xff] %vm3379, %v3240
  %3407 = vst.msk [vmem:[#allocation3 + $0xd8] sm:$0xff] %vm3379, %v3242
  %3408 = vst.msk [vmem:[#allocation3 + $0xe0] sm:$0xff] %vm3379, %v3244
  %3409 = vst.msk [vmem:[#allocation3 + $0xe8] sm:$0xff] %vm3379, %v3246
  %3410 = vst.msk [vmem:[#allocation3 + $0xf0] sm:$0xff] %vm3379, %v3248
  %3411 = vst.msk [vmem:[#allocation3 + $0xf8] sm:$0xff] %vm3379, %v3250
  %3412 = vst.msk [vmem:[#allocation3 + $0x100] sm:$0xff] %vm3379, %v3252
  %3413 = vst.msk [vmem:[#allocation3 + $0x108] sm:$0xff] %vm3379, %v3254
  %3414 = vst.msk [vmem:[#allocation3 + $0x110] sm:$0xff] %vm3379, %v3256
  %3415 = vst.msk [vmem:[#allocation3 + $0x118] sm:$0xff] %vm3379, %v3258
  %3416 = vst.msk [vmem:[#allocation3 + $0x120] sm:$0xff] %vm3379, %v3260
  %3417 = vst.msk [vmem:[#allocation3 + $0x128] sm:$0xff] %vm3379, %v3262
  %3418 = vst.msk [vmem:[#allocation3 + $0x130] sm:$0xff] %vm3379, %v3264
  %3419 = vst.msk [vmem:[#allocation3 + $0x138] sm:$0xff] %vm3379, %v3266
  %3420 = vst.msk [vmem:[#allocation3 + $0x140] sm:$0xff] %vm3379, %v3268
  %3421 = vst.msk [vmem:[#allocation3 + $0x148] sm:$0xff] %vm3379, %v3270
  %3422 = vst.msk [vmem:[#allocation3 + $0x150] sm:$0xff] %vm3379, %v3272
  %3423 = vst.msk [vmem:[#allocation3 + $0x158] sm:$0xff] %vm3379, %v3274
  %3424 = vst.msk [vmem:[#allocation3 + $0x160] sm:$0xff] %vm3379, %v3276
  %3425 = vst.msk [vmem:[#allocation3 + $0x168] sm:$0xff] %vm3379, %v3278
  %3426 = vst.msk [vmem:[#allocation3 + $0x170] sm:$0xff] %vm3379, %v3280
  %3427 = vst.msk [vmem:[#allocation3 + $0x178] sm:$0xff] %vm3379, %v3282
  %3428 = vst.msk [vmem:[#allocation3 + $0x180] sm:$0xff] %vm3379, %v3284
  %3429 = vst.msk [vmem:[#allocation3 + $0x188] sm:$0xff] %vm3379, %v3286
  %3430 = vst.msk [vmem:[#allocation3 + $0x190] sm:$0xff] %vm3379, %v3288
  %3431 = vst.msk [vmem:[#allocation3 + $0x198] sm:$0xff] %vm3379, %v3290
  %3432 = vst.msk [vmem:[#allocation3 + $0x1a0] sm:$0xff] %vm3379, %v3292
  %3433 = vst.msk [vmem:[#allocation3 + $0x1a8] sm:$0xff] %vm3379, %v3294
  %3434 = vst.msk [vmem:[#allocation3 + $0x1b0] sm:$0xff] %vm3379, %v3296
  %3435 = vst.msk [vmem:[#allocation3 + $0x1b8] sm:$0xff] %vm3379, %v3298
  %3436 = vst.msk [vmem:[#allocation3 + $0x1c0] sm:$0xff] %vm3379, %v3300
  %3437 = vst.msk [vmem:[#allocation3 + $0x1c8] sm:$0xff] %vm3379, %v3302
  %3438 = vst.msk [vmem:[#allocation3 + $0x1d0] sm:$0xff] %vm3379, %v3304
  %3439 = vst.msk [vmem:[#allocation3 + $0x1d8] sm:$0xff] %vm3379, %v3306
  %3440 = vst.msk [vmem:[#allocation3 + $0x1e0] sm:$0xff] %vm3379, %v3308
  %3441 = vst.msk [vmem:[#allocation3 + $0x1e8] sm:$0xff] %vm3379, %v3310
  %3442 = vst.msk [vmem:[#allocation3 + $0x1f0] sm:$0xff] %vm3379, %v3312
  %3443 = vst.msk [vmem:[#allocation3 + $0x1f8] sm:$0xff] %vm3379, %v3314
  %v3444 = vld [vmem:[#allocation3] sm:$0xff]
  %v3445 = vld [vmem:[#allocation3 + $0x8] sm:$0xff]
  %v3446 = vld [vmem:[#allocation3 + $0x10] sm:$0xff]
  %v3447 = vld [vmem:[#allocation3 + $0x18] sm:$0xff]
  %v3448 = vld [vmem:[#allocation3 + $0x20] sm:$0xff]
  %v3449 = vld [vmem:[#allocation3 + $0x28] sm:$0xff]
  %v3450 = vld [vmem:[#allocation3 + $0x30] sm:$0xff]
  %v3451 = vld [vmem:[#allocation3 + $0x38] sm:$0xff]
  %v3452 = vld [vmem:[#allocation3 + $0x40] sm:$0xff]
  %v3453 = vld [vmem:[#allocation3 + $0x48] sm:$0xff]
  %v3454 = vld [vmem:[#allocation3 + $0x50] sm:$0xff]
  %v3455 = vld [vmem:[#allocation3 + $0x58] sm:$0xff]
  %v3456 = vld [vmem:[#allocation3 + $0x60] sm:$0xff]
  %v3457 = vld [vmem:[#allocation3 + $0x68] sm:$0xff]
  %v3458 = vld [vmem:[#allocation3 + $0x70] sm:$0xff]
  %v3459 = vld [vmem:[#allocation3 + $0x78] sm:$0xff]
  %v3460 = vld [vmem:[#allocation3 + $0x80] sm:$0xff]
  %v3461 = vld [vmem:[#allocation3 + $0x88] sm:$0xff]
  %v3462 = vld [vmem:[#allocation3 + $0x90] sm:$0xff]
  %v3463 = vld [vmem:[#allocation3 + $0x98] sm:$0xff]
  %v3464 = vld [vmem:[#allocation3 + $0xa0] sm:$0xff]
  %v3465 = vld [vmem:[#allocation3 + $0xa8] sm:$0xff]
  %v3466 = vld [vmem:[#allocation3 + $0xb0] sm:$0xff]
  %v3467 = vld [vmem:[#allocation3 + $0xb8] sm:$0xff]
  %v3468 = vld [vmem:[#allocation3 + $0xc0] sm:$0xff]
  %v3469 = vld [vmem:[#allocation3 + $0xc8] sm:$0xff]
  %v3470 = vld [vmem:[#allocation3 + $0xd0] sm:$0xff]
  %v3471 = vld [vmem:[#allocation3 + $0xd8] sm:$0xff]
  %v3472 = vld [vmem:[#allocation3 + $0xe0] sm:$0xff]
  %v3473 = vld [vmem:[#allocation3 + $0xe8] sm:$0xff]
  %v3474 = vld [vmem:[#allocation3 + $0xf0] sm:$0xff]
  %v3475 = vld [vmem:[#allocation3 + $0xf8] sm:$0xff]
  %v3476 = vld [vmem:[#allocation3 + $0x100] sm:$0xff]
  %v3477 = vld [vmem:[#allocation3 + $0x108] sm:$0xff]
  %v3478 = vld [vmem:[#allocation3 + $0x110] sm:$0xff]
  %v3479 = vld [vmem:[#allocation3 + $0x118] sm:$0xff]
  %v3480 = vld [vmem:[#allocation3 + $0x120] sm:$0xff]
  %v3481 = vld [vmem:[#allocation3 + $0x128] sm:$0xff]
  %v3482 = vld [vmem:[#allocation3 + $0x130] sm:$0xff]
  %v3483 = vld [vmem:[#allocation3 + $0x138] sm:$0xff]
  %v3484 = vld [vmem:[#allocation3 + $0x140] sm:$0xff]
  %v3485 = vld [vmem:[#allocation3 + $0x148] sm:$0xff]
  %v3486 = vld [vmem:[#allocation3 + $0x150] sm:$0xff]
  %v3487 = vld [vmem:[#allocation3 + $0x158] sm:$0xff]
  %v3488 = vld [vmem:[#allocation3 + $0x160] sm:$0xff]
  %v3489 = vld [vmem:[#allocation3 + $0x168] sm:$0xff]
  %v3490 = vld [vmem:[#allocation3 + $0x170] sm:$0xff]
  %v3491 = vld [vmem:[#allocation3 + $0x178] sm:$0xff]
  %v3492 = vld [vmem:[#allocation3 + $0x180] sm:$0xff]
  %v3493 = vld [vmem:[#allocation3 + $0x188] sm:$0xff]
  %v3494 = vld [vmem:[#allocation3 + $0x190] sm:$0xff]
  %v3495 = vld [vmem:[#allocation3 + $0x198] sm:$0xff]
  %v3496 = vld [vmem:[#allocation3 + $0x1a0] sm:$0xff]
  %v3497 = vld [vmem:[#allocation3 + $0x1a8] sm:$0xff]
  %v3498 = vld [vmem:[#allocation3 + $0x1b0] sm:$0xff]
  %v3499 = vld [vmem:[#allocation3 + $0x1b8] sm:$0xff]
  %v3500 = vld [vmem:[#allocation3 + $0x1c0] sm:$0xff]
  %v3501 = vld [vmem:[#allocation3 + $0x1c8] sm:$0xff]
  %v3502 = vld [vmem:[#allocation3 + $0x1d0] sm:$0xff]
  %v3503 = vld [vmem:[#allocation3 + $0x1d8] sm:$0xff]
  %v3504 = vld [vmem:[#allocation3 + $0x1e0] sm:$0xff]
  %v3505 = vld [vmem:[#allocation3 + $0x1e8] sm:$0xff]
  %v3506 = vld [vmem:[#allocation3 + $0x1f0] sm:$0xff]
  %v3507 = vld [vmem:[#allocation3 + $0x1f8] sm:$0xff]
  %v3508 = vld [vmem:[%s1] sm:$0xff]
  %v3509 = vld [vmem:[%s1 + $0x8] sm:$0xff]
  %v3510 = vld [vmem:[%s1 + $0x10] sm:$0xff]
  %v3511 = vld [vmem:[%s1 + $0x18] sm:$0xff]
  %v3512 = vld [vmem:[%s1 + $0x20] sm:$0xf]
  %vm3513 = vcmask 293888
  %v3515 = vsel %vm3513, %v3444, 0
  %v3518 = vsel %vm3513, %v3445, 0
  %v3521 = vsel %vm3513, %v3446, 0
  %v3524 = vsel %vm3513, %v3447, 0
  %v3527 = vsel %vm3513, %v3448, 0
  %v3530 = vsel %vm3513, %v3449, 0
  %v3533 = vsel %vm3513, %v3450, 0
  %v3536 = vsel %vm3513, %v3451, 0
  %v3539 = vsel %vm3513, %v3452, 0
  %v3542 = vsel %vm3513, %v3453, 0
  %v3545 = vsel %vm3513, %v3454, 0
  %v3548 = vsel %vm3513, %v3455, 0
  %v3551 = vsel %vm3513, %v3456, 0
  %v3554 = vsel %vm3513, %v3457, 0
  %v3557 = vsel %vm3513, %v3458, 0
  %v3560 = vsel %vm3513, %v3459, 0
  %v3563 = vsel %vm3513, %v3460, 0
  %v3566 = vsel %vm3513, %v3461, 0
  %v3569 = vsel %vm3513, %v3462, 0
  %v3572 = vsel %vm3513, %v3463, 0
  %v3575 = vsel %vm3513, %v3464, 0
  %v3578 = vsel %vm3513, %v3465, 0
  %v3581 = vsel %vm3513, %v3466, 0
  %v3584 = vsel %vm3513, %v3467, 0
  %v3587 = vsel %vm3513, %v3468, 0
  %v3590 = vsel %vm3513, %v3469, 0
  %v3593 = vsel %vm3513, %v3470, 0
  %v3596 = vsel %vm3513, %v3471, 0
  %v3599 = vsel %vm3513, %v3472, 0
  %v3602 = vsel %vm3513, %v3473, 0
  %v3605 = vsel %vm3513, %v3474, 0
  %v3608 = vsel %vm3513, %v3475, 0
  %v3611 = vsel %vm3513, %v3476, 0
  %v3614 = vsel %vm3513, %v3477, 0
  %v3617 = vsel %vm3513, %v3478, 0
  %v3620 = vsel %vm3513, %v3479, 0
  %v3623 = vsel %vm3513, %v3480, 0
  %v3626 = vsel %vm3513, %v3481, 0
  %v3629 = vsel %vm3513, %v3482, 0
  %v3632 = vsel %vm3513, %v3483, 0
  %v3635 = vsel %vm3513, %v3484, 0
  %v3638 = vsel %vm3513, %v3485, 0
  %v3641 = vsel %vm3513, %v3486, 0
  %v3644 = vsel %vm3513, %v3487, 0
  %v3647 = vsel %vm3513, %v3488, 0
  %v3650 = vsel %vm3513, %v3489, 0
  %v3653 = vsel %vm3513, %v3490, 0
  %v3656 = vsel %vm3513, %v3491, 0
  %v3659 = vsel %vm3513, %v3492, 0
  %v3662 = vsel %vm3513, %v3493, 0
  %v3665 = vsel %vm3513, %v3494, 0
  %v3668 = vsel %vm3513, %v3495, 0
  %v3671 = vsel %vm3513, %v3496, 0
  %v3674 = vsel %vm3513, %v3497, 0
  %v3677 = vsel %vm3513, %v3498, 0
  %v3680 = vsel %vm3513, %v3499, 0
  %v3683 = vsel %vm3513, %v3500, 0
  %v3686 = vsel %vm3513, %v3501, 0
  %v3689 = vsel %vm3513, %v3502, 0
  %v3692 = vsel %vm3513, %v3503, 0
  %v3695 = vsel %vm3513, %v3504, 0
  %v3698 = vsel %vm3513, %v3505, 0
  %v3701 = vsel %vm3513, %v3506, 0
  %v3704 = vsel %vm3513, %v3507, 0
  %vm3706 = vcmask 1043456
  %v3708 = vsel %vm3706, %v3512, 0
  %3710 = vmatprep.subr.mxu0 0.0
  %3711 = vmatpush1.msra.mxu0 %v3508
  %3712 = vmatprep.subr.mxu0 0.0
  %3713 = vmatpush1.msra.mxu0 %v3509
  %3714 = vmatprep.subr.mxu0 0.0
  %3715 = vmatpush1.msra.mxu0 %v3510
  %3716 = vmatprep.subr.mxu0 0.0
  %3717 = vmatpush1.msra.mxu0 %v3511
  %3718 = vmatprep.subr.mxu0 0.0
  %3719 = vmatpush1.msra.mxu0 %v3708
  %3720 = vmatprep.subr.mxu0 0.0
  %3721 = vmatpush1.msra.mxu0 0.0
  %3722 = vmatprep.subr.mxu0 0.0
  %3723 = vmatpush1.msra.mxu0 0.0
  %3724 = vmatprep.subr.mxu0 0.0
  %3725 = vmatpush1.msra.mxu0 0.0
  %3726 = vmatprep.subr.mxu0 0.0
  %3727 = vmatpush1.msra.mxu0 0.0
  %3728 = vmatprep.subr.mxu0 0.0
  %3729 = vmatpush1.msra.mxu0 0.0
  %3730 = vmatprep.subr.mxu0 0.0
  %3731 = vmatpush1.msra.mxu0 0.0
  %3732 = vmatprep.subr.mxu0 0.0
  %3733 = vmatpush1.msra.mxu0 0.0
  %3734 = vmatprep.subr.mxu0 0.0
  %3735 = vmatpush1.msra.mxu0 0.0
  %3736 = vmatprep.subr.mxu0 0.0
  %3737 = vmatpush1.msra.mxu0 0.0
  %3738 = vmatprep.subr.mxu0 0.0
  %3739 = vmatpush1.msra.mxu0 0.0
  %3740 = vmatprep.subr.mxu0 0.0
  %3741 = vmatpush1.msra.mxu0 0.0
  %3742 = vmatprep.subr.mxu0 0.0
  %3743 = vmatpush1.msra.mxu0 0.0
  %3744 = vmatprep.subr.mxu0 0.0
  %3745 = vmatpush1.msra.mxu0 0.0
  %3746 = vmatprep.subr.mxu0 0.0
  %3747 = vmatpush1.msra.mxu0 0.0
  %3748 = vmatprep.subr.mxu0 0.0
  %3749 = vmatpush1.msra.mxu0 0.0
  %3750 = vmatprep.subr.mxu0 0.0
  %3751 = vmatpush1.msra.mxu0 0.0
  %3752 = vmatprep.subr.mxu0 0.0
  %3753 = vmatpush1.msra.mxu0 0.0
  %3754 = vmatprep.subr.mxu0 0.0
  %3755 = vmatpush1.msra.mxu0 0.0
  %3756 = vmatprep.subr.mxu0 0.0
  %3757 = vmatpush1.msra.mxu0 0.0
  %3758 = vmatprep.subr.mxu0 0.0
  %3759 = vmatpush1.msra.mxu0 0.0
  %3760 = vmatprep.subr.mxu0 0.0
  %3761 = vmatpush1.msra.mxu0 0.0
  %3762 = vmatprep.subr.mxu0 0.0
  %3763 = vmatpush1.msra.mxu0 0.0
  %3764 = vmatprep.subr.mxu0 0.0
  %3765 = vmatpush1.msra.mxu0 0.0
  %3766 = vmatprep.subr.mxu0 0.0
  %3767 = vmatpush1.msra.mxu0 0.0
  %3768 = vmatprep.subr.mxu0 0.0
  %3769 = vmatpush1.msra.mxu0 0.0
  %3770 = vmatprep.subr.mxu0 0.0
  %3771 = vmatpush1.msra.mxu0 0.0
  %3772 = vmatprep.subr.mxu0 0.0
  %3773 = vmatpush1.msra.mxu0 0.0
  %3774 = vmatprep.mubr.f32.mxu0 0.0
  %3775 = vmatmul.mubr.f32.gmra.mrb[0].mxu0 %v3515
  %v3776 = vpop.f32.mrb[0].mxu0
  %v3777 = vadd.f32 0.0, %v3776
  %v3778 = vpop.f32.mrb[0].mxu0
  %3779 = vmatprep.mubr.f32.mxu0 0.0
  %3780 = vmatmul.mubr.f32.gmra.mrb[0].mxu0 %v3518
  %v3781 = vpop.f32.mrb[0].mxu0
  %v3782 = vadd.f32 0.0, %v3781
  %v3783 = vpop.f32.mrb[0].mxu0
  %3784 = vmatprep.mubr.f32.mxu0 0.0
  %3785 = vmatmul.mubr.f32.gmra.mrb[0].mxu0 %v3521
  %v3786 = vpop.f32.mrb[0].mxu0
  %v3787 = vadd.f32 0.0, %v3786
  %v3788 = vpop.f32.mrb[0].mxu0
  %3789 = vmatprep.mubr.f32.mxu0 0.0
  %3790 = vmatmul.mubr.f32.gmra.mrb[0].mxu0 %v3524
  %v3791 = vpop.f32.mrb[0].mxu0
  %v3792 = vadd.f32 0.0, %v3791
  %v3793 = vpop.f32.mrb[0].mxu0
  %3794 = vmatprep.mubr.f32.mxu0 0.0
  %3795 = vmatmul.mubr.f32.gmra.mrb[0].mxu0 %v3527
  %v3796 = vpop.f32.mrb[0].mxu0
  %v3797 = vadd.f32 0.0, %v3796
  %v3798 = vpop.f32.mrb[0].mxu0
  %3799 = vmatprep.mubr.f32.mxu0 0.0
  %3800 = vmatmul.mubr.f32.gmra.mrb[0].mxu0 %v3530
  %v3801 = vpop.f32.mrb[0].mxu0
  %v3802 = vadd.f32 0.0, %v3801
  %v3803 = vpop.f32.mrb[0].mxu0
  %3804 = vmatprep.mubr.f32.mxu0 0.0
  %3805 = vmatmul.mubr.f32.gmra.mrb[0].mxu0 %v3533
  %v3806 = vpop.f32.mrb[0].mxu0
  %v3807 = vadd.f32 0.0, %v3806
  %v3808 = vpop.f32.mrb[0].mxu0
  %3809 = vmatprep.mubr.f32.mxu0 0.0
  %3810 = vmatmul.mubr.f32.gmra.mrb[0].mxu0 %v3536
  %v3811 = vpop.f32.mrb[0].mxu0
  %v3812 = vadd.f32 0.0, %v3811
  %v3813 = vpop.f32.mrb[0].mxu0
  %3814 = vmatprep.mubr.f32.mxu0 0.0
  %3815 = vmatmul.mubr.f32.gmra.mrb[0].mxu0 %v3539
  %v3816 = vpop.f32.mrb[0].mxu0
  %v3817 = vadd.f32 0.0, %v3816
  %v3818 = vpop.f32.mrb[0].mxu0
  %3819 = vmatprep.mubr.f32.mxu0 0.0
  %3820 = vmatmul.mubr.f32.gmra.mrb[0].mxu0 %v3542
  %v3821 = vpop.f32.mrb[0].mxu0
  %v3822 = vadd.f32 0.0, %v3821
  %v3823 = vpop.f32.mrb[0].mxu0
  %3824 = vmatprep.mubr.f32.mxu0 0.0
  %3825 = vmatmul.mubr.f32.gmra.mrb[0].mxu0 %v3545
  %v3826 = vpop.f32.mrb[0].mxu0
  %v3827 = vadd.f32 0.0, %v3826
  %v3828 = vpop.f32.mrb[0].mxu0
  %3829 = vmatprep.mubr.f32.mxu0 0.0
  %3830 = vmatmul.mubr.f32.gmra.mrb[0].mxu0 %v3548
  %v3831 = vpop.f32.mrb[0].mxu0
  %v3832 = vadd.f32 0.0, %v3831
  %v3833 = vpop.f32.mrb[0].mxu0
  %3834 = vmatprep.mubr.f32.mxu0 0.0
  %3835 = vmatmul.mubr.f32.gmra.mrb[0].mxu0 %v3551
  %v3836 = vpop.f32.mrb[0].mxu0
  %v3837 = vadd.f32 0.0, %v3836
  %v3838 = vpop.f32.mrb[0].mxu0
  %3839 = vmatprep.mubr.f32.mxu0 0.0
  %3840 = vmatmul.mubr.f32.gmra.mrb[0].mxu0 %v3554
  %v3841 = vpop.f32.mrb[0].mxu0
  %v3842 = vadd.f32 0.0, %v3841
  %v3843 = vpop.f32.mrb[0].mxu0
  %3844 = vmatprep.mubr.f32.mxu0 0.0
  %3845 = vmatmul.mubr.f32.gmra.mrb[0].mxu0 %v3557
  %v3846 = vpop.f32.mrb[0].mxu0
  %v3847 = vadd.f32 0.0, %v3846
  %v3848 = vpop.f32.mrb[0].mxu0
  %3849 = vmatprep.mubr.f32.mxu0 0.0
  %3850 = vmatmul.mubr.f32.gmra.mrb[0].mxu0 %v3560
  %v3851 = vpop.f32.mrb[0].mxu0
  %v3852 = vadd.f32 0.0, %v3851
  %v3853 = vpop.f32.mrb[0].mxu0
  %3854 = vmatprep.mubr.f32.mxu0 0.0
  %3855 = vmatmul.mubr.f32.gmra.mrb[0].mxu0 %v3563
  %v3856 = vpop.f32.mrb[0].mxu0
  %v3857 = vadd.f32 0.0, %v3856
  %v3858 = vpop.f32.mrb[0].mxu0
  %3859 = vmatprep.mubr.f32.mxu0 0.0
  %3860 = vmatmul.mubr.f32.gmra.mrb[0].mxu0 %v3566
  %v3861 = vpop.f32.mrb[0].mxu0
  %v3862 = vadd.f32 0.0, %v3861
  %v3863 = vpop.f32.mrb[0].mxu0
  %3864 = vmatprep.mubr.f32.mxu0 0.0
  %3865 = vmatmul.mubr.f32.gmra.mrb[0].mxu0 %v3569
  %v3866 = vpop.f32.mrb[0].mxu0
  %v3867 = vadd.f32 0.0, %v3866
  %v3868 = vpop.f32.mrb[0].mxu0
  %3869 = vmatprep.mubr.f32.mxu0 0.0
  %3870 = vmatmul.mubr.f32.gmra.mrb[0].mxu0 %v3572
  %v3871 = vpop.f32.mrb[0].mxu0
  %v3872 = vadd.f32 0.0, %v3871
  %v3873 = vpop.f32.mrb[0].mxu0
  %3874 = vmatprep.mubr.f32.mxu0 0.0
  %3875 = vmatmul.mubr.f32.gmra.mrb[0].mxu0 %v3575
  %v3876 = vpop.f32.mrb[0].mxu0
  %v3877 = vadd.f32 0.0, %v3876
  %v3878 = vpop.f32.mrb[0].mxu0
  %3879 = vmatprep.mubr.f32.mxu0 0.0
  %3880 = vmatmul.mubr.f32.gmra.mrb[0].mxu0 %v3578
  %v3881 = vpop.f32.mrb[0].mxu0
  %v3882 = vadd.f32 0.0, %v3881
  %v3883 = vpop.f32.mrb[0].mxu0
  %3884 = vmatprep.mubr.f32.mxu0 0.0
  %3885 = vmatmul.mubr.f32.gmra.mrb[0].mxu0 %v3581
  %v3886 = vpop.f32.mrb[0].mxu0
  %v3887 = vadd.f32 0.0, %v3886
  %v3888 = vpop.f32.mrb[0].mxu0
  %3889 = vmatprep.mubr.f32.mxu0 0.0
  %3890 = vmatmul.mubr.f32.gmra.mrb[0].mxu0 %v3584
  %v3891 = vpop.f32.mrb[0].mxu0
  %v3892 = vadd.f32 0.0, %v3891
  %v3893 = vpop.f32.mrb[0].mxu0
  %3894 = vmatprep.mubr.f32.mxu0 0.0
  %3895 = vmatmul.mubr.f32.gmra.mrb[0].mxu0 %v3587
  %v3896 = vpop.f32.mrb[0].mxu0
  %v3897 = vadd.f32 0.0, %v3896
  %v3898 = vpop.f32.mrb[0].mxu0
  %3899 = vmatprep.mubr.f32.mxu0 0.0
  %3900 = vmatmul.mubr.f32.gmra.mrb[0].mxu0 %v3590
  %v3901 = vpop.f32.mrb[0].mxu0
  %v3902 = vadd.f32 0.0, %v3901
  %v3903 = vpop.f32.mrb[0].mxu0
  %3904 = vmatprep.mubr.f32.mxu0 0.0
  %3905 = vmatmul.mubr.f32.gmra.mrb[0].mxu0 %v3593
  %v3906 = vpop.f32.mrb[0].mxu0
  %v3907 = vadd.f32 0.0, %v3906
  %v3908 = vpop.f32.mrb[0].mxu0
  %3909 = vmatprep.mubr.f32.mxu0 0.0
  %3910 = vmatmul.mubr.f32.gmra.mrb[0].mxu0 %v3596
  %v3911 = vpop.f32.mrb[0].mxu0
  %v3912 = vadd.f32 0.0, %v3911
  %v3913 = vpop.f32.mrb[0].mxu0
  %3914 = vmatprep.mubr.f32.mxu0 0.0
  %3915 = vmatmul.mubr.f32.gmra.mrb[0].mxu0 %v3599
  %v3916 = vpop.f32.mrb[0].mxu0
  %v3917 = vadd.f32 0.0, %v3916
  %v3918 = vpop.f32.mrb[0].mxu0
  %3919 = vmatprep.mubr.f32.mxu0 0.0
  %3920 = vmatmul.mubr.f32.gmra.mrb[0].mxu0 %v3602
  %v3921 = vpop.f32.mrb[0].mxu0
  %v3922 = vadd.f32 0.0, %v3921
  %v3923 = vpop.f32.mrb[0].mxu0
  %3924 = vmatprep.mubr.f32.mxu0 0.0
  %3925 = vmatmul.mubr.f32.gmra.mrb[0].mxu0 %v3605
  %v3926 = vpop.f32.mrb[0].mxu0
  %v3927 = vadd.f32 0.0, %v3926
  %v3928 = vpop.f32.mrb[0].mxu0
  %3929 = vmatprep.mubr.f32.mxu0 0.0
  %3930 = vmatmul.mubr.f32.gmra.mrb[0].mxu0 %v3608
  %v3931 = vpop.f32.mrb[0].mxu0
  %v3932 = vadd.f32 0.0, %v3931
  %v3933 = vpop.f32.mrb[0].mxu0
  %3934 = vmatprep.mubr.f32.mxu0 0.0
  %3935 = vmatmul.mubr.f32.gmra.mrb[0].mxu0 %v3611
  %v3936 = vpop.f32.mrb[0].mxu0
  %v3937 = vadd.f32 0.0, %v3936
  %v3938 = vpop.f32.mrb[0].mxu0
  %3939 = vmatprep.mubr.f32.mxu0 0.0
  %3940 = vmatmul.mubr.f32.gmra.mrb[0].mxu0 %v3614
  %v3941 = vpop.f32.mrb[0].mxu0
  %v3942 = vadd.f32 0.0, %v3941
  %v3943 = vpop.f32.mrb[0].mxu0
  %3944 = vmatprep.mubr.f32.mxu0 0.0
  %3945 = vmatmul.mubr.f32.gmra.mrb[0].mxu0 %v3617
  %v3946 = vpop.f32.mrb[0].mxu0
  %v3947 = vadd.f32 0.0, %v3946
  %v3948 = vpop.f32.mrb[0].mxu0
  %3949 = vmatprep.mubr.f32.mxu0 0.0
  %3950 = vmatmul.mubr.f32.gmra.mrb[0].mxu0 %v3620
  %v3951 = vpop.f32.mrb[0].mxu0
  %v3952 = vadd.f32 0.0, %v3951
  %v3953 = vpop.f32.mrb[0].mxu0
  %3954 = vmatprep.mubr.f32.mxu0 0.0
  %3955 = vmatmul.mubr.f32.gmra.mrb[0].mxu0 %v3623
  %v3956 = vpop.f32.mrb[0].mxu0
  %v3957 = vadd.f32 0.0, %v3956
  %v3958 = vpop.f32.mrb[0].mxu0
  %3959 = vmatprep.mubr.f32.mxu0 0.0
  %3960 = vmatmul.mubr.f32.gmra.mrb[0].mxu0 %v3626
  %v3961 = vpop.f32.mrb[0].mxu0
  %v3962 = vadd.f32 0.0, %v3961
  %v3963 = vpop.f32.mrb[0].mxu0
  %3964 = vmatprep.mubr.f32.mxu0 0.0
  %3965 = vmatmul.mubr.f32.gmra.mrb[0].mxu0 %v3629
  %v3966 = vpop.f32.mrb[0].mxu0
  %v3967 = vadd.f32 0.0, %v3966
  %v3968 = vpop.f32.mrb[0].mxu0
  %3969 = vmatprep.mubr.f32.mxu0 0.0
  %3970 = vmatmul.mubr.f32.gmra.mrb[0].mxu0 %v3632
  %v3971 = vpop.f32.mrb[0].mxu0
  %v3972 = vadd.f32 0.0, %v3971
  %v3973 = vpop.f32.mrb[0].mxu0
  %3974 = vmatprep.mubr.f32.mxu0 0.0
  %3975 = vmatmul.mubr.f32.gmra.mrb[0].mxu0 %v3635
  %v3976 = vpop.f32.mrb[0].mxu0
  %v3977 = vadd.f32 0.0, %v3976
  %v3978 = vpop.f32.mrb[0].mxu0
  %3979 = vmatprep.mubr.f32.mxu0 0.0
  %3980 = vmatmul.mubr.f32.gmra.mrb[0].mxu0 %v3638
  %v3981 = vpop.f32.mrb[0].mxu0
  %v3982 = vadd.f32 0.0, %v3981
  %v3983 = vpop.f32.mrb[0].mxu0
  %3984 = vmatprep.mubr.f32.mxu0 0.0
  %3985 = vmatmul.mubr.f32.gmra.mrb[0].mxu0 %v3641
  %v3986 = vpop.f32.mrb[0].mxu0
  %v3987 = vadd.f32 0.0, %v3986
  %v3988 = vpop.f32.mrb[0].mxu0
  %3989 = vmatprep.mubr.f32.mxu0 0.0
  %3990 = vmatmul.mubr.f32.gmra.mrb[0].mxu0 %v3644
  %v3991 = vpop.f32.mrb[0].mxu0
  %v3992 = vadd.f32 0.0, %v3991
  %v3993 = vpop.f32.mrb[0].mxu0
  %3994 = vmatprep.mubr.f32.mxu0 0.0
  %3995 = vmatmul.mubr.f32.gmra.mrb[0].mxu0 %v3647
  %v3996 = vpop.f32.mrb[0].mxu0
  %v3997 = vadd.f32 0.0, %v3996
  %v3998 = vpop.f32.mrb[0].mxu0
  %3999 = vmatprep.mubr.f32.mxu0 0.0
  %4000 = vmatmul.mubr.f32.gmra.mrb[0].mxu0 %v3650
  %v4001 = vpop.f32.mrb[0].mxu0
  %v4002 = vadd.f32 0.0, %v4001
  %v4003 = vpop.f32.mrb[0].mxu0
  %4004 = vmatprep.mubr.f32.mxu0 0.0
  %4005 = vmatmul.mubr.f32.gmra.mrb[0].mxu0 %v3653
  %v4006 = vpop.f32.mrb[0].mxu0
  %v4007 = vadd.f32 0.0, %v4006
  %v4008 = vpop.f32.mrb[0].mxu0
  %4009 = vmatprep.mubr.f32.mxu0 0.0
  %4010 = vmatmul.mubr.f32.gmra.mrb[0].mxu0 %v3656
  %v4011 = vpop.f32.mrb[0].mxu0
  %v4012 = vadd.f32 0.0, %v4011
  %v4013 = vpop.f32.mrb[0].mxu0
  %4014 = vmatprep.mubr.f32.mxu0 0.0
  %4015 = vmatmul.mubr.f32.gmra.mrb[0].mxu0 %v3659
  %v4016 = vpop.f32.mrb[0].mxu0
  %v4017 = vadd.f32 0.0, %v4016
  %v4018 = vpop.f32.mrb[0].mxu0
  %4019 = vmatprep.mubr.f32.mxu0 0.0
  %4020 = vmatmul.mubr.f32.gmra.mrb[0].mxu0 %v3662
  %v4021 = vpop.f32.mrb[0].mxu0
  %v4022 = vadd.f32 0.0, %v4021
  %v4023 = vpop.f32.mrb[0].mxu0
  %4024 = vmatprep.mubr.f32.mxu0 0.0
  %4025 = vmatmul.mubr.f32.gmra.mrb[0].mxu0 %v3665
  %v4026 = vpop.f32.mrb[0].mxu0
  %v4027 = vadd.f32 0.0, %v4026
  %v4028 = vpop.f32.mrb[0].mxu0
  %4029 = vmatprep.mubr.f32.mxu0 0.0
  %4030 = vmatmul.mubr.f32.gmra.mrb[0].mxu0 %v3668
  %v4031 = vpop.f32.mrb[0].mxu0
  %v4032 = vadd.f32 0.0, %v4031
  %v4033 = vpop.f32.mrb[0].mxu0
  %4034 = vmatprep.mubr.f32.mxu0 0.0
  %4035 = vmatmul.mubr.f32.gmra.mrb[0].mxu0 %v3671
  %v4036 = vpop.f32.mrb[0].mxu0
  %v4037 = vadd.f32 0.0, %v4036
  %v4038 = vpop.f32.mrb[0].mxu0
  %4039 = vmatprep.mubr.f32.mxu0 0.0
  %4040 = vmatmul.mubr.f32.gmra.mrb[0].mxu0 %v3674
  %v4041 = vpop.f32.mrb[0].mxu0
  %v4042 = vadd.f32 0.0, %v4041
  %v4043 = vpop.f32.mrb[0].mxu0
  %4044 = vmatprep.mubr.f32.mxu0 0.0
  %4045 = vmatmul.mubr.f32.gmra.mrb[0].mxu0 %v3677
  %v4046 = vpop.f32.mrb[0].mxu0
  %v4047 = vadd.f32 0.0, %v4046
  %v4048 = vpop.f32.mrb[0].mxu0
  %4049 = vmatprep.mubr.f32.mxu0 0.0
  %4050 = vmatmul.mubr.f32.gmra.mrb[0].mxu0 %v3680
  %v4051 = vpop.f32.mrb[0].mxu0
  %v4052 = vadd.f32 0.0, %v4051
  %v4053 = vpop.f32.mrb[0].mxu0
  %4054 = vmatprep.mubr.f32.mxu0 0.0
  %4055 = vmatmul.mubr.f32.gmra.mrb[0].mxu0 %v3683
  %v4056 = vpop.f32.mrb[0].mxu0
  %v4057 = vadd.f32 0.0, %v4056
  %v4058 = vpop.f32.mrb[0].mxu0
  %4059 = vmatprep.mubr.f32.mxu0 0.0
  %4060 = vmatmul.mubr.f32.gmra.mrb[0].mxu0 %v3686
  %v4061 = vpop.f32.mrb[0].mxu0
  %v4062 = vadd.f32 0.0, %v4061
  %v4063 = vpop.f32.mrb[0].mxu0
  %4064 = vmatprep.mubr.f32.mxu0 0.0
  %4065 = vmatmul.mubr.f32.gmra.mrb[0].mxu0 %v3689
  %v4066 = vpop.f32.mrb[0].mxu0
  %v4067 = vadd.f32 0.0, %v4066
  %v4068 = vpop.f32.mrb[0].mxu0
  %4069 = vmatprep.mubr.f32.mxu0 0.0
  %4070 = vmatmul.mubr.f32.gmra.mrb[0].mxu0 %v3692
  %v4071 = vpop.f32.mrb[0].mxu0
  %v4072 = vadd.f32 0.0, %v4071
  %v4073 = vpop.f32.mrb[0].mxu0
  %4074 = vmatprep.mubr.f32.mxu0 0.0
  %4075 = vmatmul.mubr.f32.gmra.mrb[0].mxu0 %v3695
  %v4076 = vpop.f32.mrb[0].mxu0
  %v4077 = vadd.f32 0.0, %v4076
  %v4078 = vpop.f32.mrb[0].mxu0
  %4079 = vmatprep.mubr.f32.mxu0 0.0
  %4080 = vmatmul.mubr.f32.gmra.mrb[0].mxu0 %v3698
  %v4081 = vpop.f32.mrb[0].mxu0
  %v4082 = vadd.f32 0.0, %v4081
  %v4083 = vpop.f32.mrb[0].mxu0
  %4084 = vmatprep.mubr.f32.mxu0 0.0
  %4085 = vmatmul.mubr.f32.gmra.mrb[0].mxu0 %v3701
  %v4086 = vpop.f32.mrb[0].mxu0
  %v4087 = vadd.f32 0.0, %v4086
  %v4088 = vpop.f32.mrb[0].mxu0
  %4089 = vmatprep.mubr.f32.mxu0 0.0
  %4090 = vmatmul.mubr.f32.gmra.mrb[0].mxu0 %v3704
  %v4091 = vpop.f32.mrb[0].mxu0
  %v4092 = vadd.f32 0.0, %v4091
  %v4093 = vpop.f32.mrb[0].mxu0
  %4094 = vdwg.mxu0
  %v4095 = vld [vmem:[%s3] sm:$0x1]
  %v4096 = vld [vmem:[%s4] sm:$0x1]
  %v4097 = vsel %vm26, %v3777, 0.0
  %v4098 = vsel %vm26, %v3782, 0.0
  %v4099 = vadd.f32 %v4097, %v4098
  %v4100 = vsel %vm26, %v3787, 0.0
  %v4101 = vadd.f32 %v4099, %v4100
  %v4102 = vsel %vm26, %v3792, 0.0
  %v4103 = vadd.f32 %v4101, %v4102
  %v4104 = vsel %vm26, %v3797, 0.0
  %v4105 = vadd.f32 %v4103, %v4104
  %v4106 = vsel %vm26, %v3802, 0.0
  %v4107 = vadd.f32 %v4105, %v4106
  %v4108 = vsel %vm26, %v3807, 0.0
  %v4109 = vadd.f32 %v4107, %v4108
  %v4110 = vsel %vm26, %v3812, 0.0
  %v4111 = vadd.f32 %v4109, %v4110
  %v4112 = vsel %vm26, %v3817, 0.0
  %v4113 = vadd.f32 %v4111, %v4112
  %v4114 = vsel %vm26, %v3822, 0.0
  %v4115 = vadd.f32 %v4113, %v4114
  %v4116 = vsel %vm26, %v3827, 0.0
  %v4117 = vadd.f32 %v4115, %v4116
  %v4118 = vsel %vm26, %v3832, 0.0
  %v4119 = vadd.f32 %v4117, %v4118
  %v4120 = vsel %vm26, %v3837, 0.0
  %v4121 = vadd.f32 %v4119, %v4120
  %v4122 = vsel %vm26, %v3842, 0.0
  %v4123 = vadd.f32 %v4121, %v4122
  %v4124 = vsel %vm26, %v3847, 0.0
  %v4125 = vadd.f32 %v4123, %v4124
  %v4126 = vsel %vm26, %v3852, 0.0
  %v4127 = vadd.f32 %v4125, %v4126
  %v4128 = vsel %vm26, %v3857, 0.0
  %v4129 = vadd.f32 %v4127, %v4128
  %v4130 = vsel %vm26, %v3862, 0.0
  %v4131 = vadd.f32 %v4129, %v4130
  %v4132 = vsel %vm26, %v3867, 0.0
  %v4133 = vadd.f32 %v4131, %v4132
  %v4134 = vsel %vm26, %v3872, 0.0
  %v4135 = vadd.f32 %v4133, %v4134
  %v4136 = vsel %vm26, %v3877, 0.0
  %v4137 = vadd.f32 %v4135, %v4136
  %v4138 = vsel %vm26, %v3882, 0.0
  %v4139 = vadd.f32 %v4137, %v4138
  %v4140 = vsel %vm26, %v3887, 0.0
  %v4141 = vadd.f32 %v4139, %v4140
  %v4142 = vsel %vm26, %v3892, 0.0
  %v4143 = vadd.f32 %v4141, %v4142
  %v4144 = vsel %vm26, %v3897, 0.0
  %v4145 = vadd.f32 %v4143, %v4144
  %v4146 = vsel %vm26, %v3902, 0.0
  %v4147 = vadd.f32 %v4145, %v4146
  %v4148 = vsel %vm26, %v3907, 0.0
  %v4149 = vadd.f32 %v4147, %v4148
  %v4150 = vsel %vm26, %v3912, 0.0
  %v4151 = vadd.f32 %v4149, %v4150
  %v4152 = vsel %vm26, %v3917, 0.0
  %v4153 = vadd.f32 %v4151, %v4152
  %v4154 = vsel %vm26, %v3922, 0.0
  %v4155 = vadd.f32 %v4153, %v4154
  %v4156 = vsel %vm26, %v3927, 0.0
  %v4157 = vadd.f32 %v4155, %v4156
  %v4158 = vsel %vm26, %v3932, 0.0
  %v4159 = vadd.f32 %v4157, %v4158
  %v4160 = vsel %vm26, %v3937, 0.0
  %v4161 = vadd.f32 %v4159, %v4160
  %v4162 = vsel %vm26, %v3942, 0.0
  %v4163 = vadd.f32 %v4161, %v4162
  %v4164 = vsel %vm26, %v3947, 0.0
  %v4165 = vadd.f32 %v4163, %v4164
  %v4166 = vsel %vm26, %v3952, 0.0
  %v4167 = vadd.f32 %v4165, %v4166
  %v4168 = vsel %vm26, %v3957, 0.0
  %v4169 = vadd.f32 %v4167, %v4168
  %v4170 = vsel %vm26, %v3962, 0.0
  %v4171 = vadd.f32 %v4169, %v4170
  %v4172 = vsel %vm26, %v3967, 0.0
  %v4173 = vadd.f32 %v4171, %v4172
  %v4174 = vsel %vm26, %v3972, 0.0
  %v4175 = vadd.f32 %v4173, %v4174
  %v4176 = vsel %vm26, %v3977, 0.0
  %v4177 = vadd.f32 %v4175, %v4176
  %v4178 = vsel %vm26, %v3982, 0.0
  %v4179 = vadd.f32 %v4177, %v4178
  %v4180 = vsel %vm26, %v3987, 0.0
  %v4181 = vadd.f32 %v4179, %v4180
  %v4182 = vsel %vm26, %v3992, 0.0
  %v4183 = vadd.f32 %v4181, %v4182
  %v4184 = vsel %vm26, %v3997, 0.0
  %v4185 = vadd.f32 %v4183, %v4184
  %v4186 = vsel %vm26, %v4002, 0.0
  %v4187 = vadd.f32 %v4185, %v4186
  %v4188 = vsel %vm26, %v4007, 0.0
  %v4189 = vadd.f32 %v4187, %v4188
  %v4190 = vsel %vm26, %v4012, 0.0
  %v4191 = vadd.f32 %v4189, %v4190
  %v4192 = vsel %vm26, %v4017, 0.0
  %v4193 = vadd.f32 %v4191, %v4192
  %v4194 = vsel %vm26, %v4022, 0.0
  %v4195 = vadd.f32 %v4193, %v4194
  %v4196 = vsel %vm26, %v4027, 0.0
  %v4197 = vadd.f32 %v4195, %v4196
  %v4198 = vsel %vm26, %v4032, 0.0
  %v4199 = vadd.f32 %v4197, %v4198
  %v4200 = vsel %vm26, %v4037, 0.0
  %v4201 = vadd.f32 %v4199, %v4200
  %v4202 = vsel %vm26, %v4042, 0.0
  %v4203 = vadd.f32 %v4201, %v4202
  %v4204 = vsel %vm26, %v4047, 0.0
  %v4205 = vadd.f32 %v4203, %v4204
  %v4206 = vsel %vm26, %v4052, 0.0
  %v4207 = vadd.f32 %v4205, %v4206
  %v4208 = vsel %vm26, %v4057, 0.0
  %v4209 = vadd.f32 %v4207, %v4208
  %v4210 = vsel %vm26, %v4062, 0.0
  %v4211 = vadd.f32 %v4209, %v4210
  %v4212 = vsel %vm26, %v4067, 0.0
  %v4213 = vadd.f32 %v4211, %v4212
  %v4214 = vsel %vm26, %v4072, 0.0
  %v4215 = vadd.f32 %v4213, %v4214
  %v4216 = vsel %vm26, %v4077, 0.0
  %v4217 = vadd.f32 %v4215, %v4216
  %v4218 = vsel %vm26, %v4082, 0.0
  %v4219 = vadd.f32 %v4217, %v4218
  %v4220 = vsel %vm26, %v4087, 0.0
  %v4221 = vadd.f32 %v4219, %v4220
  %v4222 = vsel %vm26, %v4092, 0.0
  %v4223 = vadd.f32 %v4221, %v4222
  %v4224 = vrot.slane %v4223, 4
  %v4225 = vadd.f32 %v4223, %v4224
  %v4226 = vrot.slane %v4225, 2
  %v4227 = vadd.f32 %v4225, %v4226
  %v4228 = vrot.slane %v4227, 1
  %v4229 = vadd.f32 %v4227, %v4228
  %v4230 = vmul.f32 %v3777, %v3777
  %v4231 = vmul.f32 %v3782, %v3782
  %v4232 = vmul.f32 %v3787, %v3787
  %v4233 = vmul.f32 %v3792, %v3792
  %v4234 = vmul.f32 %v3797, %v3797
  %v4235 = vmul.f32 %v3802, %v3802
  %v4236 = vmul.f32 %v3807, %v3807
  %v4237 = vmul.f32 %v3812, %v3812
  %v4238 = vmul.f32 %v3817, %v3817
  %v4239 = vmul.f32 %v3822, %v3822
  %v4240 = vmul.f32 %v3827, %v3827
  %v4241 = vmul.f32 %v3832, %v3832
  %v4242 = vmul.f32 %v3837, %v3837
  %v4243 = vmul.f32 %v3842, %v3842
  %v4244 = vmul.f32 %v3847, %v3847
  %v4245 = vmul.f32 %v3852, %v3852
  %v4246 = vmul.f32 %v3857, %v3857
  %v4247 = vmul.f32 %v3862, %v3862
  %v4248 = vmul.f32 %v3867, %v3867
  %v4249 = vmul.f32 %v3872, %v3872
  %v4250 = vmul.f32 %v3877, %v3877
  %v4251 = vmul.f32 %v3882, %v3882
  %v4252 = vmul.f32 %v3887, %v3887
  %v4253 = vmul.f32 %v3892, %v3892
  %v4254 = vmul.f32 %v3897, %v3897
  %v4255 = vmul.f32 %v3902, %v3902
  %v4256 = vmul.f32 %v3907, %v3907
  %v4257 = vmul.f32 %v3912, %v3912
  %v4258 = vmul.f32 %v3917, %v3917
  %v4259 = vmul.f32 %v3922, %v3922
  %v4260 = vmul.f32 %v3927, %v3927
  %v4261 = vmul.f32 %v3932, %v3932
  %v4262 = vmul.f32 %v3937, %v3937
  %v4263 = vmul.f32 %v3942, %v3942
  %v4264 = vmul.f32 %v3947, %v3947
  %v4265 = vmul.f32 %v3952, %v3952
  %v4266 = vmul.f32 %v3957, %v3957
  %v4267 = vmul.f32 %v3962, %v3962
  %v4268 = vmul.f32 %v3967, %v3967
  %v4269 = vmul.f32 %v3972, %v3972
  %v4270 = vmul.f32 %v3977, %v3977
  %v4271 = vmul.f32 %v3982, %v3982
  %v4272 = vmul.f32 %v3987, %v3987
  %v4273 = vmul.f32 %v3992, %v3992
  %v4274 = vmul.f32 %v3997, %v3997
  %v4275 = vmul.f32 %v4002, %v4002
  %v4276 = vmul.f32 %v4007, %v4007
  %v4277 = vmul.f32 %v4012, %v4012
  %v4278 = vmul.f32 %v4017, %v4017
  %v4279 = vmul.f32 %v4022, %v4022
  %v4280 = vmul.f32 %v4027, %v4027
  %v4281 = vmul.f32 %v4032, %v4032
  %v4282 = vmul.f32 %v4037, %v4037
  %v4283 = vmul.f32 %v4042, %v4042
  %v4284 = vmul.f32 %v4047, %v4047
  %v4285 = vmul.f32 %v4052, %v4052
  %v4286 = vmul.f32 %v4057, %v4057
  %v4287 = vmul.f32 %v4062, %v4062
  %v4288 = vmul.f32 %v4067, %v4067
  %v4289 = vmul.f32 %v4072, %v4072
  %v4290 = vmul.f32 %v4077, %v4077
  %v4291 = vmul.f32 %v4082, %v4082
  %v4292 = vmul.f32 %v4087, %v4087
  %v4293 = vmul.f32 %v4092, %v4092
  %v4294 = vsel %vm26, %v4230, 0.0
  %v4295 = vsel %vm26, %v4231, 0.0
  %v4296 = vadd.f32 %v4294, %v4295
  %v4297 = vsel %vm26, %v4232, 0.0
  %v4298 = vadd.f32 %v4296, %v4297
  %v4299 = vsel %vm26, %v4233, 0.0
  %v4300 = vadd.f32 %v4298, %v4299
  %v4301 = vsel %vm26, %v4234, 0.0
  %v4302 = vadd.f32 %v4300, %v4301
  %v4303 = vsel %vm26, %v4235, 0.0
  %v4304 = vadd.f32 %v4302, %v4303
  %v4305 = vsel %vm26, %v4236, 0.0
  %v4306 = vadd.f32 %v4304, %v4305
  %v4307 = vsel %vm26, %v4237, 0.0
  %v4308 = vadd.f32 %v4306, %v4307
  %v4309 = vsel %vm26, %v4238, 0.0
  %v4310 = vadd.f32 %v4308, %v4309
  %v4311 = vsel %vm26, %v4239, 0.0
  %v4312 = vadd.f32 %v4310, %v4311
  %v4313 = vsel %vm26, %v4240, 0.0
  %v4314 = vadd.f32 %v4312, %v4313
  %v4315 = vsel %vm26, %v4241, 0.0
  %v4316 = vadd.f32 %v4314, %v4315
  %v4317 = vsel %vm26, %v4242, 0.0
  %v4318 = vadd.f32 %v4316, %v4317
  %v4319 = vsel %vm26, %v4243, 0.0
  %v4320 = vadd.f32 %v4318, %v4319
  %v4321 = vsel %vm26, %v4244, 0.0
  %v4322 = vadd.f32 %v4320, %v4321
  %v4323 = vsel %vm26, %v4245, 0.0
  %v4324 = vadd.f32 %v4322, %v4323
  %v4325 = vsel %vm26, %v4246, 0.0
  %v4326 = vadd.f32 %v4324, %v4325
  %v4327 = vsel %vm26, %v4247, 0.0
  %v4328 = vadd.f32 %v4326, %v4327
  %v4329 = vsel %vm26, %v4248, 0.0
  %v4330 = vadd.f32 %v4328, %v4329
  %v4331 = vsel %vm26, %v4249, 0.0
  %v4332 = vadd.f32 %v4330, %v4331
  %v4333 = vsel %vm26, %v4250, 0.0
  %v4334 = vadd.f32 %v4332, %v4333
  %v4335 = vsel %vm26, %v4251, 0.0
  %v4336 = vadd.f32 %v4334, %v4335
  %v4337 = vsel %vm26, %v4252, 0.0
  %v4338 = vadd.f32 %v4336, %v4337
  %v4339 = vsel %vm26, %v4253, 0.0
  %v4340 = vadd.f32 %v4338, %v4339
  %v4341 = vsel %vm26, %v4254, 0.0
  %v4342 = vadd.f32 %v4340, %v4341
  %v4343 = vsel %vm26, %v4255, 0.0
  %v4344 = vadd.f32 %v4342, %v4343
  %v4345 = vsel %vm26, %v4256, 0.0
  %v4346 = vadd.f32 %v4344, %v4345
  %v4347 = vsel %vm26, %v4257, 0.0
  %v4348 = vadd.f32 %v4346, %v4347
  %v4349 = vsel %vm26, %v4258, 0.0
  %v4350 = vadd.f32 %v4348, %v4349
  %v4351 = vsel %vm26, %v4259, 0.0
  %v4352 = vadd.f32 %v4350, %v4351
  %v4353 = vsel %vm26, %v4260, 0.0
  %v4354 = vadd.f32 %v4352, %v4353
  %v4355 = vsel %vm26, %v4261, 0.0
  %v4356 = vadd.f32 %v4354, %v4355
  %v4357 = vsel %vm26, %v4262, 0.0
  %v4358 = vadd.f32 %v4356, %v4357
  %v4359 = vsel %vm26, %v4263, 0.0
  %v4360 = vadd.f32 %v4358, %v4359
  %v4361 = vsel %vm26, %v4264, 0.0
  %v4362 = vadd.f32 %v4360, %v4361
  %v4363 = vsel %vm26, %v4265, 0.0
  %v4364 = vadd.f32 %v4362, %v4363
  %v4365 = vsel %vm26, %v4266, 0.0
  %v4366 = vadd.f32 %v4364, %v4365
  %v4367 = vsel %vm26, %v4267, 0.0
  %v4368 = vadd.f32 %v4366, %v4367
  %v4369 = vsel %vm26, %v4268, 0.0
  %v4370 = vadd.f32 %v4368, %v4369
  %v4371 = vsel %vm26, %v4269, 0.0
  %v4372 = vadd.f32 %v4370, %v4371
  %v4373 = vsel %vm26, %v4270, 0.0
  %v4374 = vadd.f32 %v4372, %v4373
  %v4375 = vsel %vm26, %v4271, 0.0
  %v4376 = vadd.f32 %v4374, %v4375
  %v4377 = vsel %vm26, %v4272, 0.0
  %v4378 = vadd.f32 %v4376, %v4377
  %v4379 = vsel %vm26, %v4273, 0.0
  %v4380 = vadd.f32 %v4378, %v4379
  %v4381 = vsel %vm26, %v4274, 0.0
  %v4382 = vadd.f32 %v4380, %v4381
  %v4383 = vsel %vm26, %v4275, 0.0
  %v4384 = vadd.f32 %v4382, %v4383
  %v4385 = vsel %vm26, %v4276, 0.0
  %v4386 = vadd.f32 %v4384, %v4385
  %v4387 = vsel %vm26, %v4277, 0.0
  %v4388 = vadd.f32 %v4386, %v4387
  %v4389 = vsel %vm26, %v4278, 0.0
  %v4390 = vadd.f32 %v4388, %v4389
  %v4391 = vsel %vm26, %v4279, 0.0
  %v4392 = vadd.f32 %v4390, %v4391
  %v4393 = vsel %vm26, %v4280, 0.0
  %v4394 = vadd.f32 %v4392, %v4393
  %v4395 = vsel %vm26, %v4281, 0.0
  %v4396 = vadd.f32 %v4394, %v4395
  %v4397 = vsel %vm26, %v4282, 0.0
  %v4398 = vadd.f32 %v4396, %v4397
  %v4399 = vsel %vm26, %v4283, 0.0
  %v4400 = vadd.f32 %v4398, %v4399
  %v4401 = vsel %vm26, %v4284, 0.0
  %v4402 = vadd.f32 %v4400, %v4401
  %v4403 = vsel %vm26, %v4285, 0.0
  %v4404 = vadd.f32 %v4402, %v4403
  %v4405 = vsel %vm26, %v4286, 0.0
  %v4406 = vadd.f32 %v4404, %v4405
  %v4407 = vsel %vm26, %v4287, 0.0
  %v4408 = vadd.f32 %v4406, %v4407
  %v4409 = vsel %vm26, %v4288, 0.0
  %v4410 = vadd.f32 %v4408, %v4409
  %v4411 = vsel %vm26, %v4289, 0.0
  %v4412 = vadd.f32 %v4410, %v4411
  %v4413 = vsel %vm26, %v4290, 0.0
  %v4414 = vadd.f32 %v4412, %v4413
  %v4415 = vsel %vm26, %v4291, 0.0
  %v4416 = vadd.f32 %v4414, %v4415
  %v4417 = vsel %vm26, %v4292, 0.0
  %v4418 = vadd.f32 %v4416, %v4417
  %v4419 = vsel %vm26, %v4293, 0.0
  %v4420 = vadd.f32 %v4418, %v4419
  %v4421 = vrot.slane %v4420, 4
  %v4422 = vadd.f32 %v4420, %v4421
  %v4423 = vrot.slane %v4422, 2
  %v4424 = vadd.f32 %v4422, %v4423
  %v4425 = vrot.slane %v4424, 1
  %v4426 = vadd.f32 %v4424, %v4425
  %v4427 = vmul.f32 %v4229, 0.001953125
  %v4428 = vmul.f32 %v4426, 0.001953125
  %v4429 = vmul.f32 %v4427, %v4427
  %v4430 = vsub.f32 %v4428, %v4429
  %v4431 = vadd.f32 %v4430, 1e-05
  %v4432 = vrsqrt.pop %v4431
  %v4433 = vmul.f32 %v4095, %v4432
  %v4434 = vmul.f32 %v4427, %v4433
  %v4435 = vsub.f32 %v4096, %v4434
  %v4437 = vlaneseq
  %v4438 = vshrl.u32 %v4437, 7
  %v4439 = vsub.s32 0, %v4438
  %v4440 = vrot.slane %v4433, %v4439
  %v4442 = vmul.f32 %v3777, %v4440
  %v4443 = vmul.f32 %v3782, %v4440
  %v4444 = vmul.f32 %v3787, %v4440
  %v4445 = vmul.f32 %v3792, %v4440
  %v4446 = vmul.f32 %v3797, %v4440
  %v4447 = vmul.f32 %v3802, %v4440
  %v4448 = vmul.f32 %v3807, %v4440
  %v4449 = vmul.f32 %v3812, %v4440
  %v4450 = vmul.f32 %v3817, %v4440
  %v4451 = vmul.f32 %v3822, %v4440
  %v4452 = vmul.f32 %v3827, %v4440
  %v4453 = vmul.f32 %v3832, %v4440
  %v4454 = vmul.f32 %v3837, %v4440
  %v4455 = vmul.f32 %v3842, %v4440
  %v4456 = vmul.f32 %v3847, %v4440
  %v4457 = vmul.f32 %v3852, %v4440
  %v4458 = vmul.f32 %v3857, %v4440
  %v4459 = vmul.f32 %v3862, %v4440
  %v4460 = vmul.f32 %v3867, %v4440
  %v4461 = vmul.f32 %v3872, %v4440
  %v4462 = vmul.f32 %v3877, %v4440
  %v4463 = vmul.f32 %v3882, %v4440
  %v4464 = vmul.f32 %v3887, %v4440
  %v4465 = vmul.f32 %v3892, %v4440
  %v4466 = vmul.f32 %v3897, %v4440
  %v4467 = vmul.f32 %v3902, %v4440
  %v4468 = vmul.f32 %v3907, %v4440
  %v4469 = vmul.f32 %v3912, %v4440
  %v4470 = vmul.f32 %v3917, %v4440
  %v4471 = vmul.f32 %v3922, %v4440
  %v4472 = vmul.f32 %v3927, %v4440
  %v4473 = vmul.f32 %v3932, %v4440
  %v4474 = vmul.f32 %v3937, %v4440
  %v4475 = vmul.f32 %v3942, %v4440
  %v4476 = vmul.f32 %v3947, %v4440
  %v4477 = vmul.f32 %v3952, %v4440
  %v4478 = vmul.f32 %v3957, %v4440
  %v4479 = vmul.f32 %v3962, %v4440
  %v4480 = vmul.f32 %v3967, %v4440
  %v4481 = vmul.f32 %v3972, %v4440
  %v4482 = vmul.f32 %v3977, %v4440
  %v4483 = vmul.f32 %v3982, %v4440
  %v4484 = vmul.f32 %v3987, %v4440
  %v4485 = vmul.f32 %v3992, %v4440
  %v4486 = vmul.f32 %v3997, %v4440
  %v4487 = vmul.f32 %v4002, %v4440
  %v4488 = vmul.f32 %v4007, %v4440
  %v4489 = vmul.f32 %v4012, %v4440
  %v4490 = vmul.f32 %v4017, %v4440
  %v4491 = vmul.f32 %v4022, %v4440
  %v4492 = vmul.f32 %v4027, %v4440
  %v4493 = vmul.f32 %v4032, %v4440
  %v4494 = vmul.f32 %v4037, %v4440
  %v4495 = vmul.f32 %v4042, %v4440
  %v4496 = vmul.f32 %v4047, %v4440
  %v4497 = vmul.f32 %v4052, %v4440
  %v4498 = vmul.f32 %v4057, %v4440
  %v4499 = vmul.f32 %v4062, %v4440
  %v4500 = vmul.f32 %v4067, %v4440
  %v4501 = vmul.f32 %v4072, %v4440
  %v4502 = vmul.f32 %v4077, %v4440
  %v4503 = vmul.f32 %v4082, %v4440
  %v4504 = vmul.f32 %v4087, %v4440
  %v4505 = vmul.f32 %v4092, %v4440
  %v4507 = vlaneseq
  %v4508 = vshrl.u32 %v4507, 7
  %v4509 = vsub.s32 0, %v4508
  %v4510 = vrot.slane %v4435, %v4509
  %v4512 = vadd.f32 %v4442, %v4510
  %v4513 = vadd.f32 %v4443, %v4510
  %v4514 = vadd.f32 %v4444, %v4510
  %v4515 = vadd.f32 %v4445, %v4510
  %v4516 = vadd.f32 %v4446, %v4510
  %v4517 = vadd.f32 %v4447, %v4510
  %v4518 = vadd.f32 %v4448, %v4510
  %v4519 = vadd.f32 %v4449, %v4510
  %v4520 = vadd.f32 %v4450, %v4510
  %v4521 = vadd.f32 %v4451, %v4510
  %v4522 = vadd.f32 %v4452, %v4510
  %v4523 = vadd.f32 %v4453, %v4510
  %v4524 = vadd.f32 %v4454, %v4510
  %v4525 = vadd.f32 %v4455, %v4510
  %v4526 = vadd.f32 %v4456, %v4510
  %v4527 = vadd.f32 %v4457, %v4510
  %v4528 = vadd.f32 %v4458, %v4510
  %v4529 = vadd.f32 %v4459, %v4510
  %v4530 = vadd.f32 %v4460, %v4510
  %v4531 = vadd.f32 %v4461, %v4510
  %v4532 = vadd.f32 %v4462, %v4510
  %v4533 = vadd.f32 %v4463, %v4510
  %v4534 = vadd.f32 %v4464, %v4510
  %v4535 = vadd.f32 %v4465, %v4510
  %v4536 = vadd.f32 %v4466, %v4510
  %v4537 = vadd.f32 %v4467, %v4510
  %v4538 = vadd.f32 %v4468, %v4510
  %v4539 = vadd.f32 %v4469, %v4510
  %v4540 = vadd.f32 %v4470, %v4510
  %v4541 = vadd.f32 %v4471, %v4510
  %v4542 = vadd.f32 %v4472, %v4510
  %v4543 = vadd.f32 %v4473, %v4510
  %v4544 = vadd.f32 %v4474, %v4510
  %v4545 = vadd.f32 %v4475, %v4510
  %v4546 = vadd.f32 %v4476, %v4510
  %v4547 = vadd.f32 %v4477, %v4510
  %v4548 = vadd.f32 %v4478, %v4510
  %v4549 = vadd.f32 %v4479, %v4510
  %v4550 = vadd.f32 %v4480, %v4510
  %v4551 = vadd.f32 %v4481, %v4510
  %v4552 = vadd.f32 %v4482, %v4510
  %v4553 = vadd.f32 %v4483, %v4510
  %v4554 = vadd.f32 %v4484, %v4510
  %v4555 = vadd.f32 %v4485, %v4510
  %v4556 = vadd.f32 %v4486, %v4510
  %v4557 = vadd.f32 %v4487, %v4510
  %v4558 = vadd.f32 %v4488, %v4510
  %v4559 = vadd.f32 %v4489, %v4510
  %v4560 = vadd.f32 %v4490, %v4510
  %v4561 = vadd.f32 %v4491, %v4510
  %v4562 = vadd.f32 %v4492, %v4510
  %v4563 = vadd.f32 %v4493, %v4510
  %v4564 = vadd.f32 %v4494, %v4510
  %v4565 = vadd.f32 %v4495, %v4510
  %v4566 = vadd.f32 %v4496, %v4510
  %v4567 = vadd.f32 %v4497, %v4510
  %v4568 = vadd.f32 %v4498, %v4510
  %v4569 = vadd.f32 %v4499, %v4510
  %v4570 = vadd.f32 %v4500, %v4510
  %v4571 = vadd.f32 %v4501, %v4510
  %v4572 = vadd.f32 %v4502, %v4510
  %v4573 = vadd.f32 %v4503, %v4510
  %v4574 = vadd.f32 %v4504, %v4510
  %v4575 = vadd.f32 %v4505, %v4510
  %v4576 = vmax.f32 %v4512, 0.0
  %v4577 = vmax.f32 %v4513, 0.0
  %v4578 = vmax.f32 %v4514, 0.0
  %v4579 = vmax.f32 %v4515, 0.0
  %v4580 = vmax.f32 %v4516, 0.0
  %v4581 = vmax.f32 %v4517, 0.0
  %v4582 = vmax.f32 %v4518, 0.0
  %v4583 = vmax.f32 %v4519, 0.0
  %v4584 = vmax.f32 %v4520, 0.0
  %v4585 = vmax.f32 %v4521, 0.0
  %v4586 = vmax.f32 %v4522, 0.0
  %v4587 = vmax.f32 %v4523, 0.0
  %v4588 = vmax.f32 %v4524, 0.0
  %v4589 = vmax.f32 %v4525, 0.0
  %v4590 = vmax.f32 %v4526, 0.0
  %v4591 = vmax.f32 %v4527, 0.0
  %v4592 = vmax.f32 %v4528, 0.0
  %v4593 = vmax.f32 %v4529, 0.0
  %v4594 = vmax.f32 %v4530, 0.0
  %v4595 = vmax.f32 %v4531, 0.0
  %v4596 = vmax.f32 %v4532, 0.0
  %v4597 = vmax.f32 %v4533, 0.0
  %v4598 = vmax.f32 %v4534, 0.0
  %v4599 = vmax.f32 %v4535, 0.0
  %v4600 = vmax.f32 %v4536, 0.0
  %v4601 = vmax.f32 %v4537, 0.0
  %v4602 = vmax.f32 %v4538, 0.0
  %v4603 = vmax.f32 %v4539, 0.0
  %v4604 = vmax.f32 %v4540, 0.0
  %v4605 = vmax.f32 %v4541, 0.0
  %v4606 = vmax.f32 %v4542, 0.0
  %v4607 = vmax.f32 %v4543, 0.0
  %v4608 = vmax.f32 %v4544, 0.0
  %v4609 = vmax.f32 %v4545, 0.0
  %v4610 = vmax.f32 %v4546, 0.0
  %v4611 = vmax.f32 %v4547, 0.0
  %v4612 = vmax.f32 %v4548, 0.0
  %v4613 = vmax.f32 %v4549, 0.0
  %v4614 = vmax.f32 %v4550, 0.0
  %v4615 = vmax.f32 %v4551, 0.0
  %v4616 = vmax.f32 %v4552, 0.0
  %v4617 = vmax.f32 %v4553, 0.0
  %v4618 = vmax.f32 %v4554, 0.0
  %v4619 = vmax.f32 %v4555, 0.0
  %v4620 = vmax.f32 %v4556, 0.0
  %v4621 = vmax.f32 %v4557, 0.0
  %v4622 = vmax.f32 %v4558, 0.0
  %v4623 = vmax.f32 %v4559, 0.0
  %v4624 = vmax.f32 %v4560, 0.0
  %v4625 = vmax.f32 %v4561, 0.0
  %v4626 = vmax.f32 %v4562, 0.0
  %v4627 = vmax.f32 %v4563, 0.0
  %v4628 = vmax.f32 %v4564, 0.0
  %v4629 = vmax.f32 %v4565, 0.0
  %v4630 = vmax.f32 %v4566, 0.0
  %v4631 = vmax.f32 %v4567, 0.0
  %v4632 = vmax.f32 %v4568, 0.0
  %v4633 = vmax.f32 %v4569, 0.0
  %v4634 = vmax.f32 %v4570, 0.0
  %v4635 = vmax.f32 %v4571, 0.0
  %v4636 = vmax.f32 %v4572, 0.0
  %v4637 = vmax.f32 %v4573, 0.0
  %v4638 = vmax.f32 %v4574, 0.0
  %v4639 = vmax.f32 %v4575, 0.0
  %4640 = vst.msk [vmem:[%s41 + $0x1] sm:$0xff] %vm26, %v4576
  %4641 = vst.msk [vmem:[%s41 + $0x9] sm:$0xff] %vm26, %v4577
  %4642 = vst.msk [vmem:[%s41 + $0x19] sm:$0xff] %vm26, %v4578
  %4643 = vst.msk [vmem:[%s41 + $0x21] sm:$0xff] %vm26, %v4579
  %4644 = vst.msk [vmem:[%s41 + $0x31] sm:$0xff] %vm26, %v4580
  %4645 = vst.msk [vmem:[%s41 + $0x39] sm:$0xff] %vm26, %v4581
  %4646 = vst.msk [vmem:[%s41 + $0x49] sm:$0xff] %vm26, %v4582
  %4647 = vst.msk [vmem:[%s41 + $0x51] sm:$0xff] %vm26, %v4583
  %4648 = vst.msk [vmem:[%s41 + $0x61] sm:$0xff] %vm26, %v4584
  %4649 = vst.msk [vmem:[%s41 + $0x69] sm:$0xff] %vm26, %v4585
  %4650 = vst.msk [vmem:[%s41 + $0x79] sm:$0xff] %vm26, %v4586
  %4651 = vst.msk [vmem:[%s41 + $0x81] sm:$0xff] %vm26, %v4587
  %4652 = vst.msk [vmem:[%s41 + $0x91] sm:$0xff] %vm26, %v4588
  %4653 = vst.msk [vmem:[%s41 + $0x99] sm:$0xff] %vm26, %v4589
  %4654 = vst.msk [vmem:[%s41 + $0xa9] sm:$0xff] %vm26, %v4590
  %4655 = vst.msk [vmem:[%s41 + $0xb1] sm:$0xff] %vm26, %v4591
  %4656 = vst.msk [vmem:[%s41 + $0xc1] sm:$0xff] %vm26, %v4592
  %4657 = vst.msk [vmem:[%s41 + $0xc9] sm:$0xff] %vm26, %v4593
  %4658 = vst.msk [vmem:[%s41 + $0xd9] sm:$0xff] %vm26, %v4594
  %4659 = vst.msk [vmem:[%s41 + $0xe1] sm:$0xff] %vm26, %v4595
  %4660 = vst.msk [vmem:[%s41 + $0xf1] sm:$0xff] %vm26, %v4596
  %4661 = vst.msk [vmem:[%s41 + $0xf9] sm:$0xff] %vm26, %v4597
  %4662 = vst.msk [vmem:[%s41 + $0x109] sm:$0xff] %vm26, %v4598
  %4663 = vst.msk [vmem:[%s41 + $0x111] sm:$0xff] %vm26, %v4599
  %4664 = vst.msk [vmem:[%s41 + $0x121] sm:$0xff] %vm26, %v4600
  %4665 = vst.msk [vmem:[%s41 + $0x129] sm:$0xff] %vm26, %v4601
  %4666 = vst.msk [vmem:[%s41 + $0x139] sm:$0xff] %vm26, %v4602
  %4667 = vst.msk [vmem:[%s41 + $0x141] sm:$0xff] %vm26, %v4603
  %4668 = vst.msk [vmem:[%s41 + $0x151] sm:$0xff] %vm26, %v4604
  %4669 = vst.msk [vmem:[%s41 + $0x159] sm:$0xff] %vm26, %v4605
  %4670 = vst.msk [vmem:[%s41 + $0x169] sm:$0xff] %vm26, %v4606
  %4671 = vst.msk [vmem:[%s41 + $0x171] sm:$0xff] %vm26, %v4607
  %4672 = vst.msk [vmem:[%s41 + $0x1b1] sm:$0xff] %vm26, %v4608
  %4673 = vst.msk [vmem:[%s41 + $0x1b9] sm:$0xff] %vm26, %v4609
  %4674 = vst.msk [vmem:[%s41 + $0x1c9] sm:$0xff] %vm26, %v4610
  %4675 = vst.msk [vmem:[%s41 + $0x1d1] sm:$0xff] %vm26, %v4611
  %4676 = vst.msk [vmem:[%s41 + $0x1e1] sm:$0xff] %vm26, %v4612
  %4677 = vst.msk [vmem:[%s41 + $0x1e9] sm:$0xff] %vm26, %v4613
  %4678 = vst.msk [vmem:[%s41 + $0x1f9] sm:$0xff] %vm26, %v4614
  %4679 = vst.msk [vmem:[%s41 + $0x201] sm:$0xff] %vm26, %v4615
  %4680 = vst.msk [vmem:[%s41 + $0x211] sm:$0xff] %vm26, %v4616
  %4681 = vst.msk [vmem:[%s41 + $0x219] sm:$0xff] %vm26, %v4617
  %4682 = vst.msk [vmem:[%s41 + $0x229] sm:$0xff] %vm26, %v4618
  %4683 = vst.msk [vmem:[%s41 + $0x231] sm:$0xff] %vm26, %v4619
  %4684 = vst.msk [vmem:[%s41 + $0x241] sm:$0xff] %vm26, %v4620
  %4685 = vst.msk [vmem:[%s41 + $0x249] sm:$0xff] %vm26, %v4621
  %4686 = vst.msk [vmem:[%s41 + $0x259] sm:$0xff] %vm26, %v4622
  %4687 = vst.msk [vmem:[%s41 + $0x261] sm:$0xff] %vm26, %v4623
  %4688 = vst.msk [vmem:[%s41 + $0x271] sm:$0xff] %vm26, %v4624
  %4689 = vst.msk [vmem:[%s41 + $0x279] sm:$0xff] %vm26, %v4625
  %4690 = vst.msk [vmem:[%s41 + $0x289] sm:$0xff] %vm26, %v4626
  %4691 = vst.msk [vmem:[%s41 + $0x291] sm:$0xff] %vm26, %v4627
  %4692 = vst.msk [vmem:[%s41 + $0x2a1] sm:$0xff] %vm26, %v4628
  %4693 = vst.msk [vmem:[%s41 + $0x2a9] sm:$0xff] %vm26, %v4629
  %4694 = vst.msk [vmem:[%s41 + $0x2b9] sm:$0xff] %vm26, %v4630
  %4695 = vst.msk [vmem:[%s41 + $0x2c1] sm:$0xff] %vm26, %v4631
  %4696 = vst.msk [vmem:[%s41 + $0x2d1] sm:$0xff] %vm26, %v4632
  %4697 = vst.msk [vmem:[%s41 + $0x2d9] sm:$0xff] %vm26, %v4633
  %4698 = vst.msk [vmem:[%s41 + $0x2e9] sm:$0xff] %vm26, %v4634
  %4699 = vst.msk [vmem:[%s41 + $0x2f1] sm:$0xff] %vm26, %v4635
  %4700 = vst.msk [vmem:[%s41 + $0x301] sm:$0xff] %vm26, %v4636
  %4701 = vst.msk [vmem:[%s41 + $0x309] sm:$0xff] %vm26, %v4637
  %4702 = vst.msk [vmem:[%s41 + $0x319] sm:$0xff] %vm26, %v4638
  %4703 = vst.msk [vmem:[%s41 + $0x321] sm:$0xff] %vm26, %v4639
  %v4704 = vld [vmem:[#allocation2] sm:$0xff]
  %v4705 = vld [vmem:[#allocation2 + $0x8] sm:$0xff]
  %v4706 = vld [vmem:[#allocation2 + $0x18] sm:$0xff]
  %v4707 = vld [vmem:[#allocation2 + $0x20] sm:$0xff]
  %v4708 = vld [vmem:[#allocation2 + $0x30] sm:$0xff]
  %v4709 = vld [vmem:[#allocation2 + $0x38] sm:$0xff]
  %v4710 = vld [vmem:[#allocation2 + $0x48] sm:$0xff]
  %v4711 = vld [vmem:[#allocation2 + $0x50] sm:$0xff]
  %v4712 = vld [vmem:[#allocation2 + $0x60] sm:$0xff]
  %v4713 = vld [vmem:[#allocation2 + $0x68] sm:$0xff]
  %v4714 = vld [vmem:[#allocation2 + $0x78] sm:$0xff]
  %v4715 = vld [vmem:[#allocation2 + $0x80] sm:$0xff]
  %v4716 = vld [vmem:[#allocation2 + $0x90] sm:$0xff]
  %v4717 = vld [vmem:[#allocation2 + $0x98] sm:$0xff]
  %v4718 = vld [vmem:[#allocation2 + $0xa8] sm:$0xff]
  %v4719 = vld [vmem:[#allocation2 + $0xb0] sm:$0xff]
  %v4720 = vld [vmem:[#allocation2 + $0xc0] sm:$0xff]
  %v4721 = vld [vmem:[#allocation2 + $0xc8] sm:$0xff]
  %v4722 = vld [vmem:[#allocation2 + $0xd8] sm:$0xff]
  %v4723 = vld [vmem:[#allocation2 + $0xe0] sm:$0xff]
  %v4724 = vld [vmem:[#allocation2 + $0xf0] sm:$0xff]
  %v4725 = vld [vmem:[#allocation2 + $0xf8] sm:$0xff]
  %v4726 = vld [vmem:[#allocation2 + $0x108] sm:$0xff]
  %v4727 = vld [vmem:[#allocation2 + $0x110] sm:$0xff]
  %v4728 = vld [vmem:[#allocation2 + $0x120] sm:$0xff]
  %v4729 = vld [vmem:[#allocation2 + $0x128] sm:$0xff]
  %v4730 = vld [vmem:[#allocation2 + $0x138] sm:$0xff]
  %v4731 = vld [vmem:[#allocation2 + $0x140] sm:$0xff]
  %v4732 = vld [vmem:[#allocation2 + $0x150] sm:$0xff]
  %v4733 = vld [vmem:[#allocation2 + $0x158] sm:$0xff]
  %v4734 = vld [vmem:[#allocation2 + $0x168] sm:$0xff]
  %v4735 = vld [vmem:[#allocation2 + $0x170] sm:$0xff]
  %v4736 = vld [vmem:[#allocation2 + $0x1b0] sm:$0xff]
  %v4737 = vld [vmem:[#allocation2 + $0x1b8] sm:$0xff]
  %v4738 = vld [vmem:[#allocation2 + $0x1c8] sm:$0xff]
  %v4739 = vld [vmem:[#allocation2 + $0x1d0] sm:$0xff]
  %v4740 = vld [vmem:[#allocation2 + $0x1e0] sm:$0xff]
  %v4741 = vld [vmem:[#allocation2 + $0x1e8] sm:$0xff]
  %v4742 = vld [vmem:[#allocation2 + $0x1f8] sm:$0xff]
  %v4743 = vld [vmem:[#allocation2 + $0x200] sm:$0xff]
  %v4744 = vld [vmem:[#allocation2 + $0x210] sm:$0xff]
  %v4745 = vld [vmem:[#allocation2 + $0x218] sm:$0xff]
  %v4746 = vld [vmem:[#allocation2 + $0x228] sm:$0xff]
  %v4747 = vld [vmem:[#allocation2 + $0x230] sm:$0xff]
  %v4748 = vld [vmem:[#allocation2 + $0x240] sm:$0xff]
  %v4749 = vld [vmem:[#allocation2 + $0x248] sm:$0xff]
  %v4750 = vld [vmem:[#allocation2 + $0x258] sm:$0xff]
  %v4751 = vld [vmem:[#allocation2 + $0x260] sm:$0xff]
  %v4752 = vld [vmem:[#allocation2 + $0x270] sm:$0xff]
  %v4753 = vld [vmem:[#allocation2 + $0x278] sm:$0xff]
  %v4754 = vld [vmem:[#allocation2 + $0x288] sm:$0xff]
  %v4755 = vld [vmem:[#allocation2 + $0x290] sm:$0xff]
  %v4756 = vld [vmem:[#allocation2 + $0x2a0] sm:$0xff]
  %v4757 = vld [vmem:[#allocation2 + $0x2a8] sm:$0xff]
  %v4758 = vld [vmem:[#allocation2 + $0x2b8] sm:$0xff]
  %v4759 = vld [vmem:[#allocation2 + $0x2c0] sm:$0xff]
  %v4760 = vld [vmem:[#allocation2 + $0x2d0] sm:$0xff]
  %v4761 = vld [vmem:[#allocation2 + $0x2d8] sm:$0xff]
  %v4762 = vld [vmem:[#allocation2 + $0x2e8] sm:$0xff]
  %v4763 = vld [vmem:[#allocation2 + $0x2f0] sm:$0xff]
  %v4764 = vld [vmem:[#allocation2 + $0x300] sm:$0xff]
  %v4765 = vld [vmem:[#allocation2 + $0x308] sm:$0xff]
  %v4766 = vld [vmem:[#allocation2 + $0x318] sm:$0xff]
  %v4767 = vld [vmem:[#allocation2 + $0x320] sm:$0xff]
  %4768 = vst.msk [vmem:[#allocation3] sm:$0xff] %vm26, %v4704
  %4769 = vst.msk [vmem:[#allocation3 + $0x8] sm:$0xff] %vm26, %v4705
  %4770 = vst.msk [vmem:[#allocation3 + $0x10] sm:$0xff] %vm26, %v4706
  %4771 = vst.msk [vmem:[#allocation3 + $0x18] sm:$0xff] %vm26, %v4707
  %4772 = vst.msk [vmem:[#allocation3 + $0x20] sm:$0xff] %vm26, %v4708
  %4773 = vst.msk [vmem:[#allocation3 + $0x28] sm:$0xff] %vm26, %v4709
  %4774 = vst.msk [vmem:[#allocation3 + $0x30] sm:$0xff] %vm26, %v4710
  %4775 = vst.msk [vmem:[#allocation3 + $0x38] sm:$0xff] %vm26, %v4711
  %4776 = vst.msk [vmem:[#allocation3 + $0x40] sm:$0xff] %vm26, %v4712
  %4777 = vst.msk [vmem:[#allocation3 + $0x48] sm:$0xff] %vm26, %v4713
  %4778 = vst.msk [vmem:[#allocation3 + $0x50] sm:$0xff] %vm26, %v4714
  %4779 = vst.msk [vmem:[#allocation3 + $0x58] sm:$0xff] %vm26, %v4715
  %4780 = vst.msk [vmem:[#allocation3 + $0x60] sm:$0xff] %vm26, %v4716
  %4781 = vst.msk [vmem:[#allocation3 + $0x68] sm:$0xff] %vm26, %v4717
  %4782 = vst.msk [vmem:[#allocation3 + $0x70] sm:$0xff] %vm26, %v4718
  %4783 = vst.msk [vmem:[#allocation3 + $0x78] sm:$0xff] %vm26, %v4719
  %4784 = vst.msk [vmem:[#allocation3 + $0x80] sm:$0xff] %vm26, %v4720
  %4785 = vst.msk [vmem:[#allocation3 + $0x88] sm:$0xff] %vm26, %v4721
  %4786 = vst.msk [vmem:[#allocation3 + $0x90] sm:$0xff] %vm26, %v4722
  %4787 = vst.msk [vmem:[#allocation3 + $0x98] sm:$0xff] %vm26, %v4723
  %4788 = vst.msk [vmem:[#allocation3 + $0xa0] sm:$0xff] %vm26, %v4724
  %4789 = vst.msk [vmem:[#allocation3 + $0xa8] sm:$0xff] %vm26, %v4725
  %4790 = vst.msk [vmem:[#allocation3 + $0xb0] sm:$0xff] %vm26, %v4726
  %4791 = vst.msk [vmem:[#allocation3 + $0xb8] sm:$0xff] %vm26, %v4727
  %4792 = vst.msk [vmem:[#allocation3 + $0xc0] sm:$0xff] %vm26, %v4728
  %4793 = vst.msk [vmem:[#allocation3 + $0xc8] sm:$0xff] %vm26, %v4729
  %4794 = vst.msk [vmem:[#allocation3 + $0xd0] sm:$0xff] %vm26, %v4730
  %4795 = vst.msk [vmem:[#allocation3 + $0xd8] sm:$0xff] %vm26, %v4731
  %4796 = vst.msk [vmem:[#allocation3 + $0xe0] sm:$0xff] %vm26, %v4732
  %4797 = vst.msk [vmem:[#allocation3 + $0xe8] sm:$0xff] %vm26, %v4733
  %4798 = vst.msk [vmem:[#allocation3 + $0xf0] sm:$0xff] %vm26, %v4734
  %4799 = vst.msk [vmem:[#allocation3 + $0xf8] sm:$0xff] %vm26, %v4735
  %4800 = vst.msk [vmem:[#allocation3 + $0x100] sm:$0xff] %vm26, %v4736
  %4801 = vst.msk [vmem:[#allocation3 + $0x108] sm:$0xff] %vm26, %v4737
  %4802 = vst.msk [vmem:[#allocation3 + $0x110] sm:$0xff] %vm26, %v4738
  %4803 = vst.msk [vmem:[#allocation3 + $0x118] sm:$0xff] %vm26, %v4739
  %4804 = vst.msk [vmem:[#allocation3 + $0x120] sm:$0xff] %vm26, %v4740
  %4805 = vst.msk [vmem:[#allocation3 + $0x128] sm:$0xff] %vm26, %v4741
  %4806 = vst.msk [vmem:[#allocation3 + $0x130] sm:$0xff] %vm26, %v4742
  %4807 = vst.msk [vmem:[#allocation3 + $0x138] sm:$0xff] %vm26, %v4743
  %4808 = vst.msk [vmem:[#allocation3 + $0x140] sm:$0xff] %vm26, %v4744
  %4809 = vst.msk [vmem:[#allocation3 + $0x148] sm:$0xff] %vm26, %v4745
  %4810 = vst.msk [vmem:[#allocation3 + $0x150] sm:$0xff] %vm26, %v4746
  %4811 = vst.msk [vmem:[#allocation3 + $0x158] sm:$0xff] %vm26, %v4747
  %4812 = vst.msk [vmem:[#allocation3 + $0x160] sm:$0xff] %vm26, %v4748
  %4813 = vst.msk [vmem:[#allocation3 + $0x168] sm:$0xff] %vm26, %v4749
  %4814 = vst.msk [vmem:[#allocation3 + $0x170] sm:$0xff] %vm26, %v4750
  %4815 = vst.msk [vmem:[#allocation3 + $0x178] sm:$0xff] %vm26, %v4751
  %4816 = vst.msk [vmem:[#allocation3 + $0x180] sm:$0xff] %vm26, %v4752
  %4817 = vst.msk [vmem:[#allocation3 + $0x188] sm:$0xff] %vm26, %v4753
  %4818 = vst.msk [vmem:[#allocation3 + $0x190] sm:$0xff] %vm26, %v4754
  %4819 = vst.msk [vmem:[#allocation3 + $0x198] sm:$0xff] %vm26, %v4755
  %4820 = vst.msk [vmem:[#allocation3 + $0x1a0] sm:$0xff] %vm26, %v4756
  %4821 = vst.msk [vmem:[#allocation3 + $0x1a8] sm:$0xff] %vm26, %v4757
  %4822 = vst.msk [vmem:[#allocation3 + $0x1b0] sm:$0xff] %vm26, %v4758
  %4823 = vst.msk [vmem:[#allocation3 + $0x1b8] sm:$0xff] %vm26, %v4759
  %4824 = vst.msk [vmem:[#allocation3 + $0x1c0] sm:$0xff] %vm26, %v4760
  %4825 = vst.msk [vmem:[#allocation3 + $0x1c8] sm:$0xff] %vm26, %v4761
  %4826 = vst.msk [vmem:[#allocation3 + $0x1d0] sm:$0xff] %vm26, %v4762
  %4827 = vst.msk [vmem:[#allocation3 + $0x1d8] sm:$0xff] %vm26, %v4763
  %4828 = vst.msk [vmem:[#allocation3 + $0x1e0] sm:$0xff] %vm26, %v4764
  %4829 = vst.msk [vmem:[#allocation3 + $0x1e8] sm:$0xff] %vm26, %v4765
  %4830 = vst.msk [vmem:[#allocation3 + $0x1f0] sm:$0xff] %vm26, %v4766
  %4831 = vst.msk [vmem:[#allocation3 + $0x1f8] sm:$0xff] %vm26, %v4767
  %v4832 = vld [vmem:[#allocation2 + $0x1] sm:$0xff]
  %v4833 = vld [vmem:[#allocation2 + $0x9] sm:$0xff]
  %v4834 = vld [vmem:[#allocation2 + $0x19] sm:$0xff]
  %v4835 = vld [vmem:[#allocation2 + $0x21] sm:$0xff]
  %v4836 = vld [vmem:[#allocation2 + $0x31] sm:$0xff]
  %v4837 = vld [vmem:[#allocation2 + $0x39] sm:$0xff]
  %v4838 = vld [vmem:[#allocation2 + $0x49] sm:$0xff]
  %v4839 = vld [vmem:[#allocation2 + $0x51] sm:$0xff]
  %v4840 = vld [vmem:[#allocation2 + $0x61] sm:$0xff]
  %v4841 = vld [vmem:[#allocation2 + $0x69] sm:$0xff]
  %v4842 = vld [vmem:[#allocation2 + $0x79] sm:$0xff]
  %v4843 = vld [vmem:[#allocation2 + $0x81] sm:$0xff]
  %v4844 = vld [vmem:[#allocation2 + $0x91] sm:$0xff]
  %v4845 = vld [vmem:[#allocation2 + $0x99] sm:$0xff]
  %v4846 = vld [vmem:[#allocation2 + $0xa9] sm:$0xff]
  %v4847 = vld [vmem:[#allocation2 + $0xb1] sm:$0xff]
  %v4848 = vld [vmem:[#allocation2 + $0xc1] sm:$0xff]
  %v4849 = vld [vmem:[#allocation2 + $0xc9] sm:$0xff]
  %v4850 = vld [vmem:[#allocation2 + $0xd9] sm:$0xff]
  %v4851 = vld [vmem:[#allocation2 + $0xe1] sm:$0xff]
  %v4852 = vld [vmem:[#allocation2 + $0xf1] sm:$0xff]
  %v4853 = vld [vmem:[#allocation2 + $0xf9] sm:$0xff]
  %v4854 = vld [vmem:[#allocation2 + $0x109] sm:$0xff]
  %v4855 = vld [vmem:[#allocation2 + $0x111] sm:$0xff]
  %v4856 = vld [vmem:[#allocation2 + $0x121] sm:$0xff]
  %v4857 = vld [vmem:[#allocation2 + $0x129] sm:$0xff]
  %v4858 = vld [vmem:[#allocation2 + $0x139] sm:$0xff]
  %v4859 = vld [vmem:[#allocation2 + $0x141] sm:$0xff]
  %v4860 = vld [vmem:[#allocation2 + $0x151] sm:$0xff]
  %v4861 = vld [vmem:[#allocation2 + $0x159] sm:$0xff]
  %v4862 = vld [vmem:[#allocation2 + $0x169] sm:$0xff]
  %v4863 = vld [vmem:[#allocation2 + $0x171] sm:$0xff]
  %v4864 = vld [vmem:[#allocation2 + $0x1b1] sm:$0xff]
  %v4865 = vld [vmem:[#allocation2 + $0x1b9] sm:$0xff]
  %v4866 = vld [vmem:[#allocation2 + $0x1c9] sm:$0xff]
  %v4867 = vld [vmem:[#allocation2 + $0x1d1] sm:$0xff]
  %v4868 = vld [vmem:[#allocation2 + $0x1e1] sm:$0xff]
  %v4869 = vld [vmem:[#allocation2 + $0x1e9] sm:$0xff]
  %v4870 = vld [vmem:[#allocation2 + $0x1f9] sm:$0xff]
  %v4871 = vld [vmem:[#allocation2 + $0x201] sm:$0xff]
  %v4872 = vld [vmem:[#allocation2 + $0x211] sm:$0xff]
  %v4873 = vld [vmem:[#allocation2 + $0x219] sm:$0xff]
  %v4874 = vld [vmem:[#allocation2 + $0x229] sm:$0xff]
  %v4875 = vld [vmem:[#allocation2 + $0x231] sm:$0xff]
  %v4876 = vld [vmem:[#allocation2 + $0x241] sm:$0xff]
  %v4877 = vld [vmem:[#allocation2 + $0x249] sm:$0xff]
  %v4878 = vld [vmem:[#allocation2 + $0x259] sm:$0xff]
  %v4879 = vld [vmem:[#allocation2 + $0x261] sm:$0xff]
  %v4880 = vld [vmem:[#allocation2 + $0x271] sm:$0xff]
  %v4881 = vld [vmem:[#allocation2 + $0x279] sm:$0xff]
  %v4882 = vld [vmem:[#allocation2 + $0x289] sm:$0xff]
  %v4883 = vld [vmem:[#allocation2 + $0x291] sm:$0xff]
  %v4884 = vld [vmem:[#allocation2 + $0x2a1] sm:$0xff]
  %v4885 = vld [vmem:[#allocation2 + $0x2a9] sm:$0xff]
  %v4886 = vld [vmem:[#allocation2 + $0x2b9] sm:$0xff]
  %v4887 = vld [vmem:[#allocation2 + $0x2c1] sm:$0xff]
  %v4888 = vld [vmem:[#allocation2 + $0x2d1] sm:$0xff]
  %v4889 = vld [vmem:[#allocation2 + $0x2d9] sm:$0xff]
  %v4890 = vld [vmem:[#allocation2 + $0x2e9] sm:$0xff]
  %v4891 = vld [vmem:[#allocation2 + $0x2f1] sm:$0xff]
  %v4892 = vld [vmem:[#allocation2 + $0x301] sm:$0xff]
  %v4893 = vld [vmem:[#allocation2 + $0x309] sm:$0xff]
  %v4894 = vld [vmem:[#allocation2 + $0x319] sm:$0xff]
  %v4895 = vld [vmem:[#allocation2 + $0x321] sm:$0xff]
  %4960 = vrot.lane.b32.xlu0 %v4832, 4
  %v4961 = vpop.permute.xlu0 %4960
  %4962 = vrot.lane.b32.xlu0 %v4833, 4
  %v4963 = vpop.permute.xlu0 %4962
  %4964 = vrot.lane.b32.xlu0 %v4834, 4
  %v4965 = vpop.permute.xlu0 %4964
  %4966 = vrot.lane.b32.xlu0 %v4835, 4
  %v4967 = vpop.permute.xlu0 %4966
  %4968 = vrot.lane.b32.xlu0 %v4836, 4
  %v4969 = vpop.permute.xlu0 %4968
  %4970 = vrot.lane.b32.xlu0 %v4837, 4
  %v4971 = vpop.permute.xlu0 %4970
  %4972 = vrot.lane.b32.xlu0 %v4838, 4
  %v4973 = vpop.permute.xlu0 %4972
  %4974 = vrot.lane.b32.xlu0 %v4839, 4
  %v4975 = vpop.permute.xlu0 %4974
  %4976 = vrot.lane.b32.xlu0 %v4840, 4
  %v4977 = vpop.permute.xlu0 %4976
  %4978 = vrot.lane.b32.xlu0 %v4841, 4
  %v4979 = vpop.permute.xlu0 %4978
  %4980 = vrot.lane.b32.xlu0 %v4842, 4
  %v4981 = vpop.permute.xlu0 %4980
  %4982 = vrot.lane.b32.xlu0 %v4843, 4
  %v4983 = vpop.permute.xlu0 %4982
  %4984 = vrot.lane.b32.xlu0 %v4844, 4
  %v4985 = vpop.permute.xlu0 %4984
  %4986 = vrot.lane.b32.xlu0 %v4845, 4
  %v4987 = vpop.permute.xlu0 %4986
  %4988 = vrot.lane.b32.xlu0 %v4846, 4
  %v4989 = vpop.permute.xlu0 %4988
  %4990 = vrot.lane.b32.xlu0 %v4847, 4
  %v4991 = vpop.permute.xlu0 %4990
  %4992 = vrot.lane.b32.xlu0 %v4848, 4
  %v4993 = vpop.permute.xlu0 %4992
  %4994 = vrot.lane.b32.xlu0 %v4849, 4
  %v4995 = vpop.permute.xlu0 %4994
  %4996 = vrot.lane.b32.xlu0 %v4850, 4
  %v4997 = vpop.permute.xlu0 %4996
  %4998 = vrot.lane.b32.xlu0 %v4851, 4
  %v4999 = vpop.permute.xlu0 %4998
  %5000 = vrot.lane.b32.xlu0 %v4852, 4
  %v5001 = vpop.permute.xlu0 %5000
  %5002 = vrot.lane.b32.xlu0 %v4853, 4
  %v5003 = vpop.permute.xlu0 %5002
  %5004 = vrot.lane.b32.xlu0 %v4854, 4
  %v5005 = vpop.permute.xlu0 %5004
  %5006 = vrot.lane.b32.xlu0 %v4855, 4
  %v5007 = vpop.permute.xlu0 %5006
  %5008 = vrot.lane.b32.xlu0 %v4856, 4
  %v5009 = vpop.permute.xlu0 %5008
  %5010 = vrot.lane.b32.xlu0 %v4857, 4
  %v5011 = vpop.permute.xlu0 %5010
  %5012 = vrot.lane.b32.xlu0 %v4858, 4
  %v5013 = vpop.permute.xlu0 %5012
  %5014 = vrot.lane.b32.xlu0 %v4859, 4
  %v5015 = vpop.permute.xlu0 %5014
  %5016 = vrot.lane.b32.xlu0 %v4860, 4
  %v5017 = vpop.permute.xlu0 %5016
  %5018 = vrot.lane.b32.xlu0 %v4861, 4
  %v5019 = vpop.permute.xlu0 %5018
  %5020 = vrot.lane.b32.xlu0 %v4862, 4
  %v5021 = vpop.permute.xlu0 %5020
  %5022 = vrot.lane.b32.xlu0 %v4863, 4
  %v5023 = vpop.permute.xlu0 %5022
  %5024 = vrot.lane.b32.xlu0 %v4864, 4
  %v5025 = vpop.permute.xlu0 %5024
  %5026 = vrot.lane.b32.xlu0 %v4865, 4
  %v5027 = vpop.permute.xlu0 %5026
  %5028 = vrot.lane.b32.xlu0 %v4866, 4
  %v5029 = vpop.permute.xlu0 %5028
  %5030 = vrot.lane.b32.xlu0 %v4867, 4
  %v5031 = vpop.permute.xlu0 %5030
  %5032 = vrot.lane.b32.xlu0 %v4868, 4
  %v5033 = vpop.permute.xlu0 %5032
  %5034 = vrot.lane.b32.xlu0 %v4869, 4
  %v5035 = vpop.permute.xlu0 %5034
  %5036 = vrot.lane.b32.xlu0 %v4870, 4
  %v5037 = vpop.permute.xlu0 %5036
  %5038 = vrot.lane.b32.xlu0 %v4871, 4
  %v5039 = vpop.permute.xlu0 %5038
  %5040 = vrot.lane.b32.xlu0 %v4872, 4
  %v5041 = vpop.permute.xlu0 %5040
  %5042 = vrot.lane.b32.xlu0 %v4873, 4
  %v5043 = vpop.permute.xlu0 %5042
  %5044 = vrot.lane.b32.xlu0 %v4874, 4
  %v5045 = vpop.permute.xlu0 %5044
  %5046 = vrot.lane.b32.xlu0 %v4875, 4
  %v5047 = vpop.permute.xlu0 %5046
  %5048 = vrot.lane.b32.xlu0 %v4876, 4
  %v5049 = vpop.permute.xlu0 %5048
  %5050 = vrot.lane.b32.xlu0 %v4877, 4
  %v5051 = vpop.permute.xlu0 %5050
  %5052 = vrot.lane.b32.xlu0 %v4878, 4
  %v5053 = vpop.permute.xlu0 %5052
  %5054 = vrot.lane.b32.xlu0 %v4879, 4
  %v5055 = vpop.permute.xlu0 %5054
  %5056 = vrot.lane.b32.xlu0 %v4880, 4
  %v5057 = vpop.permute.xlu0 %5056
  %5058 = vrot.lane.b32.xlu0 %v4881, 4
  %v5059 = vpop.permute.xlu0 %5058
  %5060 = vrot.lane.b32.xlu0 %v4882, 4
  %v5061 = vpop.permute.xlu0 %5060
  %5062 = vrot.lane.b32.xlu0 %v4883, 4
  %v5063 = vpop.permute.xlu0 %5062
  %5064 = vrot.lane.b32.xlu0 %v4884, 4
  %v5065 = vpop.permute.xlu0 %5064
  %5066 = vrot.lane.b32.xlu0 %v4885, 4
  %v5067 = vpop.permute.xlu0 %5066
  %5068 = vrot.lane.b32.xlu0 %v4886, 4
  %v5069 = vpop.permute.xlu0 %5068
  %5070 = vrot.lane.b32.xlu0 %v4887, 4
  %v5071 = vpop.permute.xlu0 %5070
  %5072 = vrot.lane.b32.xlu0 %v4888, 4
  %v5073 = vpop.permute.xlu0 %5072
  %5074 = vrot.lane.b32.xlu0 %v4889, 4
  %v5075 = vpop.permute.xlu0 %5074
  %5076 = vrot.lane.b32.xlu0 %v4890, 4
  %v5077 = vpop.permute.xlu0 %5076
  %5078 = vrot.lane.b32.xlu0 %v4891, 4
  %v5079 = vpop.permute.xlu0 %5078
  %5080 = vrot.lane.b32.xlu0 %v4892, 4
  %v5081 = vpop.permute.xlu0 %5080
  %5082 = vrot.lane.b32.xlu0 %v4893, 4
  %v5083 = vpop.permute.xlu0 %5082
  %5084 = vrot.lane.b32.xlu0 %v4894, 4
  %v5085 = vpop.permute.xlu0 %5084
  %5086 = vrot.lane.b32.xlu0 %v4895, 4
  %v5087 = vpop.permute.xlu0 %5086
  %5152 = vst.msk [vmem:[#allocation3] sm:$0xff] %vm683, %v4961
  %5153 = vst.msk [vmem:[#allocation3 + $0x8] sm:$0xff] %vm683, %v4963
  %5154 = vst.msk [vmem:[#allocation3 + $0x10] sm:$0xff] %vm683, %v4965
  %5155 = vst.msk [vmem:[#allocation3 + $0x18] sm:$0xff] %vm683, %v4967
  %5156 = vst.msk [vmem:[#allocation3 + $0x20] sm:$0xff] %vm683, %v4969
  %5157 = vst.msk [vmem:[#allocation3 + $0x28] sm:$0xff] %vm683, %v4971
  %5158 = vst.msk [vmem:[#allocation3 + $0x30] sm:$0xff] %vm683, %v4973
  %5159 = vst.msk [vmem:[#allocation3 + $0x38] sm:$0xff] %vm683, %v4975
  %5160 = vst.msk [vmem:[#allocation3 + $0x40] sm:$0xff] %vm683, %v4977
  %5161 = vst.msk [vmem:[#allocation3 + $0x48] sm:$0xff] %vm683, %v4979
  %5162 = vst.msk [vmem:[#allocation3 + $0x50] sm:$0xff] %vm683, %v4981
  %5163 = vst.msk [vmem:[#allocation3 + $0x58] sm:$0xff] %vm683, %v4983
  %5164 = vst.msk [vmem:[#allocation3 + $0x60] sm:$0xff] %vm683, %v4985
  %5165 = vst.msk [vmem:[#allocation3 + $0x68] sm:$0xff] %vm683, %v4987
  %5166 = vst.msk [vmem:[#allocation3 + $0x70] sm:$0xff] %vm683, %v4989
  %5167 = vst.msk [vmem:[#allocation3 + $0x78] sm:$0xff] %vm683, %v4991
  %5168 = vst.msk [vmem:[#allocation3 + $0x80] sm:$0xff] %vm683, %v4993
  %5169 = vst.msk [vmem:[#allocation3 + $0x88] sm:$0xff] %vm683, %v4995
  %5170 = vst.msk [vmem:[#allocation3 + $0x90] sm:$0xff] %vm683, %v4997
  %5171 = vst.msk [vmem:[#allocation3 + $0x98] sm:$0xff] %vm683, %v4999
  %5172 = vst.msk [vmem:[#allocation3 + $0xa0] sm:$0xff] %vm683, %v5001
  %5173 = vst.msk [vmem:[#allocation3 + $0xa8] sm:$0xff] %vm683, %v5003
  %5174 = vst.msk [vmem:[#allocation3 + $0xb0] sm:$0xff] %vm683, %v5005
  %5175 = vst.msk [vmem:[#allocation3 + $0xb8] sm:$0xff] %vm683, %v5007
  %5176 = vst.msk [vmem:[#allocation3 + $0xc0] sm:$0xff] %vm683, %v5009
  %5177 = vst.msk [vmem:[#allocation3 + $0xc8] sm:$0xff] %vm683, %v5011
  %5178 = vst.msk [vmem:[#allocation3 + $0xd0] sm:$0xff] %vm683, %v5013
  %5179 = vst.msk [vmem:[#allocation3 + $0xd8] sm:$0xff] %vm683, %v5015
  %5180 = vst.msk [vmem:[#allocation3 + $0xe0] sm:$0xff] %vm683, %v5017
  %5181 = vst.msk [vmem:[#allocation3 + $0xe8] sm:$0xff] %vm683, %v5019
  %5182 = vst.msk [vmem:[#allocation3 + $0xf0] sm:$0xff] %vm683, %v5021
  %5183 = vst.msk [vmem:[#allocation3 + $0xf8] sm:$0xff] %vm683, %v5023
  %5184 = vst.msk [vmem:[#allocation3 + $0x100] sm:$0xff] %vm683, %v5025
  %5185 = vst.msk [vmem:[#allocation3 + $0x108] sm:$0xff] %vm683, %v5027
  %5186 = vst.msk [vmem:[#allocation3 + $0x110] sm:$0xff] %vm683, %v5029
  %5187 = vst.msk [vmem:[#allocation3 + $0x118] sm:$0xff] %vm683, %v5031
  %5188 = vst.msk [vmem:[#allocation3 + $0x120] sm:$0xff] %vm683, %v5033
  %5189 = vst.msk [vmem:[#allocation3 + $0x128] sm:$0xff] %vm683, %v5035
  %5190 = vst.msk [vmem:[#allocation3 + $0x130] sm:$0xff] %vm683, %v5037
  %5191 = vst.msk [vmem:[#allocation3 + $0x138] sm:$0xff] %vm683, %v5039
  %5192 = vst.msk [vmem:[#allocation3 + $0x140] sm:$0xff] %vm683, %v5041
  %5193 = vst.msk [vmem:[#allocation3 + $0x148] sm:$0xff] %vm683, %v5043
  %5194 = vst.msk [vmem:[#allocation3 + $0x150] sm:$0xff] %vm683, %v5045
  %5195 = vst.msk [vmem:[#allocation3 + $0x158] sm:$0xff] %vm683, %v5047
  %5196 = vst.msk [vmem:[#allocation3 + $0x160] sm:$0xff] %vm683, %v5049
  %5197 = vst.msk [vmem:[#allocation3 + $0x168] sm:$0xff] %vm683, %v5051
  %5198 = vst.msk [vmem:[#allocation3 + $0x170] sm:$0xff] %vm683, %v5053
  %5199 = vst.msk [vmem:[#allocation3 + $0x178] sm:$0xff] %vm683, %v5055
  %5200 = vst.msk [vmem:[#allocation3 + $0x180] sm:$0xff] %vm683, %v5057
  %5201 = vst.msk [vmem:[#allocation3 + $0x188] sm:$0xff] %vm683, %v5059
  %5202 = vst.msk [vmem:[#allocation3 + $0x190] sm:$0xff] %vm683, %v5061
  %5203 = vst.msk [vmem:[#allocation3 + $0x198] sm:$0xff] %vm683, %v5063
  %5204 = vst.msk [vmem:[#allocation3 + $0x1a0] sm:$0xff] %vm683, %v5065
  %5205 = vst.msk [vmem:[#allocation3 + $0x1a8] sm:$0xff] %vm683, %v5067
  %5206 = vst.msk [vmem:[#allocation3 + $0x1b0] sm:$0xff] %vm683, %v5069
  %5207 = vst.msk [vmem:[#allocation3 + $0x1b8] sm:$0xff] %vm683, %v5071
  %5208 = vst.msk [vmem:[#allocation3 + $0x1c0] sm:$0xff] %vm683, %v5073
  %5209 = vst.msk [vmem:[#allocation3 + $0x1c8] sm:$0xff] %vm683, %v5075
  %5210 = vst.msk [vmem:[#allocation3 + $0x1d0] sm:$0xff] %vm683, %v5077
  %5211 = vst.msk [vmem:[#allocation3 + $0x1d8] sm:$0xff] %vm683, %v5079
  %5212 = vst.msk [vmem:[#allocation3 + $0x1e0] sm:$0xff] %vm683, %v5081
  %5213 = vst.msk [vmem:[#allocation3 + $0x1e8] sm:$0xff] %vm683, %v5083
  %5214 = vst.msk [vmem:[#allocation3 + $0x1f0] sm:$0xff] %vm683, %v5085
  %5215 = vst.msk [vmem:[#allocation3 + $0x1f8] sm:$0xff] %vm683, %v5087
  %v5216 = vld [vmem:[#allocation2 + $0x2] sm:$0xff]
  %v5217 = vld [vmem:[#allocation2 + $0xa] sm:$0xff]
  %v5218 = vld [vmem:[#allocation2 + $0x1a] sm:$0xff]
  %v5219 = vld [vmem:[#allocation2 + $0x22] sm:$0xff]
  %v5220 = vld [vmem:[#allocation2 + $0x32] sm:$0xff]
  %v5221 = vld [vmem:[#allocation2 + $0x3a] sm:$0xff]
  %v5222 = vld [vmem:[#allocation2 + $0x4a] sm:$0xff]
  %v5223 = vld [vmem:[#allocation2 + $0x52] sm:$0xff]
  %v5224 = vld [vmem:[#allocation2 + $0x62] sm:$0xff]
  %v5225 = vld [vmem:[#allocation2 + $0x6a] sm:$0xff]
  %v5226 = vld [vmem:[#allocation2 + $0x7a] sm:$0xff]
  %v5227 = vld [vmem:[#allocation2 + $0x82] sm:$0xff]
  %v5228 = vld [vmem:[#allocation2 + $0x92] sm:$0xff]
  %v5229 = vld [vmem:[#allocation2 + $0x9a] sm:$0xff]
  %v5230 = vld [vmem:[#allocation2 + $0xaa] sm:$0xff]
  %v5231 = vld [vmem:[#allocation2 + $0xb2] sm:$0xff]
  %v5232 = vld [vmem:[#allocation2 + $0xc2] sm:$0xff]
  %v5233 = vld [vmem:[#allocation2 + $0xca] sm:$0xff]
  %v5234 = vld [vmem:[#allocation2 + $0xda] sm:$0xff]
  %v5235 = vld [vmem:[#allocation2 + $0xe2] sm:$0xff]
  %v5236 = vld [vmem:[#allocation2 + $0xf2] sm:$0xff]
  %v5237 = vld [vmem:[#allocation2 + $0xfa] sm:$0xff]
  %v5238 = vld [vmem:[#allocation2 + $0x10a] sm:$0xff]
  %v5239 = vld [vmem:[#allocation2 + $0x112] sm:$0xff]
  %v5240 = vld [vmem:[#allocation2 + $0x122] sm:$0xff]
  %v5241 = vld [vmem:[#allocation2 + $0x12a] sm:$0xff]
  %v5242 = vld [vmem:[#allocation2 + $0x13a] sm:$0xff]
  %v5243 = vld [vmem:[#allocation2 + $0x142] sm:$0xff]
  %v5244 = vld [vmem:[#allocation2 + $0x152] sm:$0xff]
  %v5245 = vld [vmem:[#allocation2 + $0x15a] sm:$0xff]
  %v5246 = vld [vmem:[#allocation2 + $0x16a] sm:$0xff]
  %v5247 = vld [vmem:[#allocation2 + $0x172] sm:$0xff]
  %v5248 = vld [vmem:[#allocation2 + $0x1b2] sm:$0xff]
  %v5249 = vld [vmem:[#allocation2 + $0x1ba] sm:$0xff]
  %v5250 = vld [vmem:[#allocation2 + $0x1ca] sm:$0xff]
  %v5251 = vld [vmem:[#allocation2 + $0x1d2] sm:$0xff]
  %v5252 = vld [vmem:[#allocation2 + $0x1e2] sm:$0xff]
  %v5253 = vld [vmem:[#allocation2 + $0x1ea] sm:$0xff]
  %v5254 = vld [vmem:[#allocation2 + $0x1fa] sm:$0xff]
  %v5255 = vld [vmem:[#allocation2 + $0x202] sm:$0xff]
  %v5256 = vld [vmem:[#allocation2 + $0x212] sm:$0xff]
  %v5257 = vld [vmem:[#allocation2 + $0x21a] sm:$0xff]
  %v5258 = vld [vmem:[#allocation2 + $0x22a] sm:$0xff]
  %v5259 = vld [vmem:[#allocation2 + $0x232] sm:$0xff]
  %v5260 = vld [vmem:[#allocation2 + $0x242] sm:$0xff]
  %v5261 = vld [vmem:[#allocation2 + $0x24a] sm:$0xff]
  %v5262 = vld [vmem:[#allocation2 + $0x25a] sm:$0xff]
  %v5263 = vld [vmem:[#allocation2 + $0x262] sm:$0xff]
  %v5264 = vld [vmem:[#allocation2 + $0x272] sm:$0xff]
  %v5265 = vld [vmem:[#allocation2 + $0x27a] sm:$0xff]
  %v5266 = vld [vmem:[#allocation2 + $0x28a] sm:$0xff]
  %v5267 = vld [vmem:[#allocation2 + $0x292] sm:$0xff]
  %v5268 = vld [vmem:[#allocation2 + $0x2a2] sm:$0xff]
  %v5269 = vld [vmem:[#allocation2 + $0x2aa] sm:$0xff]
  %v5270 = vld [vmem:[#allocation2 + $0x2ba] sm:$0xff]
  %v5271 = vld [vmem:[#allocation2 + $0x2c2] sm:$0xff]
  %v5272 = vld [vmem:[#allocation2 + $0x2d2] sm:$0xff]
  %v5273 = vld [vmem:[#allocation2 + $0x2da] sm:$0xff]
  %v5274 = vld [vmem:[#allocation2 + $0x2ea] sm:$0xff]
  %v5275 = vld [vmem:[#allocation2 + $0x2f2] sm:$0xff]
  %v5276 = vld [vmem:[#allocation2 + $0x302] sm:$0xff]
  %v5277 = vld [vmem:[#allocation2 + $0x30a] sm:$0xff]
  %v5278 = vld [vmem:[#allocation2 + $0x31a] sm:$0xff]
  %v5279 = vld [vmem:[#allocation2 + $0x322] sm:$0xff]
  %5344 = vrot.lane.b32.xlu0 %v5216, 8
  %v5345 = vpop.permute.xlu0 %5344
  %5346 = vrot.lane.b32.xlu0 %v5217, 8
  %v5347 = vpop.permute.xlu0 %5346
  %5348 = vrot.lane.b32.xlu0 %v5218, 8
  %v5349 = vpop.permute.xlu0 %5348
  %5350 = vrot.lane.b32.xlu0 %v5219, 8
  %v5351 = vpop.permute.xlu0 %5350
  %5352 = vrot.lane.b32.xlu0 %v5220, 8
  %v5353 = vpop.permute.xlu0 %5352
  %5354 = vrot.lane.b32.xlu0 %v5221, 8
  %v5355 = vpop.permute.xlu0 %5354
  %5356 = vrot.lane.b32.xlu0 %v5222, 8
  %v5357 = vpop.permute.xlu0 %5356
  %5358 = vrot.lane.b32.xlu0 %v5223, 8
  %v5359 = vpop.permute.xlu0 %5358
  %5360 = vrot.lane.b32.xlu0 %v5224, 8
  %v5361 = vpop.permute.xlu0 %5360
  %5362 = vrot.lane.b32.xlu0 %v5225, 8
  %v5363 = vpop.permute.xlu0 %5362
  %5364 = vrot.lane.b32.xlu0 %v5226, 8
  %v5365 = vpop.permute.xlu0 %5364
  %5366 = vrot.lane.b32.xlu0 %v5227, 8
  %v5367 = vpop.permute.xlu0 %5366
  %5368 = vrot.lane.b32.xlu0 %v5228, 8
  %v5369 = vpop.permute.xlu0 %5368
  %5370 = vrot.lane.b32.xlu0 %v5229, 8
  %v5371 = vpop.permute.xlu0 %5370
  %5372 = vrot.lane.b32.xlu0 %v5230, 8
  %v5373 = vpop.permute.xlu0 %5372
  %5374 = vrot.lane.b32.xlu0 %v5231, 8
  %v5375 = vpop.permute.xlu0 %5374
  %5376 = vrot.lane.b32.xlu0 %v5232, 8
  %v5377 = vpop.permute.xlu0 %5376
  %5378 = vrot.lane.b32.xlu0 %v5233, 8
  %v5379 = vpop.permute.xlu0 %5378
  %5380 = vrot.lane.b32.xlu0 %v5234, 8
  %v5381 = vpop.permute.xlu0 %5380
  %5382 = vrot.lane.b32.xlu0 %v5235, 8
  %v5383 = vpop.permute.xlu0 %5382
  %5384 = vrot.lane.b32.xlu0 %v5236, 8
  %v5385 = vpop.permute.xlu0 %5384
  %5386 = vrot.lane.b32.xlu0 %v5237, 8
  %v5387 = vpop.permute.xlu0 %5386
  %5388 = vrot.lane.b32.xlu0 %v5238, 8
  %v5389 = vpop.permute.xlu0 %5388
  %5390 = vrot.lane.b32.xlu0 %v5239, 8
  %v5391 = vpop.permute.xlu0 %5390
  %5392 = vrot.lane.b32.xlu0 %v5240, 8
  %v5393 = vpop.permute.xlu0 %5392
  %5394 = vrot.lane.b32.xlu0 %v5241, 8
  %v5395 = vpop.permute.xlu0 %5394
  %5396 = vrot.lane.b32.xlu0 %v5242, 8
  %v5397 = vpop.permute.xlu0 %5396
  %5398 = vrot.lane.b32.xlu0 %v5243, 8
  %v5399 = vpop.permute.xlu0 %5398
  %5400 = vrot.lane.b32.xlu0 %v5244, 8
  %v5401 = vpop.permute.xlu0 %5400
  %5402 = vrot.lane.b32.xlu0 %v5245, 8
  %v5403 = vpop.permute.xlu0 %5402
  %5404 = vrot.lane.b32.xlu0 %v5246, 8
  %v5405 = vpop.permute.xlu0 %5404
  %5406 = vrot.lane.b32.xlu0 %v5247, 8
  %v5407 = vpop.permute.xlu0 %5406
  %5408 = vrot.lane.b32.xlu0 %v5248, 8
  %v5409 = vpop.permute.xlu0 %5408
  %5410 = vrot.lane.b32.xlu0 %v5249, 8
  %v5411 = vpop.permute.xlu0 %5410
  %5412 = vrot.lane.b32.xlu0 %v5250, 8
  %v5413 = vpop.permute.xlu0 %5412
  %5414 = vrot.lane.b32.xlu0 %v5251, 8
  %v5415 = vpop.permute.xlu0 %5414
  %5416 = vrot.lane.b32.xlu0 %v5252, 8
  %v5417 = vpop.permute.xlu0 %5416
  %5418 = vrot.lane.b32.xlu0 %v5253, 8
  %v5419 = vpop.permute.xlu0 %5418
  %5420 = vrot.lane.b32.xlu0 %v5254, 8
  %v5421 = vpop.permute.xlu0 %5420
  %5422 = vrot.lane.b32.xlu0 %v5255, 8
  %v5423 = vpop.permute.xlu0 %5422
  %5424 = vrot.lane.b32.xlu0 %v5256, 8
  %v5425 = vpop.permute.xlu0 %5424
  %5426 = vrot.lane.b32.xlu0 %v5257, 8
  %v5427 = vpop.permute.xlu0 %5426
  %5428 = vrot.lane.b32.xlu0 %v5258, 8
  %v5429 = vpop.permute.xlu0 %5428
  %5430 = vrot.lane.b32.xlu0 %v5259, 8
  %v5431 = vpop.permute.xlu0 %5430
  %5432 = vrot.lane.b32.xlu0 %v5260, 8
  %v5433 = vpop.permute.xlu0 %5432
  %5434 = vrot.lane.b32.xlu0 %v5261, 8
  %v5435 = vpop.permute.xlu0 %5434
  %5436 = vrot.lane.b32.xlu0 %v5262, 8
  %v5437 = vpop.permute.xlu0 %5436
  %5438 = vrot.lane.b32.xlu0 %v5263, 8
  %v5439 = vpop.permute.xlu0 %5438
  %5440 = vrot.lane.b32.xlu0 %v5264, 8
  %v5441 = vpop.permute.xlu0 %5440
  %5442 = vrot.lane.b32.xlu0 %v5265, 8
  %v5443 = vpop.permute.xlu0 %5442
  %5444 = vrot.lane.b32.xlu0 %v5266, 8
  %v5445 = vpop.permute.xlu0 %5444
  %5446 = vrot.lane.b32.xlu0 %v5267, 8
  %v5447 = vpop.permute.xlu0 %5446
  %5448 = vrot.lane.b32.xlu0 %v5268, 8
  %v5449 = vpop.permute.xlu0 %5448
  %5450 = vrot.lane.b32.xlu0 %v5269, 8
  %v5451 = vpop.permute.xlu0 %5450
  %5452 = vrot.lane.b32.xlu0 %v5270, 8
  %v5453 = vpop.permute.xlu0 %5452
  %5454 = vrot.lane.b32.xlu0 %v5271, 8
  %v5455 = vpop.permute.xlu0 %5454
  %5456 = vrot.lane.b32.xlu0 %v5272, 8
  %v5457 = vpop.permute.xlu0 %5456
  %5458 = vrot.lane.b32.xlu0 %v5273, 8
  %v5459 = vpop.permute.xlu0 %5458
  %5460 = vrot.lane.b32.xlu0 %v5274, 8
  %v5461 = vpop.permute.xlu0 %5460
  %5462 = vrot.lane.b32.xlu0 %v5275, 8
  %v5463 = vpop.permute.xlu0 %5462
  %5464 = vrot.lane.b32.xlu0 %v5276, 8
  %v5465 = vpop.permute.xlu0 %5464
  %5466 = vrot.lane.b32.xlu0 %v5277, 8
  %v5467 = vpop.permute.xlu0 %5466
  %5468 = vrot.lane.b32.xlu0 %v5278, 8
  %v5469 = vpop.permute.xlu0 %5468
  %5470 = vrot.lane.b32.xlu0 %v5279, 8
  %v5471 = vpop.permute.xlu0 %5470
  %5536 = vst.msk [vmem:[#allocation3] sm:$0xff] %vm1068, %v5345
  %5537 = vst.msk [vmem:[#allocation3 + $0x8] sm:$0xff] %vm1068, %v5347
  %5538 = vst.msk [vmem:[#allocation3 + $0x10] sm:$0xff] %vm1068, %v5349
  %5539 = vst.msk [vmem:[#allocation3 + $0x18] sm:$0xff] %vm1068, %v5351
  %5540 = vst.msk [vmem:[#allocation3 + $0x20] sm:$0xff] %vm1068, %v5353
  %5541 = vst.msk [vmem:[#allocation3 + $0x28] sm:$0xff] %vm1068, %v5355
  %5542 = vst.msk [vmem:[#allocation3 + $0x30] sm:$0xff] %vm1068, %v5357
  %5543 = vst.msk [vmem:[#allocation3 + $0x38] sm:$0xff] %vm1068, %v5359
  %5544 = vst.msk [vmem:[#allocation3 + $0x40] sm:$0xff] %vm1068, %v5361
  %5545 = vst.msk [vmem:[#allocation3 + $0x48] sm:$0xff] %vm1068, %v5363
  %5546 = vst.msk [vmem:[#allocation3 + $0x50] sm:$0xff] %vm1068, %v5365
  %5547 = vst.msk [vmem:[#allocation3 + $0x58] sm:$0xff] %vm1068, %v5367
  %5548 = vst.msk [vmem:[#allocation3 + $0x60] sm:$0xff] %vm1068, %v5369
  %5549 = vst.msk [vmem:[#allocation3 + $0x68] sm:$0xff] %vm1068, %v5371
  %5550 = vst.msk [vmem:[#allocation3 + $0x70] sm:$0xff] %vm1068, %v5373
  %5551 = vst.msk [vmem:[#allocation3 + $0x78] sm:$0xff] %vm1068, %v5375
  %5552 = vst.msk [vmem:[#allocation3 + $0x80] sm:$0xff] %vm1068, %v5377
  %5553 = vst.msk [vmem:[#allocation3 + $0x88] sm:$0xff] %vm1068, %v5379
  %5554 = vst.msk [vmem:[#allocation3 + $0x90] sm:$0xff] %vm1068, %v5381
  %5555 = vst.msk [vmem:[#allocation3 + $0x98] sm:$0xff] %vm1068, %v5383
  %5556 = vst.msk [vmem:[#allocation3 + $0xa0] sm:$0xff] %vm1068, %v5385
  %5557 = vst.msk [vmem:[#allocation3 + $0xa8] sm:$0xff] %vm1068, %v5387
  %5558 = vst.msk [vmem:[#allocation3 + $0xb0] sm:$0xff] %vm1068, %v5389
  %5559 = vst.msk [vmem:[#allocation3 + $0xb8] sm:$0xff] %vm1068, %v5391
  %5560 = vst.msk [vmem:[#allocation3 + $0xc0] sm:$0xff] %vm1068, %v5393
  %5561 = vst.msk [vmem:[#allocation3 + $0xc8] sm:$0xff] %vm1068, %v5395
  %5562 = vst.msk [vmem:[#allocation3 + $0xd0] sm:$0xff] %vm1068, %v5397
  %5563 = vst.msk [vmem:[#allocation3 + $0xd8] sm:$0xff] %vm1068, %v5399
  %5564 = vst.msk [vmem:[#allocation3 + $0xe0] sm:$0xff] %vm1068, %v5401
  %5565 = vst.msk [vmem:[#allocation3 + $0xe8] sm:$0xff] %vm1068, %v5403
  %5566 = vst.msk [vmem:[#allocation3 + $0xf0] sm:$0xff] %vm1068, %v5405
  %5567 = vst.msk [vmem:[#allocation3 + $0xf8] sm:$0xff] %vm1068, %v5407
  %5568 = vst.msk [vmem:[#allocation3 + $0x100] sm:$0xff] %vm1068, %v5409
  %5569 = vst.msk [vmem:[#allocation3 + $0x108] sm:$0xff] %vm1068, %v5411
  %5570 = vst.msk [vmem:[#allocation3 + $0x110] sm:$0xff] %vm1068, %v5413
  %5571 = vst.msk [vmem:[#allocation3 + $0x118] sm:$0xff] %vm1068, %v5415
  %5572 = vst.msk [vmem:[#allocation3 + $0x120] sm:$0xff] %vm1068, %v5417
  %5573 = vst.msk [vmem:[#allocation3 + $0x128] sm:$0xff] %vm1068, %v5419
  %5574 = vst.msk [vmem:[#allocation3 + $0x130] sm:$0xff] %vm1068, %v5421
  %5575 = vst.msk [vmem:[#allocation3 + $0x138] sm:$0xff] %vm1068, %v5423
  %5576 = vst.msk [vmem:[#allocation3 + $0x140] sm:$0xff] %vm1068, %v5425
  %5577 = vst.msk [vmem:[#allocation3 + $0x148] sm:$0xff] %vm1068, %v5427
  %5578 = vst.msk [vmem:[#allocation3 + $0x150] sm:$0xff] %vm1068, %v5429
  %5579 = vst.msk [vmem:[#allocation3 + $0x158] sm:$0xff] %vm1068, %v5431
  %5580 = vst.msk [vmem:[#allocation3 + $0x160] sm:$0xff] %vm1068, %v5433
  %5581 = vst.msk [vmem:[#allocation3 + $0x168] sm:$0xff] %vm1068, %v5435
  %5582 = vst.msk [vmem:[#allocation3 + $0x170] sm:$0xff] %vm1068, %v5437
  %5583 = vst.msk [vmem:[#allocation3 + $0x178] sm:$0xff] %vm1068, %v5439
  %5584 = vst.msk [vmem:[#allocation3 + $0x180] sm:$0xff] %vm1068, %v5441
  %5585 = vst.msk [vmem:[#allocation3 + $0x188] sm:$0xff] %vm1068, %v5443
  %5586 = vst.msk [vmem:[#allocation3 + $0x190] sm:$0xff] %vm1068, %v5445
  %5587 = vst.msk [vmem:[#allocation3 + $0x198] sm:$0xff] %vm1068, %v5447
  %5588 = vst.msk [vmem:[#allocation3 + $0x1a0] sm:$0xff] %vm1068, %v5449
  %5589 = vst.msk [vmem:[#allocation3 + $0x1a8] sm:$0xff] %vm1068, %v5451
  %5590 = vst.msk [vmem:[#allocation3 + $0x1b0] sm:$0xff] %vm1068, %v5453
  %5591 = vst.msk [vmem:[#allocation3 + $0x1b8] sm:$0xff] %vm1068, %v5455
  %5592 = vst.msk [vmem:[#allocation3 + $0x1c0] sm:$0xff] %vm1068, %v5457
  %5593 = vst.msk [vmem:[#allocation3 + $0x1c8] sm:$0xff] %vm1068, %v5459
  %5594 = vst.msk [vmem:[#allocation3 + $0x1d0] sm:$0xff] %vm1068, %v5461
  %5595 = vst.msk [vmem:[#allocation3 + $0x1d8] sm:$0xff] %vm1068, %v5463
  %5596 = vst.msk [vmem:[#allocation3 + $0x1e0] sm:$0xff] %vm1068, %v5465
  %5597 = vst.msk [vmem:[#allocation3 + $0x1e8] sm:$0xff] %vm1068, %v5467
  %5598 = vst.msk [vmem:[#allocation3 + $0x1f0] sm:$0xff] %vm1068, %v5469
  %5599 = vst.msk [vmem:[#allocation3 + $0x1f8] sm:$0xff] %vm1068, %v5471
  %v5600 = vld [vmem:[%s41] sm:$0xff]
  %v5601 = vld [vmem:[%s41 + $0x8] sm:$0xff]
  %v5602 = vld [vmem:[%s41 + $0x18] sm:$0xff]
  %v5603 = vld [vmem:[%s41 + $0x20] sm:$0xff]
  %v5604 = vld [vmem:[%s41 + $0x30] sm:$0xff]
  %v5605 = vld [vmem:[%s41 + $0x38] sm:$0xff]
  %v5606 = vld [vmem:[%s41 + $0x48] sm:$0xff]
  %v5607 = vld [vmem:[%s41 + $0x50] sm:$0xff]
  %v5608 = vld [vmem:[%s41 + $0x60] sm:$0xff]
  %v5609 = vld [vmem:[%s41 + $0x68] sm:$0xff]
  %v5610 = vld [vmem:[%s41 + $0x78] sm:$0xff]
  %v5611 = vld [vmem:[%s41 + $0x80] sm:$0xff]
  %v5612 = vld [vmem:[%s41 + $0x90] sm:$0xff]
  %v5613 = vld [vmem:[%s41 + $0x98] sm:$0xff]
  %v5614 = vld [vmem:[%s41 + $0xa8] sm:$0xff]
  %v5615 = vld [vmem:[%s41 + $0xb0] sm:$0xff]
  %v5616 = vld [vmem:[%s41 + $0xc0] sm:$0xff]
  %v5617 = vld [vmem:[%s41 + $0xc8] sm:$0xff]
  %v5618 = vld [vmem:[%s41 + $0xd8] sm:$0xff]
  %v5619 = vld [vmem:[%s41 + $0xe0] sm:$0xff]
  %v5620 = vld [vmem:[%s41 + $0xf0] sm:$0xff]
  %v5621 = vld [vmem:[%s41 + $0xf8] sm:$0xff]
  %v5622 = vld [vmem:[%s41 + $0x108] sm:$0xff]
  %v5623 = vld [vmem:[%s41 + $0x110] sm:$0xff]
  %v5624 = vld [vmem:[%s41 + $0x120] sm:$0xff]
  %v5625 = vld [vmem:[%s41 + $0x128] sm:$0xff]
  %v5626 = vld [vmem:[%s41 + $0x138] sm:$0xff]
  %v5627 = vld [vmem:[%s41 + $0x140] sm:$0xff]
  %v5628 = vld [vmem:[%s41 + $0x150] sm:$0xff]
  %v5629 = vld [vmem:[%s41 + $0x158] sm:$0xff]
  %v5630 = vld [vmem:[%s41 + $0x168] sm:$0xff]
  %v5631 = vld [vmem:[%s41 + $0x170] sm:$0xff]
  %v5632 = vld [vmem:[%s41 + $0x1b0] sm:$0xff]
  %v5633 = vld [vmem:[%s41 + $0x1b8] sm:$0xff]
  %v5634 = vld [vmem:[%s41 + $0x1c8] sm:$0xff]
  %v5635 = vld [vmem:[%s41 + $0x1d0] sm:$0xff]
  %v5636 = vld [vmem:[%s41 + $0x1e0] sm:$0xff]
  %v5637 = vld [vmem:[%s41 + $0x1e8] sm:$0xff]
  %v5638 = vld [vmem:[%s41 + $0x1f8] sm:$0xff]
  %v5639 = vld [vmem:[%s41 + $0x200] sm:$0xff]
  %v5640 = vld [vmem:[%s41 + $0x210] sm:$0xff]
  %v5641 = vld [vmem:[%s41 + $0x218] sm:$0xff]
  %v5642 = vld [vmem:[%s41 + $0x228] sm:$0xff]
  %v5643 = vld [vmem:[%s41 + $0x230] sm:$0xff]
  %v5644 = vld [vmem:[%s41 + $0x240] sm:$0xff]
  %v5645 = vld [vmem:[%s41 + $0x248] sm:$0xff]
  %v5646 = vld [vmem:[%s41 + $0x258] sm:$0xff]
  %v5647 = vld [vmem:[%s41 + $0x260] sm:$0xff]
  %v5648 = vld [vmem:[%s41 + $0x270] sm:$0xff]
  %v5649 = vld [vmem:[%s41 + $0x278] sm:$0xff]
  %v5650 = vld [vmem:[%s41 + $0x288] sm:$0xff]
  %v5651 = vld [vmem:[%s41 + $0x290] sm:$0xff]
  %v5652 = vld [vmem:[%s41 + $0x2a0] sm:$0xff]
  %v5653 = vld [vmem:[%s41 + $0x2a8] sm:$0xff]
  %v5654 = vld [vmem:[%s41 + $0x2b8] sm:$0xff]
  %v5655 = vld [vmem:[%s41 + $0x2c0] sm:$0xff]
  %v5656 = vld [vmem:[%s41 + $0x2d0] sm:$0xff]
  %v5657 = vld [vmem:[%s41 + $0x2d8] sm:$0xff]
  %v5658 = vld [vmem:[%s41 + $0x2e8] sm:$0xff]
  %v5659 = vld [vmem:[%s41 + $0x2f0] sm:$0xff]
  %v5660 = vld [vmem:[%s41 + $0x300] sm:$0xff]
  %v5661 = vld [vmem:[%s41 + $0x308] sm:$0xff]
  %v5662 = vld [vmem:[%s41 + $0x318] sm:$0xff]
  %v5663 = vld [vmem:[%s41 + $0x320] sm:$0xff]
  %5728 = vrot.lane.b32.xlu0 %v5600, 12
  %v5729 = vpop.permute.xlu0 %5728
  %5730 = vrot.lane.b32.xlu0 %v5601, 12
  %v5731 = vpop.permute.xlu0 %5730
  %5732 = vrot.lane.b32.xlu0 %v5602, 12
  %v5733 = vpop.permute.xlu0 %5732
  %5734 = vrot.lane.b32.xlu0 %v5603, 12
  %v5735 = vpop.permute.xlu0 %5734
  %5736 = vrot.lane.b32.xlu0 %v5604, 12
  %v5737 = vpop.permute.xlu0 %5736
  %5738 = vrot.lane.b32.xlu0 %v5605, 12
  %v5739 = vpop.permute.xlu0 %5738
  %5740 = vrot.lane.b32.xlu0 %v5606, 12
  %v5741 = vpop.permute.xlu0 %5740
  %5742 = vrot.lane.b32.xlu0 %v5607, 12
  %v5743 = vpop.permute.xlu0 %5742
  %5744 = vrot.lane.b32.xlu0 %v5608, 12
  %v5745 = vpop.permute.xlu0 %5744
  %5746 = vrot.lane.b32.xlu0 %v5609, 12
  %v5747 = vpop.permute.xlu0 %5746
  %5748 = vrot.lane.b32.xlu0 %v5610, 12
  %v5749 = vpop.permute.xlu0 %5748
  %5750 = vrot.lane.b32.xlu0 %v5611, 12
  %v5751 = vpop.permute.xlu0 %5750
  %5752 = vrot.lane.b32.xlu0 %v5612, 12
  %v5753 = vpop.permute.xlu0 %5752
  %5754 = vrot.lane.b32.xlu0 %v5613, 12
  %v5755 = vpop.permute.xlu0 %5754
  %5756 = vrot.lane.b32.xlu0 %v5614, 12
  %v5757 = vpop.permute.xlu0 %5756
  %5758 = vrot.lane.b32.xlu0 %v5615, 12
  %v5759 = vpop.permute.xlu0 %5758
  %5760 = vrot.lane.b32.xlu0 %v5616, 12
  %v5761 = vpop.permute.xlu0 %5760
  %5762 = vrot.lane.b32.xlu0 %v5617, 12
  %v5763 = vpop.permute.xlu0 %5762
  %5764 = vrot.lane.b32.xlu0 %v5618, 12
  %v5765 = vpop.permute.xlu0 %5764
  %5766 = vrot.lane.b32.xlu0 %v5619, 12
  %v5767 = vpop.permute.xlu0 %5766
  %5768 = vrot.lane.b32.xlu0 %v5620, 12
  %v5769 = vpop.permute.xlu0 %5768
  %5770 = vrot.lane.b32.xlu0 %v5621, 12
  %v5771 = vpop.permute.xlu0 %5770
  %5772 = vrot.lane.b32.xlu0 %v5622, 12
  %v5773 = vpop.permute.xlu0 %5772
  %5774 = vrot.lane.b32.xlu0 %v5623, 12
  %v5775 = vpop.permute.xlu0 %5774
  %5776 = vrot.lane.b32.xlu0 %v5624, 12
  %v5777 = vpop.permute.xlu0 %5776
  %5778 = vrot.lane.b32.xlu0 %v5625, 12
  %v5779 = vpop.permute.xlu0 %5778
  %5780 = vrot.lane.b32.xlu0 %v5626, 12
  %v5781 = vpop.permute.xlu0 %5780
  %5782 = vrot.lane.b32.xlu0 %v5627, 12
  %v5783 = vpop.permute.xlu0 %5782
  %5784 = vrot.lane.b32.xlu0 %v5628, 12
  %v5785 = vpop.permute.xlu0 %5784
  %5786 = vrot.lane.b32.xlu0 %v5629, 12
  %v5787 = vpop.permute.xlu0 %5786
  %5788 = vrot.lane.b32.xlu0 %v5630, 12
  %v5789 = vpop.permute.xlu0 %5788
  %5790 = vrot.lane.b32.xlu0 %v5631, 12
  %v5791 = vpop.permute.xlu0 %5790
  %5792 = vrot.lane.b32.xlu0 %v5632, 12
  %v5793 = vpop.permute.xlu0 %5792
  %5794 = vrot.lane.b32.xlu0 %v5633, 12
  %v5795 = vpop.permute.xlu0 %5794
  %5796 = vrot.lane.b32.xlu0 %v5634, 12
  %v5797 = vpop.permute.xlu0 %5796
  %5798 = vrot.lane.b32.xlu0 %v5635, 12
  %v5799 = vpop.permute.xlu0 %5798
  %5800 = vrot.lane.b32.xlu0 %v5636, 12
  %v5801 = vpop.permute.xlu0 %5800
  %5802 = vrot.lane.b32.xlu0 %v5637, 12
  %v5803 = vpop.permute.xlu0 %5802
  %5804 = vrot.lane.b32.xlu0 %v5638, 12
  %v5805 = vpop.permute.xlu0 %5804
  %5806 = vrot.lane.b32.xlu0 %v5639, 12
  %v5807 = vpop.permute.xlu0 %5806
  %5808 = vrot.lane.b32.xlu0 %v5640, 12
  %v5809 = vpop.permute.xlu0 %5808
  %5810 = vrot.lane.b32.xlu0 %v5641, 12
  %v5811 = vpop.permute.xlu0 %5810
  %5812 = vrot.lane.b32.xlu0 %v5642, 12
  %v5813 = vpop.permute.xlu0 %5812
  %5814 = vrot.lane.b32.xlu0 %v5643, 12
  %v5815 = vpop.permute.xlu0 %5814
  %5816 = vrot.lane.b32.xlu0 %v5644, 12
  %v5817 = vpop.permute.xlu0 %5816
  %5818 = vrot.lane.b32.xlu0 %v5645, 12
  %v5819 = vpop.permute.xlu0 %5818
  %5820 = vrot.lane.b32.xlu0 %v5646, 12
  %v5821 = vpop.permute.xlu0 %5820
  %5822 = vrot.lane.b32.xlu0 %v5647, 12
  %v5823 = vpop.permute.xlu0 %5822
  %5824 = vrot.lane.b32.xlu0 %v5648, 12
  %v5825 = vpop.permute.xlu0 %5824
  %5826 = vrot.lane.b32.xlu0 %v5649, 12
  %v5827 = vpop.permute.xlu0 %5826
  %5828 = vrot.lane.b32.xlu0 %v5650, 12
  %v5829 = vpop.permute.xlu0 %5828
  %5830 = vrot.lane.b32.xlu0 %v5651, 12
  %v5831 = vpop.permute.xlu0 %5830
  %5832 = vrot.lane.b32.xlu0 %v5652, 12
  %v5833 = vpop.permute.xlu0 %5832
  %5834 = vrot.lane.b32.xlu0 %v5653, 12
  %v5835 = vpop.permute.xlu0 %5834
  %5836 = vrot.lane.b32.xlu0 %v5654, 12
  %v5837 = vpop.permute.xlu0 %5836
  %5838 = vrot.lane.b32.xlu0 %v5655, 12
  %v5839 = vpop.permute.xlu0 %5838
  %5840 = vrot.lane.b32.xlu0 %v5656, 12
  %v5841 = vpop.permute.xlu0 %5840
  %5842 = vrot.lane.b32.xlu0 %v5657, 12
  %v5843 = vpop.permute.xlu0 %5842
  %5844 = vrot.lane.b32.xlu0 %v5658, 12
  %v5845 = vpop.permute.xlu0 %5844
  %5846 = vrot.lane.b32.xlu0 %v5659, 12
  %v5847 = vpop.permute.xlu0 %5846
  %5848 = vrot.lane.b32.xlu0 %v5660, 12
  %v5849 = vpop.permute.xlu0 %5848
  %5850 = vrot.lane.b32.xlu0 %v5661, 12
  %v5851 = vpop.permute.xlu0 %5850
  %5852 = vrot.lane.b32.xlu0 %v5662, 12
  %v5853 = vpop.permute.xlu0 %5852
  %5854 = vrot.lane.b32.xlu0 %v5663, 12
  %v5855 = vpop.permute.xlu0 %5854
  %5920 = vst.msk [vmem:[#allocation3] sm:$0xff] %vm1453, %v5729
  %5921 = vst.msk [vmem:[#allocation3 + $0x8] sm:$0xff] %vm1453, %v5731
  %5922 = vst.msk [vmem:[#allocation3 + $0x10] sm:$0xff] %vm1453, %v5733
  %5923 = vst.msk [vmem:[#allocation3 + $0x18] sm:$0xff] %vm1453, %v5735
  %5924 = vst.msk [vmem:[#allocation3 + $0x20] sm:$0xff] %vm1453, %v5737
  %5925 = vst.msk [vmem:[#allocation3 + $0x28] sm:$0xff] %vm1453, %v5739
  %5926 = vst.msk [vmem:[#allocation3 + $0x30] sm:$0xff] %vm1453, %v5741
  %5927 = vst.msk [vmem:[#allocation3 + $0x38] sm:$0xff] %vm1453, %v5743
  %5928 = vst.msk [vmem:[#allocation3 + $0x40] sm:$0xff] %vm1453, %v5745
  %5929 = vst.msk [vmem:[#allocation3 + $0x48] sm:$0xff] %vm1453, %v5747
  %5930 = vst.msk [vmem:[#allocation3 + $0x50] sm:$0xff] %vm1453, %v5749
  %5931 = vst.msk [vmem:[#allocation3 + $0x58] sm:$0xff] %vm1453, %v5751
  %5932 = vst.msk [vmem:[#allocation3 + $0x60] sm:$0xff] %vm1453, %v5753
  %5933 = vst.msk [vmem:[#allocation3 + $0x68] sm:$0xff] %vm1453, %v5755
  %5934 = vst.msk [vmem:[#allocation3 + $0x70] sm:$0xff] %vm1453, %v5757
  %5935 = vst.msk [vmem:[#allocation3 + $0x78] sm:$0xff] %vm1453, %v5759
  %5936 = vst.msk [vmem:[#allocation3 + $0x80] sm:$0xff] %vm1453, %v5761
  %5937 = vst.msk [vmem:[#allocation3 + $0x88] sm:$0xff] %vm1453, %v5763
  %5938 = vst.msk [vmem:[#allocation3 + $0x90] sm:$0xff] %vm1453, %v5765
  %5939 = vst.msk [vmem:[#allocation3 + $0x98] sm:$0xff] %vm1453, %v5767
  %5940 = vst.msk [vmem:[#allocation3 + $0xa0] sm:$0xff] %vm1453, %v5769
  %5941 = vst.msk [vmem:[#allocation3 + $0xa8] sm:$0xff] %vm1453, %v5771
  %5942 = vst.msk [vmem:[#allocation3 + $0xb0] sm:$0xff] %vm1453, %v5773
  %5943 = vst.msk [vmem:[#allocation3 + $0xb8] sm:$0xff] %vm1453, %v5775
  %5944 = vst.msk [vmem:[#allocation3 + $0xc0] sm:$0xff] %vm1453, %v5777
  %5945 = vst.msk [vmem:[#allocation3 + $0xc8] sm:$0xff] %vm1453, %v5779
  %5946 = vst.msk [vmem:[#allocation3 + $0xd0] sm:$0xff] %vm1453, %v5781
  %5947 = vst.msk [vmem:[#allocation3 + $0xd8] sm:$0xff] %vm1453, %v5783
  %5948 = vst.msk [vmem:[#allocation3 + $0xe0] sm:$0xff] %vm1453, %v5785
  %5949 = vst.msk [vmem:[#allocation3 + $0xe8] sm:$0xff] %vm1453, %v5787
  %5950 = vst.msk [vmem:[#allocation3 + $0xf0] sm:$0xff] %vm1453, %v5789
  %5951 = vst.msk [vmem:[#allocation3 + $0xf8] sm:$0xff] %vm1453, %v5791
  %5952 = vst.msk [vmem:[#allocation3 + $0x100] sm:$0xff] %vm1453, %v5793
  %5953 = vst.msk [vmem:[#allocation3 + $0x108] sm:$0xff] %vm1453, %v5795
  %5954 = vst.msk [vmem:[#allocation3 + $0x110] sm:$0xff] %vm1453, %v5797
  %5955 = vst.msk [vmem:[#allocation3 + $0x118] sm:$0xff] %vm1453, %v5799
  %5956 = vst.msk [vmem:[#allocation3 + $0x120] sm:$0xff] %vm1453, %v5801
  %5957 = vst.msk [vmem:[#allocation3 + $0x128] sm:$0xff] %vm1453, %v5803
  %5958 = vst.msk [vmem:[#allocation3 + $0x130] sm:$0xff] %vm1453, %v5805
  %5959 = vst.msk [vmem:[#allocation3 + $0x138] sm:$0xff] %vm1453, %v5807
  %5960 = vst.msk [vmem:[#allocation3 + $0x140] sm:$0xff] %vm1453, %v5809
  %5961 = vst.msk [vmem:[#allocation3 + $0x148] sm:$0xff] %vm1453, %v5811
  %5962 = vst.msk [vmem:[#allocation3 + $0x150] sm:$0xff] %vm1453, %v5813
  %5963 = vst.msk [vmem:[#allocation3 + $0x158] sm:$0xff] %vm1453, %v5815
  %5964 = vst.msk [vmem:[#allocation3 + $0x160] sm:$0xff] %vm1453, %v5817
  %5965 = vst.msk [vmem:[#allocation3 + $0x168] sm:$0xff] %vm1453, %v5819
  %5966 = vst.msk [vmem:[#allocation3 + $0x170] sm:$0xff] %vm1453, %v5821
  %5967 = vst.msk [vmem:[#allocation3 + $0x178] sm:$0xff] %vm1453, %v5823
  %5968 = vst.msk [vmem:[#allocation3 + $0x180] sm:$0xff] %vm1453, %v5825
  %5969 = vst.msk [vmem:[#allocation3 + $0x188] sm:$0xff] %vm1453, %v5827
  %5970 = vst.msk [vmem:[#allocation3 + $0x190] sm:$0xff] %vm1453, %v5829
  %5971 = vst.msk [vmem:[#allocation3 + $0x198] sm:$0xff] %vm1453, %v5831
  %5972 = vst.msk [vmem:[#allocation3 + $0x1a0] sm:$0xff] %vm1453, %v5833
  %5973 = vst.msk [vmem:[#allocation3 + $0x1a8] sm:$0xff] %vm1453, %v5835
  %5974 = vst.msk [vmem:[#allocation3 + $0x1b0] sm:$0xff] %vm1453, %v5837
  %5975 = vst.msk [vmem:[#allocation3 + $0x1b8] sm:$0xff] %vm1453, %v5839
  %5976 = vst.msk [vmem:[#allocation3 + $0x1c0] sm:$0xff] %vm1453, %v5841
  %5977 = vst.msk [vmem:[#allocation3 + $0x1c8] sm:$0xff] %vm1453, %v5843
  %5978 = vst.msk [vmem:[#allocation3 + $0x1d0] sm:$0xff] %vm1453, %v5845
  %5979 = vst.msk [vmem:[#allocation3 + $0x1d8] sm:$0xff] %vm1453, %v5847
  %5980 = vst.msk [vmem:[#allocation3 + $0x1e0] sm:$0xff] %vm1453, %v5849
  %5981 = vst.msk [vmem:[#allocation3 + $0x1e8] sm:$0xff] %vm1453, %v5851
  %5982 = vst.msk [vmem:[#allocation3 + $0x1f0] sm:$0xff] %vm1453, %v5853
  %5983 = vst.msk [vmem:[#allocation3 + $0x1f8] sm:$0xff] %vm1453, %v5855
  %v5984 = vld [vmem:[%s41 + $0x1] sm:$0xff]
  %v5985 = vld [vmem:[%s41 + $0x9] sm:$0xff]
  %v5986 = vld [vmem:[%s41 + $0x19] sm:$0xff]
  %v5987 = vld [vmem:[%s41 + $0x21] sm:$0xff]
  %v5988 = vld [vmem:[%s41 + $0x31] sm:$0xff]
  %v5989 = vld [vmem:[%s41 + $0x39] sm:$0xff]
  %v5990 = vld [vmem:[%s41 + $0x49] sm:$0xff]
  %v5991 = vld [vmem:[%s41 + $0x51] sm:$0xff]
  %v5992 = vld [vmem:[%s41 + $0x61] sm:$0xff]
  %v5993 = vld [vmem:[%s41 + $0x69] sm:$0xff]
  %v5994 = vld [vmem:[%s41 + $0x79] sm:$0xff]
  %v5995 = vld [vmem:[%s41 + $0x81] sm:$0xff]
  %v5996 = vld [vmem:[%s41 + $0x91] sm:$0xff]
  %v5997 = vld [vmem:[%s41 + $0x99] sm:$0xff]
  %v5998 = vld [vmem:[%s41 + $0xa9] sm:$0xff]
  %v5999 = vld [vmem:[%s41 + $0xb1] sm:$0xff]
  %v6000 = vld [vmem:[%s41 + $0xc1] sm:$0xff]
  %v6001 = vld [vmem:[%s41 + $0xc9] sm:$0xff]
  %v6002 = vld [vmem:[%s41 + $0xd9] sm:$0xff]
  %v6003 = vld [vmem:[%s41 + $0xe1] sm:$0xff]
  %v6004 = vld [vmem:[%s41 + $0xf1] sm:$0xff]
  %v6005 = vld [vmem:[%s41 + $0xf9] sm:$0xff]
  %v6006 = vld [vmem:[%s41 + $0x109] sm:$0xff]
  %v6007 = vld [vmem:[%s41 + $0x111] sm:$0xff]
  %v6008 = vld [vmem:[%s41 + $0x121] sm:$0xff]
  %v6009 = vld [vmem:[%s41 + $0x129] sm:$0xff]
  %v6010 = vld [vmem:[%s41 + $0x139] sm:$0xff]
  %v6011 = vld [vmem:[%s41 + $0x141] sm:$0xff]
  %v6012 = vld [vmem:[%s41 + $0x151] sm:$0xff]
  %v6013 = vld [vmem:[%s41 + $0x159] sm:$0xff]
  %v6014 = vld [vmem:[%s41 + $0x169] sm:$0xff]
  %v6015 = vld [vmem:[%s41 + $0x171] sm:$0xff]
  %v6016 = vld [vmem:[%s41 + $0x1b1] sm:$0xff]
  %v6017 = vld [vmem:[%s41 + $0x1b9] sm:$0xff]
  %v6018 = vld [vmem:[%s41 + $0x1c9] sm:$0xff]
  %v6019 = vld [vmem:[%s41 + $0x1d1] sm:$0xff]
  %v6020 = vld [vmem:[%s41 + $0x1e1] sm:$0xff]
  %v6021 = vld [vmem:[%s41 + $0x1e9] sm:$0xff]
  %v6022 = vld [vmem:[%s41 + $0x1f9] sm:$0xff]
  %v6023 = vld [vmem:[%s41 + $0x201] sm:$0xff]
  %v6024 = vld [vmem:[%s41 + $0x211] sm:$0xff]
  %v6025 = vld [vmem:[%s41 + $0x219] sm:$0xff]
  %v6026 = vld [vmem:[%s41 + $0x229] sm:$0xff]
  %v6027 = vld [vmem:[%s41 + $0x231] sm:$0xff]
  %v6028 = vld [vmem:[%s41 + $0x241] sm:$0xff]
  %v6029 = vld [vmem:[%s41 + $0x249] sm:$0xff]
  %v6030 = vld [vmem:[%s41 + $0x259] sm:$0xff]
  %v6031 = vld [vmem:[%s41 + $0x261] sm:$0xff]
  %v6032 = vld [vmem:[%s41 + $0x271] sm:$0xff]
  %v6033 = vld [vmem:[%s41 + $0x279] sm:$0xff]
  %v6034 = vld [vmem:[%s41 + $0x289] sm:$0xff]
  %v6035 = vld [vmem:[%s41 + $0x291] sm:$0xff]
  %v6036 = vld [vmem:[%s41 + $0x2a1] sm:$0xff]
  %v6037 = vld [vmem:[%s41 + $0x2a9] sm:$0xff]
  %v6038 = vld [vmem:[%s41 + $0x2b9] sm:$0xff]
  %v6039 = vld [vmem:[%s41 + $0x2c1] sm:$0xff]
  %v6040 = vld [vmem:[%s41 + $0x2d1] sm:$0xff]
  %v6041 = vld [vmem:[%s41 + $0x2d9] sm:$0xff]
  %v6042 = vld [vmem:[%s41 + $0x2e9] sm:$0xff]
  %v6043 = vld [vmem:[%s41 + $0x2f1] sm:$0xff]
  %v6044 = vld [vmem:[%s41 + $0x301] sm:$0xff]
  %v6045 = vld [vmem:[%s41 + $0x309] sm:$0xff]
  %v6046 = vld [vmem:[%s41 + $0x319] sm:$0xff]
  %v6047 = vld [vmem:[%s41 + $0x321] sm:$0xff]
  %6112 = vrot.lane.b32.xlu0 %v5984, 16
  %v6113 = vpop.permute.xlu0 %6112
  %6114 = vrot.lane.b32.xlu0 %v5985, 16
  %v6115 = vpop.permute.xlu0 %6114
  %6116 = vrot.lane.b32.xlu0 %v5986, 16
  %v6117 = vpop.permute.xlu0 %6116
  %6118 = vrot.lane.b32.xlu0 %v5987, 16
  %v6119 = vpop.permute.xlu0 %6118
  %6120 = vrot.lane.b32.xlu0 %v5988, 16
  %v6121 = vpop.permute.xlu0 %6120
  %6122 = vrot.lane.b32.xlu0 %v5989, 16
  %v6123 = vpop.permute.xlu0 %6122
  %6124 = vrot.lane.b32.xlu0 %v5990, 16
  %v6125 = vpop.permute.xlu0 %6124
  %6126 = vrot.lane.b32.xlu0 %v5991, 16
  %v6127 = vpop.permute.xlu0 %6126
  %6128 = vrot.lane.b32.xlu0 %v5992, 16
  %v6129 = vpop.permute.xlu0 %6128
  %6130 = vrot.lane.b32.xlu0 %v5993, 16
  %v6131 = vpop.permute.xlu0 %6130
  %6132 = vrot.lane.b32.xlu0 %v5994, 16
  %v6133 = vpop.permute.xlu0 %6132
  %6134 = vrot.lane.b32.xlu0 %v5995, 16
  %v6135 = vpop.permute.xlu0 %6134
  %6136 = vrot.lane.b32.xlu0 %v5996, 16
  %v6137 = vpop.permute.xlu0 %6136
  %6138 = vrot.lane.b32.xlu0 %v5997, 16
  %v6139 = vpop.permute.xlu0 %6138
  %6140 = vrot.lane.b32.xlu0 %v5998, 16
  %v6141 = vpop.permute.xlu0 %6140
  %6142 = vrot.lane.b32.xlu0 %v5999, 16
  %v6143 = vpop.permute.xlu0 %6142
  %6144 = vrot.lane.b32.xlu0 %v6000, 16
  %v6145 = vpop.permute.xlu0 %6144
  %6146 = vrot.lane.b32.xlu0 %v6001, 16
  %v6147 = vpop.permute.xlu0 %6146
  %6148 = vrot.lane.b32.xlu0 %v6002, 16
  %v6149 = vpop.permute.xlu0 %6148
  %6150 = vrot.lane.b32.xlu0 %v6003, 16
  %v6151 = vpop.permute.xlu0 %6150
  %6152 = vrot.lane.b32.xlu0 %v6004, 16
  %v6153 = vpop.permute.xlu0 %6152
  %6154 = vrot.lane.b32.xlu0 %v6005, 16
  %v6155 = vpop.permute.xlu0 %6154
  %6156 = vrot.lane.b32.xlu0 %v6006, 16
  %v6157 = vpop.permute.xlu0 %6156
  %6158 = vrot.lane.b32.xlu0 %v6007, 16
  %v6159 = vpop.permute.xlu0 %6158
  %6160 = vrot.lane.b32.xlu0 %v6008, 16
  %v6161 = vpop.permute.xlu0 %6160
  %6162 = vrot.lane.b32.xlu0 %v6009, 16
  %v6163 = vpop.permute.xlu0 %6162
  %6164 = vrot.lane.b32.xlu0 %v6010, 16
  %v6165 = vpop.permute.xlu0 %6164
  %6166 = vrot.lane.b32.xlu0 %v6011, 16
  %v6167 = vpop.permute.xlu0 %6166
  %6168 = vrot.lane.b32.xlu0 %v6012, 16
  %v6169 = vpop.permute.xlu0 %6168
  %6170 = vrot.lane.b32.xlu0 %v6013, 16
  %v6171 = vpop.permute.xlu0 %6170
  %6172 = vrot.lane.b32.xlu0 %v6014, 16
  %v6173 = vpop.permute.xlu0 %6172
  %6174 = vrot.lane.b32.xlu0 %v6015, 16
  %v6175 = vpop.permute.xlu0 %6174
  %6176 = vrot.lane.b32.xlu0 %v6016, 16
  %v6177 = vpop.permute.xlu0 %6176
  %6178 = vrot.lane.b32.xlu0 %v6017, 16
  %v6179 = vpop.permute.xlu0 %6178
  %6180 = vrot.lane.b32.xlu0 %v6018, 16
  %v6181 = vpop.permute.xlu0 %6180
  %6182 = vrot.lane.b32.xlu0 %v6019, 16
  %v6183 = vpop.permute.xlu0 %6182
  %6184 = vrot.lane.b32.xlu0 %v6020, 16
  %v6185 = vpop.permute.xlu0 %6184
  %6186 = vrot.lane.b32.xlu0 %v6021, 16
  %v6187 = vpop.permute.xlu0 %6186
  %6188 = vrot.lane.b32.xlu0 %v6022, 16
  %v6189 = vpop.permute.xlu0 %6188
  %6190 = vrot.lane.b32.xlu0 %v6023, 16
  %v6191 = vpop.permute.xlu0 %6190
  %6192 = vrot.lane.b32.xlu0 %v6024, 16
  %v6193 = vpop.permute.xlu0 %6192
  %6194 = vrot.lane.b32.xlu0 %v6025, 16
  %v6195 = vpop.permute.xlu0 %6194
  %6196 = vrot.lane.b32.xlu0 %v6026, 16
  %v6197 = vpop.permute.xlu0 %6196
  %6198 = vrot.lane.b32.xlu0 %v6027, 16
  %v6199 = vpop.permute.xlu0 %6198
  %6200 = vrot.lane.b32.xlu0 %v6028, 16
  %v6201 = vpop.permute.xlu0 %6200
  %6202 = vrot.lane.b32.xlu0 %v6029, 16
  %v6203 = vpop.permute.xlu0 %6202
  %6204 = vrot.lane.b32.xlu0 %v6030, 16
  %v6205 = vpop.permute.xlu0 %6204
  %6206 = vrot.lane.b32.xlu0 %v6031, 16
  %v6207 = vpop.permute.xlu0 %6206
  %6208 = vrot.lane.b32.xlu0 %v6032, 16
  %v6209 = vpop.permute.xlu0 %6208
  %6210 = vrot.lane.b32.xlu0 %v6033, 16
  %v6211 = vpop.permute.xlu0 %6210
  %6212 = vrot.lane.b32.xlu0 %v6034, 16
  %v6213 = vpop.permute.xlu0 %6212
  %6214 = vrot.lane.b32.xlu0 %v6035, 16
  %v6215 = vpop.permute.xlu0 %6214
  %6216 = vrot.lane.b32.xlu0 %v6036, 16
  %v6217 = vpop.permute.xlu0 %6216
  %6218 = vrot.lane.b32.xlu0 %v6037, 16
  %v6219 = vpop.permute.xlu0 %6218
  %6220 = vrot.lane.b32.xlu0 %v6038, 16
  %v6221 = vpop.permute.xlu0 %6220
  %6222 = vrot.lane.b32.xlu0 %v6039, 16
  %v6223 = vpop.permute.xlu0 %6222
  %6224 = vrot.lane.b32.xlu0 %v6040, 16
  %v6225 = vpop.permute.xlu0 %6224
  %6226 = vrot.lane.b32.xlu0 %v6041, 16
  %v6227 = vpop.permute.xlu0 %6226
  %6228 = vrot.lane.b32.xlu0 %v6042, 16
  %v6229 = vpop.permute.xlu0 %6228
  %6230 = vrot.lane.b32.xlu0 %v6043, 16
  %v6231 = vpop.permute.xlu0 %6230
  %6232 = vrot.lane.b32.xlu0 %v6044, 16
  %v6233 = vpop.permute.xlu0 %6232
  %6234 = vrot.lane.b32.xlu0 %v6045, 16
  %v6235 = vpop.permute.xlu0 %6234
  %6236 = vrot.lane.b32.xlu0 %v6046, 16
  %v6237 = vpop.permute.xlu0 %6236
  %6238 = vrot.lane.b32.xlu0 %v6047, 16
  %v6239 = vpop.permute.xlu0 %6238
  %6304 = vst.msk [vmem:[#allocation3] sm:$0xff] %vm1838, %v6113
  %6305 = vst.msk [vmem:[#allocation3 + $0x8] sm:$0xff] %vm1838, %v6115
  %6306 = vst.msk [vmem:[#allocation3 + $0x10] sm:$0xff] %vm1838, %v6117
  %6307 = vst.msk [vmem:[#allocation3 + $0x18] sm:$0xff] %vm1838, %v6119
  %6308 = vst.msk [vmem:[#allocation3 + $0x20] sm:$0xff] %vm1838, %v6121
  %6309 = vst.msk [vmem:[#allocation3 + $0x28] sm:$0xff] %vm1838, %v6123
  %6310 = vst.msk [vmem:[#allocation3 + $0x30] sm:$0xff] %vm1838, %v6125
  %6311 = vst.msk [vmem:[#allocation3 + $0x38] sm:$0xff] %vm1838, %v6127
  %6312 = vst.msk [vmem:[#allocation3 + $0x40] sm:$0xff] %vm1838, %v6129
  %6313 = vst.msk [vmem:[#allocation3 + $0x48] sm:$0xff] %vm1838, %v6131
  %6314 = vst.msk [vmem:[#allocation3 + $0x50] sm:$0xff] %vm1838, %v6133
  %6315 = vst.msk [vmem:[#allocation3 + $0x58] sm:$0xff] %vm1838, %v6135
  %6316 = vst.msk [vmem:[#allocation3 + $0x60] sm:$0xff] %vm1838, %v6137
  %6317 = vst.msk [vmem:[#allocation3 + $0x68] sm:$0xff] %vm1838, %v6139
  %6318 = vst.msk [vmem:[#allocation3 + $0x70] sm:$0xff] %vm1838, %v6141
  %6319 = vst.msk [vmem:[#allocation3 + $0x78] sm:$0xff] %vm1838, %v6143
  %6320 = vst.msk [vmem:[#allocation3 + $0x80] sm:$0xff] %vm1838, %v6145
  %6321 = vst.msk [vmem:[#allocation3 + $0x88] sm:$0xff] %vm1838, %v6147
  %6322 = vst.msk [vmem:[#allocation3 + $0x90] sm:$0xff] %vm1838, %v6149
  %6323 = vst.msk [vmem:[#allocation3 + $0x98] sm:$0xff] %vm1838, %v6151
  %6324 = vst.msk [vmem:[#allocation3 + $0xa0] sm:$0xff] %vm1838, %v6153
  %6325 = vst.msk [vmem:[#allocation3 + $0xa8] sm:$0xff] %vm1838, %v6155
  %6326 = vst.msk [vmem:[#allocation3 + $0xb0] sm:$0xff] %vm1838, %v6157
  %6327 = vst.msk [vmem:[#allocation3 + $0xb8] sm:$0xff] %vm1838, %v6159
  %6328 = vst.msk [vmem:[#allocation3 + $0xc0] sm:$0xff] %vm1838, %v6161
  %6329 = vst.msk [vmem:[#allocation3 + $0xc8] sm:$0xff] %vm1838, %v6163
  %6330 = vst.msk [vmem:[#allocation3 + $0xd0] sm:$0xff] %vm1838, %v6165
  %6331 = vst.msk [vmem:[#allocation3 + $0xd8] sm:$0xff] %vm1838, %v6167
  %6332 = vst.msk [vmem:[#allocation3 + $0xe0] sm:$0xff] %vm1838, %v6169
  %6333 = vst.msk [vmem:[#allocation3 + $0xe8] sm:$0xff] %vm1838, %v6171
  %6334 = vst.msk [vmem:[#allocation3 + $0xf0] sm:$0xff] %vm1838, %v6173
  %6335 = vst.msk [vmem:[#allocation3 + $0xf8] sm:$0xff] %vm1838, %v6175
  %6336 = vst.msk [vmem:[#allocation3 + $0x100] sm:$0xff] %vm1838, %v6177
  %6337 = vst.msk [vmem:[#allocation3 + $0x108] sm:$0xff] %vm1838, %v6179
  %6338 = vst.msk [vmem:[#allocation3 + $0x110] sm:$0xff] %vm1838, %v6181
  %6339 = vst.msk [vmem:[#allocation3 + $0x118] sm:$0xff] %vm1838, %v6183
  %6340 = vst.msk [vmem:[#allocation3 + $0x120] sm:$0xff] %vm1838, %v6185
  %6341 = vst.msk [vmem:[#allocation3 + $0x128] sm:$0xff] %vm1838, %v6187
  %6342 = vst.msk [vmem:[#allocation3 + $0x130] sm:$0xff] %vm1838, %v6189
  %6343 = vst.msk [vmem:[#allocation3 + $0x138] sm:$0xff] %vm1838, %v6191
  %6344 = vst.msk [vmem:[#allocation3 + $0x140] sm:$0xff] %vm1838, %v6193
  %6345 = vst.msk [vmem:[#allocation3 + $0x148] sm:$0xff] %vm1838, %v6195
  %6346 = vst.msk [vmem:[#allocation3 + $0x150] sm:$0xff] %vm1838, %v6197
  %6347 = vst.msk [vmem:[#allocation3 + $0x158] sm:$0xff] %vm1838, %v6199
  %6348 = vst.msk [vmem:[#allocation3 + $0x160] sm:$0xff] %vm1838, %v6201
  %6349 = vst.msk [vmem:[#allocation3 + $0x168] sm:$0xff] %vm1838, %v6203
  %6350 = vst.msk [vmem:[#allocation3 + $0x170] sm:$0xff] %vm1838, %v6205
  %6351 = vst.msk [vmem:[#allocation3 + $0x178] sm:$0xff] %vm1838, %v6207
  %6352 = vst.msk [vmem:[#allocation3 + $0x180] sm:$0xff] %vm1838, %v6209
  %6353 = vst.msk [vmem:[#allocation3 + $0x188] sm:$0xff] %vm1838, %v6211
  %6354 = vst.msk [vmem:[#allocation3 + $0x190] sm:$0xff] %vm1838, %v6213
  %6355 = vst.msk [vmem:[#allocation3 + $0x198] sm:$0xff] %vm1838, %v6215
  %6356 = vst.msk [vmem:[#allocation3 + $0x1a0] sm:$0xff] %vm1838, %v6217
  %6357 = vst.msk [vmem:[#allocation3 + $0x1a8] sm:$0xff] %vm1838, %v6219
  %6358 = vst.msk [vmem:[#allocation3 + $0x1b0] sm:$0xff] %vm1838, %v6221
  %6359 = vst.msk [vmem:[#allocation3 + $0x1b8] sm:$0xff] %vm1838, %v6223
  %6360 = vst.msk [vmem:[#allocation3 + $0x1c0] sm:$0xff] %vm1838, %v6225
  %6361 = vst.msk [vmem:[#allocation3 + $0x1c8] sm:$0xff] %vm1838, %v6227
  %6362 = vst.msk [vmem:[#allocation3 + $0x1d0] sm:$0xff] %vm1838, %v6229
  %6363 = vst.msk [vmem:[#allocation3 + $0x1d8] sm:$0xff] %vm1838, %v6231
  %6364 = vst.msk [vmem:[#allocation3 + $0x1e0] sm:$0xff] %vm1838, %v6233
  %6365 = vst.msk [vmem:[#allocation3 + $0x1e8] sm:$0xff] %vm1838, %v6235
  %6366 = vst.msk [vmem:[#allocation3 + $0x1f0] sm:$0xff] %vm1838, %v6237
  %6367 = vst.msk [vmem:[#allocation3 + $0x1f8] sm:$0xff] %vm1838, %v6239
  %v6368 = vld [vmem:[%s41 + $0x2] sm:$0xff]
  %v6369 = vld [vmem:[%s41 + $0xa] sm:$0xff]
  %v6370 = vld [vmem:[%s41 + $0x1a] sm:$0xff]
  %v6371 = vld [vmem:[%s41 + $0x22] sm:$0xff]
  %v6372 = vld [vmem:[%s41 + $0x32] sm:$0xff]
  %v6373 = vld [vmem:[%s41 + $0x3a] sm:$0xff]
  %v6374 = vld [vmem:[%s41 + $0x4a] sm:$0xff]
  %v6375 = vld [vmem:[%s41 + $0x52] sm:$0xff]
  %v6376 = vld [vmem:[%s41 + $0x62] sm:$0xff]
  %v6377 = vld [vmem:[%s41 + $0x6a] sm:$0xff]
  %v6378 = vld [vmem:[%s41 + $0x7a] sm:$0xff]
  %v6379 = vld [vmem:[%s41 + $0x82] sm:$0xff]
  %v6380 = vld [vmem:[%s41 + $0x92] sm:$0xff]
  %v6381 = vld [vmem:[%s41 + $0x9a] sm:$0xff]
  %v6382 = vld [vmem:[%s41 + $0xaa] sm:$0xff]
  %v6383 = vld [vmem:[%s41 + $0xb2] sm:$0xff]
  %v6384 = vld [vmem:[%s41 + $0xc2] sm:$0xff]
  %v6385 = vld [vmem:[%s41 + $0xca] sm:$0xff]
  %v6386 = vld [vmem:[%s41 + $0xda] sm:$0xff]
  %v6387 = vld [vmem:[%s41 + $0xe2] sm:$0xff]
  %v6388 = vld [vmem:[%s41 + $0xf2] sm:$0xff]
  %v6389 = vld [vmem:[%s41 + $0xfa] sm:$0xff]
  %v6390 = vld [vmem:[%s41 + $0x10a] sm:$0xff]
  %v6391 = vld [vmem:[%s41 + $0x112] sm:$0xff]
  %v6392 = vld [vmem:[%s41 + $0x122] sm:$0xff]
  %v6393 = vld [vmem:[%s41 + $0x12a] sm:$0xff]
  %v6394 = vld [vmem:[%s41 + $0x13a] sm:$0xff]
  %v6395 = vld [vmem:[%s41 + $0x142] sm:$0xff]
  %v6396 = vld [vmem:[%s41 + $0x152] sm:$0xff]
  %v6397 = vld [vmem:[%s41 + $0x15a] sm:$0xff]
  %v6398 = vld [vmem:[%s41 + $0x16a] sm:$0xff]
  %v6399 = vld [vmem:[%s41 + $0x172] sm:$0xff]
  %v6400 = vld [vmem:[%s41 + $0x1b2] sm:$0xff]
  %v6401 = vld [vmem:[%s41 + $0x1ba] sm:$0xff]
  %v6402 = vld [vmem:[%s41 + $0x1ca] sm:$0xff]
  %v6403 = vld [vmem:[%s41 + $0x1d2] sm:$0xff]
  %v6404 = vld [vmem:[%s41 + $0x1e2] sm:$0xff]
  %v6405 = vld [vmem:[%s41 + $0x1ea] sm:$0xff]
  %v6406 = vld [vmem:[%s41 + $0x1fa] sm:$0xff]
  %v6407 = vld [vmem:[%s41 + $0x202] sm:$0xff]
  %v6408 = vld [vmem:[%s41 + $0x212] sm:$0xff]
  %v6409 = vld [vmem:[%s41 + $0x21a] sm:$0xff]
  %v6410 = vld [vmem:[%s41 + $0x22a] sm:$0xff]
  %v6411 = vld [vmem:[%s41 + $0x232] sm:$0xff]
  %v6412 = vld [vmem:[%s41 + $0x242] sm:$0xff]
  %v6413 = vld [vmem:[%s41 + $0x24a] sm:$0xff]
  %v6414 = vld [vmem:[%s41 + $0x25a] sm:$0xff]
  %v6415 = vld [vmem:[%s41 + $0x262] sm:$0xff]
  %v6416 = vld [vmem:[%s41 + $0x272] sm:$0xff]
  %v6417 = vld [vmem:[%s41 + $0x27a] sm:$0xff]
  %v6418 = vld [vmem:[%s41 + $0x28a] sm:$0xff]
  %v6419 = vld [vmem:[%s41 + $0x292] sm:$0xff]
  %v6420 = vld [vmem:[%s41 + $0x2a2] sm:$0xff]
  %v6421 = vld [vmem:[%s41 + $0x2aa] sm:$0xff]
  %v6422 = vld [vmem:[%s41 + $0x2ba] sm:$0xff]
  %v6423 = vld [vmem:[%s41 + $0x2c2] sm:$0xff]
  %v6424 = vld [vmem:[%s41 + $0x2d2] sm:$0xff]
  %v6425 = vld [vmem:[%s41 + $0x2da] sm:$0xff]
  %v6426 = vld [vmem:[%s41 + $0x2ea] sm:$0xff]
  %v6427 = vld [vmem:[%s41 + $0x2f2] sm:$0xff]
  %v6428 = vld [vmem:[%s41 + $0x302] sm:$0xff]
  %v6429 = vld [vmem:[%s41 + $0x30a] sm:$0xff]
  %v6430 = vld [vmem:[%s41 + $0x31a] sm:$0xff]
  %v6431 = vld [vmem:[%s41 + $0x322] sm:$0xff]
  %6496 = vrot.lane.b32.xlu0 %v6368, 20
  %v6497 = vpop.permute.xlu0 %6496
  %6498 = vrot.lane.b32.xlu0 %v6369, 20
  %v6499 = vpop.permute.xlu0 %6498
  %6500 = vrot.lane.b32.xlu0 %v6370, 20
  %v6501 = vpop.permute.xlu0 %6500
  %6502 = vrot.lane.b32.xlu0 %v6371, 20
  %v6503 = vpop.permute.xlu0 %6502
  %6504 = vrot.lane.b32.xlu0 %v6372, 20
  %v6505 = vpop.permute.xlu0 %6504
  %6506 = vrot.lane.b32.xlu0 %v6373, 20
  %v6507 = vpop.permute.xlu0 %6506
  %6508 = vrot.lane.b32.xlu0 %v6374, 20
  %v6509 = vpop.permute.xlu0 %6508
  %6510 = vrot.lane.b32.xlu0 %v6375, 20
  %v6511 = vpop.permute.xlu0 %6510
  %6512 = vrot.lane.b32.xlu0 %v6376, 20
  %v6513 = vpop.permute.xlu0 %6512
  %6514 = vrot.lane.b32.xlu0 %v6377, 20
  %v6515 = vpop.permute.xlu0 %6514
  %6516 = vrot.lane.b32.xlu0 %v6378, 20
  %v6517 = vpop.permute.xlu0 %6516
  %6518 = vrot.lane.b32.xlu0 %v6379, 20
  %v6519 = vpop.permute.xlu0 %6518
  %6520 = vrot.lane.b32.xlu0 %v6380, 20
  %v6521 = vpop.permute.xlu0 %6520
  %6522 = vrot.lane.b32.xlu0 %v6381, 20
  %v6523 = vpop.permute.xlu0 %6522
  %6524 = vrot.lane.b32.xlu0 %v6382, 20
  %v6525 = vpop.permute.xlu0 %6524
  %6526 = vrot.lane.b32.xlu0 %v6383, 20
  %v6527 = vpop.permute.xlu0 %6526
  %6528 = vrot.lane.b32.xlu0 %v6384, 20
  %v6529 = vpop.permute.xlu0 %6528
  %6530 = vrot.lane.b32.xlu0 %v6385, 20
  %v6531 = vpop.permute.xlu0 %6530
  %6532 = vrot.lane.b32.xlu0 %v6386, 20
  %v6533 = vpop.permute.xlu0 %6532
  %6534 = vrot.lane.b32.xlu0 %v6387, 20
  %v6535 = vpop.permute.xlu0 %6534
  %6536 = vrot.lane.b32.xlu0 %v6388, 20
  %v6537 = vpop.permute.xlu0 %6536
  %6538 = vrot.lane.b32.xlu0 %v6389, 20
  %v6539 = vpop.permute.xlu0 %6538
  %6540 = vrot.lane.b32.xlu0 %v6390, 20
  %v6541 = vpop.permute.xlu0 %6540
  %6542 = vrot.lane.b32.xlu0 %v6391, 20
  %v6543 = vpop.permute.xlu0 %6542
  %6544 = vrot.lane.b32.xlu0 %v6392, 20
  %v6545 = vpop.permute.xlu0 %6544
  %6546 = vrot.lane.b32.xlu0 %v6393, 20
  %v6547 = vpop.permute.xlu0 %6546
  %6548 = vrot.lane.b32.xlu0 %v6394, 20
  %v6549 = vpop.permute.xlu0 %6548
  %6550 = vrot.lane.b32.xlu0 %v6395, 20
  %v6551 = vpop.permute.xlu0 %6550
  %6552 = vrot.lane.b32.xlu0 %v6396, 20
  %v6553 = vpop.permute.xlu0 %6552
  %6554 = vrot.lane.b32.xlu0 %v6397, 20
  %v6555 = vpop.permute.xlu0 %6554
  %6556 = vrot.lane.b32.xlu0 %v6398, 20
  %v6557 = vpop.permute.xlu0 %6556
  %6558 = vrot.lane.b32.xlu0 %v6399, 20
  %v6559 = vpop.permute.xlu0 %6558
  %6560 = vrot.lane.b32.xlu0 %v6400, 20
  %v6561 = vpop.permute.xlu0 %6560
  %6562 = vrot.lane.b32.xlu0 %v6401, 20
  %v6563 = vpop.permute.xlu0 %6562
  %6564 = vrot.lane.b32.xlu0 %v6402, 20
  %v6565 = vpop.permute.xlu0 %6564
  %6566 = vrot.lane.b32.xlu0 %v6403, 20
  %v6567 = vpop.permute.xlu0 %6566
  %6568 = vrot.lane.b32.xlu0 %v6404, 20
  %v6569 = vpop.permute.xlu0 %6568
  %6570 = vrot.lane.b32.xlu0 %v6405, 20
  %v6571 = vpop.permute.xlu0 %6570
  %6572 = vrot.lane.b32.xlu0 %v6406, 20
  %v6573 = vpop.permute.xlu0 %6572
  %6574 = vrot.lane.b32.xlu0 %v6407, 20
  %v6575 = vpop.permute.xlu0 %6574
  %6576 = vrot.lane.b32.xlu0 %v6408, 20
  %v6577 = vpop.permute.xlu0 %6576
  %6578 = vrot.lane.b32.xlu0 %v6409, 20
  %v6579 = vpop.permute.xlu0 %6578
  %6580 = vrot.lane.b32.xlu0 %v6410, 20
  %v6581 = vpop.permute.xlu0 %6580
  %6582 = vrot.lane.b32.xlu0 %v6411, 20
  %v6583 = vpop.permute.xlu0 %6582
  %6584 = vrot.lane.b32.xlu0 %v6412, 20
  %v6585 = vpop.permute.xlu0 %6584
  %6586 = vrot.lane.b32.xlu0 %v6413, 20
  %v6587 = vpop.permute.xlu0 %6586
  %6588 = vrot.lane.b32.xlu0 %v6414, 20
  %v6589 = vpop.permute.xlu0 %6588
  %6590 = vrot.lane.b32.xlu0 %v6415, 20
  %v6591 = vpop.permute.xlu0 %6590
  %6592 = vrot.lane.b32.xlu0 %v6416, 20
  %v6593 = vpop.permute.xlu0 %6592
  %6594 = vrot.lane.b32.xlu0 %v6417, 20
  %v6595 = vpop.permute.xlu0 %6594
  %6596 = vrot.lane.b32.xlu0 %v6418, 20
  %v6597 = vpop.permute.xlu0 %6596
  %6598 = vrot.lane.b32.xlu0 %v6419, 20
  %v6599 = vpop.permute.xlu0 %6598
  %6600 = vrot.lane.b32.xlu0 %v6420, 20
  %v6601 = vpop.permute.xlu0 %6600
  %6602 = vrot.lane.b32.xlu0 %v6421, 20
  %v6603 = vpop.permute.xlu0 %6602
  %6604 = vrot.lane.b32.xlu0 %v6422, 20
  %v6605 = vpop.permute.xlu0 %6604
  %6606 = vrot.lane.b32.xlu0 %v6423, 20
  %v6607 = vpop.permute.xlu0 %6606
  %6608 = vrot.lane.b32.xlu0 %v6424, 20
  %v6609 = vpop.permute.xlu0 %6608
  %6610 = vrot.lane.b32.xlu0 %v6425, 20
  %v6611 = vpop.permute.xlu0 %6610
  %6612 = vrot.lane.b32.xlu0 %v6426, 20
  %v6613 = vpop.permute.xlu0 %6612
  %6614 = vrot.lane.b32.xlu0 %v6427, 20
  %v6615 = vpop.permute.xlu0 %6614
  %6616 = vrot.lane.b32.xlu0 %v6428, 20
  %v6617 = vpop.permute.xlu0 %6616
  %6618 = vrot.lane.b32.xlu0 %v6429, 20
  %v6619 = vpop.permute.xlu0 %6618
  %6620 = vrot.lane.b32.xlu0 %v6430, 20
  %v6621 = vpop.permute.xlu0 %6620
  %6622 = vrot.lane.b32.xlu0 %v6431, 20
  %v6623 = vpop.permute.xlu0 %6622
  %6688 = vst.msk [vmem:[#allocation3] sm:$0xff] %vm2223, %v6497
  %6689 = vst.msk [vmem:[#allocation3 + $0x8] sm:$0xff] %vm2223, %v6499
  %6690 = vst.msk [vmem:[#allocation3 + $0x10] sm:$0xff] %vm2223, %v6501
  %6691 = vst.msk [vmem:[#allocation3 + $0x18] sm:$0xff] %vm2223, %v6503
  %6692 = vst.msk [vmem:[#allocation3 + $0x20] sm:$0xff] %vm2223, %v6505
  %6693 = vst.msk [vmem:[#allocation3 + $0x28] sm:$0xff] %vm2223, %v6507
  %6694 = vst.msk [vmem:[#allocation3 + $0x30] sm:$0xff] %vm2223, %v6509
  %6695 = vst.msk [vmem:[#allocation3 + $0x38] sm:$0xff] %vm2223, %v6511
  %6696 = vst.msk [vmem:[#allocation3 + $0x40] sm:$0xff] %vm2223, %v6513
  %6697 = vst.msk [vmem:[#allocation3 + $0x48] sm:$0xff] %vm2223, %v6515
  %6698 = vst.msk [vmem:[#allocation3 + $0x50] sm:$0xff] %vm2223, %v6517
  %6699 = vst.msk [vmem:[#allocation3 + $0x58] sm:$0xff] %vm2223, %v6519
  %6700 = vst.msk [vmem:[#allocation3 + $0x60] sm:$0xff] %vm2223, %v6521
  %6701 = vst.msk [vmem:[#allocation3 + $0x68] sm:$0xff] %vm2223, %v6523
  %6702 = vst.msk [vmem:[#allocation3 + $0x70] sm:$0xff] %vm2223, %v6525
  %6703 = vst.msk [vmem:[#allocation3 + $0x78] sm:$0xff] %vm2223, %v6527
  %6704 = vst.msk [vmem:[#allocation3 + $0x80] sm:$0xff] %vm2223, %v6529
  %6705 = vst.msk [vmem:[#allocation3 + $0x88] sm:$0xff] %vm2223, %v6531
  %6706 = vst.msk [vmem:[#allocation3 + $0x90] sm:$0xff] %vm2223, %v6533
  %6707 = vst.msk [vmem:[#allocation3 + $0x98] sm:$0xff] %vm2223, %v6535
  %6708 = vst.msk [vmem:[#allocation3 + $0xa0] sm:$0xff] %vm2223, %v6537
  %6709 = vst.msk [vmem:[#allocation3 + $0xa8] sm:$0xff] %vm2223, %v6539
  %6710 = vst.msk [vmem:[#allocation3 + $0xb0] sm:$0xff] %vm2223, %v6541
  %6711 = vst.msk [vmem:[#allocation3 + $0xb8] sm:$0xff] %vm2223, %v6543
  %6712 = vst.msk [vmem:[#allocation3 + $0xc0] sm:$0xff] %vm2223, %v6545
  %6713 = vst.msk [vmem:[#allocation3 + $0xc8] sm:$0xff] %vm2223, %v6547
  %6714 = vst.msk [vmem:[#allocation3 + $0xd0] sm:$0xff] %vm2223, %v6549
  %6715 = vst.msk [vmem:[#allocation3 + $0xd8] sm:$0xff] %vm2223, %v6551
  %6716 = vst.msk [vmem:[#allocation3 + $0xe0] sm:$0xff] %vm2223, %v6553
  %6717 = vst.msk [vmem:[#allocation3 + $0xe8] sm:$0xff] %vm2223, %v6555
  %6718 = vst.msk [vmem:[#allocation3 + $0xf0] sm:$0xff] %vm2223, %v6557
  %6719 = vst.msk [vmem:[#allocation3 + $0xf8] sm:$0xff] %vm2223, %v6559
  %6720 = vst.msk [vmem:[#allocation3 + $0x100] sm:$0xff] %vm2223, %v6561
  %6721 = vst.msk [vmem:[#allocation3 + $0x108] sm:$0xff] %vm2223, %v6563
  %6722 = vst.msk [vmem:[#allocation3 + $0x110] sm:$0xff] %vm2223, %v6565
  %6723 = vst.msk [vmem:[#allocation3 + $0x118] sm:$0xff] %vm2223, %v6567
  %6724 = vst.msk [vmem:[#allocation3 + $0x120] sm:$0xff] %vm2223, %v6569
  %6725 = vst.msk [vmem:[#allocation3 + $0x128] sm:$0xff] %vm2223, %v6571
  %6726 = vst.msk [vmem:[#allocation3 + $0x130] sm:$0xff] %vm2223, %v6573
  %6727 = vst.msk [vmem:[#allocation3 + $0x138] sm:$0xff] %vm2223, %v6575
  %6728 = vst.msk [vmem:[#allocation3 + $0x140] sm:$0xff] %vm2223, %v6577
  %6729 = vst.msk [vmem:[#allocation3 + $0x148] sm:$0xff] %vm2223, %v6579
  %6730 = vst.msk [vmem:[#allocation3 + $0x150] sm:$0xff] %vm2223, %v6581
  %6731 = vst.msk [vmem:[#allocation3 + $0x158] sm:$0xff] %vm2223, %v6583
  %6732 = vst.msk [vmem:[#allocation3 + $0x160] sm:$0xff] %vm2223, %v6585
  %6733 = vst.msk [vmem:[#allocation3 + $0x168] sm:$0xff] %vm2223, %v6587
  %6734 = vst.msk [vmem:[#allocation3 + $0x170] sm:$0xff] %vm2223, %v6589
  %6735 = vst.msk [vmem:[#allocation3 + $0x178] sm:$0xff] %vm2223, %v6591
  %6736 = vst.msk [vmem:[#allocation3 + $0x180] sm:$0xff] %vm2223, %v6593
  %6737 = vst.msk [vmem:[#allocation3 + $0x188] sm:$0xff] %vm2223, %v6595
  %6738 = vst.msk [vmem:[#allocation3 + $0x190] sm:$0xff] %vm2223, %v6597
  %6739 = vst.msk [vmem:[#allocation3 + $0x198] sm:$0xff] %vm2223, %v6599
  %6740 = vst.msk [vmem:[#allocation3 + $0x1a0] sm:$0xff] %vm2223, %v6601
  %6741 = vst.msk [vmem:[#allocation3 + $0x1a8] sm:$0xff] %vm2223, %v6603
  %6742 = vst.msk [vmem:[#allocation3 + $0x1b0] sm:$0xff] %vm2223, %v6605
  %6743 = vst.msk [vmem:[#allocation3 + $0x1b8] sm:$0xff] %vm2223, %v6607
  %6744 = vst.msk [vmem:[#allocation3 + $0x1c0] sm:$0xff] %vm2223, %v6609
  %6745 = vst.msk [vmem:[#allocation3 + $0x1c8] sm:$0xff] %vm2223, %v6611
  %6746 = vst.msk [vmem:[#allocation3 + $0x1d0] sm:$0xff] %vm2223, %v6613
  %6747 = vst.msk [vmem:[#allocation3 + $0x1d8] sm:$0xff] %vm2223, %v6615
  %6748 = vst.msk [vmem:[#allocation3 + $0x1e0] sm:$0xff] %vm2223, %v6617
  %6749 = vst.msk [vmem:[#allocation3 + $0x1e8] sm:$0xff] %vm2223, %v6619
  %6750 = vst.msk [vmem:[#allocation3 + $0x1f0] sm:$0xff] %vm2223, %v6621
  %6751 = vst.msk [vmem:[#allocation3 + $0x1f8] sm:$0xff] %vm2223, %v6623
  %v6752 = vld [vmem:[%s2288] sm:$0xff]
  %v6753 = vld [vmem:[%s2288 + $0x8] sm:$0xff]
  %v6754 = vld [vmem:[%s2288 + $0x18] sm:$0xff]
  %v6755 = vld [vmem:[%s2288 + $0x20] sm:$0xff]
  %v6756 = vld [vmem:[%s2288 + $0x30] sm:$0xff]
  %v6757 = vld [vmem:[%s2288 + $0x38] sm:$0xff]
  %v6758 = vld [vmem:[%s2288 + $0x48] sm:$0xff]
  %v6759 = vld [vmem:[%s2288 + $0x50] sm:$0xff]
  %v6760 = vld [vmem:[%s2288 + $0x60] sm:$0xff]
  %v6761 = vld [vmem:[%s2288 + $0x68] sm:$0xff]
  %v6762 = vld [vmem:[%s2288 + $0x78] sm:$0xff]
  %v6763 = vld [vmem:[%s2288 + $0x80] sm:$0xff]
  %v6764 = vld [vmem:[%s2288 + $0x90] sm:$0xff]
  %v6765 = vld [vmem:[%s2288 + $0x98] sm:$0xff]
  %v6766 = vld [vmem:[%s2288 + $0xa8] sm:$0xff]
  %v6767 = vld [vmem:[%s2288 + $0xb0] sm:$0xff]
  %v6768 = vld [vmem:[%s2288 + $0xc0] sm:$0xff]
  %v6769 = vld [vmem:[%s2288 + $0xc8] sm:$0xff]
  %v6770 = vld [vmem:[%s2288 + $0xd8] sm:$0xff]
  %v6771 = vld [vmem:[%s2288 + $0xe0] sm:$0xff]
  %v6772 = vld [vmem:[%s2288 + $0xf0] sm:$0xff]
  %v6773 = vld [vmem:[%s2288 + $0xf8] sm:$0xff]
  %v6774 = vld [vmem:[%s2288 + $0x108] sm:$0xff]
  %v6775 = vld [vmem:[%s2288 + $0x110] sm:$0xff]
  %v6776 = vld [vmem:[%s2288 + $0x120] sm:$0xff]
  %v6777 = vld [vmem:[%s2288 + $0x128] sm:$0xff]
  %v6778 = vld [vmem:[%s2288 + $0x138] sm:$0xff]
  %v6779 = vld [vmem:[%s2288 + $0x140] sm:$0xff]
  %v6780 = vld [vmem:[%s2288 + $0x150] sm:$0xff]
  %v6781 = vld [vmem:[%s2288 + $0x158] sm:$0xff]
  %v6782 = vld [vmem:[%s2288 + $0x168] sm:$0xff]
  %v6783 = vld [vmem:[%s2288 + $0x170] sm:$0xff]
  %v6784 = vld [vmem:[%s2288 + $0x1b0] sm:$0xff]
  %v6785 = vld [vmem:[%s2288 + $0x1b8] sm:$0xff]
  %v6786 = vld [vmem:[%s2288 + $0x1c8] sm:$0xff]
  %v6787 = vld [vmem:[%s2288 + $0x1d0] sm:$0xff]
  %v6788 = vld [vmem:[%s2288 + $0x1e0] sm:$0xff]
  %v6789 = vld [vmem:[%s2288 + $0x1e8] sm:$0xff]
  %v6790 = vld [vmem:[%s2288 + $0x1f8] sm:$0xff]
  %v6791 = vld [vmem:[%s2288 + $0x200] sm:$0xff]
  %v6792 = vld [vmem:[%s2288 + $0x210] sm:$0xff]
  %v6793 = vld [vmem:[%s2288 + $0x218] sm:$0xff]
  %v6794 = vld [vmem:[%s2288 + $0x228] sm:$0xff]
  %v6795 = vld [vmem:[%s2288 + $0x230] sm:$0xff]
  %v6796 = vld [vmem:[%s2288 + $0x240] sm:$0xff]
  %v6797 = vld [vmem:[%s2288 + $0x248] sm:$0xff]
  %v6798 = vld [vmem:[%s2288 + $0x258] sm:$0xff]
  %v6799 = vld [vmem:[%s2288 + $0x260] sm:$0xff]
  %v6800 = vld [vmem:[%s2288 + $0x270] sm:$0xff]
  %v6801 = vld [vmem:[%s2288 + $0x278] sm:$0xff]
  %v6802 = vld [vmem:[%s2288 + $0x288] sm:$0xff]
  %v6803 = vld [vmem:[%s2288 + $0x290] sm:$0xff]
  %v6804 = vld [vmem:[%s2288 + $0x2a0] sm:$0xff]
  %v6805 = vld [vmem:[%s2288 + $0x2a8] sm:$0xff]
  %v6806 = vld [vmem:[%s2288 + $0x2b8] sm:$0xff]
  %v6807 = vld [vmem:[%s2288 + $0x2c0] sm:$0xff]
  %v6808 = vld [vmem:[%s2288 + $0x2d0] sm:$0xff]
  %v6809 = vld [vmem:[%s2288 + $0x2d8] sm:$0xff]
  %v6810 = vld [vmem:[%s2288 + $0x2e8] sm:$0xff]
  %v6811 = vld [vmem:[%s2288 + $0x2f0] sm:$0xff]
  %v6812 = vld [vmem:[%s2288 + $0x300] sm:$0xff]
  %v6813 = vld [vmem:[%s2288 + $0x308] sm:$0xff]
  %v6814 = vld [vmem:[%s2288 + $0x318] sm:$0xff]
  %v6815 = vld [vmem:[%s2288 + $0x320] sm:$0xff]
  %6880 = vrot.lane.b32.xlu0 %v6752, 24
  %v6881 = vpop.permute.xlu0 %6880
  %6882 = vrot.lane.b32.xlu0 %v6753, 24
  %v6883 = vpop.permute.xlu0 %6882
  %6884 = vrot.lane.b32.xlu0 %v6754, 24
  %v6885 = vpop.permute.xlu0 %6884
  %6886 = vrot.lane.b32.xlu0 %v6755, 24
  %v6887 = vpop.permute.xlu0 %6886
  %6888 = vrot.lane.b32.xlu0 %v6756, 24
  %v6889 = vpop.permute.xlu0 %6888
  %6890 = vrot.lane.b32.xlu0 %v6757, 24
  %v6891 = vpop.permute.xlu0 %6890
  %6892 = vrot.lane.b32.xlu0 %v6758, 24
  %v6893 = vpop.permute.xlu0 %6892
  %6894 = vrot.lane.b32.xlu0 %v6759, 24
  %v6895 = vpop.permute.xlu0 %6894
  %6896 = vrot.lane.b32.xlu0 %v6760, 24
  %v6897 = vpop.permute.xlu0 %6896
  %6898 = vrot.lane.b32.xlu0 %v6761, 24
  %v6899 = vpop.permute.xlu0 %6898
  %6900 = vrot.lane.b32.xlu0 %v6762, 24
  %v6901 = vpop.permute.xlu0 %6900
  %6902 = vrot.lane.b32.xlu0 %v6763, 24
  %v6903 = vpop.permute.xlu0 %6902
  %6904 = vrot.lane.b32.xlu0 %v6764, 24
  %v6905 = vpop.permute.xlu0 %6904
  %6906 = vrot.lane.b32.xlu0 %v6765, 24
  %v6907 = vpop.permute.xlu0 %6906
  %6908 = vrot.lane.b32.xlu0 %v6766, 24
  %v6909 = vpop.permute.xlu0 %6908
  %6910 = vrot.lane.b32.xlu0 %v6767, 24
  %v6911 = vpop.permute.xlu0 %6910
  %6912 = vrot.lane.b32.xlu0 %v6768, 24
  %v6913 = vpop.permute.xlu0 %6912
  %6914 = vrot.lane.b32.xlu0 %v6769, 24
  %v6915 = vpop.permute.xlu0 %6914
  %6916 = vrot.lane.b32.xlu0 %v6770, 24
  %v6917 = vpop.permute.xlu0 %6916
  %6918 = vrot.lane.b32.xlu0 %v6771, 24
  %v6919 = vpop.permute.xlu0 %6918
  %6920 = vrot.lane.b32.xlu0 %v6772, 24
  %v6921 = vpop.permute.xlu0 %6920
  %6922 = vrot.lane.b32.xlu0 %v6773, 24
  %v6923 = vpop.permute.xlu0 %6922
  %6924 = vrot.lane.b32.xlu0 %v6774, 24
  %v6925 = vpop.permute.xlu0 %6924
  %6926 = vrot.lane.b32.xlu0 %v6775, 24
  %v6927 = vpop.permute.xlu0 %6926
  %6928 = vrot.lane.b32.xlu0 %v6776, 24
  %v6929 = vpop.permute.xlu0 %6928
  %6930 = vrot.lane.b32.xlu0 %v6777, 24
  %v6931 = vpop.permute.xlu0 %6930
  %6932 = vrot.lane.b32.xlu0 %v6778, 24
  %v6933 = vpop.permute.xlu0 %6932
  %6934 = vrot.lane.b32.xlu0 %v6779, 24
  %v6935 = vpop.permute.xlu0 %6934
  %6936 = vrot.lane.b32.xlu0 %v6780, 24
  %v6937 = vpop.permute.xlu0 %6936
  %6938 = vrot.lane.b32.xlu0 %v6781, 24
  %v6939 = vpop.permute.xlu0 %6938
  %6940 = vrot.lane.b32.xlu0 %v6782, 24
  %v6941 = vpop.permute.xlu0 %6940
  %6942 = vrot.lane.b32.xlu0 %v6783, 24
  %v6943 = vpop.permute.xlu0 %6942
  %6944 = vrot.lane.b32.xlu0 %v6784, 24
  %v6945 = vpop.permute.xlu0 %6944
  %6946 = vrot.lane.b32.xlu0 %v6785, 24
  %v6947 = vpop.permute.xlu0 %6946
  %6948 = vrot.lane.b32.xlu0 %v6786, 24
  %v6949 = vpop.permute.xlu0 %6948
  %6950 = vrot.lane.b32.xlu0 %v6787, 24
  %v6951 = vpop.permute.xlu0 %6950
  %6952 = vrot.lane.b32.xlu0 %v6788, 24
  %v6953 = vpop.permute.xlu0 %6952
  %6954 = vrot.lane.b32.xlu0 %v6789, 24
  %v6955 = vpop.permute.xlu0 %6954
  %6956 = vrot.lane.b32.xlu0 %v6790, 24
  %v6957 = vpop.permute.xlu0 %6956
  %6958 = vrot.lane.b32.xlu0 %v6791, 24
  %v6959 = vpop.permute.xlu0 %6958
  %6960 = vrot.lane.b32.xlu0 %v6792, 24
  %v6961 = vpop.permute.xlu0 %6960
  %6962 = vrot.lane.b32.xlu0 %v6793, 24
  %v6963 = vpop.permute.xlu0 %6962
  %6964 = vrot.lane.b32.xlu0 %v6794, 24
  %v6965 = vpop.permute.xlu0 %6964
  %6966 = vrot.lane.b32.xlu0 %v6795, 24
  %v6967 = vpop.permute.xlu0 %6966
  %6968 = vrot.lane.b32.xlu0 %v6796, 24
  %v6969 = vpop.permute.xlu0 %6968
  %6970 = vrot.lane.b32.xlu0 %v6797, 24
  %v6971 = vpop.permute.xlu0 %6970
  %6972 = vrot.lane.b32.xlu0 %v6798, 24
  %v6973 = vpop.permute.xlu0 %6972
  %6974 = vrot.lane.b32.xlu0 %v6799, 24
  %v6975 = vpop.permute.xlu0 %6974
  %6976 = vrot.lane.b32.xlu0 %v6800, 24
  %v6977 = vpop.permute.xlu0 %6976
  %6978 = vrot.lane.b32.xlu0 %v6801, 24
  %v6979 = vpop.permute.xlu0 %6978
  %6980 = vrot.lane.b32.xlu0 %v6802, 24
  %v6981 = vpop.permute.xlu0 %6980
  %6982 = vrot.lane.b32.xlu0 %v6803, 24
  %v6983 = vpop.permute.xlu0 %6982
  %6984 = vrot.lane.b32.xlu0 %v6804, 24
  %v6985 = vpop.permute.xlu0 %6984
  %6986 = vrot.lane.b32.xlu0 %v6805, 24
  %v6987 = vpop.permute.xlu0 %6986
  %6988 = vrot.lane.b32.xlu0 %v6806, 24
  %v6989 = vpop.permute.xlu0 %6988
  %6990 = vrot.lane.b32.xlu0 %v6807, 24
  %v6991 = vpop.permute.xlu0 %6990
  %6992 = vrot.lane.b32.xlu0 %v6808, 24
  %v6993 = vpop.permute.xlu0 %6992
  %6994 = vrot.lane.b32.xlu0 %v6809, 24
  %v6995 = vpop.permute.xlu0 %6994
  %6996 = vrot.lane.b32.xlu0 %v6810, 24
  %v6997 = vpop.permute.xlu0 %6996
  %6998 = vrot.lane.b32.xlu0 %v6811, 24
  %v6999 = vpop.permute.xlu0 %6998
  %7000 = vrot.lane.b32.xlu0 %v6812, 24
  %v7001 = vpop.permute.xlu0 %7000
  %7002 = vrot.lane.b32.xlu0 %v6813, 24
  %v7003 = vpop.permute.xlu0 %7002
  %7004 = vrot.lane.b32.xlu0 %v6814, 24
  %v7005 = vpop.permute.xlu0 %7004
  %7006 = vrot.lane.b32.xlu0 %v6815, 24
  %v7007 = vpop.permute.xlu0 %7006
  %7072 = vst.msk [vmem:[#allocation3] sm:$0xff] %vm2609, %v6881
  %7073 = vst.msk [vmem:[#allocation3 + $0x8] sm:$0xff] %vm2609, %v6883
  %7074 = vst.msk [vmem:[#allocation3 + $0x10] sm:$0xff] %vm2609, %v6885
  %7075 = vst.msk [vmem:[#allocation3 + $0x18] sm:$0xff] %vm2609, %v6887
  %7076 = vst.msk [vmem:[#allocation3 + $0x20] sm:$0xff] %vm2609, %v6889
  %7077 = vst.msk [vmem:[#allocation3 + $0x28] sm:$0xff] %vm2609, %v6891
  %7078 = vst.msk [vmem:[#allocation3 + $0x30] sm:$0xff] %vm2609, %v6893
  %7079 = vst.msk [vmem:[#allocation3 + $0x38] sm:$0xff] %vm2609, %v6895
  %7080 = vst.msk [vmem:[#allocation3 + $0x40] sm:$0xff] %vm2609, %v6897
  %7081 = vst.msk [vmem:[#allocation3 + $0x48] sm:$0xff] %vm2609, %v6899
  %7082 = vst.msk [vmem:[#allocation3 + $0x50] sm:$0xff] %vm2609, %v6901
  %7083 = vst.msk [vmem:[#allocation3 + $0x58] sm:$0xff] %vm2609, %v6903
  %7084 = vst.msk [vmem:[#allocation3 + $0x60] sm:$0xff] %vm2609, %v6905
  %7085 = vst.msk [vmem:[#allocation3 + $0x68] sm:$0xff] %vm2609, %v6907
  %7086 = vst.msk [vmem:[#allocation3 + $0x70] sm:$0xff] %vm2609, %v6909
  %7087 = vst.msk [vmem:[#allocation3 + $0x78] sm:$0xff] %vm2609, %v6911
  %7088 = vst.msk [vmem:[#allocation3 + $0x80] sm:$0xff] %vm2609, %v6913
  %7089 = vst.msk [vmem:[#allocation3 + $0x88] sm:$0xff] %vm2609, %v6915
  %7090 = vst.msk [vmem:[#allocation3 + $0x90] sm:$0xff] %vm2609, %v6917
  %7091 = vst.msk [vmem:[#allocation3 + $0x98] sm:$0xff] %vm2609, %v6919
  %7092 = vst.msk [vmem:[#allocation3 + $0xa0] sm:$0xff] %vm2609, %v6921
  %7093 = vst.msk [vmem:[#allocation3 + $0xa8] sm:$0xff] %vm2609, %v6923
  %7094 = vst.msk [vmem:[#allocation3 + $0xb0] sm:$0xff] %vm2609, %v6925
  %7095 = vst.msk [vmem:[#allocation3 + $0xb8] sm:$0xff] %vm2609, %v6927
  %7096 = vst.msk [vmem:[#allocation3 + $0xc0] sm:$0xff] %vm2609, %v6929
  %7097 = vst.msk [vmem:[#allocation3 + $0xc8] sm:$0xff] %vm2609, %v6931
  %7098 = vst.msk [vmem:[#allocation3 + $0xd0] sm:$0xff] %vm2609, %v6933
  %7099 = vst.msk [vmem:[#allocation3 + $0xd8] sm:$0xff] %vm2609, %v6935
  %7100 = vst.msk [vmem:[#allocation3 + $0xe0] sm:$0xff] %vm2609, %v6937
  %7101 = vst.msk [vmem:[#allocation3 + $0xe8] sm:$0xff] %vm2609, %v6939
  %7102 = vst.msk [vmem:[#allocation3 + $0xf0] sm:$0xff] %vm2609, %v6941
  %7103 = vst.msk [vmem:[#allocation3 + $0xf8] sm:$0xff] %vm2609, %v6943
  %7104 = vst.msk [vmem:[#allocation3 + $0x100] sm:$0xff] %vm2609, %v6945
  %7105 = vst.msk [vmem:[#allocation3 + $0x108] sm:$0xff] %vm2609, %v6947
  %7106 = vst.msk [vmem:[#allocation3 + $0x110] sm:$0xff] %vm2609, %v6949
  %7107 = vst.msk [vmem:[#allocation3 + $0x118] sm:$0xff] %vm2609, %v6951
  %7108 = vst.msk [vmem:[#allocation3 + $0x120] sm:$0xff] %vm2609, %v6953
  %7109 = vst.msk [vmem:[#allocation3 + $0x128] sm:$0xff] %vm2609, %v6955
  %7110 = vst.msk [vmem:[#allocation3 + $0x130] sm:$0xff] %vm2609, %v6957
  %7111 = vst.msk [vmem:[#allocation3 + $0x138] sm:$0xff] %vm2609, %v6959
  %7112 = vst.msk [vmem:[#allocation3 + $0x140] sm:$0xff] %vm2609, %v6961
  %7113 = vst.msk [vmem:[#allocation3 + $0x148] sm:$0xff] %vm2609, %v6963
  %7114 = vst.msk [vmem:[#allocation3 + $0x150] sm:$0xff] %vm2609, %v6965
  %7115 = vst.msk [vmem:[#allocation3 + $0x158] sm:$0xff] %vm2609, %v6967
  %7116 = vst.msk [vmem:[#allocation3 + $0x160] sm:$0xff] %vm2609, %v6969
  %7117 = vst.msk [vmem:[#allocation3 + $0x168] sm:$0xff] %vm2609, %v6971
  %7118 = vst.msk [vmem:[#allocation3 + $0x170] sm:$0xff] %vm2609, %v6973
  %7119 = vst.msk [vmem:[#allocation3 + $0x178] sm:$0xff] %vm2609, %v6975
  %7120 = vst.msk [vmem:[#allocation3 + $0x180] sm:$0xff] %vm2609, %v6977
  %7121 = vst.msk [vmem:[#allocation3 + $0x188] sm:$0xff] %vm2609, %v6979
  %7122 = vst.msk [vmem:[#allocation3 + $0x190] sm:$0xff] %vm2609, %v6981
  %7123 = vst.msk [vmem:[#allocation3 + $0x198] sm:$0xff] %vm2609, %v6983
  %7124 = vst.msk [vmem:[#allocation3 + $0x1a0] sm:$0xff] %vm2609, %v6985
  %7125 = vst.msk [vmem:[#allocation3 + $0x1a8] sm:$0xff] %vm2609, %v6987
  %7126 = vst.msk [vmem:[#allocation3 + $0x1b0] sm:$0xff] %vm2609, %v6989
  %7127 = vst.msk [vmem:[#allocation3 + $0x1b8] sm:$0xff] %vm2609, %v6991
  %7128 = vst.msk [vmem:[#allocation3 + $0x1c0] sm:$0xff] %vm2609, %v6993
  %7129 = vst.msk [vmem:[#allocation3 + $0x1c8] sm:$0xff] %vm2609, %v6995
  %7130 = vst.msk [vmem:[#allocation3 + $0x1d0] sm:$0xff] %vm2609, %v6997
  %7131 = vst.msk [vmem:[#allocation3 + $0x1d8] sm:$0xff] %vm2609, %v6999
  %7132 = vst.msk [vmem:[#allocation3 + $0x1e0] sm:$0xff] %vm2609, %v7001
  %7133 = vst.msk [vmem:[#allocation3 + $0x1e8] sm:$0xff] %vm2609, %v7003
  %7134 = vst.msk [vmem:[#allocation3 + $0x1f0] sm:$0xff] %vm2609, %v7005
  %7135 = vst.msk [vmem:[#allocation3 + $0x1f8] sm:$0xff] %vm2609, %v7007
  %v7136 = vld [vmem:[%s2288 + $0x1] sm:$0xff]
  %v7137 = vld [vmem:[%s2288 + $0x9] sm:$0xff]
  %v7138 = vld [vmem:[%s2288 + $0x19] sm:$0xff]
  %v7139 = vld [vmem:[%s2288 + $0x21] sm:$0xff]
  %v7140 = vld [vmem:[%s2288 + $0x31] sm:$0xff]
  %v7141 = vld [vmem:[%s2288 + $0x39] sm:$0xff]
  %v7142 = vld [vmem:[%s2288 + $0x49] sm:$0xff]
  %v7143 = vld [vmem:[%s2288 + $0x51] sm:$0xff]
  %v7144 = vld [vmem:[%s2288 + $0x61] sm:$0xff]
  %v7145 = vld [vmem:[%s2288 + $0x69] sm:$0xff]
  %v7146 = vld [vmem:[%s2288 + $0x79] sm:$0xff]
  %v7147 = vld [vmem:[%s2288 + $0x81] sm:$0xff]
  %v7148 = vld [vmem:[%s2288 + $0x91] sm:$0xff]
  %v7149 = vld [vmem:[%s2288 + $0x99] sm:$0xff]
  %v7150 = vld [vmem:[%s2288 + $0xa9] sm:$0xff]
  %v7151 = vld [vmem:[%s2288 + $0xb1] sm:$0xff]
  %v7152 = vld [vmem:[%s2288 + $0xc1] sm:$0xff]
  %v7153 = vld [vmem:[%s2288 + $0xc9] sm:$0xff]
  %v7154 = vld [vmem:[%s2288 + $0xd9] sm:$0xff]
  %v7155 = vld [vmem:[%s2288 + $0xe1] sm:$0xff]
  %v7156 = vld [vmem:[%s2288 + $0xf1] sm:$0xff]
  %v7157 = vld [vmem:[%s2288 + $0xf9] sm:$0xff]
  %v7158 = vld [vmem:[%s2288 + $0x109] sm:$0xff]
  %v7159 = vld [vmem:[%s2288 + $0x111] sm:$0xff]
  %v7160 = vld [vmem:[%s2288 + $0x121] sm:$0xff]
  %v7161 = vld [vmem:[%s2288 + $0x129] sm:$0xff]
  %v7162 = vld [vmem:[%s2288 + $0x139] sm:$0xff]
  %v7163 = vld [vmem:[%s2288 + $0x141] sm:$0xff]
  %v7164 = vld [vmem:[%s2288 + $0x151] sm:$0xff]
  %v7165 = vld [vmem:[%s2288 + $0x159] sm:$0xff]
  %v7166 = vld [vmem:[%s2288 + $0x169] sm:$0xff]
  %v7167 = vld [vmem:[%s2288 + $0x171] sm:$0xff]
  %v7168 = vld [vmem:[%s2288 + $0x1b1] sm:$0xff]
  %v7169 = vld [vmem:[%s2288 + $0x1b9] sm:$0xff]
  %v7170 = vld [vmem:[%s2288 + $0x1c9] sm:$0xff]
  %v7171 = vld [vmem:[%s2288 + $0x1d1] sm:$0xff]
  %v7172 = vld [vmem:[%s2288 + $0x1e1] sm:$0xff]
  %v7173 = vld [vmem:[%s2288 + $0x1e9] sm:$0xff]
  %v7174 = vld [vmem:[%s2288 + $0x1f9] sm:$0xff]
  %v7175 = vld [vmem:[%s2288 + $0x201] sm:$0xff]
  %v7176 = vld [vmem:[%s2288 + $0x211] sm:$0xff]
  %v7177 = vld [vmem:[%s2288 + $0x219] sm:$0xff]
  %v7178 = vld [vmem:[%s2288 + $0x229] sm:$0xff]
  %v7179 = vld [vmem:[%s2288 + $0x231] sm:$0xff]
  %v7180 = vld [vmem:[%s2288 + $0x241] sm:$0xff]
  %v7181 = vld [vmem:[%s2288 + $0x249] sm:$0xff]
  %v7182 = vld [vmem:[%s2288 + $0x259] sm:$0xff]
  %v7183 = vld [vmem:[%s2288 + $0x261] sm:$0xff]
  %v7184 = vld [vmem:[%s2288 + $0x271] sm:$0xff]
  %v7185 = vld [vmem:[%s2288 + $0x279] sm:$0xff]
  %v7186 = vld [vmem:[%s2288 + $0x289] sm:$0xff]
  %v7187 = vld [vmem:[%s2288 + $0x291] sm:$0xff]
  %v7188 = vld [vmem:[%s2288 + $0x2a1] sm:$0xff]
  %v7189 = vld [vmem:[%s2288 + $0x2a9] sm:$0xff]
  %v7190 = vld [vmem:[%s2288 + $0x2b9] sm:$0xff]
  %v7191 = vld [vmem:[%s2288 + $0x2c1] sm:$0xff]
  %v7192 = vld [vmem:[%s2288 + $0x2d1] sm:$0xff]
  %v7193 = vld [vmem:[%s2288 + $0x2d9] sm:$0xff]
  %v7194 = vld [vmem:[%s2288 + $0x2e9] sm:$0xff]
  %v7195 = vld [vmem:[%s2288 + $0x2f1] sm:$0xff]
  %v7196 = vld [vmem:[%s2288 + $0x301] sm:$0xff]
  %v7197 = vld [vmem:[%s2288 + $0x309] sm:$0xff]
  %v7198 = vld [vmem:[%s2288 + $0x319] sm:$0xff]
  %v7199 = vld [vmem:[%s2288 + $0x321] sm:$0xff]
  %7264 = vrot.lane.b32.xlu0 %v7136, 28
  %v7265 = vpop.permute.xlu0 %7264
  %7266 = vrot.lane.b32.xlu0 %v7137, 28
  %v7267 = vpop.permute.xlu0 %7266
  %7268 = vrot.lane.b32.xlu0 %v7138, 28
  %v7269 = vpop.permute.xlu0 %7268
  %7270 = vrot.lane.b32.xlu0 %v7139, 28
  %v7271 = vpop.permute.xlu0 %7270
  %7272 = vrot.lane.b32.xlu0 %v7140, 28
  %v7273 = vpop.permute.xlu0 %7272
  %7274 = vrot.lane.b32.xlu0 %v7141, 28
  %v7275 = vpop.permute.xlu0 %7274
  %7276 = vrot.lane.b32.xlu0 %v7142, 28
  %v7277 = vpop.permute.xlu0 %7276
  %7278 = vrot.lane.b32.xlu0 %v7143, 28
  %v7279 = vpop.permute.xlu0 %7278
  %7280 = vrot.lane.b32.xlu0 %v7144, 28
  %v7281 = vpop.permute.xlu0 %7280
  %7282 = vrot.lane.b32.xlu0 %v7145, 28
  %v7283 = vpop.permute.xlu0 %7282
  %7284 = vrot.lane.b32.xlu0 %v7146, 28
  %v7285 = vpop.permute.xlu0 %7284
  %7286 = vrot.lane.b32.xlu0 %v7147, 28
  %v7287 = vpop.permute.xlu0 %7286
  %7288 = vrot.lane.b32.xlu0 %v7148, 28
  %v7289 = vpop.permute.xlu0 %7288
  %7290 = vrot.lane.b32.xlu0 %v7149, 28
  %v7291 = vpop.permute.xlu0 %7290
  %7292 = vrot.lane.b32.xlu0 %v7150, 28
  %v7293 = vpop.permute.xlu0 %7292
  %7294 = vrot.lane.b32.xlu0 %v7151, 28
  %v7295 = vpop.permute.xlu0 %7294
  %7296 = vrot.lane.b32.xlu0 %v7152, 28
  %v7297 = vpop.permute.xlu0 %7296
  %7298 = vrot.lane.b32.xlu0 %v7153, 28
  %v7299 = vpop.permute.xlu0 %7298
  %7300 = vrot.lane.b32.xlu0 %v7154, 28
  %v7301 = vpop.permute.xlu0 %7300
  %7302 = vrot.lane.b32.xlu0 %v7155, 28
  %v7303 = vpop.permute.xlu0 %7302
  %7304 = vrot.lane.b32.xlu0 %v7156, 28
  %v7305 = vpop.permute.xlu0 %7304
  %7306 = vrot.lane.b32.xlu0 %v7157, 28
  %v7307 = vpop.permute.xlu0 %7306
  %7308 = vrot.lane.b32.xlu0 %v7158, 28
  %v7309 = vpop.permute.xlu0 %7308
  %7310 = vrot.lane.b32.xlu0 %v7159, 28
  %v7311 = vpop.permute.xlu0 %7310
  %7312 = vrot.lane.b32.xlu0 %v7160, 28
  %v7313 = vpop.permute.xlu0 %7312
  %7314 = vrot.lane.b32.xlu0 %v7161, 28
  %v7315 = vpop.permute.xlu0 %7314
  %7316 = vrot.lane.b32.xlu0 %v7162, 28
  %v7317 = vpop.permute.xlu0 %7316
  %7318 = vrot.lane.b32.xlu0 %v7163, 28
  %v7319 = vpop.permute.xlu0 %7318
  %7320 = vrot.lane.b32.xlu0 %v7164, 28
  %v7321 = vpop.permute.xlu0 %7320
  %7322 = vrot.lane.b32.xlu0 %v7165, 28
  %v7323 = vpop.permute.xlu0 %7322
  %7324 = vrot.lane.b32.xlu0 %v7166, 28
  %v7325 = vpop.permute.xlu0 %7324
  %7326 = vrot.lane.b32.xlu0 %v7167, 28
  %v7327 = vpop.permute.xlu0 %7326
  %7328 = vrot.lane.b32.xlu0 %v7168, 28
  %v7329 = vpop.permute.xlu0 %7328
  %7330 = vrot.lane.b32.xlu0 %v7169, 28
  %v7331 = vpop.permute.xlu0 %7330
  %7332 = vrot.lane.b32.xlu0 %v7170, 28
  %v7333 = vpop.permute.xlu0 %7332
  %7334 = vrot.lane.b32.xlu0 %v7171, 28
  %v7335 = vpop.permute.xlu0 %7334
  %7336 = vrot.lane.b32.xlu0 %v7172, 28
  %v7337 = vpop.permute.xlu0 %7336
  %7338 = vrot.lane.b32.xlu0 %v7173, 28
  %v7339 = vpop.permute.xlu0 %7338
  %7340 = vrot.lane.b32.xlu0 %v7174, 28
  %v7341 = vpop.permute.xlu0 %7340
  %7342 = vrot.lane.b32.xlu0 %v7175, 28
  %v7343 = vpop.permute.xlu0 %7342
  %7344 = vrot.lane.b32.xlu0 %v7176, 28
  %v7345 = vpop.permute.xlu0 %7344
  %7346 = vrot.lane.b32.xlu0 %v7177, 28
  %v7347 = vpop.permute.xlu0 %7346
  %7348 = vrot.lane.b32.xlu0 %v7178, 28
  %v7349 = vpop.permute.xlu0 %7348
  %7350 = vrot.lane.b32.xlu0 %v7179, 28
  %v7351 = vpop.permute.xlu0 %7350
  %7352 = vrot.lane.b32.xlu0 %v7180, 28
  %v7353 = vpop.permute.xlu0 %7352
  %7354 = vrot.lane.b32.xlu0 %v7181, 28
  %v7355 = vpop.permute.xlu0 %7354
  %7356 = vrot.lane.b32.xlu0 %v7182, 28
  %v7357 = vpop.permute.xlu0 %7356
  %7358 = vrot.lane.b32.xlu0 %v7183, 28
  %v7359 = vpop.permute.xlu0 %7358
  %7360 = vrot.lane.b32.xlu0 %v7184, 28
  %v7361 = vpop.permute.xlu0 %7360
  %7362 = vrot.lane.b32.xlu0 %v7185, 28
  %v7363 = vpop.permute.xlu0 %7362
  %7364 = vrot.lane.b32.xlu0 %v7186, 28
  %v7365 = vpop.permute.xlu0 %7364
  %7366 = vrot.lane.b32.xlu0 %v7187, 28
  %v7367 = vpop.permute.xlu0 %7366
  %7368 = vrot.lane.b32.xlu0 %v7188, 28
  %v7369 = vpop.permute.xlu0 %7368
  %7370 = vrot.lane.b32.xlu0 %v7189, 28
  %v7371 = vpop.permute.xlu0 %7370
  %7372 = vrot.lane.b32.xlu0 %v7190, 28
  %v7373 = vpop.permute.xlu0 %7372
  %7374 = vrot.lane.b32.xlu0 %v7191, 28
  %v7375 = vpop.permute.xlu0 %7374
  %7376 = vrot.lane.b32.xlu0 %v7192, 28
  %v7377 = vpop.permute.xlu0 %7376
  %7378 = vrot.lane.b32.xlu0 %v7193, 28
  %v7379 = vpop.permute.xlu0 %7378
  %7380 = vrot.lane.b32.xlu0 %v7194, 28
  %v7381 = vpop.permute.xlu0 %7380
  %7382 = vrot.lane.b32.xlu0 %v7195, 28
  %v7383 = vpop.permute.xlu0 %7382
  %7384 = vrot.lane.b32.xlu0 %v7196, 28
  %v7385 = vpop.permute.xlu0 %7384
  %7386 = vrot.lane.b32.xlu0 %v7197, 28
  %v7387 = vpop.permute.xlu0 %7386
  %7388 = vrot.lane.b32.xlu0 %v7198, 28
  %v7389 = vpop.permute.xlu0 %7388
  %7390 = vrot.lane.b32.xlu0 %v7199, 28
  %v7391 = vpop.permute.xlu0 %7390
  %7456 = vst.msk [vmem:[#allocation3] sm:$0xff] %vm2994, %v7265
  %7457 = vst.msk [vmem:[#allocation3 + $0x8] sm:$0xff] %vm2994, %v7267
  %7458 = vst.msk [vmem:[#allocation3 + $0x10] sm:$0xff] %vm2994, %v7269
  %7459 = vst.msk [vmem:[#allocation3 + $0x18] sm:$0xff] %vm2994, %v7271
  %7460 = vst.msk [vmem:[#allocation3 + $0x20] sm:$0xff] %vm2994, %v7273
  %7461 = vst.msk [vmem:[#allocation3 + $0x28] sm:$0xff] %vm2994, %v7275
  %7462 = vst.msk [vmem:[#allocation3 + $0x30] sm:$0xff] %vm2994, %v7277
  %7463 = vst.msk [vmem:[#allocation3 + $0x38] sm:$0xff] %vm2994, %v7279
  %7464 = vst.msk [vmem:[#allocation3 + $0x40] sm:$0xff] %vm2994, %v7281
  %7465 = vst.msk [vmem:[#allocation3 + $0x48] sm:$0xff] %vm2994, %v7283
  %7466 = vst.msk [vmem:[#allocation3 + $0x50] sm:$0xff] %vm2994, %v7285
  %7467 = vst.msk [vmem:[#allocation3 + $0x58] sm:$0xff] %vm2994, %v7287
  %7468 = vst.msk [vmem:[#allocation3 + $0x60] sm:$0xff] %vm2994, %v7289
  %7469 = vst.msk [vmem:[#allocation3 + $0x68] sm:$0xff] %vm2994, %v7291
  %7470 = vst.msk [vmem:[#allocation3 + $0x70] sm:$0xff] %vm2994, %v7293
  %7471 = vst.msk [vmem:[#allocation3 + $0x78] sm:$0xff] %vm2994, %v7295
  %7472 = vst.msk [vmem:[#allocation3 + $0x80] sm:$0xff] %vm2994, %v7297
  %7473 = vst.msk [vmem:[#allocation3 + $0x88] sm:$0xff] %vm2994, %v7299
  %7474 = vst.msk [vmem:[#allocation3 + $0x90] sm:$0xff] %vm2994, %v7301
  %7475 = vst.msk [vmem:[#allocation3 + $0x98] sm:$0xff] %vm2994, %v7303
  %7476 = vst.msk [vmem:[#allocation3 + $0xa0] sm:$0xff] %vm2994, %v7305
  %7477 = vst.msk [vmem:[#allocation3 + $0xa8] sm:$0xff] %vm2994, %v7307
  %7478 = vst.msk [vmem:[#allocation3 + $0xb0] sm:$0xff] %vm2994, %v7309
  %7479 = vst.msk [vmem:[#allocation3 + $0xb8] sm:$0xff] %vm2994, %v7311
  %7480 = vst.msk [vmem:[#allocation3 + $0xc0] sm:$0xff] %vm2994, %v7313
  %7481 = vst.msk [vmem:[#allocation3 + $0xc8] sm:$0xff] %vm2994, %v7315
  %7482 = vst.msk [vmem:[#allocation3 + $0xd0] sm:$0xff] %vm2994, %v7317
  %7483 = vst.msk [vmem:[#allocation3 + $0xd8] sm:$0xff] %vm2994, %v7319
  %7484 = vst.msk [vmem:[#allocation3 + $0xe0] sm:$0xff] %vm2994, %v7321
  %7485 = vst.msk [vmem:[#allocation3 + $0xe8] sm:$0xff] %vm2994, %v7323
  %7486 = vst.msk [vmem:[#allocation3 + $0xf0] sm:$0xff] %vm2994, %v7325
  %7487 = vst.msk [vmem:[#allocation3 + $0xf8] sm:$0xff] %vm2994, %v7327
  %7488 = vst.msk [vmem:[#allocation3 + $0x100] sm:$0xff] %vm2994, %v7329
  %7489 = vst.msk [vmem:[#allocation3 + $0x108] sm:$0xff] %vm2994, %v7331
  %7490 = vst.msk [vmem:[#allocation3 + $0x110] sm:$0xff] %vm2994, %v7333
  %7491 = vst.msk [vmem:[#allocation3 + $0x118] sm:$0xff] %vm2994, %v7335
  %7492 = vst.msk [vmem:[#allocation3 + $0x120] sm:$0xff] %vm2994, %v7337
  %7493 = vst.msk [vmem:[#allocation3 + $0x128] sm:$0xff] %vm2994, %v7339
  %7494 = vst.msk [vmem:[#allocation3 + $0x130] sm:$0xff] %vm2994, %v7341
  %7495 = vst.msk [vmem:[#allocation3 + $0x138] sm:$0xff] %vm2994, %v7343
  %7496 = vst.msk [vmem:[#allocation3 + $0x140] sm:$0xff] %vm2994, %v7345
  %7497 = vst.msk [vmem:[#allocation3 + $0x148] sm:$0xff] %vm2994, %v7347
  %7498 = vst.msk [vmem:[#allocation3 + $0x150] sm:$0xff] %vm2994, %v7349
  %7499 = vst.msk [vmem:[#allocation3 + $0x158] sm:$0xff] %vm2994, %v7351
  %7500 = vst.msk [vmem:[#allocation3 + $0x160] sm:$0xff] %vm2994, %v7353
  %7501 = vst.msk [vmem:[#allocation3 + $0x168] sm:$0xff] %vm2994, %v7355
  %7502 = vst.msk [vmem:[#allocation3 + $0x170] sm:$0xff] %vm2994, %v7357
  %7503 = vst.msk [vmem:[#allocation3 + $0x178] sm:$0xff] %vm2994, %v7359
  %7504 = vst.msk [vmem:[#allocation3 + $0x180] sm:$0xff] %vm2994, %v7361
  %7505 = vst.msk [vmem:[#allocation3 + $0x188] sm:$0xff] %vm2994, %v7363
  %7506 = vst.msk [vmem:[#allocation3 + $0x190] sm:$0xff] %vm2994, %v7365
  %7507 = vst.msk [vmem:[#allocation3 + $0x198] sm:$0xff] %vm2994, %v7367
  %7508 = vst.msk [vmem:[#allocation3 + $0x1a0] sm:$0xff] %vm2994, %v7369
  %7509 = vst.msk [vmem:[#allocation3 + $0x1a8] sm:$0xff] %vm2994, %v7371
  %7510 = vst.msk [vmem:[#allocation3 + $0x1b0] sm:$0xff] %vm2994, %v7373
  %7511 = vst.msk [vmem:[#allocation3 + $0x1b8] sm:$0xff] %vm2994, %v7375
  %7512 = vst.msk [vmem:[#allocation3 + $0x1c0] sm:$0xff] %vm2994, %v7377
  %7513 = vst.msk [vmem:[#allocation3 + $0x1c8] sm:$0xff] %vm2994, %v7379
  %7514 = vst.msk [vmem:[#allocation3 + $0x1d0] sm:$0xff] %vm2994, %v7381
  %7515 = vst.msk [vmem:[#allocation3 + $0x1d8] sm:$0xff] %vm2994, %v7383
  %7516 = vst.msk [vmem:[#allocation3 + $0x1e0] sm:$0xff] %vm2994, %v7385
  %7517 = vst.msk [vmem:[#allocation3 + $0x1e8] sm:$0xff] %vm2994, %v7387
  %7518 = vst.msk [vmem:[#allocation3 + $0x1f0] sm:$0xff] %vm2994, %v7389
  %7519 = vst.msk [vmem:[#allocation3 + $0x1f8] sm:$0xff] %vm2994, %v7391
  %v7520 = vld [vmem:[%s2288 + $0x2] sm:$0xff]
  %v7521 = vld [vmem:[%s2288 + $0xa] sm:$0xff]
  %v7522 = vld [vmem:[%s2288 + $0x1a] sm:$0xff]
  %v7523 = vld [vmem:[%s2288 + $0x22] sm:$0xff]
  %v7524 = vld [vmem:[%s2288 + $0x32] sm:$0xff]
  %v7525 = vld [vmem:[%s2288 + $0x3a] sm:$0xff]
  %v7526 = vld [vmem:[%s2288 + $0x4a] sm:$0xff]
  %v7527 = vld [vmem:[%s2288 + $0x52] sm:$0xff]
  %v7528 = vld [vmem:[%s2288 + $0x62] sm:$0xff]
  %v7529 = vld [vmem:[%s2288 + $0x6a] sm:$0xff]
  %v7530 = vld [vmem:[%s2288 + $0x7a] sm:$0xff]
  %v7531 = vld [vmem:[%s2288 + $0x82] sm:$0xff]
  %v7532 = vld [vmem:[%s2288 + $0x92] sm:$0xff]
  %v7533 = vld [vmem:[%s2288 + $0x9a] sm:$0xff]
  %v7534 = vld [vmem:[%s2288 + $0xaa] sm:$0xff]
  %v7535 = vld [vmem:[%s2288 + $0xb2] sm:$0xff]
  %v7536 = vld [vmem:[%s2288 + $0xc2] sm:$0xff]
  %v7537 = vld [vmem:[%s2288 + $0xca] sm:$0xff]
  %v7538 = vld [vmem:[%s2288 + $0xda] sm:$0xff]
  %v7539 = vld [vmem:[%s2288 + $0xe2] sm:$0xff]
  %v7540 = vld [vmem:[%s2288 + $0xf2] sm:$0xff]
  %v7541 = vld [vmem:[%s2288 + $0xfa] sm:$0xff]
  %v7542 = vld [vmem:[%s2288 + $0x10a] sm:$0xff]
  %v7543 = vld [vmem:[%s2288 + $0x112] sm:$0xff]
  %v7544 = vld [vmem:[%s2288 + $0x122] sm:$0xff]
  %v7545 = vld [vmem:[%s2288 + $0x12a] sm:$0xff]
  %v7546 = vld [vmem:[%s2288 + $0x13a] sm:$0xff]
  %v7547 = vld [vmem:[%s2288 + $0x142] sm:$0xff]
  %v7548 = vld [vmem:[%s2288 + $0x152] sm:$0xff]
  %v7549 = vld [vmem:[%s2288 + $0x15a] sm:$0xff]
  %v7550 = vld [vmem:[%s2288 + $0x16a] sm:$0xff]
  %v7551 = vld [vmem:[%s2288 + $0x172] sm:$0xff]
  %v7552 = vld [vmem:[%s2288 + $0x1b2] sm:$0xff]
  %v7553 = vld [vmem:[%s2288 + $0x1ba] sm:$0xff]
  %v7554 = vld [vmem:[%s2288 + $0x1ca] sm:$0xff]
  %v7555 = vld [vmem:[%s2288 + $0x1d2] sm:$0xff]
  %v7556 = vld [vmem:[%s2288 + $0x1e2] sm:$0xff]
  %v7557 = vld [vmem:[%s2288 + $0x1ea] sm:$0xff]
  %v7558 = vld [vmem:[%s2288 + $0x1fa] sm:$0xff]
  %v7559 = vld [vmem:[%s2288 + $0x202] sm:$0xff]
  %v7560 = vld [vmem:[%s2288 + $0x212] sm:$0xff]
  %v7561 = vld [vmem:[%s2288 + $0x21a] sm:$0xff]
  %v7562 = vld [vmem:[%s2288 + $0x22a] sm:$0xff]
  %v7563 = vld [vmem:[%s2288 + $0x232] sm:$0xff]
  %v7564 = vld [vmem:[%s2288 + $0x242] sm:$0xff]
  %v7565 = vld [vmem:[%s2288 + $0x24a] sm:$0xff]
  %v7566 = vld [vmem:[%s2288 + $0x25a] sm:$0xff]
  %v7567 = vld [vmem:[%s2288 + $0x262] sm:$0xff]
  %v7568 = vld [vmem:[%s2288 + $0x272] sm:$0xff]
  %v7569 = vld [vmem:[%s2288 + $0x27a] sm:$0xff]
  %v7570 = vld [vmem:[%s2288 + $0x28a] sm:$0xff]
  %v7571 = vld [vmem:[%s2288 + $0x292] sm:$0xff]
  %v7572 = vld [vmem:[%s2288 + $0x2a2] sm:$0xff]
  %v7573 = vld [vmem:[%s2288 + $0x2aa] sm:$0xff]
  %v7574 = vld [vmem:[%s2288 + $0x2ba] sm:$0xff]
  %v7575 = vld [vmem:[%s2288 + $0x2c2] sm:$0xff]
  %v7576 = vld [vmem:[%s2288 + $0x2d2] sm:$0xff]
  %v7577 = vld [vmem:[%s2288 + $0x2da] sm:$0xff]
  %v7578 = vld [vmem:[%s2288 + $0x2ea] sm:$0xff]
  %v7579 = vld [vmem:[%s2288 + $0x2f2] sm:$0xff]
  %v7580 = vld [vmem:[%s2288 + $0x302] sm:$0xff]
  %v7581 = vld [vmem:[%s2288 + $0x30a] sm:$0xff]
  %v7582 = vld [vmem:[%s2288 + $0x31a] sm:$0xff]
  %v7583 = vld [vmem:[%s2288 + $0x322] sm:$0xff]
  %7648 = vrot.lane.b32.xlu0 %v7520, 32
  %v7649 = vpop.permute.xlu0 %7648
  %7650 = vrot.lane.b32.xlu0 %v7521, 32
  %v7651 = vpop.permute.xlu0 %7650
  %7652 = vrot.lane.b32.xlu0 %v7522, 32
  %v7653 = vpop.permute.xlu0 %7652
  %7654 = vrot.lane.b32.xlu0 %v7523, 32
  %v7655 = vpop.permute.xlu0 %7654
  %7656 = vrot.lane.b32.xlu0 %v7524, 32
  %v7657 = vpop.permute.xlu0 %7656
  %7658 = vrot.lane.b32.xlu0 %v7525, 32
  %v7659 = vpop.permute.xlu0 %7658
  %7660 = vrot.lane.b32.xlu0 %v7526, 32
  %v7661 = vpop.permute.xlu0 %7660
  %7662 = vrot.lane.b32.xlu0 %v7527, 32
  %v7663 = vpop.permute.xlu0 %7662
  %7664 = vrot.lane.b32.xlu0 %v7528, 32
  %v7665 = vpop.permute.xlu0 %7664
  %7666 = vrot.lane.b32.xlu0 %v7529, 32
  %v7667 = vpop.permute.xlu0 %7666
  %7668 = vrot.lane.b32.xlu0 %v7530, 32
  %v7669 = vpop.permute.xlu0 %7668
  %7670 = vrot.lane.b32.xlu0 %v7531, 32
  %v7671 = vpop.permute.xlu0 %7670
  %7672 = vrot.lane.b32.xlu0 %v7532, 32
  %v7673 = vpop.permute.xlu0 %7672
  %7674 = vrot.lane.b32.xlu0 %v7533, 32
  %v7675 = vpop.permute.xlu0 %7674
  %7676 = vrot.lane.b32.xlu0 %v7534, 32
  %v7677 = vpop.permute.xlu0 %7676
  %7678 = vrot.lane.b32.xlu0 %v7535, 32
  %v7679 = vpop.permute.xlu0 %7678
  %7680 = vrot.lane.b32.xlu0 %v7536, 32
  %v7681 = vpop.permute.xlu0 %7680
  %7682 = vrot.lane.b32.xlu0 %v7537, 32
  %v7683 = vpop.permute.xlu0 %7682
  %7684 = vrot.lane.b32.xlu0 %v7538, 32
  %v7685 = vpop.permute.xlu0 %7684
  %7686 = vrot.lane.b32.xlu0 %v7539, 32
  %v7687 = vpop.permute.xlu0 %7686
  %7688 = vrot.lane.b32.xlu0 %v7540, 32
  %v7689 = vpop.permute.xlu0 %7688
  %7690 = vrot.lane.b32.xlu0 %v7541, 32
  %v7691 = vpop.permute.xlu0 %7690
  %7692 = vrot.lane.b32.xlu0 %v7542, 32
  %v7693 = vpop.permute.xlu0 %7692
  %7694 = vrot.lane.b32.xlu0 %v7543, 32
  %v7695 = vpop.permute.xlu0 %7694
  %7696 = vrot.lane.b32.xlu0 %v7544, 32
  %v7697 = vpop.permute.xlu0 %7696
  %7698 = vrot.lane.b32.xlu0 %v7545, 32
  %v7699 = vpop.permute.xlu0 %7698
  %7700 = vrot.lane.b32.xlu0 %v7546, 32
  %v7701 = vpop.permute.xlu0 %7700
  %7702 = vrot.lane.b32.xlu0 %v7547, 32
  %v7703 = vpop.permute.xlu0 %7702
  %7704 = vrot.lane.b32.xlu0 %v7548, 32
  %v7705 = vpop.permute.xlu0 %7704
  %7706 = vrot.lane.b32.xlu0 %v7549, 32
  %v7707 = vpop.permute.xlu0 %7706
  %7708 = vrot.lane.b32.xlu0 %v7550, 32
  %v7709 = vpop.permute.xlu0 %7708
  %7710 = vrot.lane.b32.xlu0 %v7551, 32
  %v7711 = vpop.permute.xlu0 %7710
  %7712 = vrot.lane.b32.xlu0 %v7552, 32
  %v7713 = vpop.permute.xlu0 %7712
  %7714 = vrot.lane.b32.xlu0 %v7553, 32
  %v7715 = vpop.permute.xlu0 %7714
  %7716 = vrot.lane.b32.xlu0 %v7554, 32
  %v7717 = vpop.permute.xlu0 %7716
  %7718 = vrot.lane.b32.xlu0 %v7555, 32
  %v7719 = vpop.permute.xlu0 %7718
  %7720 = vrot.lane.b32.xlu0 %v7556, 32
  %v7721 = vpop.permute.xlu0 %7720
  %7722 = vrot.lane.b32.xlu0 %v7557, 32
  %v7723 = vpop.permute.xlu0 %7722
  %7724 = vrot.lane.b32.xlu0 %v7558, 32
  %v7725 = vpop.permute.xlu0 %7724
  %7726 = vrot.lane.b32.xlu0 %v7559, 32
  %v7727 = vpop.permute.xlu0 %7726
  %7728 = vrot.lane.b32.xlu0 %v7560, 32
  %v7729 = vpop.permute.xlu0 %7728
  %7730 = vrot.lane.b32.xlu0 %v7561, 32
  %v7731 = vpop.permute.xlu0 %7730
  %7732 = vrot.lane.b32.xlu0 %v7562, 32
  %v7733 = vpop.permute.xlu0 %7732
  %7734 = vrot.lane.b32.xlu0 %v7563, 32
  %v7735 = vpop.permute.xlu0 %7734
  %7736 = vrot.lane.b32.xlu0 %v7564, 32
  %v7737 = vpop.permute.xlu0 %7736
  %7738 = vrot.lane.b32.xlu0 %v7565, 32
  %v7739 = vpop.permute.xlu0 %7738
  %7740 = vrot.lane.b32.xlu0 %v7566, 32
  %v7741 = vpop.permute.xlu0 %7740
  %7742 = vrot.lane.b32.xlu0 %v7567, 32
  %v7743 = vpop.permute.xlu0 %7742
  %7744 = vrot.lane.b32.xlu0 %v7568, 32
  %v7745 = vpop.permute.xlu0 %7744
  %7746 = vrot.lane.b32.xlu0 %v7569, 32
  %v7747 = vpop.permute.xlu0 %7746
  %7748 = vrot.lane.b32.xlu0 %v7570, 32
  %v7749 = vpop.permute.xlu0 %7748
  %7750 = vrot.lane.b32.xlu0 %v7571, 32
  %v7751 = vpop.permute.xlu0 %7750
  %7752 = vrot.lane.b32.xlu0 %v7572, 32
  %v7753 = vpop.permute.xlu0 %7752
  %7754 = vrot.lane.b32.xlu0 %v7573, 32
  %v7755 = vpop.permute.xlu0 %7754
  %7756 = vrot.lane.b32.xlu0 %v7574, 32
  %v7757 = vpop.permute.xlu0 %7756
  %7758 = vrot.lane.b32.xlu0 %v7575, 32
  %v7759 = vpop.permute.xlu0 %7758
  %7760 = vrot.lane.b32.xlu0 %v7576, 32
  %v7761 = vpop.permute.xlu0 %7760
  %7762 = vrot.lane.b32.xlu0 %v7577, 32
  %v7763 = vpop.permute.xlu0 %7762
  %7764 = vrot.lane.b32.xlu0 %v7578, 32
  %v7765 = vpop.permute.xlu0 %7764
  %7766 = vrot.lane.b32.xlu0 %v7579, 32
  %v7767 = vpop.permute.xlu0 %7766
  %7768 = vrot.lane.b32.xlu0 %v7580, 32
  %v7769 = vpop.permute.xlu0 %7768
  %7770 = vrot.lane.b32.xlu0 %v7581, 32
  %v7771 = vpop.permute.xlu0 %7770
  %7772 = vrot.lane.b32.xlu0 %v7582, 32
  %v7773 = vpop.permute.xlu0 %7772
  %7774 = vrot.lane.b32.xlu0 %v7583, 32
  %v7775 = vpop.permute.xlu0 %7774
  %7840 = vst.msk [vmem:[#allocation3] sm:$0xff] %vm3379, %v7649
  %7841 = vst.msk [vmem:[#allocation3 + $0x8] sm:$0xff] %vm3379, %v7651
  %7842 = vst.msk [vmem:[#allocation3 + $0x10] sm:$0xff] %vm3379, %v7653
  %7843 = vst.msk [vmem:[#allocation3 + $0x18] sm:$0xff] %vm3379, %v7655
  %7844 = vst.msk [vmem:[#allocation3 + $0x20] sm:$0xff] %vm3379, %v7657
  %7845 = vst.msk [vmem:[#allocation3 + $0x28] sm:$0xff] %vm3379, %v7659
  %7846 = vst.msk [vmem:[#allocation3 + $0x30] sm:$0xff] %vm3379, %v7661
  %7847 = vst.msk [vmem:[#allocation3 + $0x38] sm:$0xff] %vm3379, %v7663
  %7848 = vst.msk [vmem:[#allocation3 + $0x40] sm:$0xff] %vm3379, %v7665
  %7849 = vst.msk [vmem:[#allocation3 + $0x48] sm:$0xff] %vm3379, %v7667
  %7850 = vst.msk [vmem:[#allocation3 + $0x50] sm:$0xff] %vm3379, %v7669
  %7851 = vst.msk [vmem:[#allocation3 + $0x58] sm:$0xff] %vm3379, %v7671
  %7852 = vst.msk [vmem:[#allocation3 + $0x60] sm:$0xff] %vm3379, %v7673
  %7853 = vst.msk [vmem:[#allocation3 + $0x68] sm:$0xff] %vm3379, %v7675
  %7854 = vst.msk [vmem:[#allocation3 + $0x70] sm:$0xff] %vm3379, %v7677
  %7855 = vst.msk [vmem:[#allocation3 + $0x78] sm:$0xff] %vm3379, %v7679
  %7856 = vst.msk [vmem:[#allocation3 + $0x80] sm:$0xff] %vm3379, %v7681
  %7857 = vst.msk [vmem:[#allocation3 + $0x88] sm:$0xff] %vm3379, %v7683
  %7858 = vst.msk [vmem:[#allocation3 + $0x90] sm:$0xff] %vm3379, %v7685
  %7859 = vst.msk [vmem:[#allocation3 + $0x98] sm:$0xff] %vm3379, %v7687
  %7860 = vst.msk [vmem:[#allocation3 + $0xa0] sm:$0xff] %vm3379, %v7689
  %7861 = vst.msk [vmem:[#allocation3 + $0xa8] sm:$0xff] %vm3379, %v7691
  %7862 = vst.msk [vmem:[#allocation3 + $0xb0] sm:$0xff] %vm3379, %v7693
  %7863 = vst.msk [vmem:[#allocation3 + $0xb8] sm:$0xff] %vm3379, %v7695
  %7864 = vst.msk [vmem:[#allocation3 + $0xc0] sm:$0xff] %vm3379, %v7697
  %7865 = vst.msk [vmem:[#allocation3 + $0xc8] sm:$0xff] %vm3379, %v7699
  %7866 = vst.msk [vmem:[#allocation3 + $0xd0] sm:$0xff] %vm3379, %v7701
  %7867 = vst.msk [vmem:[#allocation3 + $0xd8] sm:$0xff] %vm3379, %v7703
  %7868 = vst.msk [vmem:[#allocation3 + $0xe0] sm:$0xff] %vm3379, %v7705
  %7869 = vst.msk [vmem:[#allocation3 + $0xe8] sm:$0xff] %vm3379, %v7707
  %7870 = vst.msk [vmem:[#allocation3 + $0xf0] sm:$0xff] %vm3379, %v7709
  %7871 = vst.msk [vmem:[#allocation3 + $0xf8] sm:$0xff] %vm3379, %v7711
  %7872 = vst.msk [vmem:[#allocation3 + $0x100] sm:$0xff] %vm3379, %v7713
  %7873 = vst.msk [vmem:[#allocation3 + $0x108] sm:$0xff] %vm3379, %v7715
  %7874 = vst.msk [vmem:[#allocation3 + $0x110] sm:$0xff] %vm3379, %v7717
  %7875 = vst.msk [vmem:[#allocation3 + $0x118] sm:$0xff] %vm3379, %v7719
  %7876 = vst.msk [vmem:[#allocation3 + $0x120] sm:$0xff] %vm3379, %v7721
  %7877 = vst.msk [vmem:[#allocation3 + $0x128] sm:$0xff] %vm3379, %v7723
  %7878 = vst.msk [vmem:[#allocation3 + $0x130] sm:$0xff] %vm3379, %v7725
  %7879 = vst.msk [vmem:[#allocation3 + $0x138] sm:$0xff] %vm3379, %v7727
  %7880 = vst.msk [vmem:[#allocation3 + $0x140] sm:$0xff] %vm3379, %v7729
  %7881 = vst.msk [vmem:[#allocation3 + $0x148] sm:$0xff] %vm3379, %v7731
  %7882 = vst.msk [vmem:[#allocation3 + $0x150] sm:$0xff] %vm3379, %v7733
  %7883 = vst.msk [vmem:[#allocation3 + $0x158] sm:$0xff] %vm3379, %v7735
  %7884 = vst.msk [vmem:[#allocation3 + $0x160] sm:$0xff] %vm3379, %v7737
  %7885 = vst.msk [vmem:[#allocation3 + $0x168] sm:$0xff] %vm3379, %v7739
  %7886 = vst.msk [vmem:[#allocation3 + $0x170] sm:$0xff] %vm3379, %v7741
  %7887 = vst.msk [vmem:[#allocation3 + $0x178] sm:$0xff] %vm3379, %v7743
  %7888 = vst.msk [vmem:[#allocation3 + $0x180] sm:$0xff] %vm3379, %v7745
  %7889 = vst.msk [vmem:[#allocation3 + $0x188] sm:$0xff] %vm3379, %v7747
  %7890 = vst.msk [vmem:[#allocation3 + $0x190] sm:$0xff] %vm3379, %v7749
  %7891 = vst.msk [vmem:[#allocation3 + $0x198] sm:$0xff] %vm3379, %v7751
  %7892 = vst.msk [vmem:[#allocation3 + $0x1a0] sm:$0xff] %vm3379, %v7753
  %7893 = vst.msk [vmem:[#allocation3 + $0x1a8] sm:$0xff] %vm3379, %v7755
  %7894 = vst.msk [vmem:[#allocation3 + $0x1b0] sm:$0xff] %vm3379, %v7757
  %7895 = vst.msk [vmem:[#allocation3 + $0x1b8] sm:$0xff] %vm3379, %v7759
  %7896 = vst.msk [vmem:[#allocation3 + $0x1c0] sm:$0xff] %vm3379, %v7761
  %7897 = vst.msk [vmem:[#allocation3 + $0x1c8] sm:$0xff] %vm3379, %v7763
  %7898 = vst.msk [vmem:[#allocation3 + $0x1d0] sm:$0xff] %vm3379, %v7765
  %7899 = vst.msk [vmem:[#allocation3 + $0x1d8] sm:$0xff] %vm3379, %v7767
  %7900 = vst.msk [vmem:[#allocation3 + $0x1e0] sm:$0xff] %vm3379, %v7769
  %7901 = vst.msk [vmem:[#allocation3 + $0x1e8] sm:$0xff] %vm3379, %v7771
  %7902 = vst.msk [vmem:[#allocation3 + $0x1f0] sm:$0xff] %vm3379, %v7773
  %7903 = vst.msk [vmem:[#allocation3 + $0x1f8] sm:$0xff] %vm3379, %v7775
  %v7904 = vld [vmem:[#allocation3] sm:$0xff]
  %v7905 = vld [vmem:[#allocation3 + $0x8] sm:$0xff]
  %v7906 = vld [vmem:[#allocation3 + $0x10] sm:$0xff]
  %v7907 = vld [vmem:[#allocation3 + $0x18] sm:$0xff]
  %v7908 = vld [vmem:[#allocation3 + $0x20] sm:$0xff]
  %v7909 = vld [vmem:[#allocation3 + $0x28] sm:$0xff]
  %v7910 = vld [vmem:[#allocation3 + $0x30] sm:$0xff]
  %v7911 = vld [vmem:[#allocation3 + $0x38] sm:$0xff]
  %v7912 = vld [vmem:[#allocation3 + $0x40] sm:$0xff]
  %v7913 = vld [vmem:[#allocation3 + $0x48] sm:$0xff]
  %v7914 = vld [vmem:[#allocation3 + $0x50] sm:$0xff]
  %v7915 = vld [vmem:[#allocation3 + $0x58] sm:$0xff]
  %v7916 = vld [vmem:[#allocation3 + $0x60] sm:$0xff]
  %v7917 = vld [vmem:[#allocation3 + $0x68] sm:$0xff]
  %v7918 = vld [vmem:[#allocation3 + $0x70] sm:$0xff]
  %v7919 = vld [vmem:[#allocation3 + $0x78] sm:$0xff]
  %v7920 = vld [vmem:[#allocation3 + $0x80] sm:$0xff]
  %v7921 = vld [vmem:[#allocation3 + $0x88] sm:$0xff]
  %v7922 = vld [vmem:[#allocation3 + $0x90] sm:$0xff]
  %v7923 = vld [vmem:[#allocation3 + $0x98] sm:$0xff]
  %v7924 = vld [vmem:[#allocation3 + $0xa0] sm:$0xff]
  %v7925 = vld [vmem:[#allocation3 + $0xa8] sm:$0xff]
  %v7926 = vld [vmem:[#allocation3 + $0xb0] sm:$0xff]
  %v7927 = vld [vmem:[#allocation3 + $0xb8] sm:$0xff]
  %v7928 = vld [vmem:[#allocation3 + $0xc0] sm:$0xff]
  %v7929 = vld [vmem:[#allocation3 + $0xc8] sm:$0xff]
  %v7930 = vld [vmem:[#allocation3 + $0xd0] sm:$0xff]
  %v7931 = vld [vmem:[#allocation3 + $0xd8] sm:$0xff]
  %v7932 = vld [vmem:[#allocation3 + $0xe0] sm:$0xff]
  %v7933 = vld [vmem:[#allocation3 + $0xe8] sm:$0xff]
  %v7934 = vld [vmem:[#allocation3 + $0xf0] sm:$0xff]
  %v7935 = vld [vmem:[#allocation3 + $0xf8] sm:$0xff]
  %v7936 = vld [vmem:[#allocation3 + $0x100] sm:$0xff]
  %v7937 = vld [vmem:[#allocation3 + $0x108] sm:$0xff]
  %v7938 = vld [vmem:[#allocation3 + $0x110] sm:$0xff]
  %v7939 = vld [vmem:[#allocation3 + $0x118] sm:$0xff]
  %v7940 = vld [vmem:[#allocation3 + $0x120] sm:$0xff]
  %v7941 = vld [vmem:[#allocation3 + $0x128] sm:$0xff]
  %v7942 = vld [vmem:[#allocation3 + $0x130] sm:$0xff]
  %v7943 = vld [vmem:[#allocation3 + $0x138] sm:$0xff]
  %v7944 = vld [vmem:[#allocation3 + $0x140] sm:$0xff]
  %v7945 = vld [vmem:[#allocation3 + $0x148] sm:$0xff]
  %v7946 = vld [vmem:[#allocation3 + $0x150] sm:$0xff]
  %v7947 = vld [vmem:[#allocation3 + $0x158] sm:$0xff]
  %v7948 = vld [vmem:[#allocation3 + $0x160] sm:$0xff]
  %v7949 = vld [vmem:[#allocation3 + $0x168] sm:$0xff]
  %v7950 = vld [vmem:[#allocation3 + $0x170] sm:$0xff]
  %v7951 = vld [vmem:[#allocation3 + $0x178] sm:$0xff]
  %v7952 = vld [vmem:[#allocation3 + $0x180] sm:$0xff]
  %v7953 = vld [vmem:[#allocation3 + $0x188] sm:$0xff]
  %v7954 = vld [vmem:[#allocation3 + $0x190] sm:$0xff]
  %v7955 = vld [vmem:[#allocation3 + $0x198] sm:$0xff]
  %v7956 = vld [vmem:[#allocation3 + $0x1a0] sm:$0xff]
  %v7957 = vld [vmem:[#allocation3 + $0x1a8] sm:$0xff]
  %v7958 = vld [vmem:[#allocation3 + $0x1b0] sm:$0xff]
  %v7959 = vld [vmem:[#allocation3 + $0x1b8] sm:$0xff]
  %v7960 = vld [vmem:[#allocation3 + $0x1c0] sm:$0xff]
  %v7961 = vld [vmem:[#allocation3 + $0x1c8] sm:$0xff]
  %v7962 = vld [vmem:[#allocation3 + $0x1d0] sm:$0xff]
  %v7963 = vld [vmem:[#allocation3 + $0x1d8] sm:$0xff]
  %v7964 = vld [vmem:[#allocation3 + $0x1e0] sm:$0xff]
  %v7965 = vld [vmem:[#allocation3 + $0x1e8] sm:$0xff]
  %v7966 = vld [vmem:[#allocation3 + $0x1f0] sm:$0xff]
  %v7967 = vld [vmem:[#allocation3 + $0x1f8] sm:$0xff]
  %v7968 = vld [vmem:[%s2] sm:$0xff]
  %v7969 = vld [vmem:[%s2 + $0x8] sm:$0xff]
  %v7970 = vld [vmem:[%s2 + $0x10] sm:$0xff]
  %v7971 = vld [vmem:[%s2 + $0x18] sm:$0xff]
  %v7972 = vld [vmem:[%s2 + $0x20] sm:$0xf]
  %v7974 = vsel %vm3513, %v7904, 0
  %v7977 = vsel %vm3513, %v7905, 0
  %v7980 = vsel %vm3513, %v7906, 0
  %v7983 = vsel %vm3513, %v7907, 0
  %v7986 = vsel %vm3513, %v7908, 0
  %v7989 = vsel %vm3513, %v7909, 0
  %v7992 = vsel %vm3513, %v7910, 0
  %v7995 = vsel %vm3513, %v7911, 0
  %v7998 = vsel %vm3513, %v7912, 0
  %v8001 = vsel %vm3513, %v7913, 0
  %v8004 = vsel %vm3513, %v7914, 0
  %v8007 = vsel %vm3513, %v7915, 0
  %v8010 = vsel %vm3513, %v7916, 0
  %v8013 = vsel %vm3513, %v7917, 0
  %v8016 = vsel %vm3513, %v7918, 0
  %v8019 = vsel %vm3513, %v7919, 0
  %v8022 = vsel %vm3513, %v7920, 0
  %v8025 = vsel %vm3513, %v7921, 0
  %v8028 = vsel %vm3513, %v7922, 0
  %v8031 = vsel %vm3513, %v7923, 0
  %v8034 = vsel %vm3513, %v7924, 0
  %v8037 = vsel %vm3513, %v7925, 0
  %v8040 = vsel %vm3513, %v7926, 0
  %v8043 = vsel %vm3513, %v7927, 0
  %v8046 = vsel %vm3513, %v7928, 0
  %v8049 = vsel %vm3513, %v7929, 0
  %v8052 = vsel %vm3513, %v7930, 0
  %v8055 = vsel %vm3513, %v7931, 0
  %v8058 = vsel %vm3513, %v7932, 0
  %v8061 = vsel %vm3513, %v7933, 0
  %v8064 = vsel %vm3513, %v7934, 0
  %v8067 = vsel %vm3513, %v7935, 0
  %v8070 = vsel %vm3513, %v7936, 0
  %v8073 = vsel %vm3513, %v7937, 0
  %v8076 = vsel %vm3513, %v7938, 0
  %v8079 = vsel %vm3513, %v7939, 0
  %v8082 = vsel %vm3513, %v7940, 0
  %v8085 = vsel %vm3513, %v7941, 0
  %v8088 = vsel %vm3513, %v7942, 0
  %v8091 = vsel %vm3513, %v7943, 0
  %v8094 = vsel %vm3513, %v7944, 0
  %v8097 = vsel %vm3513, %v7945, 0
  %v8100 = vsel %vm3513, %v7946, 0
  %v8103 = vsel %vm3513, %v7947, 0
  %v8106 = vsel %vm3513, %v7948, 0
  %v8109 = vsel %vm3513, %v7949, 0
  %v8112 = vsel %vm3513, %v7950, 0
  %v8115 = vsel %vm3513, %v7951, 0
  %v8118 = vsel %vm3513, %v7952, 0
  %v8121 = vsel %vm3513, %v7953, 0
  %v8124 = vsel %vm3513, %v7954, 0
  %v8127 = vsel %vm3513, %v7955, 0
  %v8130 = vsel %vm3513, %v7956, 0
  %v8133 = vsel %vm3513, %v7957, 0
  %v8136 = vsel %vm3513, %v7958, 0
  %v8139 = vsel %vm3513, %v7959, 0
  %v8142 = vsel %vm3513, %v7960, 0
  %v8145 = vsel %vm3513, %v7961, 0
  %v8148 = vsel %vm3513, %v7962, 0
  %v8151 = vsel %vm3513, %v7963, 0
  %v8154 = vsel %vm3513, %v7964, 0
  %v8157 = vsel %vm3513, %v7965, 0
  %v8160 = vsel %vm3513, %v7966, 0
  %v8163 = vsel %vm3513, %v7967, 0
  %v8166 = vsel %vm3706, %v7972, 0
  %8168 = vmatprep.subr.mxu0 0.0
  %8169 = vmatpush1.msra.mxu0 %v7968
  %8170 = vmatprep.subr.mxu0 0.0
  %8171 = vmatpush1.msra.mxu0 %v7969
  %8172 = vmatprep.subr.mxu0 0.0
  %8173 = vmatpush1.msra.mxu0 %v7970
  %8174 = vmatprep.subr.mxu0 0.0
  %8175 = vmatpush1.msra.mxu0 %v7971
  %8176 = vmatprep.subr.mxu0 0.0
  %8177 = vmatpush1.msra.mxu0 %v8166
  %8178 = vmatprep.subr.mxu0 0.0
  %8179 = vmatpush1.msra.mxu0 0.0
  %8180 = vmatprep.subr.mxu0 0.0
  %8181 = vmatpush1.msra.mxu0 0.0
  %8182 = vmatprep.subr.mxu0 0.0
  %8183 = vmatpush1.msra.mxu0 0.0
  %8184 = vmatprep.subr.mxu0 0.0
  %8185 = vmatpush1.msra.mxu0 0.0
  %8186 = vmatprep.subr.mxu0 0.0
  %8187 = vmatpush1.msra.mxu0 0.0
  %8188 = vmatprep.subr.mxu0 0.0
  %8189 = vmatpush1.msra.mxu0 0.0
  %8190 = vmatprep.subr.mxu0 0.0
  %8191 = vmatpush1.msra.mxu0 0.0
  %8192 = vmatprep.subr.mxu0 0.0
  %8193 = vmatpush1.msra.mxu0 0.0
  %8194 = vmatprep.subr.mxu0 0.0
  %8195 = vmatpush1.msra.mxu0 0.0
  %8196 = vmatprep.subr.mxu0 0.0
  %8197 = vmatpush1.msra.mxu0 0.0
  %8198 = vmatprep.subr.mxu0 0.0
  %8199 = vmatpush1.msra.mxu0 0.0
  %8200 = vmatprep.subr.mxu0 0.0
  %8201 = vmatpush1.msra.mxu0 0.0
  %8202 = vmatprep.subr.mxu0 0.0
  %8203 = vmatpush1.msra.mxu0 0.0
  %8204 = vmatprep.subr.mxu0 0.0
  %8205 = vmatpush1.msra.mxu0 0.0
  %8206 = vmatprep.subr.mxu0 0.0
  %8207 = vmatpush1.msra.mxu0 0.0
  %8208 = vmatprep.subr.mxu0 0.0
  %8209 = vmatpush1.msra.mxu0 0.0
  %8210 = vmatprep.subr.mxu0 0.0
  %8211 = vmatpush1.msra.mxu0 0.0
  %8212 = vmatprep.subr.mxu0 0.0
  %8213 = vmatpush1.msra.mxu0 0.0
  %8214 = vmatprep.subr.mxu0 0.0
  %8215 = vmatpush1.msra.mxu0 0.0
  %8216 = vmatprep.subr.mxu0 0.0
  %8217 = vmatpush1.msra.mxu0 0.0
  %8218 = vmatprep.subr.mxu0 0.0
  %8219 = vmatpush1.msra.mxu0 0.0
  %8220 = vmatprep.subr.mxu0 0.0
  %8221 = vmatpush1.msra.mxu0 0.0
  %8222 = vmatprep.subr.mxu0 0.0
  %8223 = vmatpush1.msra.mxu0 0.0
  %8224 = vmatprep.subr.mxu0 0.0
  %8225 = vmatpush1.msra.mxu0 0.0
  %8226 = vmatprep.subr.mxu0 0.0
  %8227 = vmatpush1.msra.mxu0 0.0
  %8228 = vmatprep.subr.mxu0 0.0
  %8229 = vmatpush1.msra.mxu0 0.0
  %8230 = vmatprep.subr.mxu0 0.0
  %8231 = vmatpush1.msra.mxu0 0.0
  %8232 = vmatprep.mubr.f32.mxu0 0.0
  %8233 = vmatmul.mubr.f32.gmra.mrb[0].mxu0 %v7974
  %v8234 = vpop.f32.mrb[0].mxu0
  %v8235 = vadd.f32 0.0, %v8234
  %v8236 = vpop.f32.mrb[0].mxu0
  %8237 = vmatprep.mubr.f32.mxu0 0.0
  %8238 = vmatmul.mubr.f32.gmra.mrb[0].mxu0 %v7977
  %v8239 = vpop.f32.mrb[0].mxu0
  %v8240 = vadd.f32 0.0, %v8239
  %v8241 = vpop.f32.mrb[0].mxu0
  %8242 = vmatprep.mubr.f32.mxu0 0.0
  %8243 = vmatmul.mubr.f32.gmra.mrb[0].mxu0 %v7980
  %v8244 = vpop.f32.mrb[0].mxu0
  %v8245 = vadd.f32 0.0, %v8244
  %v8246 = vpop.f32.mrb[0].mxu0
  %8247 = vmatprep.mubr.f32.mxu0 0.0
  %8248 = vmatmul.mubr.f32.gmra.mrb[0].mxu0 %v7983
  %v8249 = vpop.f32.mrb[0].mxu0
  %v8250 = vadd.f32 0.0, %v8249
  %v8251 = vpop.f32.mrb[0].mxu0
  %8252 = vmatprep.mubr.f32.mxu0 0.0
  %8253 = vmatmul.mubr.f32.gmra.mrb[0].mxu0 %v7986
  %v8254 = vpop.f32.mrb[0].mxu0
  %v8255 = vadd.f32 0.0, %v8254
  %v8256 = vpop.f32.mrb[0].mxu0
  %8257 = vmatprep.mubr.f32.mxu0 0.0
  %8258 = vmatmul.mubr.f32.gmra.mrb[0].mxu0 %v7989
  %v8259 = vpop.f32.mrb[0].mxu0
  %v8260 = vadd.f32 0.0, %v8259
  %v8261 = vpop.f32.mrb[0].mxu0
  %8262 = vmatprep.mubr.f32.mxu0 0.0
  %8263 = vmatmul.mubr.f32.gmra.mrb[0].mxu0 %v7992
  %v8264 = vpop.f32.mrb[0].mxu0
  %v8265 = vadd.f32 0.0, %v8264
  %v8266 = vpop.f32.mrb[0].mxu0
  %8267 = vmatprep.mubr.f32.mxu0 0.0
  %8268 = vmatmul.mubr.f32.gmra.mrb[0].mxu0 %v7995
  %v8269 = vpop.f32.mrb[0].mxu0
  %v8270 = vadd.f32 0.0, %v8269
  %v8271 = vpop.f32.mrb[0].mxu0
  %8272 = vmatprep.mubr.f32.mxu0 0.0
  %8273 = vmatmul.mubr.f32.gmra.mrb[0].mxu0 %v7998
  %v8274 = vpop.f32.mrb[0].mxu0
  %v8275 = vadd.f32 0.0, %v8274
  %v8276 = vpop.f32.mrb[0].mxu0
  %8277 = vmatprep.mubr.f32.mxu0 0.0
  %8278 = vmatmul.mubr.f32.gmra.mrb[0].mxu0 %v8001
  %v8279 = vpop.f32.mrb[0].mxu0
  %v8280 = vadd.f32 0.0, %v8279
  %v8281 = vpop.f32.mrb[0].mxu0
  %8282 = vmatprep.mubr.f32.mxu0 0.0
  %8283 = vmatmul.mubr.f32.gmra.mrb[0].mxu0 %v8004
  %v8284 = vpop.f32.mrb[0].mxu0
  %v8285 = vadd.f32 0.0, %v8284
  %v8286 = vpop.f32.mrb[0].mxu0
  %8287 = vmatprep.mubr.f32.mxu0 0.0
  %8288 = vmatmul.mubr.f32.gmra.mrb[0].mxu0 %v8007
  %v8289 = vpop.f32.mrb[0].mxu0
  %v8290 = vadd.f32 0.0, %v8289
  %v8291 = vpop.f32.mrb[0].mxu0
  %8292 = vmatprep.mubr.f32.mxu0 0.0
  %8293 = vmatmul.mubr.f32.gmra.mrb[0].mxu0 %v8010
  %v8294 = vpop.f32.mrb[0].mxu0
  %v8295 = vadd.f32 0.0, %v8294
  %v8296 = vpop.f32.mrb[0].mxu0
  %8297 = vmatprep.mubr.f32.mxu0 0.0
  %8298 = vmatmul.mubr.f32.gmra.mrb[0].mxu0 %v8013
  %v8299 = vpop.f32.mrb[0].mxu0
  %v8300 = vadd.f32 0.0, %v8299
  %v8301 = vpop.f32.mrb[0].mxu0
  %8302 = vmatprep.mubr.f32.mxu0 0.0
  %8303 = vmatmul.mubr.f32.gmra.mrb[0].mxu0 %v8016
  %v8304 = vpop.f32.mrb[0].mxu0
  %v8305 = vadd.f32 0.0, %v8304
  %v8306 = vpop.f32.mrb[0].mxu0
  %8307 = vmatprep.mubr.f32.mxu0 0.0
  %8308 = vmatmul.mubr.f32.gmra.mrb[0].mxu0 %v8019
  %v8309 = vpop.f32.mrb[0].mxu0
  %v8310 = vadd.f32 0.0, %v8309
  %v8311 = vpop.f32.mrb[0].mxu0
  %8312 = vmatprep.mubr.f32.mxu0 0.0
  %8313 = vmatmul.mubr.f32.gmra.mrb[0].mxu0 %v8022
  %v8314 = vpop.f32.mrb[0].mxu0
  %v8315 = vadd.f32 0.0, %v8314
  %v8316 = vpop.f32.mrb[0].mxu0
  %8317 = vmatprep.mubr.f32.mxu0 0.0
  %8318 = vmatmul.mubr.f32.gmra.mrb[0].mxu0 %v8025
  %v8319 = vpop.f32.mrb[0].mxu0
  %v8320 = vadd.f32 0.0, %v8319
  %v8321 = vpop.f32.mrb[0].mxu0
  %8322 = vmatprep.mubr.f32.mxu0 0.0
  %8323 = vmatmul.mubr.f32.gmra.mrb[0].mxu0 %v8028
  %v8324 = vpop.f32.mrb[0].mxu0
  %v8325 = vadd.f32 0.0, %v8324
  %v8326 = vpop.f32.mrb[0].mxu0
  %8327 = vmatprep.mubr.f32.mxu0 0.0
  %8328 = vmatmul.mubr.f32.gmra.mrb[0].mxu0 %v8031
  %v8329 = vpop.f32.mrb[0].mxu0
  %v8330 = vadd.f32 0.0, %v8329
  %v8331 = vpop.f32.mrb[0].mxu0
  %8332 = vmatprep.mubr.f32.mxu0 0.0
  %8333 = vmatmul.mubr.f32.gmra.mrb[0].mxu0 %v8034
  %v8334 = vpop.f32.mrb[0].mxu0
  %v8335 = vadd.f32 0.0, %v8334
  %v8336 = vpop.f32.mrb[0].mxu0
  %8337 = vmatprep.mubr.f32.mxu0 0.0
  %8338 = vmatmul.mubr.f32.gmra.mrb[0].mxu0 %v8037
  %v8339 = vpop.f32.mrb[0].mxu0
  %v8340 = vadd.f32 0.0, %v8339
  %v8341 = vpop.f32.mrb[0].mxu0
  %8342 = vmatprep.mubr.f32.mxu0 0.0
  %8343 = vmatmul.mubr.f32.gmra.mrb[0].mxu0 %v8040
  %v8344 = vpop.f32.mrb[0].mxu0
  %v8345 = vadd.f32 0.0, %v8344
  %v8346 = vpop.f32.mrb[0].mxu0
  %8347 = vmatprep.mubr.f32.mxu0 0.0
  %8348 = vmatmul.mubr.f32.gmra.mrb[0].mxu0 %v8043
  %v8349 = vpop.f32.mrb[0].mxu0
  %v8350 = vadd.f32 0.0, %v8349
  %v8351 = vpop.f32.mrb[0].mxu0
  %8352 = vmatprep.mubr.f32.mxu0 0.0
  %8353 = vmatmul.mubr.f32.gmra.mrb[0].mxu0 %v8046
  %v8354 = vpop.f32.mrb[0].mxu0
  %v8355 = vadd.f32 0.0, %v8354
  %v8356 = vpop.f32.mrb[0].mxu0
  %8357 = vmatprep.mubr.f32.mxu0 0.0
  %8358 = vmatmul.mubr.f32.gmra.mrb[0].mxu0 %v8049
  %v8359 = vpop.f32.mrb[0].mxu0
  %v8360 = vadd.f32 0.0, %v8359
  %v8361 = vpop.f32.mrb[0].mxu0
  %8362 = vmatprep.mubr.f32.mxu0 0.0
  %8363 = vmatmul.mubr.f32.gmra.mrb[0].mxu0 %v8052
  %v8364 = vpop.f32.mrb[0].mxu0
  %v8365 = vadd.f32 0.0, %v8364
  %v8366 = vpop.f32.mrb[0].mxu0
  %8367 = vmatprep.mubr.f32.mxu0 0.0
  %8368 = vmatmul.mubr.f32.gmra.mrb[0].mxu0 %v8055
  %v8369 = vpop.f32.mrb[0].mxu0
  %v8370 = vadd.f32 0.0, %v8369
  %v8371 = vpop.f32.mrb[0].mxu0
  %8372 = vmatprep.mubr.f32.mxu0 0.0
  %8373 = vmatmul.mubr.f32.gmra.mrb[0].mxu0 %v8058
  %v8374 = vpop.f32.mrb[0].mxu0
  %v8375 = vadd.f32 0.0, %v8374
  %v8376 = vpop.f32.mrb[0].mxu0
  %8377 = vmatprep.mubr.f32.mxu0 0.0
  %8378 = vmatmul.mubr.f32.gmra.mrb[0].mxu0 %v8061
  %v8379 = vpop.f32.mrb[0].mxu0
  %v8380 = vadd.f32 0.0, %v8379
  %v8381 = vpop.f32.mrb[0].mxu0
  %8382 = vmatprep.mubr.f32.mxu0 0.0
  %8383 = vmatmul.mubr.f32.gmra.mrb[0].mxu0 %v8064
  %v8384 = vpop.f32.mrb[0].mxu0
  %v8385 = vadd.f32 0.0, %v8384
  %v8386 = vpop.f32.mrb[0].mxu0
  %8387 = vmatprep.mubr.f32.mxu0 0.0
  %8388 = vmatmul.mubr.f32.gmra.mrb[0].mxu0 %v8067
  %v8389 = vpop.f32.mrb[0].mxu0
  %v8390 = vadd.f32 0.0, %v8389
  %v8391 = vpop.f32.mrb[0].mxu0
  %8392 = vmatprep.mubr.f32.mxu0 0.0
  %8393 = vmatmul.mubr.f32.gmra.mrb[0].mxu0 %v8070
  %v8394 = vpop.f32.mrb[0].mxu0
  %v8395 = vadd.f32 0.0, %v8394
  %v8396 = vpop.f32.mrb[0].mxu0
  %8397 = vmatprep.mubr.f32.mxu0 0.0
  %8398 = vmatmul.mubr.f32.gmra.mrb[0].mxu0 %v8073
  %v8399 = vpop.f32.mrb[0].mxu0
  %v8400 = vadd.f32 0.0, %v8399
  %v8401 = vpop.f32.mrb[0].mxu0
  %8402 = vmatprep.mubr.f32.mxu0 0.0
  %8403 = vmatmul.mubr.f32.gmra.mrb[0].mxu0 %v8076
  %v8404 = vpop.f32.mrb[0].mxu0
  %v8405 = vadd.f32 0.0, %v8404
  %v8406 = vpop.f32.mrb[0].mxu0
  %8407 = vmatprep.mubr.f32.mxu0 0.0
  %8408 = vmatmul.mubr.f32.gmra.mrb[0].mxu0 %v8079
  %v8409 = vpop.f32.mrb[0].mxu0
  %v8410 = vadd.f32 0.0, %v8409
  %v8411 = vpop.f32.mrb[0].mxu0
  %8412 = vmatprep.mubr.f32.mxu0 0.0
  %8413 = vmatmul.mubr.f32.gmra.mrb[0].mxu0 %v8082
  %v8414 = vpop.f32.mrb[0].mxu0
  %v8415 = vadd.f32 0.0, %v8414
  %v8416 = vpop.f32.mrb[0].mxu0
  %8417 = vmatprep.mubr.f32.mxu0 0.0
  %8418 = vmatmul.mubr.f32.gmra.mrb[0].mxu0 %v8085
  %v8419 = vpop.f32.mrb[0].mxu0
  %v8420 = vadd.f32 0.0, %v8419
  %v8421 = vpop.f32.mrb[0].mxu0
  %8422 = vmatprep.mubr.f32.mxu0 0.0
  %8423 = vmatmul.mubr.f32.gmra.mrb[0].mxu0 %v8088
  %v8424 = vpop.f32.mrb[0].mxu0
  %v8425 = vadd.f32 0.0, %v8424
  %v8426 = vpop.f32.mrb[0].mxu0
  %8427 = vmatprep.mubr.f32.mxu0 0.0
  %8428 = vmatmul.mubr.f32.gmra.mrb[0].mxu0 %v8091
  %v8429 = vpop.f32.mrb[0].mxu0
  %v8430 = vadd.f32 0.0, %v8429
  %v8431 = vpop.f32.mrb[0].mxu0
  %8432 = vmatprep.mubr.f32.mxu0 0.0
  %8433 = vmatmul.mubr.f32.gmra.mrb[0].mxu0 %v8094
  %v8434 = vpop.f32.mrb[0].mxu0
  %v8435 = vadd.f32 0.0, %v8434
  %v8436 = vpop.f32.mrb[0].mxu0
  %8437 = vmatprep.mubr.f32.mxu0 0.0
  %8438 = vmatmul.mubr.f32.gmra.mrb[0].mxu0 %v8097
  %v8439 = vpop.f32.mrb[0].mxu0
  %v8440 = vadd.f32 0.0, %v8439
  %v8441 = vpop.f32.mrb[0].mxu0
  %8442 = vmatprep.mubr.f32.mxu0 0.0
  %8443 = vmatmul.mubr.f32.gmra.mrb[0].mxu0 %v8100
  %v8444 = vpop.f32.mrb[0].mxu0
  %v8445 = vadd.f32 0.0, %v8444
  %v8446 = vpop.f32.mrb[0].mxu0
  %8447 = vmatprep.mubr.f32.mxu0 0.0
  %8448 = vmatmul.mubr.f32.gmra.mrb[0].mxu0 %v8103
  %v8449 = vpop.f32.mrb[0].mxu0
  %v8450 = vadd.f32 0.0, %v8449
  %v8451 = vpop.f32.mrb[0].mxu0
  %8452 = vmatprep.mubr.f32.mxu0 0.0
  %8453 = vmatmul.mubr.f32.gmra.mrb[0].mxu0 %v8106
  %v8454 = vpop.f32.mrb[0].mxu0
  %v8455 = vadd.f32 0.0, %v8454
  %v8456 = vpop.f32.mrb[0].mxu0
  %8457 = vmatprep.mubr.f32.mxu0 0.0
  %8458 = vmatmul.mubr.f32.gmra.mrb[0].mxu0 %v8109
  %v8459 = vpop.f32.mrb[0].mxu0
  %v8460 = vadd.f32 0.0, %v8459
  %v8461 = vpop.f32.mrb[0].mxu0
  %8462 = vmatprep.mubr.f32.mxu0 0.0
  %8463 = vmatmul.mubr.f32.gmra.mrb[0].mxu0 %v8112
  %v8464 = vpop.f32.mrb[0].mxu0
  %v8465 = vadd.f32 0.0, %v8464
  %v8466 = vpop.f32.mrb[0].mxu0
  %8467 = vmatprep.mubr.f32.mxu0 0.0
  %8468 = vmatmul.mubr.f32.gmra.mrb[0].mxu0 %v8115
  %v8469 = vpop.f32.mrb[0].mxu0
  %v8470 = vadd.f32 0.0, %v8469
  %v8471 = vpop.f32.mrb[0].mxu0
  %8472 = vmatprep.mubr.f32.mxu0 0.0
  %8473 = vmatmul.mubr.f32.gmra.mrb[0].mxu0 %v8118
  %v8474 = vpop.f32.mrb[0].mxu0
  %v8475 = vadd.f32 0.0, %v8474
  %v8476 = vpop.f32.mrb[0].mxu0
  %8477 = vmatprep.mubr.f32.mxu0 0.0
  %8478 = vmatmul.mubr.f32.gmra.mrb[0].mxu0 %v8121
  %v8479 = vpop.f32.mrb[0].mxu0
  %v8480 = vadd.f32 0.0, %v8479
  %v8481 = vpop.f32.mrb[0].mxu0
  %8482 = vmatprep.mubr.f32.mxu0 0.0
  %8483 = vmatmul.mubr.f32.gmra.mrb[0].mxu0 %v8124
  %v8484 = vpop.f32.mrb[0].mxu0
  %v8485 = vadd.f32 0.0, %v8484
  %v8486 = vpop.f32.mrb[0].mxu0
  %8487 = vmatprep.mubr.f32.mxu0 0.0
  %8488 = vmatmul.mubr.f32.gmra.mrb[0].mxu0 %v8127
  %v8489 = vpop.f32.mrb[0].mxu0
  %v8490 = vadd.f32 0.0, %v8489
  %v8491 = vpop.f32.mrb[0].mxu0
  %8492 = vmatprep.mubr.f32.mxu0 0.0
  %8493 = vmatmul.mubr.f32.gmra.mrb[0].mxu0 %v8130
  %v8494 = vpop.f32.mrb[0].mxu0
  %v8495 = vadd.f32 0.0, %v8494
  %v8496 = vpop.f32.mrb[0].mxu0
  %8497 = vmatprep.mubr.f32.mxu0 0.0
  %8498 = vmatmul.mubr.f32.gmra.mrb[0].mxu0 %v8133
  %v8499 = vpop.f32.mrb[0].mxu0
  %v8500 = vadd.f32 0.0, %v8499
  %v8501 = vpop.f32.mrb[0].mxu0
  %8502 = vmatprep.mubr.f32.mxu0 0.0
  %8503 = vmatmul.mubr.f32.gmra.mrb[0].mxu0 %v8136
  %v8504 = vpop.f32.mrb[0].mxu0
  %v8505 = vadd.f32 0.0, %v8504
  %v8506 = vpop.f32.mrb[0].mxu0
  %8507 = vmatprep.mubr.f32.mxu0 0.0
  %8508 = vmatmul.mubr.f32.gmra.mrb[0].mxu0 %v8139
  %v8509 = vpop.f32.mrb[0].mxu0
  %v8510 = vadd.f32 0.0, %v8509
  %v8511 = vpop.f32.mrb[0].mxu0
  %8512 = vmatprep.mubr.f32.mxu0 0.0
  %8513 = vmatmul.mubr.f32.gmra.mrb[0].mxu0 %v8142
  %v8514 = vpop.f32.mrb[0].mxu0
  %v8515 = vadd.f32 0.0, %v8514
  %v8516 = vpop.f32.mrb[0].mxu0
  %8517 = vmatprep.mubr.f32.mxu0 0.0
  %8518 = vmatmul.mubr.f32.gmra.mrb[0].mxu0 %v8145
  %v8519 = vpop.f32.mrb[0].mxu0
  %v8520 = vadd.f32 0.0, %v8519
  %v8521 = vpop.f32.mrb[0].mxu0
  %8522 = vmatprep.mubr.f32.mxu0 0.0
  %8523 = vmatmul.mubr.f32.gmra.mrb[0].mxu0 %v8148
  %v8524 = vpop.f32.mrb[0].mxu0
  %v8525 = vadd.f32 0.0, %v8524
  %v8526 = vpop.f32.mrb[0].mxu0
  %8527 = vmatprep.mubr.f32.mxu0 0.0
  %8528 = vmatmul.mubr.f32.gmra.mrb[0].mxu0 %v8151
  %v8529 = vpop.f32.mrb[0].mxu0
  %v8530 = vadd.f32 0.0, %v8529
  %v8531 = vpop.f32.mrb[0].mxu0
  %8532 = vmatprep.mubr.f32.mxu0 0.0
  %8533 = vmatmul.mubr.f32.gmra.mrb[0].mxu0 %v8154
  %v8534 = vpop.f32.mrb[0].mxu0
  %v8535 = vadd.f32 0.0, %v8534
  %v8536 = vpop.f32.mrb[0].mxu0
  %8537 = vmatprep.mubr.f32.mxu0 0.0
  %8538 = vmatmul.mubr.f32.gmra.mrb[0].mxu0 %v8157
  %v8539 = vpop.f32.mrb[0].mxu0
  %v8540 = vadd.f32 0.0, %v8539
  %v8541 = vpop.f32.mrb[0].mxu0
  %8542 = vmatprep.mubr.f32.mxu0 0.0
  %8543 = vmatmul.mubr.f32.gmra.mrb[0].mxu0 %v8160
  %v8544 = vpop.f32.mrb[0].mxu0
  %v8545 = vadd.f32 0.0, %v8544
  %v8546 = vpop.f32.mrb[0].mxu0
  %8547 = vmatprep.mubr.f32.mxu0 0.0
  %8548 = vmatmul.mubr.f32.gmra.mrb[0].mxu0 %v8163
  %v8549 = vpop.f32.mrb[0].mxu0
  %v8550 = vadd.f32 0.0, %v8549
  %v8551 = vpop.f32.mrb[0].mxu0
  %8552 = vdwg.mxu0
  %v8553 = vld [vmem:[%s0] sm:$0xff]
  %v8554 = vld [vmem:[%s0 + $0x8] sm:$0xff]
  %v8555 = vld [vmem:[%s0 + $0x10] sm:$0xff]
  %v8556 = vld [vmem:[%s0 + $0x18] sm:$0xff]
  %v8557 = vld [vmem:[%s0 + $0x20] sm:$0xff]
  %v8558 = vld [vmem:[%s0 + $0x28] sm:$0xff]
  %v8559 = vld [vmem:[%s0 + $0x30] sm:$0xff]
  %v8560 = vld [vmem:[%s0 + $0x38] sm:$0xff]
  %v8561 = vld [vmem:[%s0 + $0x40] sm:$0xff]
  %v8562 = vld [vmem:[%s0 + $0x48] sm:$0xff]
  %v8563 = vld [vmem:[%s0 + $0x50] sm:$0xff]
  %v8564 = vld [vmem:[%s0 + $0x58] sm:$0xff]
  %v8565 = vld [vmem:[%s0 + $0x60] sm:$0xff]
  %v8566 = vld [vmem:[%s0 + $0x68] sm:$0xff]
  %v8567 = vld [vmem:[%s0 + $0x70] sm:$0xff]
  %v8568 = vld [vmem:[%s0 + $0x78] sm:$0xff]
  %v8569 = vld [vmem:[%s0 + $0x80] sm:$0xff]
  %v8570 = vld [vmem:[%s0 + $0x88] sm:$0xff]
  %v8571 = vld [vmem:[%s0 + $0x90] sm:$0xff]
  %v8572 = vld [vmem:[%s0 + $0x98] sm:$0xff]
  %v8573 = vld [vmem:[%s0 + $0xa0] sm:$0xff]
  %v8574 = vld [vmem:[%s0 + $0xa8] sm:$0xff]
  %v8575 = vld [vmem:[%s0 + $0xb0] sm:$0xff]
  %v8576 = vld [vmem:[%s0 + $0xb8] sm:$0xff]
  %v8577 = vld [vmem:[%s0 + $0xc0] sm:$0xff]
  %v8578 = vld [vmem:[%s0 + $0xc8] sm:$0xff]
  %v8579 = vld [vmem:[%s0 + $0xd0] sm:$0xff]
  %v8580 = vld [vmem:[%s0 + $0xd8] sm:$0xff]
  %v8581 = vld [vmem:[%s0 + $0xe0] sm:$0xff]
  %v8582 = vld [vmem:[%s0 + $0xe8] sm:$0xff]
  %v8583 = vld [vmem:[%s0 + $0xf0] sm:$0xff]
  %v8584 = vld [vmem:[%s0 + $0xf8] sm:$0xff]
  %v8585 = vld [vmem:[%s0 + $0x100] sm:$0xff]
  %v8586 = vld [vmem:[%s0 + $0x108] sm:$0xff]
  %v8587 = vld [vmem:[%s0 + $0x110] sm:$0xff]
  %v8588 = vld [vmem:[%s0 + $0x118] sm:$0xff]
  %v8589 = vld [vmem:[%s0 + $0x120] sm:$0xff]
  %v8590 = vld [vmem:[%s0 + $0x128] sm:$0xff]
  %v8591 = vld [vmem:[%s0 + $0x130] sm:$0xff]
  %v8592 = vld [vmem:[%s0 + $0x138] sm:$0xff]
  %v8593 = vld [vmem:[%s0 + $0x140] sm:$0xff]
  %v8594 = vld [vmem:[%s0 + $0x148] sm:$0xff]
  %v8595 = vld [vmem:[%s0 + $0x150] sm:$0xff]
  %v8596 = vld [vmem:[%s0 + $0x158] sm:$0xff]
  %v8597 = vld [vmem:[%s0 + $0x160] sm:$0xff]
  %v8598 = vld [vmem:[%s0 + $0x168] sm:$0xff]
  %v8599 = vld [vmem:[%s0 + $0x170] sm:$0xff]
  %v8600 = vld [vmem:[%s0 + $0x178] sm:$0xff]
  %v8601 = vld [vmem:[%s0 + $0x180] sm:$0xff]
  %v8602 = vld [vmem:[%s0 + $0x188] sm:$0xff]
  %v8603 = vld [vmem:[%s0 + $0x190] sm:$0xff]
  %v8604 = vld [vmem:[%s0 + $0x198] sm:$0xff]
  %v8605 = vld [vmem:[%s0 + $0x1a0] sm:$0xff]
  %v8606 = vld [vmem:[%s0 + $0x1a8] sm:$0xff]
  %v8607 = vld [vmem:[%s0 + $0x1b0] sm:$0xff]
  %v8608 = vld [vmem:[%s0 + $0x1b8] sm:$0xff]
  %v8609 = vld [vmem:[%s0 + $0x1c0] sm:$0xff]
  %v8610 = vld [vmem:[%s0 + $0x1c8] sm:$0xff]
  %v8611 = vld [vmem:[%s0 + $0x1d0] sm:$0xff]
  %v8612 = vld [vmem:[%s0 + $0x1d8] sm:$0xff]
  %v8613 = vld [vmem:[%s0 + $0x1e0] sm:$0xff]
  %v8614 = vld [vmem:[%s0 + $0x1e8] sm:$0xff]
  %v8615 = vld [vmem:[%s0 + $0x1f0] sm:$0xff]
  %v8616 = vld [vmem:[%s0 + $0x1f8] sm:$0xff]
  %v8617 = vld [vmem:[%s5] sm:$0x1]
  %v8618 = vld [vmem:[%s6] sm:$0x1]
  %v8619 = vsel %vm26, %v8235, 0.0
  %v8620 = vsel %vm26, %v8240, 0.0
  %v8621 = vadd.f32 %v8619, %v8620
  %v8622 = vsel %vm26, %v8245, 0.0
  %v8623 = vadd.f32 %v8621, %v8622
  %v8624 = vsel %vm26, %v8250, 0.0
  %v8625 = vadd.f32 %v8623, %v8624
  %v8626 = vsel %vm26, %v8255, 0.0
  %v8627 = vadd.f32 %v8625, %v8626
  %v8628 = vsel %vm26, %v8260, 0.0
  %v8629 = vadd.f32 %v8627, %v8628
  %v8630 = vsel %vm26, %v8265, 0.0
  %v8631 = vadd.f32 %v8629, %v8630
  %v8632 = vsel %vm26, %v8270, 0.0
  %v8633 = vadd.f32 %v8631, %v8632
  %v8634 = vsel %vm26, %v8275, 0.0
  %v8635 = vadd.f32 %v8633, %v8634
  %v8636 = vsel %vm26, %v8280, 0.0
  %v8637 = vadd.f32 %v8635, %v8636
  %v8638 = vsel %vm26, %v8285, 0.0
  %v8639 = vadd.f32 %v8637, %v8638
  %v8640 = vsel %vm26, %v8290, 0.0
  %v8641 = vadd.f32 %v8639, %v8640
  %v8642 = vsel %vm26, %v8295, 0.0
  %v8643 = vadd.f32 %v8641, %v8642
  %v8644 = vsel %vm26, %v8300, 0.0
  %v8645 = vadd.f32 %v8643, %v8644
  %v8646 = vsel %vm26, %v8305, 0.0
  %v8647 = vadd.f32 %v8645, %v8646
  %v8648 = vsel %vm26, %v8310, 0.0
  %v8649 = vadd.f32 %v8647, %v8648
  %v8650 = vsel %vm26, %v8315, 0.0
  %v8651 = vadd.f32 %v8649, %v8650
  %v8652 = vsel %vm26, %v8320, 0.0
  %v8653 = vadd.f32 %v8651, %v8652
  %v8654 = vsel %vm26, %v8325, 0.0
  %v8655 = vadd.f32 %v8653, %v8654
  %v8656 = vsel %vm26, %v8330, 0.0
  %v8657 = vadd.f32 %v8655, %v8656
  %v8658 = vsel %vm26, %v8335, 0.0
  %v8659 = vadd.f32 %v8657, %v8658
  %v8660 = vsel %vm26, %v8340, 0.0
  %v8661 = vadd.f32 %v8659, %v8660
  %v8662 = vsel %vm26, %v8345, 0.0
  %v8663 = vadd.f32 %v8661, %v8662
  %v8664 = vsel %vm26, %v8350, 0.0
  %v8665 = vadd.f32 %v8663, %v8664
  %v8666 = vsel %vm26, %v8355, 0.0
  %v8667 = vadd.f32 %v8665, %v8666
  %v8668 = vsel %vm26, %v8360, 0.0
  %v8669 = vadd.f32 %v8667, %v8668
  %v8670 = vsel %vm26, %v8365, 0.0
  %v8671 = vadd.f32 %v8669, %v8670
  %v8672 = vsel %vm26, %v8370, 0.0
  %v8673 = vadd.f32 %v8671, %v8672
  %v8674 = vsel %vm26, %v8375, 0.0
  %v8675 = vadd.f32 %v8673, %v8674
  %v8676 = vsel %vm26, %v8380, 0.0
  %v8677 = vadd.f32 %v8675, %v8676
  %v8678 = vsel %vm26, %v8385, 0.0
  %v8679 = vadd.f32 %v8677, %v8678
  %v8680 = vsel %vm26, %v8390, 0.0
  %v8681 = vadd.f32 %v8679, %v8680
  %v8682 = vsel %vm26, %v8395, 0.0
  %v8683 = vadd.f32 %v8681, %v8682
  %v8684 = vsel %vm26, %v8400, 0.0
  %v8685 = vadd.f32 %v8683, %v8684
  %v8686 = vsel %vm26, %v8405, 0.0
  %v8687 = vadd.f32 %v8685, %v8686
  %v8688 = vsel %vm26, %v8410, 0.0
  %v8689 = vadd.f32 %v8687, %v8688
  %v8690 = vsel %vm26, %v8415, 0.0
  %v8691 = vadd.f32 %v8689, %v8690
  %v8692 = vsel %vm26, %v8420, 0.0
  %v8693 = vadd.f32 %v8691, %v8692
  %v8694 = vsel %vm26, %v8425, 0.0
  %v8695 = vadd.f32 %v8693, %v8694
  %v8696 = vsel %vm26, %v8430, 0.0
  %v8697 = vadd.f32 %v8695, %v8696
  %v8698 = vsel %vm26, %v8435, 0.0
  %v8699 = vadd.f32 %v8697, %v8698
  %v8700 = vsel %vm26, %v8440, 0.0
  %v8701 = vadd.f32 %v8699, %v8700
  %v8702 = vsel %vm26, %v8445, 0.0
  %v8703 = vadd.f32 %v8701, %v8702
  %v8704 = vsel %vm26, %v8450, 0.0
  %v8705 = vadd.f32 %v8703, %v8704
  %v8706 = vsel %vm26, %v8455, 0.0
  %v8707 = vadd.f32 %v8705, %v8706
  %v8708 = vsel %vm26, %v8460, 0.0
  %v8709 = vadd.f32 %v8707, %v8708
  %v8710 = vsel %vm26, %v8465, 0.0
  %v8711 = vadd.f32 %v8709, %v8710
  %v8712 = vsel %vm26, %v8470, 0.0
  %v8713 = vadd.f32 %v8711, %v8712
  %v8714 = vsel %vm26, %v8475, 0.0
  %v8715 = vadd.f32 %v8713, %v8714
  %v8716 = vsel %vm26, %v8480, 0.0
  %v8717 = vadd.f32 %v8715, %v8716
  %v8718 = vsel %vm26, %v8485, 0.0
  %v8719 = vadd.f32 %v8717, %v8718
  %v8720 = vsel %vm26, %v8490, 0.0
  %v8721 = vadd.f32 %v8719, %v8720
  %v8722 = vsel %vm26, %v8495, 0.0
  %v8723 = vadd.f32 %v8721, %v8722
  %v8724 = vsel %vm26, %v8500, 0.0
  %v8725 = vadd.f32 %v8723, %v8724
  %v8726 = vsel %vm26, %v8505, 0.0
  %v8727 = vadd.f32 %v8725, %v8726
  %v8728 = vsel %vm26, %v8510, 0.0
  %v8729 = vadd.f32 %v8727, %v8728
  %v8730 = vsel %vm26, %v8515, 0.0
  %v8731 = vadd.f32 %v8729, %v8730
  %v8732 = vsel %vm26, %v8520, 0.0
  %v8733 = vadd.f32 %v8731, %v8732
  %v8734 = vsel %vm26, %v8525, 0.0
  %v8735 = vadd.f32 %v8733, %v8734
  %v8736 = vsel %vm26, %v8530, 0.0
  %v8737 = vadd.f32 %v8735, %v8736
  %v8738 = vsel %vm26, %v8535, 0.0
  %v8739 = vadd.f32 %v8737, %v8738
  %v8740 = vsel %vm26, %v8540, 0.0
  %v8741 = vadd.f32 %v8739, %v8740
  %v8742 = vsel %vm26, %v8545, 0.0
  %v8743 = vadd.f32 %v8741, %v8742
  %v8744 = vsel %vm26, %v8550, 0.0
  %v8745 = vadd.f32 %v8743, %v8744
  %v8746 = vrot.slane %v8745, 4
  %v8747 = vadd.f32 %v8745, %v8746
  %v8748 = vrot.slane %v8747, 2
  %v8749 = vadd.f32 %v8747, %v8748
  %v8750 = vrot.slane %v8749, 1
  %v8751 = vadd.f32 %v8749, %v8750
  %v8752 = vmul.f32 %v8235, %v8235
  %v8753 = vmul.f32 %v8240, %v8240
  %v8754 = vmul.f32 %v8245, %v8245
  %v8755 = vmul.f32 %v8250, %v8250
  %v8756 = vmul.f32 %v8255, %v8255
  %v8757 = vmul.f32 %v8260, %v8260
  %v8758 = vmul.f32 %v8265, %v8265
  %v8759 = vmul.f32 %v8270, %v8270
  %v8760 = vmul.f32 %v8275, %v8275
  %v8761 = vmul.f32 %v8280, %v8280
  %v8762 = vmul.f32 %v8285, %v8285
  %v8763 = vmul.f32 %v8290, %v8290
  %v8764 = vmul.f32 %v8295, %v8295
  %v8765 = vmul.f32 %v8300, %v8300
  %v8766 = vmul.f32 %v8305, %v8305
  %v8767 = vmul.f32 %v8310, %v8310
  %v8768 = vmul.f32 %v8315, %v8315
  %v8769 = vmul.f32 %v8320, %v8320
  %v8770 = vmul.f32 %v8325, %v8325
  %v8771 = vmul.f32 %v8330, %v8330
  %v8772 = vmul.f32 %v8335, %v8335
  %v8773 = vmul.f32 %v8340, %v8340
  %v8774 = vmul.f32 %v8345, %v8345
  %v8775 = vmul.f32 %v8350, %v8350
  %v8776 = vmul.f32 %v8355, %v8355
  %v8777 = vmul.f32 %v8360, %v8360
  %v8778 = vmul.f32 %v8365, %v8365
  %v8779 = vmul.f32 %v8370, %v8370
  %v8780 = vmul.f32 %v8375, %v8375
  %v8781 = vmul.f32 %v8380, %v8380
  %v8782 = vmul.f32 %v8385, %v8385
  %v8783 = vmul.f32 %v8390, %v8390
  %v8784 = vmul.f32 %v8395, %v8395
  %v8785 = vmul.f32 %v8400, %v8400
  %v8786 = vmul.f32 %v8405, %v8405
  %v8787 = vmul.f32 %v8410, %v8410
  %v8788 = vmul.f32 %v8415, %v8415
  %v8789 = vmul.f32 %v8420, %v8420
  %v8790 = vmul.f32 %v8425, %v8425
  %v8791 = vmul.f32 %v8430, %v8430
  %v8792 = vmul.f32 %v8435, %v8435
  %v8793 = vmul.f32 %v8440, %v8440
  %v8794 = vmul.f32 %v8445, %v8445
  %v8795 = vmul.f32 %v8450, %v8450
  %v8796 = vmul.f32 %v8455, %v8455
  %v8797 = vmul.f32 %v8460, %v8460
  %v8798 = vmul.f32 %v8465, %v8465
  %v8799 = vmul.f32 %v8470, %v8470
  %v8800 = vmul.f32 %v8475, %v8475
  %v8801 = vmul.f32 %v8480, %v8480
  %v8802 = vmul.f32 %v8485, %v8485
  %v8803 = vmul.f32 %v8490, %v8490
  %v8804 = vmul.f32 %v8495, %v8495
  %v8805 = vmul.f32 %v8500, %v8500
  %v8806 = vmul.f32 %v8505, %v8505
  %v8807 = vmul.f32 %v8510, %v8510
  %v8808 = vmul.f32 %v8515, %v8515
  %v8809 = vmul.f32 %v8520, %v8520
  %v8810 = vmul.f32 %v8525, %v8525
  %v8811 = vmul.f32 %v8530, %v8530
  %v8812 = vmul.f32 %v8535, %v8535
  %v8813 = vmul.f32 %v8540, %v8540
  %v8814 = vmul.f32 %v8545, %v8545
  %v8815 = vmul.f32 %v8550, %v8550
  %v8816 = vsel %vm26, %v8752, 0.0
  %v8817 = vsel %vm26, %v8753, 0.0
  %v8818 = vadd.f32 %v8816, %v8817
  %v8819 = vsel %vm26, %v8754, 0.0
  %v8820 = vadd.f32 %v8818, %v8819
  %v8821 = vsel %vm26, %v8755, 0.0
  %v8822 = vadd.f32 %v8820, %v8821
  %v8823 = vsel %vm26, %v8756, 0.0
  %v8824 = vadd.f32 %v8822, %v8823
  %v8825 = vsel %vm26, %v8757, 0.0
  %v8826 = vadd.f32 %v8824, %v8825
  %v8827 = vsel %vm26, %v8758, 0.0
  %v8828 = vadd.f32 %v8826, %v8827
  %v8829 = vsel %vm26, %v8759, 0.0
  %v8830 = vadd.f32 %v8828, %v8829
  %v8831 = vsel %vm26, %v8760, 0.0
  %v8832 = vadd.f32 %v8830, %v8831
  %v8833 = vsel %vm26, %v8761, 0.0
  %v8834 = vadd.f32 %v8832, %v8833
  %v8835 = vsel %vm26, %v8762, 0.0
  %v8836 = vadd.f32 %v8834, %v8835
  %v8837 = vsel %vm26, %v8763, 0.0
  %v8838 = vadd.f32 %v8836, %v8837
  %v8839 = vsel %vm26, %v8764, 0.0
  %v8840 = vadd.f32 %v8838, %v8839
  %v8841 = vsel %vm26, %v8765, 0.0
  %v8842 = vadd.f32 %v8840, %v8841
  %v8843 = vsel %vm26, %v8766, 0.0
  %v8844 = vadd.f32 %v8842, %v8843
  %v8845 = vsel %vm26, %v8767, 0.0
  %v8846 = vadd.f32 %v8844, %v8845
  %v8847 = vsel %vm26, %v8768, 0.0
  %v8848 = vadd.f32 %v8846, %v8847
  %v8849 = vsel %vm26, %v8769, 0.0
  %v8850 = vadd.f32 %v8848, %v8849
  %v8851 = vsel %vm26, %v8770, 0.0
  %v8852 = vadd.f32 %v8850, %v8851
  %v8853 = vsel %vm26, %v8771, 0.0
  %v8854 = vadd.f32 %v8852, %v8853
  %v8855 = vsel %vm26, %v8772, 0.0
  %v8856 = vadd.f32 %v8854, %v8855
  %v8857 = vsel %vm26, %v8773, 0.0
  %v8858 = vadd.f32 %v8856, %v8857
  %v8859 = vsel %vm26, %v8774, 0.0
  %v8860 = vadd.f32 %v8858, %v8859
  %v8861 = vsel %vm26, %v8775, 0.0
  %v8862 = vadd.f32 %v8860, %v8861
  %v8863 = vsel %vm26, %v8776, 0.0
  %v8864 = vadd.f32 %v8862, %v8863
  %v8865 = vsel %vm26, %v8777, 0.0
  %v8866 = vadd.f32 %v8864, %v8865
  %v8867 = vsel %vm26, %v8778, 0.0
  %v8868 = vadd.f32 %v8866, %v8867
  %v8869 = vsel %vm26, %v8779, 0.0
  %v8870 = vadd.f32 %v8868, %v8869
  %v8871 = vsel %vm26, %v8780, 0.0
  %v8872 = vadd.f32 %v8870, %v8871
  %v8873 = vsel %vm26, %v8781, 0.0
  %v8874 = vadd.f32 %v8872, %v8873
  %v8875 = vsel %vm26, %v8782, 0.0
  %v8876 = vadd.f32 %v8874, %v8875
  %v8877 = vsel %vm26, %v8783, 0.0
  %v8878 = vadd.f32 %v8876, %v8877
  %v8879 = vsel %vm26, %v8784, 0.0
  %v8880 = vadd.f32 %v8878, %v8879
  %v8881 = vsel %vm26, %v8785, 0.0
  %v8882 = vadd.f32 %v8880, %v8881
  %v8883 = vsel %vm26, %v8786, 0.0
  %v8884 = vadd.f32 %v8882, %v8883
  %v8885 = vsel %vm26, %v8787, 0.0
  %v8886 = vadd.f32 %v8884, %v8885
  %v8887 = vsel %vm26, %v8788, 0.0
  %v8888 = vadd.f32 %v8886, %v8887
  %v8889 = vsel %vm26, %v8789, 0.0
  %v8890 = vadd.f32 %v8888, %v8889
  %v8891 = vsel %vm26, %v8790, 0.0
  %v8892 = vadd.f32 %v8890, %v8891
  %v8893 = vsel %vm26, %v8791, 0.0
  %v8894 = vadd.f32 %v8892, %v8893
  %v8895 = vsel %vm26, %v8792, 0.0
  %v8896 = vadd.f32 %v8894, %v8895
  %v8897 = vsel %vm26, %v8793, 0.0
  %v8898 = vadd.f32 %v8896, %v8897
  %v8899 = vsel %vm26, %v8794, 0.0
  %v8900 = vadd.f32 %v8898, %v8899
  %v8901 = vsel %vm26, %v8795, 0.0
  %v8902 = vadd.f32 %v8900, %v8901
  %v8903 = vsel %vm26, %v8796, 0.0
  %v8904 = vadd.f32 %v8902, %v8903
  %v8905 = vsel %vm26, %v8797, 0.0
  %v8906 = vadd.f32 %v8904, %v8905
  %v8907 = vsel %vm26, %v8798, 0.0
  %v8908 = vadd.f32 %v8906, %v8907
  %v8909 = vsel %vm26, %v8799, 0.0
  %v8910 = vadd.f32 %v8908, %v8909
  %v8911 = vsel %vm26, %v8800, 0.0
  %v8912 = vadd.f32 %v8910, %v8911
  %v8913 = vsel %vm26, %v8801, 0.0
  %v8914 = vadd.f32 %v8912, %v8913
  %v8915 = vsel %vm26, %v8802, 0.0
  %v8916 = vadd.f32 %v8914, %v8915
  %v8917 = vsel %vm26, %v8803, 0.0
  %v8918 = vadd.f32 %v8916, %v8917
  %v8919 = vsel %vm26, %v8804, 0.0
  %v8920 = vadd.f32 %v8918, %v8919
  %v8921 = vsel %vm26, %v8805, 0.0
  %v8922 = vadd.f32 %v8920, %v8921
  %v8923 = vsel %vm26, %v8806, 0.0
  %v8924 = vadd.f32 %v8922, %v8923
  %v8925 = vsel %vm26, %v8807, 0.0
  %v8926 = vadd.f32 %v8924, %v8925
  %v8927 = vsel %vm26, %v8808, 0.0
  %v8928 = vadd.f32 %v8926, %v8927
  %v8929 = vsel %vm26, %v8809, 0.0
  %v8930 = vadd.f32 %v8928, %v8929
  %v8931 = vsel %vm26, %v8810, 0.0
  %v8932 = vadd.f32 %v8930, %v8931
  %v8933 = vsel %vm26, %v8811, 0.0
  %v8934 = vadd.f32 %v8932, %v8933
  %v8935 = vsel %vm26, %v8812, 0.0
  %v8936 = vadd.f32 %v8934, %v8935
  %v8937 = vsel %vm26, %v8813, 0.0
  %v8938 = vadd.f32 %v8936, %v8937
  %v8939 = vsel %vm26, %v8814, 0.0
  %v8940 = vadd.f32 %v8938, %v8939
  %v8941 = vsel %vm26, %v8815, 0.0
  %v8942 = vadd.f32 %v8940, %v8941
  %v8943 = vrot.slane %v8942, 4
  %v8944 = vadd.f32 %v8942, %v8943
  %v8945 = vrot.slane %v8944, 2
  %v8946 = vadd.f32 %v8944, %v8945
  %v8947 = vrot.slane %v8946, 1
  %v8948 = vadd.f32 %v8946, %v8947
  %v8949 = vmul.f32 %v8751, 0.001953125
  %v8950 = vmul.f32 %v8948, 0.001953125
  %v8951 = vmul.f32 %v8949, %v8949
  %v8952 = vsub.f32 %v8950, %v8951
  %v8953 = vadd.f32 %v8952, 1e-05
  %v8954 = vrsqrt.pop %v8953
  %v8955 = vmul.f32 %v8617, %v8954
  %v8956 = vmul.f32 %v8949, %v8955
  %v8957 = vsub.f32 %v8618, %v8956
  %v8959 = vlaneseq
  %v8960 = vshrl.u32 %v8959, 7
  %v8961 = vsub.s32 0, %v8960
  %v8962 = vrot.slane %v8955, %v8961
  %v8964 = vmul.f32 %v8235, %v8962
  %v8965 = vmul.f32 %v8240, %v8962
  %v8966 = vmul.f32 %v8245, %v8962
  %v8967 = vmul.f32 %v8250, %v8962
  %v8968 = vmul.f32 %v8255, %v8962
  %v8969 = vmul.f32 %v8260, %v8962
  %v8970 = vmul.f32 %v8265, %v8962
  %v8971 = vmul.f32 %v8270, %v8962
  %v8972 = vmul.f32 %v8275, %v8962
  %v8973 = vmul.f32 %v8280, %v8962
  %v8974 = vmul.f32 %v8285, %v8962
  %v8975 = vmul.f32 %v8290, %v8962
  %v8976 = vmul.f32 %v8295, %v8962
  %v8977 = vmul.f32 %v8300, %v8962
  %v8978 = vmul.f32 %v8305, %v8962
  %v8979 = vmul.f32 %v8310, %v8962
  %v8980 = vmul.f32 %v8315, %v8962
  %v8981 = vmul.f32 %v8320, %v8962
  %v8982 = vmul.f32 %v8325, %v8962
  %v8983 = vmul.f32 %v8330, %v8962
  %v8984 = vmul.f32 %v8335, %v8962
  %v8985 = vmul.f32 %v8340, %v8962
  %v8986 = vmul.f32 %v8345, %v8962
  %v8987 = vmul.f32 %v8350, %v8962
  %v8988 = vmul.f32 %v8355, %v8962
  %v8989 = vmul.f32 %v8360, %v8962
  %v8990 = vmul.f32 %v8365, %v8962
  %v8991 = vmul.f32 %v8370, %v8962
  %v8992 = vmul.f32 %v8375, %v8962
  %v8993 = vmul.f32 %v8380, %v8962
  %v8994 = vmul.f32 %v8385, %v8962
  %v8995 = vmul.f32 %v8390, %v8962
  %v8996 = vmul.f32 %v8395, %v8962
  %v8997 = vmul.f32 %v8400, %v8962
  %v8998 = vmul.f32 %v8405, %v8962
  %v8999 = vmul.f32 %v8410, %v8962
  %v9000 = vmul.f32 %v8415, %v8962
  %v9001 = vmul.f32 %v8420, %v8962
  %v9002 = vmul.f32 %v8425, %v8962
  %v9003 = vmul.f32 %v8430, %v8962
  %v9004 = vmul.f32 %v8435, %v8962
  %v9005 = vmul.f32 %v8440, %v8962
  %v9006 = vmul.f32 %v8445, %v8962
  %v9007 = vmul.f32 %v8450, %v8962
  %v9008 = vmul.f32 %v8455, %v8962
  %v9009 = vmul.f32 %v8460, %v8962
  %v9010 = vmul.f32 %v8465, %v8962
  %v9011 = vmul.f32 %v8470, %v8962
  %v9012 = vmul.f32 %v8475, %v8962
  %v9013 = vmul.f32 %v8480, %v8962
  %v9014 = vmul.f32 %v8485, %v8962
  %v9015 = vmul.f32 %v8490, %v8962
  %v9016 = vmul.f32 %v8495, %v8962
  %v9017 = vmul.f32 %v8500, %v8962
  %v9018 = vmul.f32 %v8505, %v8962
  %v9019 = vmul.f32 %v8510, %v8962
  %v9020 = vmul.f32 %v8515, %v8962
  %v9021 = vmul.f32 %v8520, %v8962
  %v9022 = vmul.f32 %v8525, %v8962
  %v9023 = vmul.f32 %v8530, %v8962
  %v9024 = vmul.f32 %v8535, %v8962
  %v9025 = vmul.f32 %v8540, %v8962
  %v9026 = vmul.f32 %v8545, %v8962
  %v9027 = vmul.f32 %v8550, %v8962
  %v9029 = vlaneseq
  %v9030 = vshrl.u32 %v9029, 7
  %v9031 = vsub.s32 0, %v9030
  %v9032 = vrot.slane %v8957, %v9031
  %v9034 = vadd.f32 %v8964, %v9032
  %v9035 = vadd.f32 %v8965, %v9032
  %v9036 = vadd.f32 %v8966, %v9032
  %v9037 = vadd.f32 %v8967, %v9032
  %v9038 = vadd.f32 %v8968, %v9032
  %v9039 = vadd.f32 %v8969, %v9032
  %v9040 = vadd.f32 %v8970, %v9032
  %v9041 = vadd.f32 %v8971, %v9032
  %v9042 = vadd.f32 %v8972, %v9032
  %v9043 = vadd.f32 %v8973, %v9032
  %v9044 = vadd.f32 %v8974, %v9032
  %v9045 = vadd.f32 %v8975, %v9032
  %v9046 = vadd.f32 %v8976, %v9032
  %v9047 = vadd.f32 %v8977, %v9032
  %v9048 = vadd.f32 %v8978, %v9032
  %v9049 = vadd.f32 %v8979, %v9032
  %v9050 = vadd.f32 %v8980, %v9032
  %v9051 = vadd.f32 %v8981, %v9032
  %v9052 = vadd.f32 %v8982, %v9032
  %v9053 = vadd.f32 %v8983, %v9032
  %v9054 = vadd.f32 %v8984, %v9032
  %v9055 = vadd.f32 %v8985, %v9032
  %v9056 = vadd.f32 %v8986, %v9032
  %v9057 = vadd.f32 %v8987, %v9032
  %v9058 = vadd.f32 %v8988, %v9032
  %v9059 = vadd.f32 %v8989, %v9032
  %v9060 = vadd.f32 %v8990, %v9032
  %v9061 = vadd.f32 %v8991, %v9032
  %v9062 = vadd.f32 %v8992, %v9032
  %v9063 = vadd.f32 %v8993, %v9032
  %v9064 = vadd.f32 %v8994, %v9032
  %v9065 = vadd.f32 %v8995, %v9032
  %v9066 = vadd.f32 %v8996, %v9032
  %v9067 = vadd.f32 %v8997, %v9032
  %v9068 = vadd.f32 %v8998, %v9032
  %v9069 = vadd.f32 %v8999, %v9032
  %v9070 = vadd.f32 %v9000, %v9032
  %v9071 = vadd.f32 %v9001, %v9032
  %v9072 = vadd.f32 %v9002, %v9032
  %v9073 = vadd.f32 %v9003, %v9032
  %v9074 = vadd.f32 %v9004, %v9032
  %v9075 = vadd.f32 %v9005, %v9032
  %v9076 = vadd.f32 %v9006, %v9032
  %v9077 = vadd.f32 %v9007, %v9032
  %v9078 = vadd.f32 %v9008, %v9032
  %v9079 = vadd.f32 %v9009, %v9032
  %v9080 = vadd.f32 %v9010, %v9032
  %v9081 = vadd.f32 %v9011, %v9032
  %v9082 = vadd.f32 %v9012, %v9032
  %v9083 = vadd.f32 %v9013, %v9032
  %v9084 = vadd.f32 %v9014, %v9032
  %v9085 = vadd.f32 %v9015, %v9032
  %v9086 = vadd.f32 %v9016, %v9032
  %v9087 = vadd.f32 %v9017, %v9032
  %v9088 = vadd.f32 %v9018, %v9032
  %v9089 = vadd.f32 %v9019, %v9032
  %v9090 = vadd.f32 %v9020, %v9032
  %v9091 = vadd.f32 %v9021, %v9032
  %v9092 = vadd.f32 %v9022, %v9032
  %v9093 = vadd.f32 %v9023, %v9032
  %v9094 = vadd.f32 %v9024, %v9032
  %v9095 = vadd.f32 %v9025, %v9032
  %v9096 = vadd.f32 %v9026, %v9032
  %v9097 = vadd.f32 %v9027, %v9032
  %v9098 = vadd.f32 %v9034, %v8553
  %v9099 = vadd.f32 %v9035, %v8554
  %v9100 = vadd.f32 %v9036, %v8555
  %v9101 = vadd.f32 %v9037, %v8556
  %v9102 = vadd.f32 %v9038, %v8557
  %v9103 = vadd.f32 %v9039, %v8558
  %v9104 = vadd.f32 %v9040, %v8559
  %v9105 = vadd.f32 %v9041, %v8560
  %v9106 = vadd.f32 %v9042, %v8561
  %v9107 = vadd.f32 %v9043, %v8562
  %v9108 = vadd.f32 %v9044, %v8563
  %v9109 = vadd.f32 %v9045, %v8564
  %v9110 = vadd.f32 %v9046, %v8565
  %v9111 = vadd.f32 %v9047, %v8566
  %v9112 = vadd.f32 %v9048, %v8567
  %v9113 = vadd.f32 %v9049, %v8568
  %v9114 = vadd.f32 %v9050, %v8569
  %v9115 = vadd.f32 %v9051, %v8570
  %v9116 = vadd.f32 %v9052, %v8571
  %v9117 = vadd.f32 %v9053, %v8572
  %v9118 = vadd.f32 %v9054, %v8573
  %v9119 = vadd.f32 %v9055, %v8574
  %v9120 = vadd.f32 %v9056, %v8575
  %v9121 = vadd.f32 %v9057, %v8576
  %v9122 = vadd.f32 %v9058, %v8577
  %v9123 = vadd.f32 %v9059, %v8578
  %v9124 = vadd.f32 %v9060, %v8579
  %v9125 = vadd.f32 %v9061, %v8580
  %v9126 = vadd.f32 %v9062, %v8581
  %v9127 = vadd.f32 %v9063, %v8582
  %v9128 = vadd.f32 %v9064, %v8583
  %v9129 = vadd.f32 %v9065, %v8584
  %v9130 = vadd.f32 %v9066, %v8585
  %v9131 = vadd.f32 %v9067, %v8586
  %v9132 = vadd.f32 %v9068, %v8587
  %v9133 = vadd.f32 %v9069, %v8588
  %v9134 = vadd.f32 %v9070, %v8589
  %v9135 = vadd.f32 %v9071, %v8590
  %v9136 = vadd.f32 %v9072, %v8591
  %v9137 = vadd.f32 %v9073, %v8592
  %v9138 = vadd.f32 %v9074, %v8593
  %v9139 = vadd.f32 %v9075, %v8594
  %v9140 = vadd.f32 %v9076, %v8595
  %v9141 = vadd.f32 %v9077, %v8596
  %v9142 = vadd.f32 %v9078, %v8597
  %v9143 = vadd.f32 %v9079, %v8598
  %v9144 = vadd.f32 %v9080, %v8599
  %v9145 = vadd.f32 %v9081, %v8600
  %v9146 = vadd.f32 %v9082, %v8601
  %v9147 = vadd.f32 %v9083, %v8602
  %v9148 = vadd.f32 %v9084, %v8603
  %v9149 = vadd.f32 %v9085, %v8604
  %v9150 = vadd.f32 %v9086, %v8605
  %v9151 = vadd.f32 %v9087, %v8606
  %v9152 = vadd.f32 %v9088, %v8607
  %v9153 = vadd.f32 %v9089, %v8608
  %v9154 = vadd.f32 %v9090, %v8609
  %v9155 = vadd.f32 %v9091, %v8610
  %v9156 = vadd.f32 %v9092, %v8611
  %v9157 = vadd.f32 %v9093, %v8612
  %v9158 = vadd.f32 %v9094, %v8613
  %v9159 = vadd.f32 %v9095, %v8614
  %v9160 = vadd.f32 %v9096, %v8615
  %v9161 = vadd.f32 %v9097, %v8616
  %v9162 = vmax.f32 %v9098, 0.0
  %v9163 = vmax.f32 %v9099, 0.0
  %v9164 = vmax.f32 %v9100, 0.0
  %v9165 = vmax.f32 %v9101, 0.0
  %v9166 = vmax.f32 %v9102, 0.0
  %v9167 = vmax.f32 %v9103, 0.0
  %v9168 = vmax.f32 %v9104, 0.0
  %v9169 = vmax.f32 %v9105, 0.0
  %v9170 = vmax.f32 %v9106, 0.0
  %v9171 = vmax.f32 %v9107, 0.0
  %v9172 = vmax.f32 %v9108, 0.0
  %v9173 = vmax.f32 %v9109, 0.0
  %v9174 = vmax.f32 %v9110, 0.0
  %v9175 = vmax.f32 %v9111, 0.0
  %v9176 = vmax.f32 %v9112, 0.0
  %v9177 = vmax.f32 %v9113, 0.0
  %v9178 = vmax.f32 %v9114, 0.0
  %v9179 = vmax.f32 %v9115, 0.0
  %v9180 = vmax.f32 %v9116, 0.0
  %v9181 = vmax.f32 %v9117, 0.0
  %v9182 = vmax.f32 %v9118, 0.0
  %v9183 = vmax.f32 %v9119, 0.0
  %v9184 = vmax.f32 %v9120, 0.0
  %v9185 = vmax.f32 %v9121, 0.0
  %v9186 = vmax.f32 %v9122, 0.0
  %v9187 = vmax.f32 %v9123, 0.0
  %v9188 = vmax.f32 %v9124, 0.0
  %v9189 = vmax.f32 %v9125, 0.0
  %v9190 = vmax.f32 %v9126, 0.0
  %v9191 = vmax.f32 %v9127, 0.0
  %v9192 = vmax.f32 %v9128, 0.0
  %v9193 = vmax.f32 %v9129, 0.0
  %v9194 = vmax.f32 %v9130, 0.0
  %v9195 = vmax.f32 %v9131, 0.0
  %v9196 = vmax.f32 %v9132, 0.0
  %v9197 = vmax.f32 %v9133, 0.0
  %v9198 = vmax.f32 %v9134, 0.0
  %v9199 = vmax.f32 %v9135, 0.0
  %v9200 = vmax.f32 %v9136, 0.0
  %v9201 = vmax.f32 %v9137, 0.0
  %v9202 = vmax.f32 %v9138, 0.0
  %v9203 = vmax.f32 %v9139, 0.0
  %v9204 = vmax.f32 %v9140, 0.0
  %v9205 = vmax.f32 %v9141, 0.0
  %v9206 = vmax.f32 %v9142, 0.0
  %v9207 = vmax.f32 %v9143, 0.0
  %v9208 = vmax.f32 %v9144, 0.0
  %v9209 = vmax.f32 %v9145, 0.0
  %v9210 = vmax.f32 %v9146, 0.0
  %v9211 = vmax.f32 %v9147, 0.0
  %v9212 = vmax.f32 %v9148, 0.0
  %v9213 = vmax.f32 %v9149, 0.0
  %v9214 = vmax.f32 %v9150, 0.0
  %v9215 = vmax.f32 %v9151, 0.0
  %v9216 = vmax.f32 %v9152, 0.0
  %v9217 = vmax.f32 %v9153, 0.0
  %v9218 = vmax.f32 %v9154, 0.0
  %v9219 = vmax.f32 %v9155, 0.0
  %v9220 = vmax.f32 %v9156, 0.0
  %v9221 = vmax.f32 %v9157, 0.0
  %v9222 = vmax.f32 %v9158, 0.0
  %v9223 = vmax.f32 %v9159, 0.0
  %v9224 = vmax.f32 %v9160, 0.0
  %v9225 = vmax.f32 %v9161, 0.0
  %9226 = vst.msk [vmem:[%s7] sm:$0xff] %vm26, %v9162
  %9227 = vst.msk [vmem:[%s7 + $0x8] sm:$0xff] %vm26, %v9163
  %9228 = vst.msk [vmem:[%s7 + $0x10] sm:$0xff] %vm26, %v9164
  %9229 = vst.msk [vmem:[%s7 + $0x18] sm:$0xff] %vm26, %v9165
  %9230 = vst.msk [vmem:[%s7 + $0x20] sm:$0xff] %vm26, %v9166
  %9231 = vst.msk [vmem:[%s7 + $0x28] sm:$0xff] %vm26, %v9167
  %9232 = vst.msk [vmem:[%s7 + $0x30] sm:$0xff] %vm26, %v9168
  %9233 = vst.msk [vmem:[%s7 + $0x38] sm:$0xff] %vm26, %v9169
  %9234 = vst.msk [vmem:[%s7 + $0x40] sm:$0xff] %vm26, %v9170
  %9235 = vst.msk [vmem:[%s7 + $0x48] sm:$0xff] %vm26, %v9171
  %9236 = vst.msk [vmem:[%s7 + $0x50] sm:$0xff] %vm26, %v9172
  %9237 = vst.msk [vmem:[%s7 + $0x58] sm:$0xff] %vm26, %v9173
  %9238 = vst.msk [vmem:[%s7 + $0x60] sm:$0xff] %vm26, %v9174
  %9239 = vst.msk [vmem:[%s7 + $0x68] sm:$0xff] %vm26, %v9175
  %9240 = vst.msk [vmem:[%s7 + $0x70] sm:$0xff] %vm26, %v9176
  %9241 = vst.msk [vmem:[%s7 + $0x78] sm:$0xff] %vm26, %v9177
  %9242 = vst.msk [vmem:[%s7 + $0x80] sm:$0xff] %vm26, %v9178
  %9243 = vst.msk [vmem:[%s7 + $0x88] sm:$0xff] %vm26, %v9179
  %9244 = vst.msk [vmem:[%s7 + $0x90] sm:$0xff] %vm26, %v9180
  %9245 = vst.msk [vmem:[%s7 + $0x98] sm:$0xff] %vm26, %v9181
  %9246 = vst.msk [vmem:[%s7 + $0xa0] sm:$0xff] %vm26, %v9182
  %9247 = vst.msk [vmem:[%s7 + $0xa8] sm:$0xff] %vm26, %v9183
  %9248 = vst.msk [vmem:[%s7 + $0xb0] sm:$0xff] %vm26, %v9184
  %9249 = vst.msk [vmem:[%s7 + $0xb8] sm:$0xff] %vm26, %v9185
  %9250 = vst.msk [vmem:[%s7 + $0xc0] sm:$0xff] %vm26, %v9186
  %9251 = vst.msk [vmem:[%s7 + $0xc8] sm:$0xff] %vm26, %v9187
  %9252 = vst.msk [vmem:[%s7 + $0xd0] sm:$0xff] %vm26, %v9188
  %9253 = vst.msk [vmem:[%s7 + $0xd8] sm:$0xff] %vm26, %v9189
  %9254 = vst.msk [vmem:[%s7 + $0xe0] sm:$0xff] %vm26, %v9190
  %9255 = vst.msk [vmem:[%s7 + $0xe8] sm:$0xff] %vm26, %v9191
  %9256 = vst.msk [vmem:[%s7 + $0xf0] sm:$0xff] %vm26, %v9192
  %9257 = vst.msk [vmem:[%s7 + $0xf8] sm:$0xff] %vm26, %v9193
  %9258 = vst.msk [vmem:[%s7 + $0x100] sm:$0xff] %vm26, %v9194
  %9259 = vst.msk [vmem:[%s7 + $0x108] sm:$0xff] %vm26, %v9195
  %9260 = vst.msk [vmem:[%s7 + $0x110] sm:$0xff] %vm26, %v9196
  %9261 = vst.msk [vmem:[%s7 + $0x118] sm:$0xff] %vm26, %v9197
  %9262 = vst.msk [vmem:[%s7 + $0x120] sm:$0xff] %vm26, %v9198
  %9263 = vst.msk [vmem:[%s7 + $0x128] sm:$0xff] %vm26, %v9199
  %9264 = vst.msk [vmem:[%s7 + $0x130] sm:$0xff] %vm26, %v9200
  %9265 = vst.msk [vmem:[%s7 + $0x138] sm:$0xff] %vm26, %v9201
  %9266 = vst.msk [vmem:[%s7 + $0x140] sm:$0xff] %vm26, %v9202
  %9267 = vst.msk [vmem:[%s7 + $0x148] sm:$0xff] %vm26, %v9203
  %9268 = vst.msk [vmem:[%s7 + $0x150] sm:$0xff] %vm26, %v9204
  %9269 = vst.msk [vmem:[%s7 + $0x158] sm:$0xff] %vm26, %v9205
  %9270 = vst.msk [vmem:[%s7 + $0x160] sm:$0xff] %vm26, %v9206
  %9271 = vst.msk [vmem:[%s7 + $0x168] sm:$0xff] %vm26, %v9207
  %9272 = vst.msk [vmem:[%s7 + $0x170] sm:$0xff] %vm26, %v9208
  %9273 = vst.msk [vmem:[%s7 + $0x178] sm:$0xff] %vm26, %v9209
  %9274 = vst.msk [vmem:[%s7 + $0x180] sm:$0xff] %vm26, %v9210
  %9275 = vst.msk [vmem:[%s7 + $0x188] sm:$0xff] %vm26, %v9211
  %9276 = vst.msk [vmem:[%s7 + $0x190] sm:$0xff] %vm26, %v9212
  %9277 = vst.msk [vmem:[%s7 + $0x198] sm:$0xff] %vm26, %v9213
  %9278 = vst.msk [vmem:[%s7 + $0x1a0] sm:$0xff] %vm26, %v9214
  %9279 = vst.msk [vmem:[%s7 + $0x1a8] sm:$0xff] %vm26, %v9215
  %9280 = vst.msk [vmem:[%s7 + $0x1b0] sm:$0xff] %vm26, %v9216
  %9281 = vst.msk [vmem:[%s7 + $0x1b8] sm:$0xff] %vm26, %v9217
  %9282 = vst.msk [vmem:[%s7 + $0x1c0] sm:$0xff] %vm26, %v9218
  %9283 = vst.msk [vmem:[%s7 + $0x1c8] sm:$0xff] %vm26, %v9219
  %9284 = vst.msk [vmem:[%s7 + $0x1d0] sm:$0xff] %vm26, %v9220
  %9285 = vst.msk [vmem:[%s7 + $0x1d8] sm:$0xff] %vm26, %v9221
  %9286 = vst.msk [vmem:[%s7 + $0x1e0] sm:$0xff] %vm26, %v9222
  %9287 = vst.msk [vmem:[%s7 + $0x1e8] sm:$0xff] %vm26, %v9223
  %9288 = vst.msk [vmem:[%s7 + $0x1f0] sm:$0xff] %vm26, %v9224
  %9289 = vst.msk [vmem:[%s7 + $0x1f8] sm:$0xff] %vm26, %v9225
  // Predicated region
  $region30: #{basic_block_forward.1} parent=0 // pred_check
    _
  $region31: #{basic_block_forward.1} parent=0 // pred_check_branch
    %9291 = sbr.rel (0) target = $region33
  $region32: #{basic_block_forward.1} parent=0 // pred_region
    _
  $region33: #{basic_block_forward.1} parent=0 // pred_fallthru
    _
  // Predicated region
  $region34: #{basic_block_forward.1} parent=0 // pred_check
    _
  $region35: #{basic_block_forward.1} parent=0 // pred_check_branch
    %9293 = sbr.rel (0) target = $region37
  $region36: #{basic_block_forward.1} parent=0 // pred_region
    _
  $region37: #{basic_block_forward.1} parent=0 // pred_fallthru
    _

</llo_original>
